<compile_context>
chip_gen: v7x
topology: tpu7x:2x2x1
jax: 0.10.0
libtpu: 0.0.40
codegen_flags: <defaults>
</compile_context>

<pallas_src>
import jax
import jax.numpy as jnp
from jax import lax
from jax.experimental import pallas as pl
from jax.experimental.pallas import tpu as pltpu

_LEFT = 8  # left halo width: interior starts at a sublane-aligned W offset.


def _zero_halo(buf_ref, w):
    """Zero only the 1-px 'same'-padding ring of a halo'd activation buffer.

    Buffer layout: rows [1, H+1) x cols [_LEFT, _LEFT+w) hold the activation; the conv
    taps read rows [0, H+2) x cols [_LEFT-1, _LEFT+w+1), so only that ring must be zero.
    The interior is fully overwritten every grid step, so this is the only init needed.
    """
    hp, wp, c = buf_ref.shape
    dt = buf_ref.dtype
    buf_ref[0:1, :, :] = jnp.zeros((1, wp, c), dt)                       # top halo row
    buf_ref[hp - 1:hp, :, :] = jnp.zeros((1, wp, c), dt)                 # bottom halo row
    buf_ref[:, _LEFT - 1:_LEFT, :] = jnp.zeros((hp, 1, c), dt)           # left halo col
    buf_ref[:, _LEFT + w:_LEFT + w + 1, :] = jnp.zeros((hp, 1, c), dt)   # right halo col


def _conv3x3_bn_relu(src_pad_ref, w_ref, s_ref, b_ref, h, w):
    """Direct 3x3 'same' conv + folded BN + ReLU on a zero-halo'd VMEM buffer.

    src_pad_ref : (h+2, _LEFT+w+1, cin)  activation with zero halo (matmul dtype)
    w_ref       : (3, 3, cin, cout)      HWIO weights (matmul dtype)
    s_ref/b_ref : (1, cout)              folded BN scale / shift (f32)
    Returns (h, w, cout) float32.
    """
    cin = src_pad_ref.shape[-1]
    cout = w_ref.shape[-1]
    acc = jnp.zeros((h * w, cout), jnp.float32)
    # 9 accumulated MXU matmuls on shifted slices -- no materialized im2col buffer.
    for dh in range(3):
        for dw in range(3):
            c0 = _LEFT - 1 + dw
            tap = src_pad_ref[dh:dh + h, c0:c0 + w, :].reshape(h * w, cin)
            acc = acc + jnp.dot(tap, w_ref[dh, dw],
                                preferred_element_type=jnp.float32)
    # Folded BN + conv bias + ReLU epilogue stays f32 (v5e VPU has no bf16).
    y = jnp.maximum(acc * s_ref[...] + b_ref[...], 0.0)
    return y.reshape(h, w, cout)


def _fused_convblock_kernel(x_ref, w1_ref, s1_ref, b1_ref,
                            w2_ref, s2_ref, b2_ref, o_ref,
                            xpad_ref, y1pad_ref):
    """Fused (conv3x3 'same' + folded BN + ReLU) x 2 for one batch element."""
    h, w = o_ref.shape[1], o_ref.shape[2]

    # ---- stage 1: build the zero halo in VMEM (no HBM-side spatial pad) ----
    _zero_halo(xpad_ref, w)
    xpad_ref[1:h + 1, _LEFT:_LEFT + w, :] = x_ref[0].astype(xpad_ref.dtype)
    y1 = _conv3x3_bn_relu(xpad_ref, w1_ref, s1_ref, b1_ref, h, w)

    # ---- stage 2: intermediate activation stays resident in VMEM ----
    _zero_halo(y1pad_ref, w)
    y1pad_ref[1:h + 1, _LEFT:_LEFT + w, :] = y1.astype(y1pad_ref.dtype)
    y2 = _conv3x3_bn_relu(y1pad_ref, w2_ref, s2_ref, b2_ref, h, w)

    o_ref[...] = y2.reshape(1, h, w, y2.shape[-1]).astype(o_ref.dtype)


def _fold_bn(conv_bias, gamma, beta, running_mean, running_var, eps=1e-5):
    """Fold BN (eval mode) + conv bias into per-channel scale/shift."""
    scale = gamma / jnp.sqrt(running_var + eps)
    shift = beta - running_mean * scale + conv_bias * scale
    return scale, shift


def _prep_weight(w_oihw, matmul_dtype):
    """OIHW -> HWIO (3, 3, Cin, Cout), cast once to the MXU operand dtype."""
    return jnp.transpose(w_oihw, (2, 3, 1, 0)).astype(matmul_dtype)


def _prep_affine(scale, shift):
    return (scale.reshape(1, -1).astype(jnp.float32),
            shift.reshape(1, -1).astype(jnp.float32))


def conv_block_forward(x_nchw, params, *, matmul_dtype=jnp.bfloat16):
    """ConvBlock forward. Input/Output: NCHW float32 (matches PyTorch).

    matmul_dtype: MXU operand dtype. bfloat16 (default) is the fast path on
    v5e/v6e/v7x (f32 accumulation via preferred_element_type); pass jnp.float32
    for an (almost) exact path.
    """
    N, Cin, H, W = x_nchw.shape
    Cmid = params["w1"].shape[0]
    Cout = params["w2"].shape[0]
    assert params["w2"].shape[1] == Cmid, "w2 Cin must equal w1 Cout"

    # NCHW -> NHWC.  No channel lane-padding in HBM (avoids 16-32x traffic
    # inflation for small channel counts; full last-dim blocks are legal).
    x = jnp.transpose(x_nchw, (0, 2, 3, 1)).astype(jnp.float32)

    w1 = _prep_weight(params["w1"], matmul_dtype)
    s1, b1 = _prep_affine(*_fold_bn(params["b1"], params["gamma1"], params["beta1"],
                                    params["mean1"], params["var1"]))
    w2 = _prep_weight(params["w2"], matmul_dtype)
    s2, b2 = _prep_affine(*_fold_bn(params["b2"], params["gamma2"], params["beta2"],
                                    params["mean2"], params["var2"]))

    # VMEM budget: scratch + double-buffered in/out blocks + weights, with headroom.
    itm = jnp.dtype(matmul_dtype).itemsize
    wp = W + _LEFT + 1
    scratch_bytes = (H + 2) * wp * (Cin + Cmid) * itm
    block_bytes = H * W * (Cin + Cout) * 4
    weight_bytes = 9 * (Cin * Cmid + Cmid * Cout) * itm + 4 * (Cmid + Cout) * 4
    needed = scratch_bytes + 2 * block_bytes + 2 * weight_bytes
    # Clamp to a budget that is safe on every generation (v7x has 64 MiB physical VMEM).
    vmem_limit = int(min(max(2 * needed, 16 * 1024 * 1024), 48 * 1024 * 1024))

    out = pl.pallas_call(
        _fused_convblock_kernel,
        out_shape=jax.ShapeDtypeStruct((N, H, W, Cout), jnp.float32),
        grid_spec=pltpu.PrefetchScalarGridSpec(
            num_scalar_prefetch=0,
            grid=(N,),
            in_specs=[
                pl.BlockSpec((1, H, W, Cin), lambda n: (n, 0, 0, 0)),
                pl.BlockSpec((3, 3, Cin, Cmid), lambda n: (0, 0, 0, 0)),
                pl.BlockSpec((1, Cmid), lambda n: (0, 0)),
                pl.BlockSpec((1, Cmid), lambda n: (0, 0)),
                pl.BlockSpec((3, 3, Cmid, Cout), lambda n: (0, 0, 0, 0)),
                pl.BlockSpec((1, Cout), lambda n: (0, 0)),
                pl.BlockSpec((1, Cout), lambda n: (0, 0)),
            ],
            out_specs=pl.BlockSpec((1, H, W, Cout), lambda n: (n, 0, 0, 0)),
            scratch_shapes=[
                pltpu.VMEM((H + 2, wp, Cin), matmul_dtype),    # halo'd input
                pltpu.VMEM((H + 2, wp, Cmid), matmul_dtype),   # halo'd stage-1 activation
            ]),
        compiler_params=pltpu.CompilerParams(
            dimension_semantics=("parallel",),
            vmem_limit_bytes=vmem_limit),
    )(x, w1, s1, b1, w2, s2, b2)

    return jnp.transpose(out, (0, 3, 1, 2))            # NHWC -> NCHW


def _reference_forward(x_nchw, params, eps=1e-5):
    """Pure-JAX reference (lax.conv, highest precision) for correctness check."""
    def stage(x, w, b, gamma, beta, mean, var):
        y = lax.conv_general_dilated(
            x, w, window_strides=(1, 1), padding="SAME",
            dimension_numbers=("NCHW", "OIHW", "NCHW"),
            precision=lax.Precision.HIGHEST)
        y = y + b[None, :, None, None]
        y = (y - mean[None, :, None, None]) / jnp.sqrt(var + eps)[None, :, None, None]
        y = y * gamma[None, :, None, None] + beta[None, :, None, None]
        return jnp.maximum(y, 0.0)

    y = stage(x_nchw, params["w1"], params["b1"], params["gamma1"],
              params["beta1"], params["mean1"], params["var1"])
    y = stage(y, params["w2"], params["b2"], params["gamma2"],
              params["beta2"], params["mean2"], params["var2"])
    return y


def init_params(key, in_channels, out_channels):
    ks = jax.random.split(key, 12)
    p = {}
    p["w1"] = 0.1 * jax.random.normal(ks[0], (out_channels, in_channels, 3, 3), jnp.float32)
    p["b1"] = 0.1 * jax.random.normal(ks[1], (out_channels,), jnp.float32)
    p["gamma1"] = 1.0 + 0.1 * jax.random.normal(ks[2], (out_channels,), jnp.float32)
    p["beta1"] = 0.1 * jax.random.normal(ks[3], (out_channels,), jnp.float32)
    p["mean1"] = 0.1 * jax.random.normal(ks[4], (out_channels,), jnp.float32)
    p["var1"] = jax.random.uniform(ks[5], (out_channels,), jnp.float32, 0.5, 1.5)
    p["w2"] = 0.1 * jax.random.normal(ks[6], (out_channels, out_channels, 3, 3), jnp.float32)
    p["b2"] = 0.1 * jax.random.normal(ks[7], (out_channels,), jnp.float32)
    p["gamma2"] = 1.0 + 0.1 * jax.random.normal(ks[8], (out_channels,), jnp.float32)
    p["beta2"] = 0.1 * jax.random.normal(ks[9], (out_channels,), jnp.float32)
    p["mean2"] = 0.1 * jax.random.normal(ks[10], (out_channels,), jnp.float32)
    p["var2"] = jax.random.uniform(ks[11], (out_channels,), jnp.float32, 0.5, 1.5)
    return p


if __name__ == "__main__":
    key = jax.random.PRNGKey(0)
    k_x, k_p = jax.random.split(key)

    N, Cin, Cout, H, W = 2, 4, 8, 16, 16
    x = jax.random.normal(k_x, (N, Cin, H, W), jnp.float32)
    params = init_params(k_p, Cin, Cout)

    ref = jax.block_until_ready(_reference_forward(x, params))

    # Near-exact path: f32 MXU operands (tolerance covers MXU multi-pass rounding).
    out_f32 = jax.block_until_ready(
        conv_block_forward(x, params, matmul_dtype=jnp.float32))
    assert out_f32.shape == (N, Cout, H, W), out_f32.shape
    err_f32 = float(jnp.max(jnp.abs(out_f32 - ref)))
    assert err_f32 < 2e-3, err_f32

    # Default fast path: bf16 MXU operands, f32 accumulation + epilogue.
    out_bf16 = jax.block_until_ready(conv_block_forward(x, params))
    err_bf16 = float(jnp.max(jnp.abs(out_bf16 - ref)))
    assert err_bf16 < 1e-1, err_bf16

    print("KERNEL_OK")
</pallas_src>

<mosaic_0001>
module attributes {stable_mosaic.version = 11 : i64} {
  func.func @_fused_convblock_kernel(%arg0: i32, %arg1: memref<1x16x16x4xf32, #tpu.memory_space<vmem>>, %arg2: memref<3x3x4x8xf32, #tpu.memory_space<vmem>>, %arg3: memref<1x8xf32, #tpu.memory_space<vmem>>, %arg4: memref<1x8xf32, #tpu.memory_space<vmem>>, %arg5: memref<3x3x8x8xf32, #tpu.memory_space<vmem>>, %arg6: memref<1x8xf32, #tpu.memory_space<vmem>>, %arg7: memref<1x8xf32, #tpu.memory_space<vmem>>, %arg8: memref<1x16x16x8xf32, #tpu.memory_space<vmem>>, %arg9: memref<18x25x4xf32, #tpu.memory_space<vmem>>, %arg10: memref<18x25x8xf32, #tpu.memory_space<vmem>>) attributes {dimension_semantics = [#tpu.dimension_semantics<parallel>], iteration_bounds = array<i64: 2>, scalar_prefetch = 0 : i64, scratch_operands = 2 : i64, tpu.core_type = #tpu.core_type<tc>, window_params = [{transform_indices = @transform_0, window_bounds = array<i64: 1, 16, 16, 4>}, {pipeline_mode = #tpu.pipeline_mode<synchronous>, transform_indices = @transform_1, window_bounds = array<i64: 3, 3, 4, 8>}, {pipeline_mode = #tpu.pipeline_mode<synchronous>, transform_indices = @transform_2, window_bounds = array<i64: 1, 8>}, {pipeline_mode = #tpu.pipeline_mode<synchronous>, transform_indices = @transform_3, window_bounds = array<i64: 1, 8>}, {pipeline_mode = #tpu.pipeline_mode<synchronous>, transform_indices = @transform_4, window_bounds = array<i64: 3, 3, 8, 8>}, {pipeline_mode = #tpu.pipeline_mode<synchronous>, transform_indices = @transform_5, window_bounds = array<i64: 1, 8>}, {pipeline_mode = #tpu.pipeline_mode<synchronous>, transform_indices = @transform_6, window_bounds = array<i64: 1, 8>}, {transform_indices = @transform_7, window_bounds = array<i64: 1, 16, 16, 8>}]} {
    %cst = arith.constant 0.000000e+00 : f32
    %0 = vector.broadcast %cst : f32 to vector<1x25x4xf32>
    %c0 = arith.constant 0 : index
    %c0_0 = arith.constant 0 : index
    %c0_1 = arith.constant 0 : index
    %1 = vector.load %arg9[%c0, %c0_0, %c0_1] : memref<18x25x4xf32, #tpu.memory_space<vmem>>, vector<1x25x4xf32>
    tpu.vector_store %arg9[%c0, %c0_0, %c0_1], %0 {strides = array<i32>} : memref<18x25x4xf32, #tpu.memory_space<vmem>>, vector<1x25x4xf32>,
    %cst_2 = arith.constant 0.000000e+00 : f32
    %2 = vector.broadcast %cst_2 : f32 to vector<1x25x4xf32>
    %c17 = arith.constant 17 : index
    %c0_3 = arith.constant 0 : index
    %c0_4 = arith.constant 0 : index
    %3 = vector.load %arg9[%c17, %c0_3, %c0_4] : memref<18x25x4xf32, #tpu.memory_space<vmem>>, vector<1x25x4xf32>
    tpu.vector_store %arg9[%c17, %c0_3, %c0_4], %2 {strides = array<i32>} : memref<18x25x4xf32, #tpu.memory_space<vmem>>, vector<1x25x4xf32>,
    %cst_5 = arith.constant 0.000000e+00 : f32
    %4 = vector.broadcast %cst_5 : f32 to vector<18x1x4xf32>
    %c0_6 = arith.constant 0 : index
    %c7 = arith.constant 7 : index
    %c0_7 = arith.constant 0 : index
    %5 = vector.load %arg9[%c0_6, %c7, %c0_7] : memref<18x25x4xf32, #tpu.memory_space<vmem>>, vector<18x1x4xf32>
    tpu.vector_store %arg9[%c0_6, %c7, %c0_7], %4 {strides = array<i32>} : memref<18x25x4xf32, #tpu.memory_space<vmem>>, vector<18x1x4xf32>,
    %cst_8 = arith.constant 0.000000e+00 : f32
    %6 = vector.broadcast %cst_8 : f32 to vector<18x1x4xf32>
    %c0_9 = arith.constant 0 : index
    %c24 = arith.constant 24 : index
    %c0_10 = arith.constant 0 : index
    %7 = vector.load %arg9[%c0_9, %c24, %c0_10] : memref<18x25x4xf32, #tpu.memory_space<vmem>>, vector<18x1x4xf32>
    tpu.vector_store %arg9[%c0_9, %c24, %c0_10], %6 {strides = array<i32>} : memref<18x25x4xf32, #tpu.memory_space<vmem>>, vector<18x1x4xf32>,
    %c0_11 = arith.constant 0 : index
    %c0_12 = arith.constant 0 : index
    %c0_13 = arith.constant 0 : index
    %c0_14 = arith.constant 0 : index
    %8 = vector.load %arg1[%c0_11, %c0_12, %c0_13, %c0_14] : memref<1x16x16x4xf32, #tpu.memory_space<vmem>>, vector<1x16x16x4xf32>
    %9 = vector.shape_cast %8 : vector<1x16x16x4xf32> to vector<16x16x4xf32>
    %c1 = arith.constant 1 : index
    %c8 = arith.constant 8 : index
    %c0_15 = arith.constant 0 : index
    %10 = vector.load %arg9[%c1, %c8, %c0_15] : memref<18x25x4xf32, #tpu.memory_space<vmem>>, vector<16x16x4xf32>
    tpu.vector_store %arg9[%c1, %c8, %c0_15], %9 {strides = array<i32>} : memref<18x25x4xf32, #tpu.memory_space<vmem>>, vector<16x16x4xf32>,
    %cst_16 = arith.constant 0.000000e+00 : f32
    %11 = vector.broadcast %cst_16 : f32 to vector<256x8xf32>
    %c0_17 = arith.constant 0 : index
    %c7_18 = arith.constant 7 : index
    %c0_19 = arith.constant 0 : index
    %12 = vector.load %arg9[%c0_17, %c7_18, %c0_19] : memref<18x25x4xf32, #tpu.memory_space<vmem>>, vector<16x16x4xf32>
    %13 = vector.shape_cast %12 : vector<16x16x4xf32> to vector<256x4xf32>
    %c0_20 = arith.constant 0 : index
    %c0_21 = arith.constant 0 : index
    %c0_22 = arith.constant 0 : index
    %c0_23 = arith.constant 0 : index
    %14 = vector.load %arg2[%c0_20, %c0_21, %c0_22, %c0_23] : memref<3x3x4x8xf32, #tpu.memory_space<vmem>>, vector<1x1x4x8xf32>
    %15 = vector.shape_cast %14 : vector<1x1x4x8xf32> to vector<4x8xf32>
    %cst_24 = arith.constant dense<0.000000e+00> : vector<256x8xf32>
    %16 = tpu.matmul %13, %15, %cst_24 {dimension_numbers = #tpu.dot_dimension_numbers<[1], [0], [0], [1], [0, 0, 1, 1], [], []>} : vector<256x4xf32>, vector<4x8xf32>, vector<256x8xf32> -> vector<256x8xf32>
    %17 = arith.addf %11, %16 : vector<256x8xf32>
    %c0_25 = arith.constant 0 : index
    %c8_26 = arith.constant 8 : index
    %c0_27 = arith.constant 0 : index
    %18 = vector.load %arg9[%c0_25, %c8_26, %c0_27] : memref<18x25x4xf32, #tpu.memory_space<vmem>>, vector<16x16x4xf32>
    %19 = vector.shape_cast %18 : vector<16x16x4xf32> to vector<256x4xf32>
    %c0_28 = arith.constant 0 : index
    %c1_29 = arith.constant 1 : index
    %c0_30 = arith.constant 0 : index
    %c0_31 = arith.constant 0 : index
    %20 = vector.load %arg2[%c0_28, %c1_29, %c0_30, %c0_31] : memref<3x3x4x8xf32, #tpu.memory_space<vmem>>, vector<1x1x4x8xf32>
    %21 = vector.shape_cast %20 : vector<1x1x4x8xf32> to vector<4x8xf32>
    %cst_32 = arith.constant dense<0.000000e+00> : vector<256x8xf32>
    %22 = tpu.matmul %19, %21, %cst_32 {dimension_numbers = #tpu.dot_dimension_numbers<[1], [0], [0], [1], [0, 0, 1, 1], [], []>} : vector<256x4xf32>, vector<4x8xf32>, vector<256x8xf32> -> vector<256x8xf32>
    %23 = arith.addf %17, %22 : vector<256x8xf32>
    %c0_33 = arith.constant 0 : index
    %c9 = arith.constant 9 : index
    %c0_34 = arith.constant 0 : index
    %24 = vector.load %arg9[%c0_33, %c9, %c0_34] : memref<18x25x4xf32, #tpu.memory_space<vmem>>, vector<16x16x4xf32>
    %25 = vector.shape_cast %24 : vector<16x16x4xf32> to vector<256x4xf32>
    %c0_35 = arith.constant 0 : index
    %c2 = arith.constant 2 : index
    %c0_36 = arith.constant 0 : index
    %c0_37 = arith.constant 0 : index
    %26 = vector.load %arg2[%c0_35, %c2, %c0_36, %c0_37] : memref<3x3x4x8xf32, #tpu.memory_space<vmem>>, vector<1x1x4x8xf32>
    %27 = vector.shape_cast %26 : vector<1x1x4x8xf32> to vector<4x8xf32>
    %cst_38 = arith.constant dense<0.000000e+00> : vector<256x8xf32>
    %28 = tpu.matmul %25, %27, %cst_38 {dimension_numbers = #tpu.dot_dimension_numbers<[1], [0], [0], [1], [0, 0, 1, 1], [], []>} : vector<256x4xf32>, vector<4x8xf32>, vector<256x8xf32> -> vector<256x8xf32>
    %29 = arith.addf %23, %28 : vector<256x8xf32>
    %c1_39 = arith.constant 1 : index
    %c7_40 = arith.constant 7 : index
    %c0_41 = arith.constant 0 : index
    %30 = vector.load %arg9[%c1_39, %c7_40, %c0_41] : memref<18x25x4xf32, #tpu.memory_space<vmem>>, vector<16x16x4xf32>
    %31 = vector.shape_cast %30 : vector<16x16x4xf32> to vector<256x4xf32>
    %c1_42 = arith.constant 1 : index
    %c0_43 = arith.constant 0 : index
    %c0_44 = arith.constant 0 : index
    %c0_45 = arith.constant 0 : index
    %32 = vector.load %arg2[%c1_42, %c0_43, %c0_44, %c0_45] : memref<3x3x4x8xf32, #tpu.memory_space<vmem>>, vector<1x1x4x8xf32>
    %33 = vector.shape_cast %32 : vector<1x1x4x8xf32> to vector<4x8xf32>
    %cst_46 = arith.constant dense<0.000000e+00> : vector<256x8xf32>
    %34 = tpu.matmul %31, %33, %cst_46 {dimension_numbers = #tpu.dot_dimension_numbers<[1], [0], [0], [1], [0, 0, 1, 1], [], []>} : vector<256x4xf32>, vector<4x8xf32>, vector<256x8xf32> -> vector<256x8xf32>
    %35 = arith.addf %29, %34 : vector<256x8xf32>
    %c1_47 = arith.constant 1 : index
    %c8_48 = arith.constant 8 : index
    %c0_49 = arith.constant 0 : index
    %36 = vector.load %arg9[%c1_47, %c8_48, %c0_49] : memref<18x25x4xf32, #tpu.memory_space<vmem>>, vector<16x16x4xf32>
    %37 = vector.shape_cast %36 : vector<16x16x4xf32> to vector<256x4xf32>
    %c1_50 = arith.constant 1 : index
    %c1_51 = arith.constant 1 : index
    %c0_52 = arith.constant 0 : index
    %c0_53 = arith.constant 0 : index
    %38 = vector.load %arg2[%c1_50, %c1_51, %c0_52, %c0_53] : memref<3x3x4x8xf32, #tpu.memory_space<vmem>>, vector<1x1x4x8xf32>
    %39 = vector.shape_cast %38 : vector<1x1x4x8xf32> to vector<4x8xf32>
    %cst_54 = arith.constant dense<0.000000e+00> : vector<256x8xf32>
    %40 = tpu.matmul %37, %39, %cst_54 {dimension_numbers = #tpu.dot_dimension_numbers<[1], [0], [0], [1], [0, 0, 1, 1], [], []>} : vector<256x4xf32>, vector<4x8xf32>, vector<256x8xf32> -> vector<256x8xf32>
    %41 = arith.addf %35, %40 : vector<256x8xf32>
    %c1_55 = arith.constant 1 : index
    %c9_56 = arith.constant 9 : index
    %c0_57 = arith.constant 0 : index
    %42 = vector.load %arg9[%c1_55, %c9_56, %c0_57] : memref<18x25x4xf32, #tpu.memory_space<vmem>>, vector<16x16x4xf32>
    %43 = vector.shape_cast %42 : vector<16x16x4xf32> to vector<256x4xf32>
    %c1_58 = arith.constant 1 : index
    %c2_59 = arith.constant 2 : index
    %c0_60 = arith.constant 0 : index
    %c0_61 = arith.constant 0 : index
    %44 = vector.load %arg2[%c1_58, %c2_59, %c0_60, %c0_61] : memref<3x3x4x8xf32, #tpu.memory_space<vmem>>, vector<1x1x4x8xf32>
    %45 = vector.shape_cast %44 : vector<1x1x4x8xf32> to vector<4x8xf32>
    %cst_62 = arith.constant dense<0.000000e+00> : vector<256x8xf32>
    %46 = tpu.matmul %43, %45, %cst_62 {dimension_numbers = #tpu.dot_dimension_numbers<[1], [0], [0], [1], [0, 0, 1, 1], [], []>} : vector<256x4xf32>, vector<4x8xf32>, vector<256x8xf32> -> vector<256x8xf32>
    %47 = arith.addf %41, %46 : vector<256x8xf32>
    %c2_63 = arith.constant 2 : index
    %c7_64 = arith.constant 7 : index
    %c0_65 = arith.constant 0 : index
    %48 = vector.load %arg9[%c2_63, %c7_64, %c0_65] : memref<18x25x4xf32, #tpu.memory_space<vmem>>, vector<16x16x4xf32>
    %49 = vector.shape_cast %48 : vector<16x16x4xf32> to vector<256x4xf32>
    %c2_66 = arith.constant 2 : index
    %c0_67 = arith.constant 0 : index
    %c0_68 = arith.constant 0 : index
    %c0_69 = arith.constant 0 : index
    %50 = vector.load %arg2[%c2_66, %c0_67, %c0_68, %c0_69] : memref<3x3x4x8xf32, #tpu.memory_space<vmem>>, vector<1x1x4x8xf32>
    %51 = vector.shape_cast %50 : vector<1x1x4x8xf32> to vector<4x8xf32>
    %cst_70 = arith.constant dense<0.000000e+00> : vector<256x8xf32>
    %52 = tpu.matmul %49, %51, %cst_70 {dimension_numbers = #tpu.dot_dimension_numbers<[1], [0], [0], [1], [0, 0, 1, 1], [], []>} : vector<256x4xf32>, vector<4x8xf32>, vector<256x8xf32> -> vector<256x8xf32>
    %53 = arith.addf %47, %52 : vector<256x8xf32>
    %c2_71 = arith.constant 2 : index
    %c8_72 = arith.constant 8 : index
    %c0_73 = arith.constant 0 : index
    %54 = vector.load %arg9[%c2_71, %c8_72, %c0_73] : memref<18x25x4xf32, #tpu.memory_space<vmem>>, vector<16x16x4xf32>
    %55 = vector.shape_cast %54 : vector<16x16x4xf32> to vector<256x4xf32>
    %c2_74 = arith.constant 2 : index
    %c1_75 = arith.constant 1 : index
    %c0_76 = arith.constant 0 : index
    %c0_77 = arith.constant 0 : index
    %56 = vector.load %arg2[%c2_74, %c1_75, %c0_76, %c0_77] : memref<3x3x4x8xf32, #tpu.memory_space<vmem>>, vector<1x1x4x8xf32>
    %57 = vector.shape_cast %56 : vector<1x1x4x8xf32> to vector<4x8xf32>
    %cst_78 = arith.constant dense<0.000000e+00> : vector<256x8xf32>
    %58 = tpu.matmul %55, %57, %cst_78 {dimension_numbers = #tpu.dot_dimension_numbers<[1], [0], [0], [1], [0, 0, 1, 1], [], []>} : vector<256x4xf32>, vector<4x8xf32>, vector<256x8xf32> -> vector<256x8xf32>
    %59 = arith.addf %53, %58 : vector<256x8xf32>
    %c2_79 = arith.constant 2 : index
    %c9_80 = arith.constant 9 : index
    %c0_81 = arith.constant 0 : index
    %60 = vector.load %arg9[%c2_79, %c9_80, %c0_81] : memref<18x25x4xf32, #tpu.memory_space<vmem>>, vector<16x16x4xf32>
    %61 = vector.shape_cast %60 : vector<16x16x4xf32> to vector<256x4xf32>
    %c2_82 = arith.constant 2 : index
    %c2_83 = arith.constant 2 : index
    %c0_84 = arith.constant 0 : index
    %c0_85 = arith.constant 0 : index
    %62 = vector.load %arg2[%c2_82, %c2_83, %c0_84, %c0_85] : memref<3x3x4x8xf32, #tpu.memory_space<vmem>>, vector<1x1x4x8xf32>
    %63 = vector.shape_cast %62 : vector<1x1x4x8xf32> to vector<4x8xf32>
    %cst_86 = arith.constant dense<0.000000e+00> : vector<256x8xf32>
    %64 = tpu.matmul %61, %63, %cst_86 {dimension_numbers = #tpu.dot_dimension_numbers<[1], [0], [0], [1], [0, 0, 1, 1], [], []>} : vector<256x4xf32>, vector<4x8xf32>, vector<256x8xf32> -> vector<256x8xf32>
    %65 = arith.addf %59, %64 : vector<256x8xf32>
    %c0_87 = arith.constant 0 : index
    %c0_88 = arith.constant 0 : index
    %66 = vector.load %arg3[%c0_87, %c0_88] : memref<1x8xf32, #tpu.memory_space<vmem>>, vector<1x8xf32>
    %67 = vector.broadcast %66 : vector<1x8xf32> to vector<256x8xf32>
    %68 = arith.mulf %65, %67 : vector<256x8xf32>
    %c0_89 = arith.constant 0 : index
    %c0_90 = arith.constant 0 : index
    %69 = vector.load %arg4[%c0_89, %c0_90] : memref<1x8xf32, #tpu.memory_space<vmem>>, vector<1x8xf32>
    %70 = vector.broadcast %69 : vector<1x8xf32> to vector<256x8xf32>
    %71 = arith.addf %68, %70 : vector<256x8xf32>
    %cst_91 = arith.constant 0.000000e+00 : f32
    %72 = vector.broadcast %cst_91 : f32 to vector<256x8xf32>
    %73 = arith.maximumf %71, %72 : vector<256x8xf32>
    %74 = vector.shape_cast %73 : vector<256x8xf32> to vector<16x16x8xf32>
    %cst_92 = arith.constant 0.000000e+00 : f32
    %75 = vector.broadcast %cst_92 : f32 to vector<1x25x8xf32>
    %c0_93 = arith.constant 0 : index
    %c0_94 = arith.constant 0 : index
    %c0_95 = arith.constant 0 : index
    %76 = vector.load %arg10[%c0_93, %c0_94, %c0_95] : memref<18x25x8xf32, #tpu.memory_space<vmem>>, vector<1x25x8xf32>
    tpu.vector_store %arg10[%c0_93, %c0_94, %c0_95], %75 {strides = array<i32>} : memref<18x25x8xf32, #tpu.memory_space<vmem>>, vector<1x25x8xf32>,
    %cst_96 = arith.constant 0.000000e+00 : f32
    %77 = vector.broadcast %cst_96 : f32 to vector<1x25x8xf32>
    %c17_97 = arith.constant 17 : index
    %c0_98 = arith.constant 0 : index
    %c0_99 = arith.constant 0 : index
    %78 = vector.load %arg10[%c17_97, %c0_98, %c0_99] : memref<18x25x8xf32, #tpu.memory_space<vmem>>, vector<1x25x8xf32>
    tpu.vector_store %arg10[%c17_97, %c0_98, %c0_99], %77 {strides = array<i32>} : memref<18x25x8xf32, #tpu.memory_space<vmem>>, vector<1x25x8xf32>,
    %cst_100 = arith.constant 0.000000e+00 : f32
    %79 = vector.broadcast %cst_100 : f32 to vector<18x1x8xf32>
    %c0_101 = arith.constant 0 : index
    %c7_102 = arith.constant 7 : index
    %c0_103 = arith.constant 0 : index
    %80 = vector.load %arg10[%c0_101, %c7_102, %c0_103] : memref<18x25x8xf32, #tpu.memory_space<vmem>>, vector<18x1x8xf32>
    tpu.vector_store %arg10[%c0_101, %c7_102, %c0_103], %79 {strides = array<i32>} : memref<18x25x8xf32, #tpu.memory_space<vmem>>, vector<18x1x8xf32>,
    %cst_104 = arith.constant 0.000000e+00 : f32
    %81 = vector.broadcast %cst_104 : f32 to vector<18x1x8xf32>
    %c0_105 = arith.constant 0 : index
    %c24_106 = arith.constant 24 : index
    %c0_107 = arith.constant 0 : index
    %82 = vector.load %arg10[%c0_105, %c24_106, %c0_107] : memref<18x25x8xf32, #tpu.memory_space<vmem>>, vector<18x1x8xf32>
    tpu.vector_store %arg10[%c0_105, %c24_106, %c0_107], %81 {strides = array<i32>} : memref<18x25x8xf32, #tpu.memory_space<vmem>>, vector<18x1x8xf32>,
    %c1_108 = arith.constant 1 : index
    %c8_109 = arith.constant 8 : index
    %c0_110 = arith.constant 0 : index
    %83 = vector.load %arg10[%c1_108, %c8_109, %c0_110] : memref<18x25x8xf32, #tpu.memory_space<vmem>>, vector<16x16x8xf32>
    tpu.vector_store %arg10[%c1_108, %c8_109, %c0_110], %74 {strides = array<i32>} : memref<18x25x8xf32, #tpu.memory_space<vmem>>, vector<16x16x8xf32>,
    %cst_111 = arith.constant 0.000000e+00 : f32
    %84 = vector.broadcast %cst_111 : f32 to vector<256x8xf32>
    %c0_112 = arith.constant 0 : index
    %c7_113 = arith.constant 7 : index
    %c0_114 = arith.constant 0 : index
    %85 = vector.load %arg10[%c0_112, %c7_113, %c0_114] : memref<18x25x8xf32, #tpu.memory_space<vmem>>, vector<16x16x8xf32>
    %86 = vector.shape_cast %85 : vector<16x16x8xf32> to vector<256x8xf32>
    %c0_115 = arith.constant 0 : index
    %c0_116 = arith.constant 0 : index
    %c0_117 = arith.constant 0 : index
    %c0_118 = arith.constant 0 : index
    %87 = vector.load %arg5[%c0_115, %c0_116, %c0_117, %c0_118] : memref<3x3x8x8xf32, #tpu.memory_space<vmem>>, vector<1x1x8x8xf32>
    %88 = vector.shape_cast %87 : vector<1x1x8x8xf32> to vector<8x8xf32>
    %cst_119 = arith.constant dense<0.000000e+00> : vector<256x8xf32>
    %89 = tpu.matmul %86, %88, %cst_119 {dimension_numbers = #tpu.dot_dimension_numbers<[1], [0], [0], [1], [0, 0, 1, 1], [], []>} : vector<256x8xf32>, vector<8x8xf32>, vector<256x8xf32> -> vector<256x8xf32>
    %90 = arith.addf %84, %89 : vector<256x8xf32>
    %c0_120 = arith.constant 0 : index
    %c8_121 = arith.constant 8 : index
    %c0_122 = arith.constant 0 : index
    %91 = vector.load %arg10[%c0_120, %c8_121, %c0_122] : memref<18x25x8xf32, #tpu.memory_space<vmem>>, vector<16x16x8xf32>
    %92 = vector.shape_cast %91 : vector<16x16x8xf32> to vector<256x8xf32>
    %c0_123 = arith.constant 0 : index
    %c1_124 = arith.constant 1 : index
    %c0_125 = arith.constant 0 : index
    %c0_126 = arith.constant 0 : index
    %93 = vector.load %arg5[%c0_123, %c1_124, %c0_125, %c0_126] : memref<3x3x8x8xf32, #tpu.memory_space<vmem>>, vector<1x1x8x8xf32>
    %94 = vector.shape_cast %93 : vector<1x1x8x8xf32> to vector<8x8xf32>
    %cst_127 = arith.constant dense<0.000000e+00> : vector<256x8xf32>
    %95 = tpu.matmul %92, %94, %cst_127 {dimension_numbers = #tpu.dot_dimension_numbers<[1], [0], [0], [1], [0, 0, 1, 1], [], []>} : vector<256x8xf32>, vector<8x8xf32>, vector<256x8xf32> -> vector<256x8xf32>
    %96 = arith.addf %90, %95 : vector<256x8xf32>
    %c0_128 = arith.constant 0 : index
    %c9_129 = arith.constant 9 : index
    %c0_130 = arith.constant 0 : index
    %97 = vector.load %arg10[%c0_128, %c9_129, %c0_130] : memref<18x25x8xf32, #tpu.memory_space<vmem>>, vector<16x16x8xf32>
    %98 = vector.shape_cast %97 : vector<16x16x8xf32> to vector<256x8xf32>
    %c0_131 = arith.constant 0 : index
    %c2_132 = arith.constant 2 : index
    %c0_133 = arith.constant 0 : index
    %c0_134 = arith.constant 0 : index
    %99 = vector.load %arg5[%c0_131, %c2_132, %c0_133, %c0_134] : memref<3x3x8x8xf32, #tpu.memory_space<vmem>>, vector<1x1x8x8xf32>
    %100 = vector.shape_cast %99 : vector<1x1x8x8xf32> to vector<8x8xf32>
    %cst_135 = arith.constant dense<0.000000e+00> : vector<256x8xf32>
    %101 = tpu.matmul %98, %100, %cst_135 {dimension_numbers = #tpu.dot_dimension_numbers<[1], [0], [0], [1], [0, 0, 1, 1], [], []>} : vector<256x8xf32>, vector<8x8xf32>, vector<256x8xf32> -> vector<256x8xf32>
    %102 = arith.addf %96, %101 : vector<256x8xf32>
    %c1_136 = arith.constant 1 : index
    %c7_137 = arith.constant 7 : index
    %c0_138 = arith.constant 0 : index
    %103 = vector.load %arg10[%c1_136, %c7_137, %c0_138] : memref<18x25x8xf32, #tpu.memory_space<vmem>>, vector<16x16x8xf32>
    %104 = vector.shape_cast %103 : vector<16x16x8xf32> to vector<256x8xf32>
    %c1_139 = arith.constant 1 : index
    %c0_140 = arith.constant 0 : index
    %c0_141 = arith.constant 0 : index
    %c0_142 = arith.constant 0 : index
    %105 = vector.load %arg5[%c1_139, %c0_140, %c0_141, %c0_142] : memref<3x3x8x8xf32, #tpu.memory_space<vmem>>, vector<1x1x8x8xf32>
    %106 = vector.shape_cast %105 : vector<1x1x8x8xf32> to vector<8x8xf32>
    %cst_143 = arith.constant dense<0.000000e+00> : vector<256x8xf32>
    %107 = tpu.matmul %104, %106, %cst_143 {dimension_numbers = #tpu.dot_dimension_numbers<[1], [0], [0], [1], [0, 0, 1, 1], [], []>} : vector<256x8xf32>, vector<8x8xf32>, vector<256x8xf32> -> vector<256x8xf32>
    %108 = arith.addf %102, %107 : vector<256x8xf32>
    %c1_144 = arith.constant 1 : index
    %c8_145 = arith.constant 8 : index
    %c0_146 = arith.constant 0 : index
    %109 = vector.load %arg10[%c1_144, %c8_145, %c0_146] : memref<18x25x8xf32, #tpu.memory_space<vmem>>, vector<16x16x8xf32>
    %110 = vector.shape_cast %109 : vector<16x16x8xf32> to vector<256x8xf32>
    %c1_147 = arith.constant 1 : index
    %c1_148 = arith.constant 1 : index
    %c0_149 = arith.constant 0 : index
    %c0_150 = arith.constant 0 : index
    %111 = vector.load %arg5[%c1_147, %c1_148, %c0_149, %c0_150] : memref<3x3x8x8xf32, #tpu.memory_space<vmem>>, vector<1x1x8x8xf32>
    %112 = vector.shape_cast %111 : vector<1x1x8x8xf32> to vector<8x8xf32>
    %cst_151 = arith.constant dense<0.000000e+00> : vector<256x8xf32>
    %113 = tpu.matmul %110, %112, %cst_151 {dimension_numbers = #tpu.dot_dimension_numbers<[1], [0], [0], [1], [0, 0, 1, 1], [], []>} : vector<256x8xf32>, vector<8x8xf32>, vector<256x8xf32> -> vector<256x8xf32>
    %114 = arith.addf %108, %113 : vector<256x8xf32>
    %c1_152 = arith.constant 1 : index
    %c9_153 = arith.constant 9 : index
    %c0_154 = arith.constant 0 : index
    %115 = vector.load %arg10[%c1_152, %c9_153, %c0_154] : memref<18x25x8xf32, #tpu.memory_space<vmem>>, vector<16x16x8xf32>
    %116 = vector.shape_cast %115 : vector<16x16x8xf32> to vector<256x8xf32>
    %c1_155 = arith.constant 1 : index
    %c2_156 = arith.constant 2 : index
    %c0_157 = arith.constant 0 : index
    %c0_158 = arith.constant 0 : index
    %117 = vector.load %arg5[%c1_155, %c2_156, %c0_157, %c0_158] : memref<3x3x8x8xf32, #tpu.memory_space<vmem>>, vector<1x1x8x8xf32>
    %118 = vector.shape_cast %117 : vector<1x1x8x8xf32> to vector<8x8xf32>
    %cst_159 = arith.constant dense<0.000000e+00> : vector<256x8xf32>
    %119 = tpu.matmul %116, %118, %cst_159 {dimension_numbers = #tpu.dot_dimension_numbers<[1], [0], [0], [1], [0, 0, 1, 1], [], []>} : vector<256x8xf32>, vector<8x8xf32>, vector<256x8xf32> -> vector<256x8xf32>
    %120 = arith.addf %114, %119 : vector<256x8xf32>
    %c2_160 = arith.constant 2 : index
    %c7_161 = arith.constant 7 : index
    %c0_162 = arith.constant 0 : index
    %121 = vector.load %arg10[%c2_160, %c7_161, %c0_162] : memref<18x25x8xf32, #tpu.memory_space<vmem>>, vector<16x16x8xf32>
    %122 = vector.shape_cast %121 : vector<16x16x8xf32> to vector<256x8xf32>
    %c2_163 = arith.constant 2 : index
    %c0_164 = arith.constant 0 : index
    %c0_165 = arith.constant 0 : index
    %c0_166 = arith.constant 0 : index
    %123 = vector.load %arg5[%c2_163, %c0_164, %c0_165, %c0_166] : memref<3x3x8x8xf32, #tpu.memory_space<vmem>>, vector<1x1x8x8xf32>
    %124 = vector.shape_cast %123 : vector<1x1x8x8xf32> to vector<8x8xf32>
    %cst_167 = arith.constant dense<0.000000e+00> : vector<256x8xf32>
    %125 = tpu.matmul %122, %124, %cst_167 {dimension_numbers = #tpu.dot_dimension_numbers<[1], [0], [0], [1], [0, 0, 1, 1], [], []>} : vector<256x8xf32>, vector<8x8xf32>, vector<256x8xf32> -> vector<256x8xf32>
    %126 = arith.addf %120, %125 : vector<256x8xf32>
    %c2_168 = arith.constant 2 : index
    %c8_169 = arith.constant 8 : index
    %c0_170 = arith.constant 0 : index
    %127 = vector.load %arg10[%c2_168, %c8_169, %c0_170] : memref<18x25x8xf32, #tpu.memory_space<vmem>>, vector<16x16x8xf32>
    %128 = vector.shape_cast %127 : vector<16x16x8xf32> to vector<256x8xf32>
    %c2_171 = arith.constant 2 : index
    %c1_172 = arith.constant 1 : index
    %c0_173 = arith.constant 0 : index
    %c0_174 = arith.constant 0 : index
    %129 = vector.load %arg5[%c2_171, %c1_172, %c0_173, %c0_174] : memref<3x3x8x8xf32, #tpu.memory_space<vmem>>, vector<1x1x8x8xf32>
    %130 = vector.shape_cast %129 : vector<1x1x8x8xf32> to vector<8x8xf32>
    %cst_175 = arith.constant dense<0.000000e+00> : vector<256x8xf32>
    %131 = tpu.matmul %128, %130, %cst_175 {dimension_numbers = #tpu.dot_dimension_numbers<[1], [0], [0], [1], [0, 0, 1, 1], [], []>} : vector<256x8xf32>, vector<8x8xf32>, vector<256x8xf32> -> vector<256x8xf32>
    %132 = arith.addf %126, %131 : vector<256x8xf32>
    %c2_176 = arith.constant 2 : index
    %c9_177 = arith.constant 9 : index
    %c0_178 = arith.constant 0 : index
    %133 = vector.load %arg10[%c2_176, %c9_177, %c0_178] : memref<18x25x8xf32, #tpu.memory_space<vmem>>, vector<16x16x8xf32>
    %134 = vector.shape_cast %133 : vector<16x16x8xf32> to vector<256x8xf32>
    %c2_179 = arith.constant 2 : index
    %c2_180 = arith.constant 2 : index
    %c0_181 = arith.constant 0 : index
    %c0_182 = arith.constant 0 : index
    %135 = vector.load %arg5[%c2_179, %c2_180, %c0_181, %c0_182] : memref<3x3x8x8xf32, #tpu.memory_space<vmem>>, vector<1x1x8x8xf32>
    %136 = vector.shape_cast %135 : vector<1x1x8x8xf32> to vector<8x8xf32>
    %cst_183 = arith.constant dense<0.000000e+00> : vector<256x8xf32>
    %137 = tpu.matmul %134, %136, %cst_183 {dimension_numbers = #tpu.dot_dimension_numbers<[1], [0], [0], [1], [0, 0, 1, 1], [], []>} : vector<256x8xf32>, vector<8x8xf32>, vector<256x8xf32> -> vector<256x8xf32>
    %138 = arith.addf %132, %137 : vector<256x8xf32>
    %c0_184 = arith.constant 0 : index
    %c0_185 = arith.constant 0 : index
    %139 = vector.load %arg6[%c0_184, %c0_185] : memref<1x8xf32, #tpu.memory_space<vmem>>, vector<1x8xf32>
    %140 = vector.broadcast %139 : vector<1x8xf32> to vector<256x8xf32>
    %141 = arith.mulf %138, %140 : vector<256x8xf32>
    %c0_186 = arith.constant 0 : index
    %c0_187 = arith.constant 0 : index
    %142 = vector.load %arg7[%c0_186, %c0_187] : memref<1x8xf32, #tpu.memory_space<vmem>>, vector<1x8xf32>
    %143 = vector.broadcast %142 : vector<1x8xf32> to vector<256x8xf32>
    %144 = arith.addf %141, %143 : vector<256x8xf32>
    %cst_188 = arith.constant 0.000000e+00 : f32
    %145 = vector.broadcast %cst_188 : f32 to vector<256x8xf32>
    %146 = arith.maximumf %144, %145 : vector<256x8xf32>
    %147 = vector.shape_cast %146 : vector<256x8xf32> to vector<16x16x8xf32>
    %148 = vector.shape_cast %147 : vector<16x16x8xf32> to vector<1x16x16x8xf32>
    %c0_189 = arith.constant 0 : index
    %c0_190 = arith.constant 0 : index
    %c0_191 = arith.constant 0 : index
    %c0_192 = arith.constant 0 : index
    %149 = vector.load %arg8[%c0_189, %c0_190, %c0_191, %c0_192] : memref<1x16x16x8xf32, #tpu.memory_space<vmem>>, vector<1x16x16x8xf32>
    tpu.vector_store %arg8[%c0_189, %c0_190, %c0_191, %c0_192], %148 {strides = array<i32>} : memref<1x16x16x8xf32, #tpu.memory_space<vmem>>, vector<1x16x16x8xf32>,
    return
  }
  func.func @transform_0(%arg0: i32) -> (i32, i32, i32, i32) {
    %c0_i32 = arith.constant 0 : i32
    %c0_i32_0 = arith.constant 0 : i32
    %c0_i32_1 = arith.constant 0 : i32
    %c0_i32_2 = arith.constant 0 : i32
    return %arg0, %c0_i32, %c0_i32_0, %c0_i32_1 : i32, i32, i32, i32
  }
  func.func @transform_1(%arg0: i32) -> (i32, i32, i32, i32) {
    %c0_i32 = arith.constant 0 : i32
    %c0_i32_0 = arith.constant 0 : i32
    %c0_i32_1 = arith.constant 0 : i32
    %c0_i32_2 = arith.constant 0 : i32
    %c0_i32_3 = arith.constant 0 : i32
    return %c0_i32, %c0_i32_0, %c0_i32_1, %c0_i32_2 : i32, i32, i32, i32
  }
  func.func @transform_2(%arg0: i32) -> (i32, i32) {
    %c0_i32 = arith.constant 0 : i32
    %c0_i32_0 = arith.constant 0 : i32
    %c0_i32_1 = arith.constant 0 : i32
    return %c0_i32, %c0_i32_0 : i32, i32
  }
  func.func @transform_3(%arg0: i32) -> (i32, i32) {
    %c0_i32 = arith.constant 0 : i32
    %c0_i32_0 = arith.constant 0 : i32
    %c0_i32_1 = arith.constant 0 : i32
    return %c0_i32, %c0_i32_0 : i32, i32
  }
  func.func @transform_4(%arg0: i32) -> (i32, i32, i32, i32) {
    %c0_i32 = arith.constant 0 : i32
    %c0_i32_0 = arith.constant 0 : i32
    %c0_i32_1 = arith.constant 0 : i32
    %c0_i32_2 = arith.constant 0 : i32
    %c0_i32_3 = arith.constant 0 : i32
    return %c0_i32, %c0_i32_0, %c0_i32_1, %c0_i32_2 : i32, i32, i32, i32
  }
  func.func @transform_5(%arg0: i32) -> (i32, i32) {
    %c0_i32 = arith.constant 0 : i32
    %c0_i32_0 = arith.constant 0 : i32
    %c0_i32_1 = arith.constant 0 : i32
    return %c0_i32, %c0_i32_0 : i32, i32
  }
  func.func @transform_6(%arg0: i32) -> (i32, i32) {
    %c0_i32 = arith.constant 0 : i32
    %c0_i32_0 = arith.constant 0 : i32
    %c0_i32_1 = arith.constant 0 : i32
    return %c0_i32, %c0_i32_0 : i32, i32
  }
  func.func @transform_7(%arg0: i32) -> (i32, i32, i32, i32) {
    %c0_i32 = arith.constant 0 : i32
    %c0_i32_0 = arith.constant 0 : i32
    %c0_i32_1 = arith.constant 0 : i32
    %c0_i32_2 = arith.constant 0 : i32
    return %arg0, %c0_i32, %c0_i32_0, %c0_i32_1 : i32, i32, i32, i32
  }
}

</mosaic_0001>

<llo_original>
// kernel: tpu_custom_call.1
$region0: #{tpu_custom_call.1}
  #allocation0 [shape = 'u32[]', space=smem, size = 0x4, offset = 0x4, fixed_abs, tag = 'smem constant byte address 0x4 - core index']
  #allocation1 [shape = 'u32[144,128]{1,0:T(1,128)}', space=vmem, size = 0x12000, scoped, tag = 'internal scratch']
  #allocation2 [shape = 'f32[18,25,4]{2,1,0:T(8,128)}', space=vmem, size = 0x48000, scoped, tag = 'scratch operand']
  #allocation3 [shape = 'f32[18,25,8]{2,1,0:T(8,128)}', space=vmem, size = 0x48000, scoped, tag = 'scratch operand']
  %s0 = inlined_call_operand.vmem [shape: f32[2,16,16,4], index: 0, kind: input, shape index: {}]
  %s1 = inlined_call_operand.vmem [shape: f32[3,3,4,8], index: 1, kind: input, shape index: {}]
  %s2 = inlined_call_operand.vmem [shape: f32[1,8], index: 2, kind: input, shape index: {}]
  %s3 = inlined_call_operand.vmem [shape: f32[1,8], index: 3, kind: input, shape index: {}]
  %s4 = inlined_call_operand.vmem [shape: f32[3,3,8,8], index: 4, kind: input, shape index: {}]
  %s5 = inlined_call_operand.vmem [shape: f32[1,8], index: 5, kind: input, shape index: {}]
  %s6 = inlined_call_operand.vmem [shape: f32[1,8], index: 6, kind: input, shape index: {}]
  %s7 = inlined_call_operand.vmem [shape: f32[2,16,16,8], index: 7, kind: output, shape index: {}]
  %s8 = sld [smem:[#allocation0]]
  $region61: #{tpu_custom_call.1} parent=0
    _
  %s10 = ssub.s32 1, %s8
  %s11 = scalar_select 0, %s10, %s8
  loop: start=0, step=1, limit=4
  $region2: #{tpu_custom_call.1} parent=0 // loop_pre_header
    _
  $region3: #{tpu_custom_call.1} parent=0 // loop_header
    %s13 = sphi 0, %s17
    %p14 = scmp.ge.s32.totalorder %s13, 4
    %s23 = sphi 0, %s25
    %s26 = sphi 0, %s23
    %s27 = sphi 0, %s26
    %s43 = sphi 0, %s27
    %s47 = sphi 0, %s47
    %s49 = sphi 0, %s47
    %s50 = sphi 0, %s49
    %s64 = sphi 0, %s50
    %s68 = sphi 0, %s68
    %s70 = sphi 0, %s68
    %s71 = sphi 0, %s70
    %s85 = sphi 0, %s71
    %s89 = sphi 0, %s89
    %s91 = sphi 0, %s89
    %s92 = sphi 0, %s91
    %s106 = sphi 0, %s92
    %s110 = sphi 0, %s110
    %s112 = sphi 0, %s110
    %s113 = sphi 0, %s112
    %s127 = sphi 0, %s113
    %s131 = sphi 0, %s131
    %s133 = sphi 0, %s131
    %s134 = sphi 0, %s133
    %s148 = sphi 0, %s134
    %s152 = sphi 0, %s152
    %s154 = sphi 0, %s152
    %s155 = sphi 0, %s154
    %s169 = sphi 0, %s155
    %s175 = sphi 0, %s177
    %s178 = sphi 0, %s175
    %s179 = sphi 0, %s178
    %s195 = sphi 0, %s179
  $region4: #{tpu_custom_call.1} parent=0 // loop_header_branch
    %16 = sbr.rel (%p14) target = $region8
  $region5: #{tpu_custom_call.1} parent=0 // loop_body
    %s18 = ssub.s32 %s13, 1
    %s19 = ssub.s32 %s13, 2
    %s20 = sadd.s32 %s13, 1
    %s21 = ssub.s32 %s13, %s20
    %p22 = scmp.eq.s32.totalorder %s21, 0
    %s24 = sadd.s32 %s23, 1
    %s25 = scalar_select %p22, %s23, %s24
    %p28 = pneg %p22
    %p29 = scmp.eq.s32.totalorder %s13, 1
    %p30 = por %p28, %p29
    %p31 = scmp.ne.s32.totalorder %s23, %s26
    %p32 = scmp.eq.s32.totalorder %s13, 0
    %p33 = por %p31, %p32
    %p34 = scmp.ne.s32.totalorder %s23, %s26
    %p35 = scmp.eq.s32.totalorder %s18, 1
    %p36 = por %p34, %p35
    %p37 = scmp.ne.s32.totalorder %s26, %s27
    %p38 = scmp.eq.s32.totalorder %s18, 0
    %p39 = por %p37, %p38
    %p40 = scmp.ne.s32.totalorder %s26, %s27
    %p41 = scmp.eq.s32.totalorder %s19, 1
    %p42 = por %p40, %p41
    %p44 = scmp.ne.s32.totalorder %s27, %s43
    %p45 = scmp.eq.s32.totalorder %s19, 0
    %p46 = por %p44, %p45
    %s48 = sadd.s32 %s47, 1
    %p51 = scmp.eq.s32.totalorder %s13, 1
    %p52 = scmp.ne.s32.totalorder %s47, %s49
    %p53 = scmp.eq.s32.totalorder %s13, 0
    %p54 = por %p52, %p53
    %p55 = scmp.ne.s32.totalorder %s47, %s49
    %p56 = scmp.eq.s32.totalorder %s18, 1
    %p57 = por %p55, %p56
    %p58 = scmp.ne.s32.totalorder %s49, %s50
    %p59 = scmp.eq.s32.totalorder %s18, 0
    %p60 = por %p58, %p59
    %p61 = scmp.ne.s32.totalorder %s49, %s50
    %p62 = scmp.eq.s32.totalorder %s19, 1
    %p63 = por %p61, %p62
    %p65 = scmp.ne.s32.totalorder %s50, %s64
    %p66 = scmp.eq.s32.totalorder %s19, 0
    %p67 = por %p65, %p66
    %s69 = sadd.s32 %s68, 1
    %p72 = scmp.eq.s32.totalorder %s13, 1
    %p73 = scmp.ne.s32.totalorder %s68, %s70
    %p74 = scmp.eq.s32.totalorder %s13, 0
    %p75 = por %p73, %p74
    %p76 = scmp.ne.s32.totalorder %s68, %s70
    %p77 = scmp.eq.s32.totalorder %s18, 1
    %p78 = por %p76, %p77
    %p79 = scmp.ne.s32.totalorder %s70, %s71
    %p80 = scmp.eq.s32.totalorder %s18, 0
    %p81 = por %p79, %p80
    %p82 = scmp.ne.s32.totalorder %s70, %s71
    %p83 = scmp.eq.s32.totalorder %s19, 1
    %p84 = por %p82, %p83
    %p86 = scmp.ne.s32.totalorder %s71, %s85
    %p87 = scmp.eq.s32.totalorder %s19, 0
    %p88 = por %p86, %p87
    %s90 = sadd.s32 %s89, 1
    %p93 = scmp.eq.s32.totalorder %s13, 1
    %p94 = scmp.ne.s32.totalorder %s89, %s91
    %p95 = scmp.eq.s32.totalorder %s13, 0
    %p96 = por %p94, %p95
    %p97 = scmp.ne.s32.totalorder %s89, %s91
    %p98 = scmp.eq.s32.totalorder %s18, 1
    %p99 = por %p97, %p98
    %p100 = scmp.ne.s32.totalorder %s91, %s92
    %p101 = scmp.eq.s32.totalorder %s18, 0
    %p102 = por %p100, %p101
    %p103 = scmp.ne.s32.totalorder %s91, %s92
    %p104 = scmp.eq.s32.totalorder %s19, 1
    %p105 = por %p103, %p104
    %p107 = scmp.ne.s32.totalorder %s92, %s106
    %p108 = scmp.eq.s32.totalorder %s19, 0
    %p109 = por %p107, %p108
    %s111 = sadd.s32 %s110, 1
    %p114 = scmp.eq.s32.totalorder %s13, 1
    %p115 = scmp.ne.s32.totalorder %s110, %s112
    %p116 = scmp.eq.s32.totalorder %s13, 0
    %p117 = por %p115, %p116
    %p118 = scmp.ne.s32.totalorder %s110, %s112
    %p119 = scmp.eq.s32.totalorder %s18, 1
    %p120 = por %p118, %p119
    %p121 = scmp.ne.s32.totalorder %s112, %s113
    %p122 = scmp.eq.s32.totalorder %s18, 0
    %p123 = por %p121, %p122
    %p124 = scmp.ne.s32.totalorder %s112, %s113
    %p125 = scmp.eq.s32.totalorder %s19, 1
    %p126 = por %p124, %p125
    %p128 = scmp.ne.s32.totalorder %s113, %s127
    %p129 = scmp.eq.s32.totalorder %s19, 0
    %p130 = por %p128, %p129
    %s132 = sadd.s32 %s131, 1
    %p135 = scmp.eq.s32.totalorder %s13, 1
    %p136 = scmp.ne.s32.totalorder %s131, %s133
    %p137 = scmp.eq.s32.totalorder %s13, 0
    %p138 = por %p136, %p137
    %p139 = scmp.ne.s32.totalorder %s131, %s133
    %p140 = scmp.eq.s32.totalorder %s18, 1
    %p141 = por %p139, %p140
    %p142 = scmp.ne.s32.totalorder %s133, %s134
    %p143 = scmp.eq.s32.totalorder %s18, 0
    %p144 = por %p142, %p143
    %p145 = scmp.ne.s32.totalorder %s133, %s134
    %p146 = scmp.eq.s32.totalorder %s19, 1
    %p147 = por %p145, %p146
    %p149 = scmp.ne.s32.totalorder %s134, %s148
    %p150 = scmp.eq.s32.totalorder %s19, 0
    %p151 = por %p149, %p150
    %s153 = sadd.s32 %s152, 1
    %p156 = scmp.eq.s32.totalorder %s13, 1
    %p157 = scmp.ne.s32.totalorder %s152, %s154
    %p158 = scmp.eq.s32.totalorder %s13, 0
    %p159 = por %p157, %p158
    %p160 = scmp.ne.s32.totalorder %s152, %s154
    %p161 = scmp.eq.s32.totalorder %s18, 1
    %p162 = por %p160, %p161
    %p163 = scmp.ne.s32.totalorder %s154, %s155
    %p164 = scmp.eq.s32.totalorder %s18, 0
    %p165 = por %p163, %p164
    %p166 = scmp.ne.s32.totalorder %s154, %s155
    %p167 = scmp.eq.s32.totalorder %s19, 1
    %p168 = por %p166, %p167
    %p170 = scmp.ne.s32.totalorder %s155, %s169
    %p171 = scmp.eq.s32.totalorder %s19, 0
    %p172 = por %p170, %p171
    %s173 = ssub.s32 %s13, %s20
    %p174 = scmp.eq.s32.totalorder %s173, 0
    %s176 = sadd.s32 %s175, 1
    %s177 = scalar_select %p174, %s175, %s176
    %p180 = pneg %p174
    %p181 = scmp.eq.s32.totalorder %s13, 1
    %p182 = por %p180, %p181
    %p183 = scmp.ne.s32.totalorder %s175, %s178
    %p184 = scmp.eq.s32.totalorder %s13, 0
    %p185 = por %p183, %p184
    %p186 = scmp.ne.s32.totalorder %s175, %s178
    %p187 = scmp.eq.s32.totalorder %s18, 1
    %p188 = por %p186, %p187
    %p189 = scmp.ne.s32.totalorder %s178, %s179
    %p190 = scmp.eq.s32.totalorder %s18, 0
    %p191 = por %p189, %p190
    %p192 = scmp.ne.s32.totalorder %s178, %s179
    %p193 = scmp.eq.s32.totalorder %s19, 1
    %p194 = por %p192, %p193
    %p196 = scmp.ne.s32.totalorder %s179, %s195
    %p197 = scmp.eq.s32.totalorder %s19, 0
    %p198 = por %p196, %p197
    %p199 = scmp.le.s32.totalorder 1, %s13
    %p200 = scmp.lt.s32.totalorder %s13, 3
    %p201 = pnand %p199, %p200
    %p202 = pneg %p201
    // Predicated region
    $region9: #{tpu_custom_call.1} parent=5 // pred_check
      _
    $region10: #{tpu_custom_call.1} parent=5 // pred_check_branch
      %204 = sbr.rel (%p201) target = $region12
    $region11: #{tpu_custom_call.1} parent=5 // pred_region
      %s205 = ssub.s32 %s13, 1
      // Predicated region
      $region13: #{tpu_custom_call.1} parent=11 // pred_check
        %p206 = pneg %p60
      $region14: #{tpu_custom_call.1} parent=11 // pred_check_branch
        %208 = sbr.rel (%p206) target = $region16
      $region15: #{tpu_custom_call.1} parent=11 // pred_region
        _
      $region16: #{tpu_custom_call.1} parent=11 // pred_fallthru
        _
      // Predicated region
      $region17: #{tpu_custom_call.1} parent=11 // pred_check
        %p209 = pneg %p81
      $region18: #{tpu_custom_call.1} parent=11 // pred_check_branch
        %211 = sbr.rel (%p209) target = $region20
      $region19: #{tpu_custom_call.1} parent=11 // pred_region
        _
      $region20: #{tpu_custom_call.1} parent=11 // pred_fallthru
        _
      // Predicated region
      $region21: #{tpu_custom_call.1} parent=11 // pred_check
        %p212 = pneg %p102
      $region22: #{tpu_custom_call.1} parent=11 // pred_check_branch
        %214 = sbr.rel (%p212) target = $region24
      $region23: #{tpu_custom_call.1} parent=11 // pred_region
        _
      $region24: #{tpu_custom_call.1} parent=11 // pred_fallthru
        _
      // Predicated region
      $region25: #{tpu_custom_call.1} parent=11 // pred_check
        %p215 = pneg %p123
      $region26: #{tpu_custom_call.1} parent=11 // pred_check_branch
        %217 = sbr.rel (%p215) target = $region28
      $region27: #{tpu_custom_call.1} parent=11 // pred_region
        _
      $region28: #{tpu_custom_call.1} parent=11 // pred_fallthru
        _
      // Predicated region
      $region29: #{tpu_custom_call.1} parent=11 // pred_check
        %p218 = pneg %p144
      $region30: #{tpu_custom_call.1} parent=11 // pred_check_branch
        %220 = sbr.rel (%p218) target = $region32
      $region31: #{tpu_custom_call.1} parent=11 // pred_region
        _
      $region32: #{tpu_custom_call.1} parent=11 // pred_fallthru
        _
      // Predicated region
      $region33: #{tpu_custom_call.1} parent=11 // pred_check
        %p221 = pneg %p165
      $region34: #{tpu_custom_call.1} parent=11 // pred_check_branch
        %223 = sbr.rel (%p221) target = $region36
      $region35: #{tpu_custom_call.1} parent=11 // pred_region
        _
      $region36: #{tpu_custom_call.1} parent=11 // pred_fallthru
        _
    $region12: #{tpu_custom_call.1} parent=5 // pred_fallthru
      _
    %p224 = scmp.lt.s32.totalorder %s13, 2
    // Predicated region
    $region37: #{tpu_custom_call.1} parent=5 // pred_check
      %p225 = pneg %p224
    $region38: #{tpu_custom_call.1} parent=5 // pred_check_branch
      %227 = sbr.rel (%p225) target = $region40
    $region39: #{tpu_custom_call.1} parent=5 // pred_region
      // Predicated region
      $region41: #{tpu_custom_call.1} parent=39 // pred_check
        %p228 = pneg %p33
      $region42: #{tpu_custom_call.1} parent=39 // pred_check_branch
        %230 = sbr.rel (%p228) target = $region44
      $region43: #{tpu_custom_call.1} parent=39 // pred_region
        %p231 = scmp.lt.s32.totalorder %s13, 1
        %s232 = scalar_select %p231, %s13, 1
        %s233 = smul.addr %s232, 32
        %s234 = smul.addr %s233, 8
        %s235 = scalar_lea.vmem %s0, %s234
      $region44: #{tpu_custom_call.1} parent=39 // pred_fallthru
        _
    $region40: #{tpu_custom_call.1} parent=5 // pred_fallthru
      _
    %p236 = scmp.le.s32.totalorder 1, %s13
    %p237 = scmp.lt.s32.totalorder %s13, 3
    %p238 = pnand %p236, %p237
    %p239 = pneg %p238
    // Predicated region
    $region45: #{tpu_custom_call.1} parent=5 // pred_check
      _
    $region46: #{tpu_custom_call.1} parent=5 // pred_check_branch
      %241 = sbr.rel (%p238) target = $region48
    $region47: #{tpu_custom_call.1} parent=5 // pred_region
      %s242 = ssub.s32 %s13, 1
      %p243 = scmp.lt.s32.totalorder %s18, 1
      %s244 = scalar_select %p243, %s18, 1
      %s245 = smul.addr %s244, 32
      %s246 = smul.addr %s245, 8
      %s247 = scalar_lea.vmem %s0, %s246
      %p248 = pneg %p39
      %p249 = pneg %p36
      %p250 = pneg %p60
      %p251 = pneg %p57
      %p252 = pneg %p81
      %p253 = pneg %p78
      %p254 = pneg %p102
      %p255 = pneg %p99
      %p256 = pneg %p123
      %p257 = pneg %p120
      %p258 = pneg %p144
      %p259 = pneg %p141
      %p260 = pneg %p165
      %p261 = pneg %p162
      %p262 = pneg %p191
      %p263 = pneg %p188
      %p264 = scmp.lt.s32.totalorder %s18, 1
      %s265 = scalar_select %p264, %s18, 1
      %s266 = smul.addr %s265, 32
      %s267 = smul.addr %s266, 8
      %s268 = scalar_lea.vmem %s7, %s267
      %p269 = scmp.lt.s32.totalorder %s18, 1
      %s270 = scalar_select %p269, %s18, 1
      %s271 = smul.addr %s270, 32
      %s272 = smul.addr %s271, 8
      %s273 = scalar_lea.vmem %s0, %s272
      %p274 = scmp.lt.s32.totalorder %s18, 1
      %s275 = scalar_select %p274, %s18, 1
      %s276 = smul.addr %s275, 32
      %s277 = smul.addr %s276, 8
      %s278 = scalar_lea.vmem %s7, %s277
      %vm279 = vcmask 31744
      %280 = vst.msk [vmem:[#allocation2] sm:$0xff] %vm279, 0.0
      %281 = vst.msk [vmem:[#allocation2 + $0x8] sm:$0xff] %vm279, 0.0
      %282 = vst.msk [vmem:[#allocation2 + $0x10] sm:$0xff] %vm279, 0.0
      %vm283 = vcmask 24576
      %284 = vst.msk [vmem:[#allocation2 + $0x18] sm:$0x1] %vm283, 0.0
      %s285 = scalar_lea.vmem [#allocation2], 544
      %286 = vst.msk [vmem:[%s285] sm:$0xff] %vm279, 0.0
      %287 = vst.msk [vmem:[%s285 + $0x8] sm:$0xff] %vm279, 0.0
      %288 = vst.msk [vmem:[%s285 + $0x10] sm:$0xff] %vm279, 0.0
      %289 = vst.msk [vmem:[%s285 + $0x18] sm:$0x1] %vm283, 0.0
      %290 = vst.msk [vmem:[#allocation2 + $0x7] sm:$0x1] %vm283, 0.0
      %291 = vst.msk [vmem:[#allocation2 + $0x27] sm:$0x1] %vm283, 0.0
      %292 = vst.msk [vmem:[#allocation2 + $0x47] sm:$0x1] %vm283, 0.0
      %293 = vst.msk [vmem:[#allocation2 + $0x67] sm:$0x1] %vm283, 0.0
      %294 = vst.msk [vmem:[#allocation2 + $0x87] sm:$0x1] %vm283, 0.0
      %295 = vst.msk [vmem:[#allocation2 + $0xa7] sm:$0x1] %vm283, 0.0
      %296 = vst.msk [vmem:[#allocation2 + $0xc7] sm:$0x1] %vm283, 0.0
      %297 = vst.msk [vmem:[#allocation2 + $0xe7] sm:$0x1] %vm283, 0.0
      %298 = vst.msk [vmem:[#allocation2 + $0x107] sm:$0x1] %vm283, 0.0
      %299 = vst.msk [vmem:[#allocation2 + $0x127] sm:$0x1] %vm283, 0.0
      %300 = vst.msk [vmem:[#allocation2 + $0x147] sm:$0x1] %vm283, 0.0
      %301 = vst.msk [vmem:[#allocation2 + $0x167] sm:$0x1] %vm283, 0.0
      %302 = vst.msk [vmem:[#allocation2 + $0x187] sm:$0x1] %vm283, 0.0
      %303 = vst.msk [vmem:[#allocation2 + $0x1a7] sm:$0x1] %vm283, 0.0
      %304 = vst.msk [vmem:[#allocation2 + $0x1c7] sm:$0x1] %vm283, 0.0
      %305 = vst.msk [vmem:[#allocation2 + $0x1e7] sm:$0x1] %vm283, 0.0
      %306 = vst.msk [vmem:[#allocation2 + $0x207] sm:$0x1] %vm283, 0.0
      %307 = vst.msk [vmem:[#allocation2 + $0x227] sm:$0x1] %vm283, 0.0
      %308 = vst.msk [vmem:[#allocation2 + $0x18] sm:$0x1] %vm283, 0.0
      %309 = vst.msk [vmem:[#allocation2 + $0x38] sm:$0x1] %vm283, 0.0
      %310 = vst.msk [vmem:[#allocation2 + $0x58] sm:$0x1] %vm283, 0.0
      %311 = vst.msk [vmem:[#allocation2 + $0x78] sm:$0x1] %vm283, 0.0
      %312 = vst.msk [vmem:[#allocation2 + $0x98] sm:$0x1] %vm283, 0.0
      %313 = vst.msk [vmem:[#allocation2 + $0xb8] sm:$0x1] %vm283, 0.0
      %314 = vst.msk [vmem:[#allocation2 + $0xd8] sm:$0x1] %vm283, 0.0
      %315 = vst.msk [vmem:[#allocation2 + $0xf8] sm:$0x1] %vm283, 0.0
      %316 = vst.msk [vmem:[#allocation2 + $0x118] sm:$0x1] %vm283, 0.0
      %317 = vst.msk [vmem:[#allocation2 + $0x138] sm:$0x1] %vm283, 0.0
      %318 = vst.msk [vmem:[#allocation2 + $0x158] sm:$0x1] %vm283, 0.0
      %319 = vst.msk [vmem:[#allocation2 + $0x178] sm:$0x1] %vm283, 0.0
      %320 = vst.msk [vmem:[#allocation2 + $0x198] sm:$0x1] %vm283, 0.0
      %321 = vst.msk [vmem:[#allocation2 + $0x1b8] sm:$0x1] %vm283, 0.0
      %322 = vst.msk [vmem:[#allocation2 + $0x1d8] sm:$0x1] %vm283, 0.0
      %323 = vst.msk [vmem:[#allocation2 + $0x1f8] sm:$0x1] %vm283, 0.0
      %324 = vst.msk [vmem:[#allocation2 + $0x218] sm:$0x1] %vm283, 0.0
      %325 = vst.msk [vmem:[#allocation2 + $0x238] sm:$0x1] %vm283, 0.0
      %v326 = vld [vmem:[%s273] sm:$0xff]
      %v327 = vld [vmem:[%s273 + $0x8] sm:$0xff]
      %v328 = vld [vmem:[%s273 + $0x10] sm:$0xff]
      %v329 = vld [vmem:[%s273 + $0x18] sm:$0xff]
      %v330 = vld [vmem:[%s273 + $0x20] sm:$0xff]
      %v331 = vld [vmem:[%s273 + $0x28] sm:$0xff]
      %v332 = vld [vmem:[%s273 + $0x30] sm:$0xff]
      %v333 = vld [vmem:[%s273 + $0x38] sm:$0xff]
      %v334 = vld [vmem:[%s273 + $0x40] sm:$0xff]
      %v335 = vld [vmem:[%s273 + $0x48] sm:$0xff]
      %v336 = vld [vmem:[%s273 + $0x50] sm:$0xff]
      %v337 = vld [vmem:[%s273 + $0x58] sm:$0xff]
      %v338 = vld [vmem:[%s273 + $0x60] sm:$0xff]
      %v339 = vld [vmem:[%s273 + $0x68] sm:$0xff]
      %v340 = vld [vmem:[%s273 + $0x70] sm:$0xff]
      %v341 = vld [vmem:[%s273 + $0x78] sm:$0xff]
      %v342 = vld [vmem:[%s273 + $0x80] sm:$0xff]
      %v343 = vld [vmem:[%s273 + $0x88] sm:$0xff]
      %v344 = vld [vmem:[%s273 + $0x90] sm:$0xff]
      %v345 = vld [vmem:[%s273 + $0x98] sm:$0xff]
      %v346 = vld [vmem:[%s273 + $0xa0] sm:$0xff]
      %v347 = vld [vmem:[%s273 + $0xa8] sm:$0xff]
      %v348 = vld [vmem:[%s273 + $0xb0] sm:$0xff]
      %v349 = vld [vmem:[%s273 + $0xb8] sm:$0xff]
      %v350 = vld [vmem:[%s273 + $0xc0] sm:$0xff]
      %v351 = vld [vmem:[%s273 + $0xc8] sm:$0xff]
      %v352 = vld [vmem:[%s273 + $0xd0] sm:$0xff]
      %v353 = vld [vmem:[%s273 + $0xd8] sm:$0xff]
      %v354 = vld [vmem:[%s273 + $0xe0] sm:$0xff]
      %v355 = vld [vmem:[%s273 + $0xe8] sm:$0xff]
      %v356 = vld [vmem:[%s273 + $0xf0] sm:$0xff]
      %v357 = vld [vmem:[%s273 + $0xf8] sm:$0xff]
      %s358 = scalar_lea.vmem [#allocation2], 32
      %359 = vst.msk [vmem:[%s358 + $0x8] sm:$0xff] %vm279, %v326
      %360 = vst.msk [vmem:[%s358 + $0x10] sm:$0xff] %vm279, %v327
      %361 = vst.msk [vmem:[%s358 + $0x28] sm:$0xff] %vm279, %v328
      %362 = vst.msk [vmem:[%s358 + $0x30] sm:$0xff] %vm279, %v329
      %363 = vst.msk [vmem:[%s358 + $0x48] sm:$0xff] %vm279, %v330
      %364 = vst.msk [vmem:[%s358 + $0x50] sm:$0xff] %vm279, %v331
      %365 = vst.msk [vmem:[%s358 + $0x68] sm:$0xff] %vm279, %v332
      %366 = vst.msk [vmem:[%s358 + $0x70] sm:$0xff] %vm279, %v333
      %367 = vst.msk [vmem:[%s358 + $0x88] sm:$0xff] %vm279, %v334
      %368 = vst.msk [vmem:[%s358 + $0x90] sm:$0xff] %vm279, %v335
      %369 = vst.msk [vmem:[%s358 + $0xa8] sm:$0xff] %vm279, %v336
      %370 = vst.msk [vmem:[%s358 + $0xb0] sm:$0xff] %vm279, %v337
      %371 = vst.msk [vmem:[%s358 + $0xc8] sm:$0xff] %vm279, %v338
      %372 = vst.msk [vmem:[%s358 + $0xd0] sm:$0xff] %vm279, %v339
      %373 = vst.msk [vmem:[%s358 + $0xe8] sm:$0xff] %vm279, %v340
      %374 = vst.msk [vmem:[%s358 + $0xf0] sm:$0xff] %vm279, %v341
      %375 = vst.msk [vmem:[%s358 + $0x108] sm:$0xff] %vm279, %v342
      %376 = vst.msk [vmem:[%s358 + $0x110] sm:$0xff] %vm279, %v343
      %377 = vst.msk [vmem:[%s358 + $0x128] sm:$0xff] %vm279, %v344
      %378 = vst.msk [vmem:[%s358 + $0x130] sm:$0xff] %vm279, %v345
      %379 = vst.msk [vmem:[%s358 + $0x148] sm:$0xff] %vm279, %v346
      %380 = vst.msk [vmem:[%s358 + $0x150] sm:$0xff] %vm279, %v347
      %381 = vst.msk [vmem:[%s358 + $0x168] sm:$0xff] %vm279, %v348
      %382 = vst.msk [vmem:[%s358 + $0x170] sm:$0xff] %vm279, %v349
      %383 = vst.msk [vmem:[%s358 + $0x188] sm:$0xff] %vm279, %v350
      %384 = vst.msk [vmem:[%s358 + $0x190] sm:$0xff] %vm279, %v351
      %385 = vst.msk [vmem:[%s358 + $0x1a8] sm:$0xff] %vm279, %v352
      %386 = vst.msk [vmem:[%s358 + $0x1b0] sm:$0xff] %vm279, %v353
      %387 = vst.msk [vmem:[%s358 + $0x1c8] sm:$0xff] %vm279, %v354
      %388 = vst.msk [vmem:[%s358 + $0x1d0] sm:$0xff] %vm279, %v355
      %389 = vst.msk [vmem:[%s358 + $0x1e8] sm:$0xff] %vm279, %v356
      %390 = vst.msk [vmem:[%s358 + $0x1f0] sm:$0xff] %vm279, %v357
      %v391 = vld [vmem:[#allocation2 + $0x7] sm:$0xff]
      %v392 = vld [vmem:[#allocation2 + $0xf] sm:$0xff]
      %v393 = vld [vmem:[#allocation2 + $0x27] sm:$0xff]
      %v394 = vld [vmem:[#allocation2 + $0x2f] sm:$0xff]
      %v395 = vld [vmem:[#allocation2 + $0x47] sm:$0xff]
      %v396 = vld [vmem:[#allocation2 + $0x4f] sm:$0xff]
      %v397 = vld [vmem:[#allocation2 + $0x67] sm:$0xff]
      %v398 = vld [vmem:[#allocation2 + $0x6f] sm:$0xff]
      %v399 = vld [vmem:[#allocation2 + $0x87] sm:$0xff]
      %v400 = vld [vmem:[#allocation2 + $0x8f] sm:$0xff]
      %v401 = vld [vmem:[#allocation2 + $0xa7] sm:$0xff]
      %v402 = vld [vmem:[#allocation2 + $0xaf] sm:$0xff]
      %v403 = vld [vmem:[#allocation2 + $0xc7] sm:$0xff]
      %v404 = vld [vmem:[#allocation2 + $0xcf] sm:$0xff]
      %v405 = vld [vmem:[#allocation2 + $0xe7] sm:$0xff]
      %v406 = vld [vmem:[#allocation2 + $0xef] sm:$0xff]
      %v407 = vld [vmem:[#allocation2 + $0x107] sm:$0xff]
      %v408 = vld [vmem:[#allocation2 + $0x10f] sm:$0xff]
      %v409 = vld [vmem:[#allocation2 + $0x127] sm:$0xff]
      %v410 = vld [vmem:[#allocation2 + $0x12f] sm:$0xff]
      %v411 = vld [vmem:[#allocation2 + $0x147] sm:$0xff]
      %v412 = vld [vmem:[#allocation2 + $0x14f] sm:$0xff]
      %v413 = vld [vmem:[#allocation2 + $0x167] sm:$0xff]
      %v414 = vld [vmem:[#allocation2 + $0x16f] sm:$0xff]
      %v415 = vld [vmem:[#allocation2 + $0x187] sm:$0xff]
      %v416 = vld [vmem:[#allocation2 + $0x18f] sm:$0xff]
      %v417 = vld [vmem:[#allocation2 + $0x1a7] sm:$0xff]
      %v418 = vld [vmem:[#allocation2 + $0x1af] sm:$0xff]
      %v419 = vld [vmem:[#allocation2 + $0x1c7] sm:$0xff]
      %v420 = vld [vmem:[#allocation2 + $0x1cf] sm:$0xff]
      %v421 = vld [vmem:[#allocation2 + $0x1e7] sm:$0xff]
      %v422 = vld [vmem:[#allocation2 + $0x1ef] sm:$0xff]
      %v423 = vld [vmem:[%s1] sm:$0xf]
      %v424 = vld [vmem:[#allocation2 + $0x8] sm:$0xff]
      %v425 = vld [vmem:[#allocation2 + $0x10] sm:$0xff]
      %v426 = vld [vmem:[#allocation2 + $0x28] sm:$0xff]
      %v427 = vld [vmem:[#allocation2 + $0x30] sm:$0xff]
      %v428 = vld [vmem:[#allocation2 + $0x48] sm:$0xff]
      %v429 = vld [vmem:[#allocation2 + $0x50] sm:$0xff]
      %v430 = vld [vmem:[#allocation2 + $0x68] sm:$0xff]
      %v431 = vld [vmem:[#allocation2 + $0x70] sm:$0xff]
      %v432 = vld [vmem:[#allocation2 + $0x88] sm:$0xff]
      %v433 = vld [vmem:[#allocation2 + $0x90] sm:$0xff]
      %v434 = vld [vmem:[#allocation2 + $0xa8] sm:$0xff]
      %v435 = vld [vmem:[#allocation2 + $0xb0] sm:$0xff]
      %v436 = vld [vmem:[#allocation2 + $0xc8] sm:$0xff]
      %v437 = vld [vmem:[#allocation2 + $0xd0] sm:$0xff]
      %v438 = vld [vmem:[#allocation2 + $0xe8] sm:$0xff]
      %v439 = vld [vmem:[#allocation2 + $0xf0] sm:$0xff]
      %v440 = vld [vmem:[#allocation2 + $0x108] sm:$0xff]
      %v441 = vld [vmem:[#allocation2 + $0x110] sm:$0xff]
      %v442 = vld [vmem:[#allocation2 + $0x128] sm:$0xff]
      %v443 = vld [vmem:[#allocation2 + $0x130] sm:$0xff]
      %v444 = vld [vmem:[#allocation2 + $0x148] sm:$0xff]
      %v445 = vld [vmem:[#allocation2 + $0x150] sm:$0xff]
      %v446 = vld [vmem:[#allocation2 + $0x168] sm:$0xff]
      %v447 = vld [vmem:[#allocation2 + $0x170] sm:$0xff]
      %v448 = vld [vmem:[#allocation2 + $0x188] sm:$0xff]
      %v449 = vld [vmem:[#allocation2 + $0x190] sm:$0xff]
      %v450 = vld [vmem:[#allocation2 + $0x1a8] sm:$0xff]
      %v451 = vld [vmem:[#allocation2 + $0x1b0] sm:$0xff]
      %v452 = vld [vmem:[#allocation2 + $0x1c8] sm:$0xff]
      %v453 = vld [vmem:[#allocation2 + $0x1d0] sm:$0xff]
      %v454 = vld [vmem:[#allocation2 + $0x1e8] sm:$0xff]
      %v455 = vld [vmem:[#allocation2 + $0x1f0] sm:$0xff]
      %s456 = scalar_lea.vmem %s1, 4
      %v457 = vld [vmem:[%s456] sm:$0xf]
      %v459 = vsel %vm279, %v424, 0
      %v462 = vsel %vm279, %v425, 0
      %v465 = vsel %vm279, %v426, 0
      %v468 = vsel %vm279, %v427, 0
      %v471 = vsel %vm279, %v428, 0
      %v474 = vsel %vm279, %v429, 0
      %v477 = vsel %vm279, %v430, 0
      %v480 = vsel %vm279, %v431, 0
      %v483 = vsel %vm279, %v432, 0
      %v486 = vsel %vm279, %v433, 0
      %v489 = vsel %vm279, %v434, 0
      %v492 = vsel %vm279, %v435, 0
      %v495 = vsel %vm279, %v436, 0
      %v498 = vsel %vm279, %v437, 0
      %v501 = vsel %vm279, %v438, 0
      %v504 = vsel %vm279, %v439, 0
      %v507 = vsel %vm279, %v440, 0
      %v510 = vsel %vm279, %v441, 0
      %v513 = vsel %vm279, %v442, 0
      %v516 = vsel %vm279, %v443, 0
      %v519 = vsel %vm279, %v444, 0
      %v522 = vsel %vm279, %v445, 0
      %v525 = vsel %vm279, %v446, 0
      %v528 = vsel %vm279, %v447, 0
      %v531 = vsel %vm279, %v448, 0
      %v534 = vsel %vm279, %v449, 0
      %v537 = vsel %vm279, %v450, 0
      %v540 = vsel %vm279, %v451, 0
      %v543 = vsel %vm279, %v452, 0
      %v546 = vsel %vm279, %v453, 0
      %v549 = vsel %vm279, %v454, 0
      %v552 = vsel %vm279, %v455, 0
      %vm554 = vcmask 1043456
      %v556 = vsel %vm554, %v457, 0
      %558 = vmatprep.subr.mxu0 0.0
      %559 = vmatpush1.msra.mxu0 %v556
      %560 = vmatprep.subr.mxu0 0.0
      %561 = vmatpush1.msra.mxu0 0.0
      %562 = vmatprep.subr.mxu0 0.0
      %563 = vmatpush1.msra.mxu0 0.0
      %564 = vmatprep.subr.mxu0 0.0
      %565 = vmatpush1.msra.mxu0 0.0
      %566 = vmatprep.subr.mxu0 0.0
      %567 = vmatpush1.msra.mxu0 0.0
      %568 = vmatprep.subr.mxu0 0.0
      %569 = vmatpush1.msra.mxu0 0.0
      %570 = vmatprep.subr.mxu0 0.0
      %571 = vmatpush1.msra.mxu0 0.0
      %572 = vmatprep.subr.mxu0 0.0
      %573 = vmatpush1.msra.mxu0 0.0
      %574 = vmatprep.subr.mxu0 0.0
      %575 = vmatpush1.msra.mxu0 0.0
      %576 = vmatprep.subr.mxu0 0.0
      %577 = vmatpush1.msra.mxu0 0.0
      %578 = vmatprep.subr.mxu0 0.0
      %579 = vmatpush1.msra.mxu0 0.0
      %580 = vmatprep.subr.mxu0 0.0
      %581 = vmatpush1.msra.mxu0 0.0
      %582 = vmatprep.subr.mxu0 0.0
      %583 = vmatpush1.msra.mxu0 0.0
      %584 = vmatprep.subr.mxu0 0.0
      %585 = vmatpush1.msra.mxu0 0.0
      %586 = vmatprep.subr.mxu0 0.0
      %587 = vmatpush1.msra.mxu0 0.0
      %588 = vmatprep.subr.mxu0 0.0
      %589 = vmatpush1.msra.mxu0 0.0
      %590 = vmatprep.subr.mxu0 0.0
      %591 = vmatpush1.msra.mxu0 0.0
      %592 = vmatprep.subr.mxu0 0.0
      %593 = vmatpush1.msra.mxu0 0.0
      %594 = vmatprep.subr.mxu0 0.0
      %595 = vmatpush1.msra.mxu0 0.0
      %596 = vmatprep.subr.mxu0 0.0
      %597 = vmatpush1.msra.mxu0 0.0
      %598 = vmatprep.subr.mxu0 0.0
      %599 = vmatpush1.msra.mxu0 0.0
      %600 = vmatprep.subr.mxu0 0.0
      %601 = vmatpush1.msra.mxu0 0.0
      %602 = vmatprep.subr.mxu0 0.0
      %603 = vmatpush1.msra.mxu0 0.0
      %604 = vmatprep.subr.mxu0 0.0
      %605 = vmatpush1.msra.mxu0 0.0
      %606 = vmatprep.subr.mxu0 0.0
      %607 = vmatpush1.msra.mxu0 0.0
      %608 = vmatprep.subr.mxu0 0.0
      %609 = vmatpush1.msra.mxu0 0.0
      %610 = vmatprep.subr.mxu0 0.0
      %611 = vmatpush1.msra.mxu0 0.0
      %612 = vmatprep.subr.mxu0 0.0
      %613 = vmatpush1.msra.mxu0 0.0
      %614 = vmatprep.subr.mxu0 0.0
      %615 = vmatpush1.msra.mxu0 0.0
      %616 = vmatprep.subr.mxu0 0.0
      %617 = vmatpush1.msra.mxu0 0.0
      %618 = vmatprep.subr.mxu0 0.0
      %619 = vmatpush1.msra.mxu0 0.0
      %620 = vmatprep.subr.mxu0 0.0
      %621 = vmatpush1.msra.mxu0 0.0
      %622 = vmatprep.mubr.f32.mxu0 0.0
      %623 = vmatmul.mubr.f32.gmra.mrb[0].mxu0 %v459
      %v624 = vpop.f32.mrb[0].mxu0
      %v625 = vadd.f32 0.0, %v624
      %v626 = vpop.f32.mrb[0].mxu0
      %627 = vmatprep.mubr.f32.mxu0 0.0
      %628 = vmatmul.mubr.f32.gmra.mrb[0].mxu0 %v462
      %v629 = vpop.f32.mrb[0].mxu0
      %v630 = vadd.f32 0.0, %v629
      %v631 = vpop.f32.mrb[0].mxu0
      %632 = vmatprep.mubr.f32.mxu0 0.0
      %633 = vmatmul.mubr.f32.gmra.mrb[0].mxu0 %v465
      %v634 = vpop.f32.mrb[0].mxu0
      %v635 = vadd.f32 0.0, %v634
      %v636 = vpop.f32.mrb[0].mxu0
      %637 = vmatprep.mubr.f32.mxu0 0.0
      %638 = vmatmul.mubr.f32.gmra.mrb[0].mxu0 %v468
      %v639 = vpop.f32.mrb[0].mxu0
      %v640 = vadd.f32 0.0, %v639
      %v641 = vpop.f32.mrb[0].mxu0
      %642 = vmatprep.mubr.f32.mxu0 0.0
      %643 = vmatmul.mubr.f32.gmra.mrb[0].mxu0 %v471
      %v644 = vpop.f32.mrb[0].mxu0
      %v645 = vadd.f32 0.0, %v644
      %v646 = vpop.f32.mrb[0].mxu0
      %647 = vmatprep.mubr.f32.mxu0 0.0
      %648 = vmatmul.mubr.f32.gmra.mrb[0].mxu0 %v474
      %v649 = vpop.f32.mrb[0].mxu0
      %v650 = vadd.f32 0.0, %v649
      %v651 = vpop.f32.mrb[0].mxu0
      %652 = vmatprep.mubr.f32.mxu0 0.0
      %653 = vmatmul.mubr.f32.gmra.mrb[0].mxu0 %v477
      %v654 = vpop.f32.mrb[0].mxu0
      %v655 = vadd.f32 0.0, %v654
      %v656 = vpop.f32.mrb[0].mxu0
      %657 = vmatprep.mubr.f32.mxu0 0.0
      %658 = vmatmul.mubr.f32.gmra.mrb[0].mxu0 %v480
      %v659 = vpop.f32.mrb[0].mxu0
      %v660 = vadd.f32 0.0, %v659
      %v661 = vpop.f32.mrb[0].mxu0
      %662 = vmatprep.mubr.f32.mxu0 0.0
      %663 = vmatmul.mubr.f32.gmra.mrb[0].mxu0 %v483
      %v664 = vpop.f32.mrb[0].mxu0
      %v665 = vadd.f32 0.0, %v664
      %v666 = vpop.f32.mrb[0].mxu0
      %667 = vmatprep.mubr.f32.mxu0 0.0
      %668 = vmatmul.mubr.f32.gmra.mrb[0].mxu0 %v486
      %v669 = vpop.f32.mrb[0].mxu0
      %v670 = vadd.f32 0.0, %v669
      %v671 = vpop.f32.mrb[0].mxu0
      %672 = vmatprep.mubr.f32.mxu0 0.0
      %673 = vmatmul.mubr.f32.gmra.mrb[0].mxu0 %v489
      %v674 = vpop.f32.mrb[0].mxu0
      %v675 = vadd.f32 0.0, %v674
      %v676 = vpop.f32.mrb[0].mxu0
      %677 = vmatprep.mubr.f32.mxu0 0.0
      %678 = vmatmul.mubr.f32.gmra.mrb[0].mxu0 %v492
      %v679 = vpop.f32.mrb[0].mxu0
      %v680 = vadd.f32 0.0, %v679
      %v681 = vpop.f32.mrb[0].mxu0
      %682 = vmatprep.mubr.f32.mxu0 0.0
      %683 = vmatmul.mubr.f32.gmra.mrb[0].mxu0 %v495
      %v684 = vpop.f32.mrb[0].mxu0
      %v685 = vadd.f32 0.0, %v684
      %v686 = vpop.f32.mrb[0].mxu0
      %687 = vmatprep.mubr.f32.mxu0 0.0
      %688 = vmatmul.mubr.f32.gmra.mrb[0].mxu0 %v498
      %v689 = vpop.f32.mrb[0].mxu0
      %v690 = vadd.f32 0.0, %v689
      %v691 = vpop.f32.mrb[0].mxu0
      %692 = vmatprep.mubr.f32.mxu0 0.0
      %693 = vmatmul.mubr.f32.gmra.mrb[0].mxu0 %v501
      %v694 = vpop.f32.mrb[0].mxu0
      %v695 = vadd.f32 0.0, %v694
      %v696 = vpop.f32.mrb[0].mxu0
      %697 = vmatprep.mubr.f32.mxu0 0.0
      %698 = vmatmul.mubr.f32.gmra.mrb[0].mxu0 %v504
      %v699 = vpop.f32.mrb[0].mxu0
      %v700 = vadd.f32 0.0, %v699
      %v701 = vpop.f32.mrb[0].mxu0
      %702 = vmatprep.mubr.f32.mxu0 0.0
      %703 = vmatmul.mubr.f32.gmra.mrb[0].mxu0 %v507
      %v704 = vpop.f32.mrb[0].mxu0
      %v705 = vadd.f32 0.0, %v704
      %v706 = vpop.f32.mrb[0].mxu0
      %707 = vmatprep.mubr.f32.mxu0 0.0
      %708 = vmatmul.mubr.f32.gmra.mrb[0].mxu0 %v510
      %v709 = vpop.f32.mrb[0].mxu0
      %v710 = vadd.f32 0.0, %v709
      %v711 = vpop.f32.mrb[0].mxu0
      %712 = vmatprep.mubr.f32.mxu0 0.0
      %713 = vmatmul.mubr.f32.gmra.mrb[0].mxu0 %v513
      %v714 = vpop.f32.mrb[0].mxu0
      %v715 = vadd.f32 0.0, %v714
      %v716 = vpop.f32.mrb[0].mxu0
      %717 = vmatprep.mubr.f32.mxu0 0.0
      %718 = vmatmul.mubr.f32.gmra.mrb[0].mxu0 %v516
      %v719 = vpop.f32.mrb[0].mxu0
      %v720 = vadd.f32 0.0, %v719
      %v721 = vpop.f32.mrb[0].mxu0
      %722 = vmatprep.mubr.f32.mxu0 0.0
      %723 = vmatmul.mubr.f32.gmra.mrb[0].mxu0 %v519
      %v724 = vpop.f32.mrb[0].mxu0
      %v725 = vadd.f32 0.0, %v724
      %v726 = vpop.f32.mrb[0].mxu0
      %727 = vmatprep.mubr.f32.mxu0 0.0
      %728 = vmatmul.mubr.f32.gmra.mrb[0].mxu0 %v522
      %v729 = vpop.f32.mrb[0].mxu0
      %v730 = vadd.f32 0.0, %v729
      %v731 = vpop.f32.mrb[0].mxu0
      %732 = vmatprep.mubr.f32.mxu0 0.0
      %733 = vmatmul.mubr.f32.gmra.mrb[0].mxu0 %v525
      %v734 = vpop.f32.mrb[0].mxu0
      %v735 = vadd.f32 0.0, %v734
      %v736 = vpop.f32.mrb[0].mxu0
      %737 = vmatprep.mubr.f32.mxu0 0.0
      %738 = vmatmul.mubr.f32.gmra.mrb[0].mxu0 %v528
      %v739 = vpop.f32.mrb[0].mxu0
      %v740 = vadd.f32 0.0, %v739
      %v741 = vpop.f32.mrb[0].mxu0
      %742 = vmatprep.mubr.f32.mxu0 0.0
      %743 = vmatmul.mubr.f32.gmra.mrb[0].mxu0 %v531
      %v744 = vpop.f32.mrb[0].mxu0
      %v745 = vadd.f32 0.0, %v744
      %v746 = vpop.f32.mrb[0].mxu0
      %747 = vmatprep.mubr.f32.mxu0 0.0
      %748 = vmatmul.mubr.f32.gmra.mrb[0].mxu0 %v534
      %v749 = vpop.f32.mrb[0].mxu0
      %v750 = vadd.f32 0.0, %v749
      %v751 = vpop.f32.mrb[0].mxu0
      %752 = vmatprep.mubr.f32.mxu0 0.0
      %753 = vmatmul.mubr.f32.gmra.mrb[0].mxu0 %v537
      %v754 = vpop.f32.mrb[0].mxu0
      %v755 = vadd.f32 0.0, %v754
      %v756 = vpop.f32.mrb[0].mxu0
      %757 = vmatprep.mubr.f32.mxu0 0.0
      %758 = vmatmul.mubr.f32.gmra.mrb[0].mxu0 %v540
      %v759 = vpop.f32.mrb[0].mxu0
      %v760 = vadd.f32 0.0, %v759
      %v761 = vpop.f32.mrb[0].mxu0
      %762 = vmatprep.mubr.f32.mxu0 0.0
      %763 = vmatmul.mubr.f32.gmra.mrb[0].mxu0 %v543
      %v764 = vpop.f32.mrb[0].mxu0
      %v765 = vadd.f32 0.0, %v764
      %v766 = vpop.f32.mrb[0].mxu0
      %767 = vmatprep.mubr.f32.mxu0 0.0
      %768 = vmatmul.mubr.f32.gmra.mrb[0].mxu0 %v546
      %v769 = vpop.f32.mrb[0].mxu0
      %v770 = vadd.f32 0.0, %v769
      %v771 = vpop.f32.mrb[0].mxu0
      %772 = vmatprep.mubr.f32.mxu0 0.0
      %773 = vmatmul.mubr.f32.gmra.mrb[0].mxu0 %v549
      %v774 = vpop.f32.mrb[0].mxu0
      %v775 = vadd.f32 0.0, %v774
      %v776 = vpop.f32.mrb[0].mxu0
      %777 = vmatprep.mubr.f32.mxu0 0.0
      %778 = vmatmul.mubr.f32.gmra.mrb[0].mxu0 %v552
      %v779 = vpop.f32.mrb[0].mxu0
      %v780 = vadd.f32 0.0, %v779
      %v781 = vpop.f32.mrb[0].mxu0
      %782 = vdwg.mxu0
      %v784 = vsel %vm279, %v391, 0
      %v787 = vsel %vm279, %v392, 0
      %v790 = vsel %vm279, %v393, 0
      %v793 = vsel %vm279, %v394, 0
      %v796 = vsel %vm279, %v395, 0
      %v799 = vsel %vm279, %v396, 0
      %v802 = vsel %vm279, %v397, 0
      %v805 = vsel %vm279, %v398, 0
      %v808 = vsel %vm279, %v399, 0
      %v811 = vsel %vm279, %v400, 0
      %v814 = vsel %vm279, %v401, 0
      %v817 = vsel %vm279, %v402, 0
      %v820 = vsel %vm279, %v403, 0
      %v823 = vsel %vm279, %v404, 0
      %v826 = vsel %vm279, %v405, 0
      %v829 = vsel %vm279, %v406, 0
      %v832 = vsel %vm279, %v407, 0
      %v835 = vsel %vm279, %v408, 0
      %v838 = vsel %vm279, %v409, 0
      %v841 = vsel %vm279, %v410, 0
      %v844 = vsel %vm279, %v411, 0
      %v847 = vsel %vm279, %v412, 0
      %v850 = vsel %vm279, %v413, 0
      %v853 = vsel %vm279, %v414, 0
      %v856 = vsel %vm279, %v415, 0
      %v859 = vsel %vm279, %v416, 0
      %v862 = vsel %vm279, %v417, 0
      %v865 = vsel %vm279, %v418, 0
      %v868 = vsel %vm279, %v419, 0
      %v871 = vsel %vm279, %v420, 0
      %v874 = vsel %vm279, %v421, 0
      %v877 = vsel %vm279, %v422, 0
      %v880 = vsel %vm554, %v423, 0
      %882 = vmatprep.subr.mxu0 0.0
      %883 = vmatpush1.msra.mxu0 %v880
      %884 = vmatprep.subr.mxu0 0.0
      %885 = vmatpush1.msra.mxu0 0.0
      %886 = vmatprep.subr.mxu0 0.0
      %887 = vmatpush1.msra.mxu0 0.0
      %888 = vmatprep.subr.mxu0 0.0
      %889 = vmatpush1.msra.mxu0 0.0
      %890 = vmatprep.subr.mxu0 0.0
      %891 = vmatpush1.msra.mxu0 0.0
      %892 = vmatprep.subr.mxu0 0.0
      %893 = vmatpush1.msra.mxu0 0.0
      %894 = vmatprep.subr.mxu0 0.0
      %895 = vmatpush1.msra.mxu0 0.0
      %896 = vmatprep.subr.mxu0 0.0
      %897 = vmatpush1.msra.mxu0 0.0
      %898 = vmatprep.subr.mxu0 0.0
      %899 = vmatpush1.msra.mxu0 0.0
      %900 = vmatprep.subr.mxu0 0.0
      %901 = vmatpush1.msra.mxu0 0.0
      %902 = vmatprep.subr.mxu0 0.0
      %903 = vmatpush1.msra.mxu0 0.0
      %904 = vmatprep.subr.mxu0 0.0
      %905 = vmatpush1.msra.mxu0 0.0
      %906 = vmatprep.subr.mxu0 0.0
      %907 = vmatpush1.msra.mxu0 0.0
      %908 = vmatprep.subr.mxu0 0.0
      %909 = vmatpush1.msra.mxu0 0.0
      %910 = vmatprep.subr.mxu0 0.0
      %911 = vmatpush1.msra.mxu0 0.0
      %912 = vmatprep.subr.mxu0 0.0
      %913 = vmatpush1.msra.mxu0 0.0
      %914 = vmatprep.subr.mxu0 0.0
      %915 = vmatpush1.msra.mxu0 0.0
      %916 = vmatprep.subr.mxu0 0.0
      %917 = vmatpush1.msra.mxu0 0.0
      %918 = vmatprep.subr.mxu0 0.0
      %919 = vmatpush1.msra.mxu0 0.0
      %920 = vmatprep.subr.mxu0 0.0
      %921 = vmatpush1.msra.mxu0 0.0
      %922 = vmatprep.subr.mxu0 0.0
      %923 = vmatpush1.msra.mxu0 0.0
      %924 = vmatprep.subr.mxu0 0.0
      %925 = vmatpush1.msra.mxu0 0.0
      %926 = vmatprep.subr.mxu0 0.0
      %927 = vmatpush1.msra.mxu0 0.0
      %928 = vmatprep.subr.mxu0 0.0
      %929 = vmatpush1.msra.mxu0 0.0
      %930 = vmatprep.subr.mxu0 0.0
      %931 = vmatpush1.msra.mxu0 0.0
      %932 = vmatprep.subr.mxu0 0.0
      %933 = vmatpush1.msra.mxu0 0.0
      %934 = vmatprep.subr.mxu0 0.0
      %935 = vmatpush1.msra.mxu0 0.0
      %936 = vmatprep.subr.mxu0 0.0
      %937 = vmatpush1.msra.mxu0 0.0
      %938 = vmatprep.subr.mxu0 0.0
      %939 = vmatpush1.msra.mxu0 0.0
      %940 = vmatprep.subr.mxu0 0.0
      %941 = vmatpush1.msra.mxu0 0.0
      %942 = vmatprep.subr.mxu0 0.0
      %943 = vmatpush1.msra.mxu0 0.0
      %944 = vmatprep.subr.mxu0 0.0
      %945 = vmatpush1.msra.mxu0 0.0
      %946 = vmatprep.mubr.f32.mxu0 0.0
      %947 = vmatmul.mubr.f32.gmra.mrb[0].mxu0 %v784
      %v948 = vpop.f32.mrb[0].mxu0
      %v949 = vadd.f32 %v625, %v948
      %v950 = vpop.f32.mrb[0].mxu0
      %951 = vmatprep.mubr.f32.mxu0 0.0
      %952 = vmatmul.mubr.f32.gmra.mrb[0].mxu0 %v787
      %v953 = vpop.f32.mrb[0].mxu0
      %v954 = vadd.f32 %v630, %v953
      %v955 = vpop.f32.mrb[0].mxu0
      %956 = vmatprep.mubr.f32.mxu0 0.0
      %957 = vmatmul.mubr.f32.gmra.mrb[0].mxu0 %v790
      %v958 = vpop.f32.mrb[0].mxu0
      %v959 = vadd.f32 %v635, %v958
      %v960 = vpop.f32.mrb[0].mxu0
      %961 = vmatprep.mubr.f32.mxu0 0.0
      %962 = vmatmul.mubr.f32.gmra.mrb[0].mxu0 %v793
      %v963 = vpop.f32.mrb[0].mxu0
      %v964 = vadd.f32 %v640, %v963
      %v965 = vpop.f32.mrb[0].mxu0
      %966 = vmatprep.mubr.f32.mxu0 0.0
      %967 = vmatmul.mubr.f32.gmra.mrb[0].mxu0 %v796
      %v968 = vpop.f32.mrb[0].mxu0
      %v969 = vadd.f32 %v645, %v968
      %v970 = vpop.f32.mrb[0].mxu0
      %971 = vmatprep.mubr.f32.mxu0 0.0
      %972 = vmatmul.mubr.f32.gmra.mrb[0].mxu0 %v799
      %v973 = vpop.f32.mrb[0].mxu0
      %v974 = vadd.f32 %v650, %v973
      %v975 = vpop.f32.mrb[0].mxu0
      %976 = vmatprep.mubr.f32.mxu0 0.0
      %977 = vmatmul.mubr.f32.gmra.mrb[0].mxu0 %v802
      %v978 = vpop.f32.mrb[0].mxu0
      %v979 = vadd.f32 %v655, %v978
      %v980 = vpop.f32.mrb[0].mxu0
      %981 = vmatprep.mubr.f32.mxu0 0.0
      %982 = vmatmul.mubr.f32.gmra.mrb[0].mxu0 %v805
      %v983 = vpop.f32.mrb[0].mxu0
      %v984 = vadd.f32 %v660, %v983
      %v985 = vpop.f32.mrb[0].mxu0
      %986 = vmatprep.mubr.f32.mxu0 0.0
      %987 = vmatmul.mubr.f32.gmra.mrb[0].mxu0 %v808
      %v988 = vpop.f32.mrb[0].mxu0
      %v989 = vadd.f32 %v665, %v988
      %v990 = vpop.f32.mrb[0].mxu0
      %991 = vmatprep.mubr.f32.mxu0 0.0
      %992 = vmatmul.mubr.f32.gmra.mrb[0].mxu0 %v811
      %v993 = vpop.f32.mrb[0].mxu0
      %v994 = vadd.f32 %v670, %v993
      %v995 = vpop.f32.mrb[0].mxu0
      %996 = vmatprep.mubr.f32.mxu0 0.0
      %997 = vmatmul.mubr.f32.gmra.mrb[0].mxu0 %v814
      %v998 = vpop.f32.mrb[0].mxu0
      %v999 = vadd.f32 %v675, %v998
      %v1000 = vpop.f32.mrb[0].mxu0
      %1001 = vmatprep.mubr.f32.mxu0 0.0
      %1002 = vmatmul.mubr.f32.gmra.mrb[0].mxu0 %v817
      %v1003 = vpop.f32.mrb[0].mxu0
      %v1004 = vadd.f32 %v680, %v1003
      %v1005 = vpop.f32.mrb[0].mxu0
      %1006 = vmatprep.mubr.f32.mxu0 0.0
      %1007 = vmatmul.mubr.f32.gmra.mrb[0].mxu0 %v820
      %v1008 = vpop.f32.mrb[0].mxu0
      %v1009 = vadd.f32 %v685, %v1008
      %v1010 = vpop.f32.mrb[0].mxu0
      %1011 = vmatprep.mubr.f32.mxu0 0.0
      %1012 = vmatmul.mubr.f32.gmra.mrb[0].mxu0 %v823
      %v1013 = vpop.f32.mrb[0].mxu0
      %v1014 = vadd.f32 %v690, %v1013
      %v1015 = vpop.f32.mrb[0].mxu0
      %1016 = vmatprep.mubr.f32.mxu0 0.0
      %1017 = vmatmul.mubr.f32.gmra.mrb[0].mxu0 %v826
      %v1018 = vpop.f32.mrb[0].mxu0
      %v1019 = vadd.f32 %v695, %v1018
      %v1020 = vpop.f32.mrb[0].mxu0
      %1021 = vmatprep.mubr.f32.mxu0 0.0
      %1022 = vmatmul.mubr.f32.gmra.mrb[0].mxu0 %v829
      %v1023 = vpop.f32.mrb[0].mxu0
      %v1024 = vadd.f32 %v700, %v1023
      %v1025 = vpop.f32.mrb[0].mxu0
      %1026 = vmatprep.mubr.f32.mxu0 0.0
      %1027 = vmatmul.mubr.f32.gmra.mrb[0].mxu0 %v832
      %v1028 = vpop.f32.mrb[0].mxu0
      %v1029 = vadd.f32 %v705, %v1028
      %v1030 = vpop.f32.mrb[0].mxu0
      %1031 = vmatprep.mubr.f32.mxu0 0.0
      %1032 = vmatmul.mubr.f32.gmra.mrb[0].mxu0 %v835
      %v1033 = vpop.f32.mrb[0].mxu0
      %v1034 = vadd.f32 %v710, %v1033
      %v1035 = vpop.f32.mrb[0].mxu0
      %1036 = vmatprep.mubr.f32.mxu0 0.0
      %1037 = vmatmul.mubr.f32.gmra.mrb[0].mxu0 %v838
      %v1038 = vpop.f32.mrb[0].mxu0
      %v1039 = vadd.f32 %v715, %v1038
      %v1040 = vpop.f32.mrb[0].mxu0
      %1041 = vmatprep.mubr.f32.mxu0 0.0
      %1042 = vmatmul.mubr.f32.gmra.mrb[0].mxu0 %v841
      %v1043 = vpop.f32.mrb[0].mxu0
      %v1044 = vadd.f32 %v720, %v1043
      %v1045 = vpop.f32.mrb[0].mxu0
      %1046 = vmatprep.mubr.f32.mxu0 0.0
      %1047 = vmatmul.mubr.f32.gmra.mrb[0].mxu0 %v844
      %v1048 = vpop.f32.mrb[0].mxu0
      %v1049 = vadd.f32 %v725, %v1048
      %v1050 = vpop.f32.mrb[0].mxu0
      %1051 = vmatprep.mubr.f32.mxu0 0.0
      %1052 = vmatmul.mubr.f32.gmra.mrb[0].mxu0 %v847
      %v1053 = vpop.f32.mrb[0].mxu0
      %v1054 = vadd.f32 %v730, %v1053
      %v1055 = vpop.f32.mrb[0].mxu0
      %1056 = vmatprep.mubr.f32.mxu0 0.0
      %1057 = vmatmul.mubr.f32.gmra.mrb[0].mxu0 %v850
      %v1058 = vpop.f32.mrb[0].mxu0
      %v1059 = vadd.f32 %v735, %v1058
      %v1060 = vpop.f32.mrb[0].mxu0
      %1061 = vmatprep.mubr.f32.mxu0 0.0
      %1062 = vmatmul.mubr.f32.gmra.mrb[0].mxu0 %v853
      %v1063 = vpop.f32.mrb[0].mxu0
      %v1064 = vadd.f32 %v740, %v1063
      %v1065 = vpop.f32.mrb[0].mxu0
      %1066 = vmatprep.mubr.f32.mxu0 0.0
      %1067 = vmatmul.mubr.f32.gmra.mrb[0].mxu0 %v856
      %v1068 = vpop.f32.mrb[0].mxu0
      %v1069 = vadd.f32 %v745, %v1068
      %v1070 = vpop.f32.mrb[0].mxu0
      %1071 = vmatprep.mubr.f32.mxu0 0.0
      %1072 = vmatmul.mubr.f32.gmra.mrb[0].mxu0 %v859
      %v1073 = vpop.f32.mrb[0].mxu0
      %v1074 = vadd.f32 %v750, %v1073
      %v1075 = vpop.f32.mrb[0].mxu0
      %1076 = vmatprep.mubr.f32.mxu0 0.0
      %1077 = vmatmul.mubr.f32.gmra.mrb[0].mxu0 %v862
      %v1078 = vpop.f32.mrb[0].mxu0
      %v1079 = vadd.f32 %v755, %v1078
      %v1080 = vpop.f32.mrb[0].mxu0
      %1081 = vmatprep.mubr.f32.mxu0 0.0
      %1082 = vmatmul.mubr.f32.gmra.mrb[0].mxu0 %v865
      %v1083 = vpop.f32.mrb[0].mxu0
      %v1084 = vadd.f32 %v760, %v1083
      %v1085 = vpop.f32.mrb[0].mxu0
      %1086 = vmatprep.mubr.f32.mxu0 0.0
      %1087 = vmatmul.mubr.f32.gmra.mrb[0].mxu0 %v868
      %v1088 = vpop.f32.mrb[0].mxu0
      %v1089 = vadd.f32 %v765, %v1088
      %v1090 = vpop.f32.mrb[0].mxu0
      %1091 = vmatprep.mubr.f32.mxu0 0.0
      %1092 = vmatmul.mubr.f32.gmra.mrb[0].mxu0 %v871
      %v1093 = vpop.f32.mrb[0].mxu0
      %v1094 = vadd.f32 %v770, %v1093
      %v1095 = vpop.f32.mrb[0].mxu0
      %1096 = vmatprep.mubr.f32.mxu0 0.0
      %1097 = vmatmul.mubr.f32.gmra.mrb[0].mxu0 %v874
      %v1098 = vpop.f32.mrb[0].mxu0
      %v1099 = vadd.f32 %v775, %v1098
      %v1100 = vpop.f32.mrb[0].mxu0
      %1101 = vmatprep.mubr.f32.mxu0 0.0
      %1102 = vmatmul.mubr.f32.gmra.mrb[0].mxu0 %v877
      %v1103 = vpop.f32.mrb[0].mxu0
      %v1104 = vadd.f32 %v780, %v1103
      %v1105 = vpop.f32.mrb[0].mxu0
      %1106 = vdwg.mxu0
      %v1107 = vld [vmem:[#allocation2 + $0x9] sm:$0xff]
      %v1108 = vld [vmem:[#allocation2 + $0x11] sm:$0xff]
      %v1109 = vld [vmem:[#allocation2 + $0x29] sm:$0xff]
      %v1110 = vld [vmem:[#allocation2 + $0x31] sm:$0xff]
      %v1111 = vld [vmem:[#allocation2 + $0x49] sm:$0xff]
      %v1112 = vld [vmem:[#allocation2 + $0x51] sm:$0xff]
      %v1113 = vld [vmem:[#allocation2 + $0x69] sm:$0xff]
      %v1114 = vld [vmem:[#allocation2 + $0x71] sm:$0xff]
      %v1115 = vld [vmem:[#allocation2 + $0x89] sm:$0xff]
      %v1116 = vld [vmem:[#allocation2 + $0x91] sm:$0xff]
      %v1117 = vld [vmem:[#allocation2 + $0xa9] sm:$0xff]
      %v1118 = vld [vmem:[#allocation2 + $0xb1] sm:$0xff]
      %v1119 = vld [vmem:[#allocation2 + $0xc9] sm:$0xff]
      %v1120 = vld [vmem:[#allocation2 + $0xd1] sm:$0xff]
      %v1121 = vld [vmem:[#allocation2 + $0xe9] sm:$0xff]
      %v1122 = vld [vmem:[#allocation2 + $0xf1] sm:$0xff]
      %v1123 = vld [vmem:[#allocation2 + $0x109] sm:$0xff]
      %v1124 = vld [vmem:[#allocation2 + $0x111] sm:$0xff]
      %v1125 = vld [vmem:[#allocation2 + $0x129] sm:$0xff]
      %v1126 = vld [vmem:[#allocation2 + $0x131] sm:$0xff]
      %v1127 = vld [vmem:[#allocation2 + $0x149] sm:$0xff]
      %v1128 = vld [vmem:[#allocation2 + $0x151] sm:$0xff]
      %v1129 = vld [vmem:[#allocation2 + $0x169] sm:$0xff]
      %v1130 = vld [vmem:[#allocation2 + $0x171] sm:$0xff]
      %v1131 = vld [vmem:[#allocation2 + $0x189] sm:$0xff]
      %v1132 = vld [vmem:[#allocation2 + $0x191] sm:$0xff]
      %v1133 = vld [vmem:[#allocation2 + $0x1a9] sm:$0xff]
      %v1134 = vld [vmem:[#allocation2 + $0x1b1] sm:$0xff]
      %v1135 = vld [vmem:[#allocation2 + $0x1c9] sm:$0xff]
      %v1136 = vld [vmem:[#allocation2 + $0x1d1] sm:$0xff]
      %v1137 = vld [vmem:[#allocation2 + $0x1e9] sm:$0xff]
      %v1138 = vld [vmem:[#allocation2 + $0x1f1] sm:$0xff]
      %s1139 = scalar_lea.vmem %s1, 8
      %v1140 = vld [vmem:[%s1139] sm:$0xf]
      %v1142 = vsel %vm279, %v1107, 0
      %v1145 = vsel %vm279, %v1108, 0
      %v1148 = vsel %vm279, %v1109, 0
      %v1151 = vsel %vm279, %v1110, 0
      %v1154 = vsel %vm279, %v1111, 0
      %v1157 = vsel %vm279, %v1112, 0
      %v1160 = vsel %vm279, %v1113, 0
      %v1163 = vsel %vm279, %v1114, 0
      %v1166 = vsel %vm279, %v1115, 0
      %v1169 = vsel %vm279, %v1116, 0
      %v1172 = vsel %vm279, %v1117, 0
      %v1175 = vsel %vm279, %v1118, 0
      %v1178 = vsel %vm279, %v1119, 0
      %v1181 = vsel %vm279, %v1120, 0
      %v1184 = vsel %vm279, %v1121, 0
      %v1187 = vsel %vm279, %v1122, 0
      %v1190 = vsel %vm279, %v1123, 0
      %v1193 = vsel %vm279, %v1124, 0
      %v1196 = vsel %vm279, %v1125, 0
      %v1199 = vsel %vm279, %v1126, 0
      %v1202 = vsel %vm279, %v1127, 0
      %v1205 = vsel %vm279, %v1128, 0
      %v1208 = vsel %vm279, %v1129, 0
      %v1211 = vsel %vm279, %v1130, 0
      %v1214 = vsel %vm279, %v1131, 0
      %v1217 = vsel %vm279, %v1132, 0
      %v1220 = vsel %vm279, %v1133, 0
      %v1223 = vsel %vm279, %v1134, 0
      %v1226 = vsel %vm279, %v1135, 0
      %v1229 = vsel %vm279, %v1136, 0
      %v1232 = vsel %vm279, %v1137, 0
      %v1235 = vsel %vm279, %v1138, 0
      %v1238 = vsel %vm554, %v1140, 0
      %1240 = vmatprep.subr.mxu0 0.0
      %1241 = vmatpush1.msra.mxu0 %v1238
      %1242 = vmatprep.subr.mxu0 0.0
      %1243 = vmatpush1.msra.mxu0 0.0
      %1244 = vmatprep.subr.mxu0 0.0
      %1245 = vmatpush1.msra.mxu0 0.0
      %1246 = vmatprep.subr.mxu0 0.0
      %1247 = vmatpush1.msra.mxu0 0.0
      %1248 = vmatprep.subr.mxu0 0.0
      %1249 = vmatpush1.msra.mxu0 0.0
      %1250 = vmatprep.subr.mxu0 0.0
      %1251 = vmatpush1.msra.mxu0 0.0
      %1252 = vmatprep.subr.mxu0 0.0
      %1253 = vmatpush1.msra.mxu0 0.0
      %1254 = vmatprep.subr.mxu0 0.0
      %1255 = vmatpush1.msra.mxu0 0.0
      %1256 = vmatprep.subr.mxu0 0.0
      %1257 = vmatpush1.msra.mxu0 0.0
      %1258 = vmatprep.subr.mxu0 0.0
      %1259 = vmatpush1.msra.mxu0 0.0
      %1260 = vmatprep.subr.mxu0 0.0
      %1261 = vmatpush1.msra.mxu0 0.0
      %1262 = vmatprep.subr.mxu0 0.0
      %1263 = vmatpush1.msra.mxu0 0.0
      %1264 = vmatprep.subr.mxu0 0.0
      %1265 = vmatpush1.msra.mxu0 0.0
      %1266 = vmatprep.subr.mxu0 0.0
      %1267 = vmatpush1.msra.mxu0 0.0
      %1268 = vmatprep.subr.mxu0 0.0
      %1269 = vmatpush1.msra.mxu0 0.0
      %1270 = vmatprep.subr.mxu0 0.0
      %1271 = vmatpush1.msra.mxu0 0.0
      %1272 = vmatprep.subr.mxu0 0.0
      %1273 = vmatpush1.msra.mxu0 0.0
      %1274 = vmatprep.subr.mxu0 0.0
      %1275 = vmatpush1.msra.mxu0 0.0
      %1276 = vmatprep.subr.mxu0 0.0
      %1277 = vmatpush1.msra.mxu0 0.0
      %1278 = vmatprep.subr.mxu0 0.0
      %1279 = vmatpush1.msra.mxu0 0.0
      %1280 = vmatprep.subr.mxu0 0.0
      %1281 = vmatpush1.msra.mxu0 0.0
      %1282 = vmatprep.subr.mxu0 0.0
      %1283 = vmatpush1.msra.mxu0 0.0
      %1284 = vmatprep.subr.mxu0 0.0
      %1285 = vmatpush1.msra.mxu0 0.0
      %1286 = vmatprep.subr.mxu0 0.0
      %1287 = vmatpush1.msra.mxu0 0.0
      %1288 = vmatprep.subr.mxu0 0.0
      %1289 = vmatpush1.msra.mxu0 0.0
      %1290 = vmatprep.subr.mxu0 0.0
      %1291 = vmatpush1.msra.mxu0 0.0
      %1292 = vmatprep.subr.mxu0 0.0
      %1293 = vmatpush1.msra.mxu0 0.0
      %1294 = vmatprep.subr.mxu0 0.0
      %1295 = vmatpush1.msra.mxu0 0.0
      %1296 = vmatprep.subr.mxu0 0.0
      %1297 = vmatpush1.msra.mxu0 0.0
      %1298 = vmatprep.subr.mxu0 0.0
      %1299 = vmatpush1.msra.mxu0 0.0
      %1300 = vmatprep.subr.mxu0 0.0
      %1301 = vmatpush1.msra.mxu0 0.0
      %1302 = vmatprep.subr.mxu0 0.0
      %1303 = vmatpush1.msra.mxu0 0.0
      %1304 = vmatprep.mubr.f32.mxu0 0.0
      %1305 = vmatmul.mubr.f32.gmra.mrb[0].mxu0 %v1142
      %v1306 = vpop.f32.mrb[0].mxu0
      %v1307 = vadd.f32 0.0, %v1306
      %v1308 = vpop.f32.mrb[0].mxu0
      %1309 = vmatprep.mubr.f32.mxu0 0.0
      %1310 = vmatmul.mubr.f32.gmra.mrb[0].mxu0 %v1145
      %v1311 = vpop.f32.mrb[0].mxu0
      %v1312 = vadd.f32 0.0, %v1311
      %v1313 = vpop.f32.mrb[0].mxu0
      %1314 = vmatprep.mubr.f32.mxu0 0.0
      %1315 = vmatmul.mubr.f32.gmra.mrb[0].mxu0 %v1148
      %v1316 = vpop.f32.mrb[0].mxu0
      %v1317 = vadd.f32 0.0, %v1316
      %v1318 = vpop.f32.mrb[0].mxu0
      %1319 = vmatprep.mubr.f32.mxu0 0.0
      %1320 = vmatmul.mubr.f32.gmra.mrb[0].mxu0 %v1151
      %v1321 = vpop.f32.mrb[0].mxu0
      %v1322 = vadd.f32 0.0, %v1321
      %v1323 = vpop.f32.mrb[0].mxu0
      %1324 = vmatprep.mubr.f32.mxu0 0.0
      %1325 = vmatmul.mubr.f32.gmra.mrb[0].mxu0 %v1154
      %v1326 = vpop.f32.mrb[0].mxu0
      %v1327 = vadd.f32 0.0, %v1326
      %v1328 = vpop.f32.mrb[0].mxu0
      %1329 = vmatprep.mubr.f32.mxu0 0.0
      %1330 = vmatmul.mubr.f32.gmra.mrb[0].mxu0 %v1157
      %v1331 = vpop.f32.mrb[0].mxu0
      %v1332 = vadd.f32 0.0, %v1331
      %v1333 = vpop.f32.mrb[0].mxu0
      %1334 = vmatprep.mubr.f32.mxu0 0.0
      %1335 = vmatmul.mubr.f32.gmra.mrb[0].mxu0 %v1160
      %v1336 = vpop.f32.mrb[0].mxu0
      %v1337 = vadd.f32 0.0, %v1336
      %v1338 = vpop.f32.mrb[0].mxu0
      %1339 = vmatprep.mubr.f32.mxu0 0.0
      %1340 = vmatmul.mubr.f32.gmra.mrb[0].mxu0 %v1163
      %v1341 = vpop.f32.mrb[0].mxu0
      %v1342 = vadd.f32 0.0, %v1341
      %v1343 = vpop.f32.mrb[0].mxu0
      %1344 = vmatprep.mubr.f32.mxu0 0.0
      %1345 = vmatmul.mubr.f32.gmra.mrb[0].mxu0 %v1166
      %v1346 = vpop.f32.mrb[0].mxu0
      %v1347 = vadd.f32 0.0, %v1346
      %v1348 = vpop.f32.mrb[0].mxu0
      %1349 = vmatprep.mubr.f32.mxu0 0.0
      %1350 = vmatmul.mubr.f32.gmra.mrb[0].mxu0 %v1169
      %v1351 = vpop.f32.mrb[0].mxu0
      %v1352 = vadd.f32 0.0, %v1351
      %v1353 = vpop.f32.mrb[0].mxu0
      %1354 = vmatprep.mubr.f32.mxu0 0.0
      %1355 = vmatmul.mubr.f32.gmra.mrb[0].mxu0 %v1172
      %v1356 = vpop.f32.mrb[0].mxu0
      %v1357 = vadd.f32 0.0, %v1356
      %v1358 = vpop.f32.mrb[0].mxu0
      %1359 = vmatprep.mubr.f32.mxu0 0.0
      %1360 = vmatmul.mubr.f32.gmra.mrb[0].mxu0 %v1175
      %v1361 = vpop.f32.mrb[0].mxu0
      %v1362 = vadd.f32 0.0, %v1361
      %v1363 = vpop.f32.mrb[0].mxu0
      %1364 = vmatprep.mubr.f32.mxu0 0.0
      %1365 = vmatmul.mubr.f32.gmra.mrb[0].mxu0 %v1178
      %v1366 = vpop.f32.mrb[0].mxu0
      %v1367 = vadd.f32 0.0, %v1366
      %v1368 = vpop.f32.mrb[0].mxu0
      %1369 = vmatprep.mubr.f32.mxu0 0.0
      %1370 = vmatmul.mubr.f32.gmra.mrb[0].mxu0 %v1181
      %v1371 = vpop.f32.mrb[0].mxu0
      %v1372 = vadd.f32 0.0, %v1371
      %v1373 = vpop.f32.mrb[0].mxu0
      %1374 = vmatprep.mubr.f32.mxu0 0.0
      %1375 = vmatmul.mubr.f32.gmra.mrb[0].mxu0 %v1184
      %v1376 = vpop.f32.mrb[0].mxu0
      %v1377 = vadd.f32 0.0, %v1376
      %v1378 = vpop.f32.mrb[0].mxu0
      %1379 = vmatprep.mubr.f32.mxu0 0.0
      %1380 = vmatmul.mubr.f32.gmra.mrb[0].mxu0 %v1187
      %v1381 = vpop.f32.mrb[0].mxu0
      %v1382 = vadd.f32 0.0, %v1381
      %v1383 = vpop.f32.mrb[0].mxu0
      %1384 = vmatprep.mubr.f32.mxu0 0.0
      %1385 = vmatmul.mubr.f32.gmra.mrb[0].mxu0 %v1190
      %v1386 = vpop.f32.mrb[0].mxu0
      %v1387 = vadd.f32 0.0, %v1386
      %v1388 = vpop.f32.mrb[0].mxu0
      %1389 = vmatprep.mubr.f32.mxu0 0.0
      %1390 = vmatmul.mubr.f32.gmra.mrb[0].mxu0 %v1193
      %v1391 = vpop.f32.mrb[0].mxu0
      %v1392 = vadd.f32 0.0, %v1391
      %v1393 = vpop.f32.mrb[0].mxu0
      %1394 = vmatprep.mubr.f32.mxu0 0.0
      %1395 = vmatmul.mubr.f32.gmra.mrb[0].mxu0 %v1196
      %v1396 = vpop.f32.mrb[0].mxu0
      %v1397 = vadd.f32 0.0, %v1396
      %v1398 = vpop.f32.mrb[0].mxu0
      %1399 = vmatprep.mubr.f32.mxu0 0.0
      %1400 = vmatmul.mubr.f32.gmra.mrb[0].mxu0 %v1199
      %v1401 = vpop.f32.mrb[0].mxu0
      %v1402 = vadd.f32 0.0, %v1401
      %v1403 = vpop.f32.mrb[0].mxu0
      %1404 = vmatprep.mubr.f32.mxu0 0.0
      %1405 = vmatmul.mubr.f32.gmra.mrb[0].mxu0 %v1202
      %v1406 = vpop.f32.mrb[0].mxu0
      %v1407 = vadd.f32 0.0, %v1406
      %v1408 = vpop.f32.mrb[0].mxu0
      %1409 = vmatprep.mubr.f32.mxu0 0.0
      %1410 = vmatmul.mubr.f32.gmra.mrb[0].mxu0 %v1205
      %v1411 = vpop.f32.mrb[0].mxu0
      %v1412 = vadd.f32 0.0, %v1411
      %v1413 = vpop.f32.mrb[0].mxu0
      %1414 = vmatprep.mubr.f32.mxu0 0.0
      %1415 = vmatmul.mubr.f32.gmra.mrb[0].mxu0 %v1208
      %v1416 = vpop.f32.mrb[0].mxu0
      %v1417 = vadd.f32 0.0, %v1416
      %v1418 = vpop.f32.mrb[0].mxu0
      %1419 = vmatprep.mubr.f32.mxu0 0.0
      %1420 = vmatmul.mubr.f32.gmra.mrb[0].mxu0 %v1211
      %v1421 = vpop.f32.mrb[0].mxu0
      %v1422 = vadd.f32 0.0, %v1421
      %v1423 = vpop.f32.mrb[0].mxu0
      %1424 = vmatprep.mubr.f32.mxu0 0.0
      %1425 = vmatmul.mubr.f32.gmra.mrb[0].mxu0 %v1214
      %v1426 = vpop.f32.mrb[0].mxu0
      %v1427 = vadd.f32 0.0, %v1426
      %v1428 = vpop.f32.mrb[0].mxu0
      %1429 = vmatprep.mubr.f32.mxu0 0.0
      %1430 = vmatmul.mubr.f32.gmra.mrb[0].mxu0 %v1217
      %v1431 = vpop.f32.mrb[0].mxu0
      %v1432 = vadd.f32 0.0, %v1431
      %v1433 = vpop.f32.mrb[0].mxu0
      %1434 = vmatprep.mubr.f32.mxu0 0.0
      %1435 = vmatmul.mubr.f32.gmra.mrb[0].mxu0 %v1220
      %v1436 = vpop.f32.mrb[0].mxu0
      %v1437 = vadd.f32 0.0, %v1436
      %v1438 = vpop.f32.mrb[0].mxu0
      %1439 = vmatprep.mubr.f32.mxu0 0.0
      %1440 = vmatmul.mubr.f32.gmra.mrb[0].mxu0 %v1223
      %v1441 = vpop.f32.mrb[0].mxu0
      %v1442 = vadd.f32 0.0, %v1441
      %v1443 = vpop.f32.mrb[0].mxu0
      %1444 = vmatprep.mubr.f32.mxu0 0.0
      %1445 = vmatmul.mubr.f32.gmra.mrb[0].mxu0 %v1226
      %v1446 = vpop.f32.mrb[0].mxu0
      %v1447 = vadd.f32 0.0, %v1446
      %v1448 = vpop.f32.mrb[0].mxu0
      %1449 = vmatprep.mubr.f32.mxu0 0.0
      %1450 = vmatmul.mubr.f32.gmra.mrb[0].mxu0 %v1229
      %v1451 = vpop.f32.mrb[0].mxu0
      %v1452 = vadd.f32 0.0, %v1451
      %v1453 = vpop.f32.mrb[0].mxu0
      %1454 = vmatprep.mubr.f32.mxu0 0.0
      %1455 = vmatmul.mubr.f32.gmra.mrb[0].mxu0 %v1232
      %v1456 = vpop.f32.mrb[0].mxu0
      %v1457 = vadd.f32 0.0, %v1456
      %v1458 = vpop.f32.mrb[0].mxu0
      %1459 = vmatprep.mubr.f32.mxu0 0.0
      %1460 = vmatmul.mubr.f32.gmra.mrb[0].mxu0 %v1235
      %v1461 = vpop.f32.mrb[0].mxu0
      %v1462 = vadd.f32 0.0, %v1461
      %v1463 = vpop.f32.mrb[0].mxu0
      %1464 = vdwg.mxu0
      %v1465 = vadd.f32 %v949, %v1307
      %v1466 = vadd.f32 %v954, %v1312
      %v1467 = vadd.f32 %v959, %v1317
      %v1468 = vadd.f32 %v964, %v1322
      %v1469 = vadd.f32 %v969, %v1327
      %v1470 = vadd.f32 %v974, %v1332
      %v1471 = vadd.f32 %v979, %v1337
      %v1472 = vadd.f32 %v984, %v1342
      %v1473 = vadd.f32 %v989, %v1347
      %v1474 = vadd.f32 %v994, %v1352
      %v1475 = vadd.f32 %v999, %v1357
      %v1476 = vadd.f32 %v1004, %v1362
      %v1477 = vadd.f32 %v1009, %v1367
      %v1478 = vadd.f32 %v1014, %v1372
      %v1479 = vadd.f32 %v1019, %v1377
      %v1480 = vadd.f32 %v1024, %v1382
      %v1481 = vadd.f32 %v1029, %v1387
      %v1482 = vadd.f32 %v1034, %v1392
      %v1483 = vadd.f32 %v1039, %v1397
      %v1484 = vadd.f32 %v1044, %v1402
      %v1485 = vadd.f32 %v1049, %v1407
      %v1486 = vadd.f32 %v1054, %v1412
      %v1487 = vadd.f32 %v1059, %v1417
      %v1488 = vadd.f32 %v1064, %v1422
      %v1489 = vadd.f32 %v1069, %v1427
      %v1490 = vadd.f32 %v1074, %v1432
      %v1491 = vadd.f32 %v1079, %v1437
      %v1492 = vadd.f32 %v1084, %v1442
      %v1493 = vadd.f32 %v1089, %v1447
      %v1494 = vadd.f32 %v1094, %v1452
      %v1495 = vadd.f32 %v1099, %v1457
      %v1496 = vadd.f32 %v1104, %v1462
      %v1497 = vld [vmem:[%s358 + $0x7] sm:$0xff]
      %v1498 = vld [vmem:[%s358 + $0xf] sm:$0xff]
      %v1499 = vld [vmem:[%s358 + $0x27] sm:$0xff]
      %v1500 = vld [vmem:[%s358 + $0x2f] sm:$0xff]
      %v1501 = vld [vmem:[%s358 + $0x47] sm:$0xff]
      %v1502 = vld [vmem:[%s358 + $0x4f] sm:$0xff]
      %v1503 = vld [vmem:[%s358 + $0x67] sm:$0xff]
      %v1504 = vld [vmem:[%s358 + $0x6f] sm:$0xff]
      %v1505 = vld [vmem:[%s358 + $0x87] sm:$0xff]
      %v1506 = vld [vmem:[%s358 + $0x8f] sm:$0xff]
      %v1507 = vld [vmem:[%s358 + $0xa7] sm:$0xff]
      %v1508 = vld [vmem:[%s358 + $0xaf] sm:$0xff]
      %v1509 = vld [vmem:[%s358 + $0xc7] sm:$0xff]
      %v1510 = vld [vmem:[%s358 + $0xcf] sm:$0xff]
      %v1511 = vld [vmem:[%s358 + $0xe7] sm:$0xff]
      %v1512 = vld [vmem:[%s358 + $0xef] sm:$0xff]
      %v1513 = vld [vmem:[%s358 + $0x107] sm:$0xff]
      %v1514 = vld [vmem:[%s358 + $0x10f] sm:$0xff]
      %v1515 = vld [vmem:[%s358 + $0x127] sm:$0xff]
      %v1516 = vld [vmem:[%s358 + $0x12f] sm:$0xff]
      %v1517 = vld [vmem:[%s358 + $0x147] sm:$0xff]
      %v1518 = vld [vmem:[%s358 + $0x14f] sm:$0xff]
      %v1519 = vld [vmem:[%s358 + $0x167] sm:$0xff]
      %v1520 = vld [vmem:[%s358 + $0x16f] sm:$0xff]
      %v1521 = vld [vmem:[%s358 + $0x187] sm:$0xff]
      %v1522 = vld [vmem:[%s358 + $0x18f] sm:$0xff]
      %v1523 = vld [vmem:[%s358 + $0x1a7] sm:$0xff]
      %v1524 = vld [vmem:[%s358 + $0x1af] sm:$0xff]
      %v1525 = vld [vmem:[%s358 + $0x1c7] sm:$0xff]
      %v1526 = vld [vmem:[%s358 + $0x1cf] sm:$0xff]
      %v1527 = vld [vmem:[%s358 + $0x1e7] sm:$0xff]
      %v1528 = vld [vmem:[%s358 + $0x1ef] sm:$0xff]
      %s1529 = scalar_lea.vmem %s1, 12
      %v1530 = vld [vmem:[%s1529] sm:$0xf]
      %v1532 = vsel %vm279, %v1497, 0
      %v1535 = vsel %vm279, %v1498, 0
      %v1538 = vsel %vm279, %v1499, 0
      %v1541 = vsel %vm279, %v1500, 0
      %v1544 = vsel %vm279, %v1501, 0
      %v1547 = vsel %vm279, %v1502, 0
      %v1550 = vsel %vm279, %v1503, 0
      %v1553 = vsel %vm279, %v1504, 0
      %v1556 = vsel %vm279, %v1505, 0
      %v1559 = vsel %vm279, %v1506, 0
      %v1562 = vsel %vm279, %v1507, 0
      %v1565 = vsel %vm279, %v1508, 0
      %v1568 = vsel %vm279, %v1509, 0
      %v1571 = vsel %vm279, %v1510, 0
      %v1574 = vsel %vm279, %v1511, 0
      %v1577 = vsel %vm279, %v1512, 0
      %v1580 = vsel %vm279, %v1513, 0
      %v1583 = vsel %vm279, %v1514, 0
      %v1586 = vsel %vm279, %v1515, 0
      %v1589 = vsel %vm279, %v1516, 0
      %v1592 = vsel %vm279, %v1517, 0
      %v1595 = vsel %vm279, %v1518, 0
      %v1598 = vsel %vm279, %v1519, 0
      %v1601 = vsel %vm279, %v1520, 0
      %v1604 = vsel %vm279, %v1521, 0
      %v1607 = vsel %vm279, %v1522, 0
      %v1610 = vsel %vm279, %v1523, 0
      %v1613 = vsel %vm279, %v1524, 0
      %v1616 = vsel %vm279, %v1525, 0
      %v1619 = vsel %vm279, %v1526, 0
      %v1622 = vsel %vm279, %v1527, 0
      %v1625 = vsel %vm279, %v1528, 0
      %v1628 = vsel %vm554, %v1530, 0
      %1630 = vmatprep.subr.mxu0 0.0
      %1631 = vmatpush1.msra.mxu0 %v1628
      %1632 = vmatprep.subr.mxu0 0.0
      %1633 = vmatpush1.msra.mxu0 0.0
      %1634 = vmatprep.subr.mxu0 0.0
      %1635 = vmatpush1.msra.mxu0 0.0
      %1636 = vmatprep.subr.mxu0 0.0
      %1637 = vmatpush1.msra.mxu0 0.0
      %1638 = vmatprep.subr.mxu0 0.0
      %1639 = vmatpush1.msra.mxu0 0.0
      %1640 = vmatprep.subr.mxu0 0.0
      %1641 = vmatpush1.msra.mxu0 0.0
      %1642 = vmatprep.subr.mxu0 0.0
      %1643 = vmatpush1.msra.mxu0 0.0
      %1644 = vmatprep.subr.mxu0 0.0
      %1645 = vmatpush1.msra.mxu0 0.0
      %1646 = vmatprep.subr.mxu0 0.0
      %1647 = vmatpush1.msra.mxu0 0.0
      %1648 = vmatprep.subr.mxu0 0.0
      %1649 = vmatpush1.msra.mxu0 0.0
      %1650 = vmatprep.subr.mxu0 0.0
      %1651 = vmatpush1.msra.mxu0 0.0
      %1652 = vmatprep.subr.mxu0 0.0
      %1653 = vmatpush1.msra.mxu0 0.0
      %1654 = vmatprep.subr.mxu0 0.0
      %1655 = vmatpush1.msra.mxu0 0.0
      %1656 = vmatprep.subr.mxu0 0.0
      %1657 = vmatpush1.msra.mxu0 0.0
      %1658 = vmatprep.subr.mxu0 0.0
      %1659 = vmatpush1.msra.mxu0 0.0
      %1660 = vmatprep.subr.mxu0 0.0
      %1661 = vmatpush1.msra.mxu0 0.0
      %1662 = vmatprep.subr.mxu0 0.0
      %1663 = vmatpush1.msra.mxu0 0.0
      %1664 = vmatprep.subr.mxu0 0.0
      %1665 = vmatpush1.msra.mxu0 0.0
      %1666 = vmatprep.subr.mxu0 0.0
      %1667 = vmatpush1.msra.mxu0 0.0
      %1668 = vmatprep.subr.mxu0 0.0
      %1669 = vmatpush1.msra.mxu0 0.0
      %1670 = vmatprep.subr.mxu0 0.0
      %1671 = vmatpush1.msra.mxu0 0.0
      %1672 = vmatprep.subr.mxu0 0.0
      %1673 = vmatpush1.msra.mxu0 0.0
      %1674 = vmatprep.subr.mxu0 0.0
      %1675 = vmatpush1.msra.mxu0 0.0
      %1676 = vmatprep.subr.mxu0 0.0
      %1677 = vmatpush1.msra.mxu0 0.0
      %1678 = vmatprep.subr.mxu0 0.0
      %1679 = vmatpush1.msra.mxu0 0.0
      %1680 = vmatprep.subr.mxu0 0.0
      %1681 = vmatpush1.msra.mxu0 0.0
      %1682 = vmatprep.subr.mxu0 0.0
      %1683 = vmatpush1.msra.mxu0 0.0
      %1684 = vmatprep.subr.mxu0 0.0
      %1685 = vmatpush1.msra.mxu0 0.0
      %1686 = vmatprep.subr.mxu0 0.0
      %1687 = vmatpush1.msra.mxu0 0.0
      %1688 = vmatprep.subr.mxu0 0.0
      %1689 = vmatpush1.msra.mxu0 0.0
      %1690 = vmatprep.subr.mxu0 0.0
      %1691 = vmatpush1.msra.mxu0 0.0
      %1692 = vmatprep.subr.mxu0 0.0
      %1693 = vmatpush1.msra.mxu0 0.0
      %1694 = vmatprep.mubr.f32.mxu0 0.0
      %1695 = vmatmul.mubr.f32.gmra.mrb[0].mxu0 %v1532
      %v1696 = vpop.f32.mrb[0].mxu0
      %v1697 = vadd.f32 0.0, %v1696
      %v1698 = vpop.f32.mrb[0].mxu0
      %1699 = vmatprep.mubr.f32.mxu0 0.0
      %1700 = vmatmul.mubr.f32.gmra.mrb[0].mxu0 %v1535
      %v1701 = vpop.f32.mrb[0].mxu0
      %v1702 = vadd.f32 0.0, %v1701
      %v1703 = vpop.f32.mrb[0].mxu0
      %1704 = vmatprep.mubr.f32.mxu0 0.0
      %1705 = vmatmul.mubr.f32.gmra.mrb[0].mxu0 %v1538
      %v1706 = vpop.f32.mrb[0].mxu0
      %v1707 = vadd.f32 0.0, %v1706
      %v1708 = vpop.f32.mrb[0].mxu0
      %1709 = vmatprep.mubr.f32.mxu0 0.0
      %1710 = vmatmul.mubr.f32.gmra.mrb[0].mxu0 %v1541
      %v1711 = vpop.f32.mrb[0].mxu0
      %v1712 = vadd.f32 0.0, %v1711
      %v1713 = vpop.f32.mrb[0].mxu0
      %1714 = vmatprep.mubr.f32.mxu0 0.0
      %1715 = vmatmul.mubr.f32.gmra.mrb[0].mxu0 %v1544
      %v1716 = vpop.f32.mrb[0].mxu0
      %v1717 = vadd.f32 0.0, %v1716
      %v1718 = vpop.f32.mrb[0].mxu0
      %1719 = vmatprep.mubr.f32.mxu0 0.0
      %1720 = vmatmul.mubr.f32.gmra.mrb[0].mxu0 %v1547
      %v1721 = vpop.f32.mrb[0].mxu0
      %v1722 = vadd.f32 0.0, %v1721
      %v1723 = vpop.f32.mrb[0].mxu0
      %1724 = vmatprep.mubr.f32.mxu0 0.0
      %1725 = vmatmul.mubr.f32.gmra.mrb[0].mxu0 %v1550
      %v1726 = vpop.f32.mrb[0].mxu0
      %v1727 = vadd.f32 0.0, %v1726
      %v1728 = vpop.f32.mrb[0].mxu0
      %1729 = vmatprep.mubr.f32.mxu0 0.0
      %1730 = vmatmul.mubr.f32.gmra.mrb[0].mxu0 %v1553
      %v1731 = vpop.f32.mrb[0].mxu0
      %v1732 = vadd.f32 0.0, %v1731
      %v1733 = vpop.f32.mrb[0].mxu0
      %1734 = vmatprep.mubr.f32.mxu0 0.0
      %1735 = vmatmul.mubr.f32.gmra.mrb[0].mxu0 %v1556
      %v1736 = vpop.f32.mrb[0].mxu0
      %v1737 = vadd.f32 0.0, %v1736
      %v1738 = vpop.f32.mrb[0].mxu0
      %1739 = vmatprep.mubr.f32.mxu0 0.0
      %1740 = vmatmul.mubr.f32.gmra.mrb[0].mxu0 %v1559
      %v1741 = vpop.f32.mrb[0].mxu0
      %v1742 = vadd.f32 0.0, %v1741
      %v1743 = vpop.f32.mrb[0].mxu0
      %1744 = vmatprep.mubr.f32.mxu0 0.0
      %1745 = vmatmul.mubr.f32.gmra.mrb[0].mxu0 %v1562
      %v1746 = vpop.f32.mrb[0].mxu0
      %v1747 = vadd.f32 0.0, %v1746
      %v1748 = vpop.f32.mrb[0].mxu0
      %1749 = vmatprep.mubr.f32.mxu0 0.0
      %1750 = vmatmul.mubr.f32.gmra.mrb[0].mxu0 %v1565
      %v1751 = vpop.f32.mrb[0].mxu0
      %v1752 = vadd.f32 0.0, %v1751
      %v1753 = vpop.f32.mrb[0].mxu0
      %1754 = vmatprep.mubr.f32.mxu0 0.0
      %1755 = vmatmul.mubr.f32.gmra.mrb[0].mxu0 %v1568
      %v1756 = vpop.f32.mrb[0].mxu0
      %v1757 = vadd.f32 0.0, %v1756
      %v1758 = vpop.f32.mrb[0].mxu0
      %1759 = vmatprep.mubr.f32.mxu0 0.0
      %1760 = vmatmul.mubr.f32.gmra.mrb[0].mxu0 %v1571
      %v1761 = vpop.f32.mrb[0].mxu0
      %v1762 = vadd.f32 0.0, %v1761
      %v1763 = vpop.f32.mrb[0].mxu0
      %1764 = vmatprep.mubr.f32.mxu0 0.0
      %1765 = vmatmul.mubr.f32.gmra.mrb[0].mxu0 %v1574
      %v1766 = vpop.f32.mrb[0].mxu0
      %v1767 = vadd.f32 0.0, %v1766
      %v1768 = vpop.f32.mrb[0].mxu0
      %1769 = vmatprep.mubr.f32.mxu0 0.0
      %1770 = vmatmul.mubr.f32.gmra.mrb[0].mxu0 %v1577
      %v1771 = vpop.f32.mrb[0].mxu0
      %v1772 = vadd.f32 0.0, %v1771
      %v1773 = vpop.f32.mrb[0].mxu0
      %1774 = vmatprep.mubr.f32.mxu0 0.0
      %1775 = vmatmul.mubr.f32.gmra.mrb[0].mxu0 %v1580
      %v1776 = vpop.f32.mrb[0].mxu0
      %v1777 = vadd.f32 0.0, %v1776
      %v1778 = vpop.f32.mrb[0].mxu0
      %1779 = vmatprep.mubr.f32.mxu0 0.0
      %1780 = vmatmul.mubr.f32.gmra.mrb[0].mxu0 %v1583
      %v1781 = vpop.f32.mrb[0].mxu0
      %v1782 = vadd.f32 0.0, %v1781
      %v1783 = vpop.f32.mrb[0].mxu0
      %1784 = vmatprep.mubr.f32.mxu0 0.0
      %1785 = vmatmul.mubr.f32.gmra.mrb[0].mxu0 %v1586
      %v1786 = vpop.f32.mrb[0].mxu0
      %v1787 = vadd.f32 0.0, %v1786
      %v1788 = vpop.f32.mrb[0].mxu0
      %1789 = vmatprep.mubr.f32.mxu0 0.0
      %1790 = vmatmul.mubr.f32.gmra.mrb[0].mxu0 %v1589
      %v1791 = vpop.f32.mrb[0].mxu0
      %v1792 = vadd.f32 0.0, %v1791
      %v1793 = vpop.f32.mrb[0].mxu0
      %1794 = vmatprep.mubr.f32.mxu0 0.0
      %1795 = vmatmul.mubr.f32.gmra.mrb[0].mxu0 %v1592
      %v1796 = vpop.f32.mrb[0].mxu0
      %v1797 = vadd.f32 0.0, %v1796
      %v1798 = vpop.f32.mrb[0].mxu0
      %1799 = vmatprep.mubr.f32.mxu0 0.0
      %1800 = vmatmul.mubr.f32.gmra.mrb[0].mxu0 %v1595
      %v1801 = vpop.f32.mrb[0].mxu0
      %v1802 = vadd.f32 0.0, %v1801
      %v1803 = vpop.f32.mrb[0].mxu0
      %1804 = vmatprep.mubr.f32.mxu0 0.0
      %1805 = vmatmul.mubr.f32.gmra.mrb[0].mxu0 %v1598
      %v1806 = vpop.f32.mrb[0].mxu0
      %v1807 = vadd.f32 0.0, %v1806
      %v1808 = vpop.f32.mrb[0].mxu0
      %1809 = vmatprep.mubr.f32.mxu0 0.0
      %1810 = vmatmul.mubr.f32.gmra.mrb[0].mxu0 %v1601
      %v1811 = vpop.f32.mrb[0].mxu0
      %v1812 = vadd.f32 0.0, %v1811
      %v1813 = vpop.f32.mrb[0].mxu0
      %1814 = vmatprep.mubr.f32.mxu0 0.0
      %1815 = vmatmul.mubr.f32.gmra.mrb[0].mxu0 %v1604
      %v1816 = vpop.f32.mrb[0].mxu0
      %v1817 = vadd.f32 0.0, %v1816
      %v1818 = vpop.f32.mrb[0].mxu0
      %1819 = vmatprep.mubr.f32.mxu0 0.0
      %1820 = vmatmul.mubr.f32.gmra.mrb[0].mxu0 %v1607
      %v1821 = vpop.f32.mrb[0].mxu0
      %v1822 = vadd.f32 0.0, %v1821
      %v1823 = vpop.f32.mrb[0].mxu0
      %1824 = vmatprep.mubr.f32.mxu0 0.0
      %1825 = vmatmul.mubr.f32.gmra.mrb[0].mxu0 %v1610
      %v1826 = vpop.f32.mrb[0].mxu0
      %v1827 = vadd.f32 0.0, %v1826
      %v1828 = vpop.f32.mrb[0].mxu0
      %1829 = vmatprep.mubr.f32.mxu0 0.0
      %1830 = vmatmul.mubr.f32.gmra.mrb[0].mxu0 %v1613
      %v1831 = vpop.f32.mrb[0].mxu0
      %v1832 = vadd.f32 0.0, %v1831
      %v1833 = vpop.f32.mrb[0].mxu0
      %1834 = vmatprep.mubr.f32.mxu0 0.0
      %1835 = vmatmul.mubr.f32.gmra.mrb[0].mxu0 %v1616
      %v1836 = vpop.f32.mrb[0].mxu0
      %v1837 = vadd.f32 0.0, %v1836
      %v1838 = vpop.f32.mrb[0].mxu0
      %1839 = vmatprep.mubr.f32.mxu0 0.0
      %1840 = vmatmul.mubr.f32.gmra.mrb[0].mxu0 %v1619
      %v1841 = vpop.f32.mrb[0].mxu0
      %v1842 = vadd.f32 0.0, %v1841
      %v1843 = vpop.f32.mrb[0].mxu0
      %1844 = vmatprep.mubr.f32.mxu0 0.0
      %1845 = vmatmul.mubr.f32.gmra.mrb[0].mxu0 %v1622
      %v1846 = vpop.f32.mrb[0].mxu0
      %v1847 = vadd.f32 0.0, %v1846
      %v1848 = vpop.f32.mrb[0].mxu0
      %1849 = vmatprep.mubr.f32.mxu0 0.0
      %1850 = vmatmul.mubr.f32.gmra.mrb[0].mxu0 %v1625
      %v1851 = vpop.f32.mrb[0].mxu0
      %v1852 = vadd.f32 0.0, %v1851
      %v1853 = vpop.f32.mrb[0].mxu0
      %1854 = vdwg.mxu0
      %v1855 = vadd.f32 %v1465, %v1697
      %v1856 = vadd.f32 %v1466, %v1702
      %v1857 = vadd.f32 %v1467, %v1707
      %v1858 = vadd.f32 %v1468, %v1712
      %v1859 = vadd.f32 %v1469, %v1717
      %v1860 = vadd.f32 %v1470, %v1722
      %v1861 = vadd.f32 %v1471, %v1727
      %v1862 = vadd.f32 %v1472, %v1732
      %v1863 = vadd.f32 %v1473, %v1737
      %v1864 = vadd.f32 %v1474, %v1742
      %v1865 = vadd.f32 %v1475, %v1747
      %v1866 = vadd.f32 %v1476, %v1752
      %v1867 = vadd.f32 %v1477, %v1757
      %v1868 = vadd.f32 %v1478, %v1762
      %v1869 = vadd.f32 %v1479, %v1767
      %v1870 = vadd.f32 %v1480, %v1772
      %v1871 = vadd.f32 %v1481, %v1777
      %v1872 = vadd.f32 %v1482, %v1782
      %v1873 = vadd.f32 %v1483, %v1787
      %v1874 = vadd.f32 %v1484, %v1792
      %v1875 = vadd.f32 %v1485, %v1797
      %v1876 = vadd.f32 %v1486, %v1802
      %v1877 = vadd.f32 %v1487, %v1807
      %v1878 = vadd.f32 %v1488, %v1812
      %v1879 = vadd.f32 %v1489, %v1817
      %v1880 = vadd.f32 %v1490, %v1822
      %v1881 = vadd.f32 %v1491, %v1827
      %v1882 = vadd.f32 %v1492, %v1832
      %v1883 = vadd.f32 %v1493, %v1837
      %v1884 = vadd.f32 %v1494, %v1842
      %v1885 = vadd.f32 %v1495, %v1847
      %v1886 = vadd.f32 %v1496, %v1852
      %v1887 = vld [vmem:[%s358 + $0x8] sm:$0xff]
      %v1888 = vld [vmem:[%s358 + $0x10] sm:$0xff]
      %v1889 = vld [vmem:[%s358 + $0x28] sm:$0xff]
      %v1890 = vld [vmem:[%s358 + $0x30] sm:$0xff]
      %v1891 = vld [vmem:[%s358 + $0x48] sm:$0xff]
      %v1892 = vld [vmem:[%s358 + $0x50] sm:$0xff]
      %v1893 = vld [vmem:[%s358 + $0x68] sm:$0xff]
      %v1894 = vld [vmem:[%s358 + $0x70] sm:$0xff]
      %v1895 = vld [vmem:[%s358 + $0x88] sm:$0xff]
      %v1896 = vld [vmem:[%s358 + $0x90] sm:$0xff]
      %v1897 = vld [vmem:[%s358 + $0xa8] sm:$0xff]
      %v1898 = vld [vmem:[%s358 + $0xb0] sm:$0xff]
      %v1899 = vld [vmem:[%s358 + $0xc8] sm:$0xff]
      %v1900 = vld [vmem:[%s358 + $0xd0] sm:$0xff]
      %v1901 = vld [vmem:[%s358 + $0xe8] sm:$0xff]
      %v1902 = vld [vmem:[%s358 + $0xf0] sm:$0xff]
      %v1903 = vld [vmem:[%s358 + $0x108] sm:$0xff]
      %v1904 = vld [vmem:[%s358 + $0x110] sm:$0xff]
      %v1905 = vld [vmem:[%s358 + $0x128] sm:$0xff]
      %v1906 = vld [vmem:[%s358 + $0x130] sm:$0xff]
      %v1907 = vld [vmem:[%s358 + $0x148] sm:$0xff]
      %v1908 = vld [vmem:[%s358 + $0x150] sm:$0xff]
      %v1909 = vld [vmem:[%s358 + $0x168] sm:$0xff]
      %v1910 = vld [vmem:[%s358 + $0x170] sm:$0xff]
      %v1911 = vld [vmem:[%s358 + $0x188] sm:$0xff]
      %v1912 = vld [vmem:[%s358 + $0x190] sm:$0xff]
      %v1913 = vld [vmem:[%s358 + $0x1a8] sm:$0xff]
      %v1914 = vld [vmem:[%s358 + $0x1b0] sm:$0xff]
      %v1915 = vld [vmem:[%s358 + $0x1c8] sm:$0xff]
      %v1916 = vld [vmem:[%s358 + $0x1d0] sm:$0xff]
      %v1917 = vld [vmem:[%s358 + $0x1e8] sm:$0xff]
      %v1918 = vld [vmem:[%s358 + $0x1f0] sm:$0xff]
      %s1919 = scalar_lea.vmem %s1, 16
      %v1920 = vld [vmem:[%s1919] sm:$0xf]
      %v1922 = vsel %vm279, %v1887, 0
      %v1925 = vsel %vm279, %v1888, 0
      %v1928 = vsel %vm279, %v1889, 0
      %v1931 = vsel %vm279, %v1890, 0
      %v1934 = vsel %vm279, %v1891, 0
      %v1937 = vsel %vm279, %v1892, 0
      %v1940 = vsel %vm279, %v1893, 0
      %v1943 = vsel %vm279, %v1894, 0
      %v1946 = vsel %vm279, %v1895, 0
      %v1949 = vsel %vm279, %v1896, 0
      %v1952 = vsel %vm279, %v1897, 0
      %v1955 = vsel %vm279, %v1898, 0
      %v1958 = vsel %vm279, %v1899, 0
      %v1961 = vsel %vm279, %v1900, 0
      %v1964 = vsel %vm279, %v1901, 0
      %v1967 = vsel %vm279, %v1902, 0
      %v1970 = vsel %vm279, %v1903, 0
      %v1973 = vsel %vm279, %v1904, 0
      %v1976 = vsel %vm279, %v1905, 0
      %v1979 = vsel %vm279, %v1906, 0
      %v1982 = vsel %vm279, %v1907, 0
      %v1985 = vsel %vm279, %v1908, 0
      %v1988 = vsel %vm279, %v1909, 0
      %v1991 = vsel %vm279, %v1910, 0
      %v1994 = vsel %vm279, %v1911, 0
      %v1997 = vsel %vm279, %v1912, 0
      %v2000 = vsel %vm279, %v1913, 0
      %v2003 = vsel %vm279, %v1914, 0
      %v2006 = vsel %vm279, %v1915, 0
      %v2009 = vsel %vm279, %v1916, 0
      %v2012 = vsel %vm279, %v1917, 0
      %v2015 = vsel %vm279, %v1918, 0
      %v2018 = vsel %vm554, %v1920, 0
      %2020 = vmatprep.subr.mxu0 0.0
      %2021 = vmatpush1.msra.mxu0 %v2018
      %2022 = vmatprep.subr.mxu0 0.0
      %2023 = vmatpush1.msra.mxu0 0.0
      %2024 = vmatprep.subr.mxu0 0.0
      %2025 = vmatpush1.msra.mxu0 0.0
      %2026 = vmatprep.subr.mxu0 0.0
      %2027 = vmatpush1.msra.mxu0 0.0
      %2028 = vmatprep.subr.mxu0 0.0
      %2029 = vmatpush1.msra.mxu0 0.0
      %2030 = vmatprep.subr.mxu0 0.0
      %2031 = vmatpush1.msra.mxu0 0.0
      %2032 = vmatprep.subr.mxu0 0.0
      %2033 = vmatpush1.msra.mxu0 0.0
      %2034 = vmatprep.subr.mxu0 0.0
      %2035 = vmatpush1.msra.mxu0 0.0
      %2036 = vmatprep.subr.mxu0 0.0
      %2037 = vmatpush1.msra.mxu0 0.0
      %2038 = vmatprep.subr.mxu0 0.0
      %2039 = vmatpush1.msra.mxu0 0.0
      %2040 = vmatprep.subr.mxu0 0.0
      %2041 = vmatpush1.msra.mxu0 0.0
      %2042 = vmatprep.subr.mxu0 0.0
      %2043 = vmatpush1.msra.mxu0 0.0
      %2044 = vmatprep.subr.mxu0 0.0
      %2045 = vmatpush1.msra.mxu0 0.0
      %2046 = vmatprep.subr.mxu0 0.0
      %2047 = vmatpush1.msra.mxu0 0.0
      %2048 = vmatprep.subr.mxu0 0.0
      %2049 = vmatpush1.msra.mxu0 0.0
      %2050 = vmatprep.subr.mxu0 0.0
      %2051 = vmatpush1.msra.mxu0 0.0
      %2052 = vmatprep.subr.mxu0 0.0
      %2053 = vmatpush1.msra.mxu0 0.0
      %2054 = vmatprep.subr.mxu0 0.0
      %2055 = vmatpush1.msra.mxu0 0.0
      %2056 = vmatprep.subr.mxu0 0.0
      %2057 = vmatpush1.msra.mxu0 0.0
      %2058 = vmatprep.subr.mxu0 0.0
      %2059 = vmatpush1.msra.mxu0 0.0
      %2060 = vmatprep.subr.mxu0 0.0
      %2061 = vmatpush1.msra.mxu0 0.0
      %2062 = vmatprep.subr.mxu0 0.0
      %2063 = vmatpush1.msra.mxu0 0.0
      %2064 = vmatprep.subr.mxu0 0.0
      %2065 = vmatpush1.msra.mxu0 0.0
      %2066 = vmatprep.subr.mxu0 0.0
      %2067 = vmatpush1.msra.mxu0 0.0
      %2068 = vmatprep.subr.mxu0 0.0
      %2069 = vmatpush1.msra.mxu0 0.0
      %2070 = vmatprep.subr.mxu0 0.0
      %2071 = vmatpush1.msra.mxu0 0.0
      %2072 = vmatprep.subr.mxu0 0.0
      %2073 = vmatpush1.msra.mxu0 0.0
      %2074 = vmatprep.subr.mxu0 0.0
      %2075 = vmatpush1.msra.mxu0 0.0
      %2076 = vmatprep.subr.mxu0 0.0
      %2077 = vmatpush1.msra.mxu0 0.0
      %2078 = vmatprep.subr.mxu0 0.0
      %2079 = vmatpush1.msra.mxu0 0.0
      %2080 = vmatprep.subr.mxu0 0.0
      %2081 = vmatpush1.msra.mxu0 0.0
      %2082 = vmatprep.subr.mxu0 0.0
      %2083 = vmatpush1.msra.mxu0 0.0
      %2084 = vmatprep.mubr.f32.mxu0 0.0
      %2085 = vmatmul.mubr.f32.gmra.mrb[0].mxu0 %v1922
      %v2086 = vpop.f32.mrb[0].mxu0
      %v2087 = vadd.f32 0.0, %v2086
      %v2088 = vpop.f32.mrb[0].mxu0
      %2089 = vmatprep.mubr.f32.mxu0 0.0
      %2090 = vmatmul.mubr.f32.gmra.mrb[0].mxu0 %v1925
      %v2091 = vpop.f32.mrb[0].mxu0
      %v2092 = vadd.f32 0.0, %v2091
      %v2093 = vpop.f32.mrb[0].mxu0
      %2094 = vmatprep.mubr.f32.mxu0 0.0
      %2095 = vmatmul.mubr.f32.gmra.mrb[0].mxu0 %v1928
      %v2096 = vpop.f32.mrb[0].mxu0
      %v2097 = vadd.f32 0.0, %v2096
      %v2098 = vpop.f32.mrb[0].mxu0
      %2099 = vmatprep.mubr.f32.mxu0 0.0
      %2100 = vmatmul.mubr.f32.gmra.mrb[0].mxu0 %v1931
      %v2101 = vpop.f32.mrb[0].mxu0
      %v2102 = vadd.f32 0.0, %v2101
      %v2103 = vpop.f32.mrb[0].mxu0
      %2104 = vmatprep.mubr.f32.mxu0 0.0
      %2105 = vmatmul.mubr.f32.gmra.mrb[0].mxu0 %v1934
      %v2106 = vpop.f32.mrb[0].mxu0
      %v2107 = vadd.f32 0.0, %v2106
      %v2108 = vpop.f32.mrb[0].mxu0
      %2109 = vmatprep.mubr.f32.mxu0 0.0
      %2110 = vmatmul.mubr.f32.gmra.mrb[0].mxu0 %v1937
      %v2111 = vpop.f32.mrb[0].mxu0
      %v2112 = vadd.f32 0.0, %v2111
      %v2113 = vpop.f32.mrb[0].mxu0
      %2114 = vmatprep.mubr.f32.mxu0 0.0
      %2115 = vmatmul.mubr.f32.gmra.mrb[0].mxu0 %v1940
      %v2116 = vpop.f32.mrb[0].mxu0
      %v2117 = vadd.f32 0.0, %v2116
      %v2118 = vpop.f32.mrb[0].mxu0
      %2119 = vmatprep.mubr.f32.mxu0 0.0
      %2120 = vmatmul.mubr.f32.gmra.mrb[0].mxu0 %v1943
      %v2121 = vpop.f32.mrb[0].mxu0
      %v2122 = vadd.f32 0.0, %v2121
      %v2123 = vpop.f32.mrb[0].mxu0
      %2124 = vmatprep.mubr.f32.mxu0 0.0
      %2125 = vmatmul.mubr.f32.gmra.mrb[0].mxu0 %v1946
      %v2126 = vpop.f32.mrb[0].mxu0
      %v2127 = vadd.f32 0.0, %v2126
      %v2128 = vpop.f32.mrb[0].mxu0
      %2129 = vmatprep.mubr.f32.mxu0 0.0
      %2130 = vmatmul.mubr.f32.gmra.mrb[0].mxu0 %v1949
      %v2131 = vpop.f32.mrb[0].mxu0
      %v2132 = vadd.f32 0.0, %v2131
      %v2133 = vpop.f32.mrb[0].mxu0
      %2134 = vmatprep.mubr.f32.mxu0 0.0
      %2135 = vmatmul.mubr.f32.gmra.mrb[0].mxu0 %v1952
      %v2136 = vpop.f32.mrb[0].mxu0
      %v2137 = vadd.f32 0.0, %v2136
      %v2138 = vpop.f32.mrb[0].mxu0
      %2139 = vmatprep.mubr.f32.mxu0 0.0
      %2140 = vmatmul.mubr.f32.gmra.mrb[0].mxu0 %v1955
      %v2141 = vpop.f32.mrb[0].mxu0
      %v2142 = vadd.f32 0.0, %v2141
      %v2143 = vpop.f32.mrb[0].mxu0
      %2144 = vmatprep.mubr.f32.mxu0 0.0
      %2145 = vmatmul.mubr.f32.gmra.mrb[0].mxu0 %v1958
      %v2146 = vpop.f32.mrb[0].mxu0
      %v2147 = vadd.f32 0.0, %v2146
      %v2148 = vpop.f32.mrb[0].mxu0
      %2149 = vmatprep.mubr.f32.mxu0 0.0
      %2150 = vmatmul.mubr.f32.gmra.mrb[0].mxu0 %v1961
      %v2151 = vpop.f32.mrb[0].mxu0
      %v2152 = vadd.f32 0.0, %v2151
      %v2153 = vpop.f32.mrb[0].mxu0
      %2154 = vmatprep.mubr.f32.mxu0 0.0
      %2155 = vmatmul.mubr.f32.gmra.mrb[0].mxu0 %v1964
      %v2156 = vpop.f32.mrb[0].mxu0
      %v2157 = vadd.f32 0.0, %v2156
      %v2158 = vpop.f32.mrb[0].mxu0
      %2159 = vmatprep.mubr.f32.mxu0 0.0
      %2160 = vmatmul.mubr.f32.gmra.mrb[0].mxu0 %v1967
      %v2161 = vpop.f32.mrb[0].mxu0
      %v2162 = vadd.f32 0.0, %v2161
      %v2163 = vpop.f32.mrb[0].mxu0
      %2164 = vmatprep.mubr.f32.mxu0 0.0
      %2165 = vmatmul.mubr.f32.gmra.mrb[0].mxu0 %v1970
      %v2166 = vpop.f32.mrb[0].mxu0
      %v2167 = vadd.f32 0.0, %v2166
      %v2168 = vpop.f32.mrb[0].mxu0
      %2169 = vmatprep.mubr.f32.mxu0 0.0
      %2170 = vmatmul.mubr.f32.gmra.mrb[0].mxu0 %v1973
      %v2171 = vpop.f32.mrb[0].mxu0
      %v2172 = vadd.f32 0.0, %v2171
      %v2173 = vpop.f32.mrb[0].mxu0
      %2174 = vmatprep.mubr.f32.mxu0 0.0
      %2175 = vmatmul.mubr.f32.gmra.mrb[0].mxu0 %v1976
      %v2176 = vpop.f32.mrb[0].mxu0
      %v2177 = vadd.f32 0.0, %v2176
      %v2178 = vpop.f32.mrb[0].mxu0
      %2179 = vmatprep.mubr.f32.mxu0 0.0
      %2180 = vmatmul.mubr.f32.gmra.mrb[0].mxu0 %v1979
      %v2181 = vpop.f32.mrb[0].mxu0
      %v2182 = vadd.f32 0.0, %v2181
      %v2183 = vpop.f32.mrb[0].mxu0
      %2184 = vmatprep.mubr.f32.mxu0 0.0
      %2185 = vmatmul.mubr.f32.gmra.mrb[0].mxu0 %v1982
      %v2186 = vpop.f32.mrb[0].mxu0
      %v2187 = vadd.f32 0.0, %v2186
      %v2188 = vpop.f32.mrb[0].mxu0
      %2189 = vmatprep.mubr.f32.mxu0 0.0
      %2190 = vmatmul.mubr.f32.gmra.mrb[0].mxu0 %v1985
      %v2191 = vpop.f32.mrb[0].mxu0
      %v2192 = vadd.f32 0.0, %v2191
      %v2193 = vpop.f32.mrb[0].mxu0
      %2194 = vmatprep.mubr.f32.mxu0 0.0
      %2195 = vmatmul.mubr.f32.gmra.mrb[0].mxu0 %v1988
      %v2196 = vpop.f32.mrb[0].mxu0
      %v2197 = vadd.f32 0.0, %v2196
      %v2198 = vpop.f32.mrb[0].mxu0
      %2199 = vmatprep.mubr.f32.mxu0 0.0
      %2200 = vmatmul.mubr.f32.gmra.mrb[0].mxu0 %v1991
      %v2201 = vpop.f32.mrb[0].mxu0
      %v2202 = vadd.f32 0.0, %v2201
      %v2203 = vpop.f32.mrb[0].mxu0
      %2204 = vmatprep.mubr.f32.mxu0 0.0
      %2205 = vmatmul.mubr.f32.gmra.mrb[0].mxu0 %v1994
      %v2206 = vpop.f32.mrb[0].mxu0
      %v2207 = vadd.f32 0.0, %v2206
      %v2208 = vpop.f32.mrb[0].mxu0
      %2209 = vmatprep.mubr.f32.mxu0 0.0
      %2210 = vmatmul.mubr.f32.gmra.mrb[0].mxu0 %v1997
      %v2211 = vpop.f32.mrb[0].mxu0
      %v2212 = vadd.f32 0.0, %v2211
      %v2213 = vpop.f32.mrb[0].mxu0
      %2214 = vmatprep.mubr.f32.mxu0 0.0
      %2215 = vmatmul.mubr.f32.gmra.mrb[0].mxu0 %v2000
      %v2216 = vpop.f32.mrb[0].mxu0
      %v2217 = vadd.f32 0.0, %v2216
      %v2218 = vpop.f32.mrb[0].mxu0
      %2219 = vmatprep.mubr.f32.mxu0 0.0
      %2220 = vmatmul.mubr.f32.gmra.mrb[0].mxu0 %v2003
      %v2221 = vpop.f32.mrb[0].mxu0
      %v2222 = vadd.f32 0.0, %v2221
      %v2223 = vpop.f32.mrb[0].mxu0
      %2224 = vmatprep.mubr.f32.mxu0 0.0
      %2225 = vmatmul.mubr.f32.gmra.mrb[0].mxu0 %v2006
      %v2226 = vpop.f32.mrb[0].mxu0
      %v2227 = vadd.f32 0.0, %v2226
      %v2228 = vpop.f32.mrb[0].mxu0
      %2229 = vmatprep.mubr.f32.mxu0 0.0
      %2230 = vmatmul.mubr.f32.gmra.mrb[0].mxu0 %v2009
      %v2231 = vpop.f32.mrb[0].mxu0
      %v2232 = vadd.f32 0.0, %v2231
      %v2233 = vpop.f32.mrb[0].mxu0
      %2234 = vmatprep.mubr.f32.mxu0 0.0
      %2235 = vmatmul.mubr.f32.gmra.mrb[0].mxu0 %v2012
      %v2236 = vpop.f32.mrb[0].mxu0
      %v2237 = vadd.f32 0.0, %v2236
      %v2238 = vpop.f32.mrb[0].mxu0
      %2239 = vmatprep.mubr.f32.mxu0 0.0
      %2240 = vmatmul.mubr.f32.gmra.mrb[0].mxu0 %v2015
      %v2241 = vpop.f32.mrb[0].mxu0
      %v2242 = vadd.f32 0.0, %v2241
      %v2243 = vpop.f32.mrb[0].mxu0
      %2244 = vdwg.mxu0
      %v2245 = vadd.f32 %v1855, %v2087
      %v2246 = vadd.f32 %v1856, %v2092
      %v2247 = vadd.f32 %v1857, %v2097
      %v2248 = vadd.f32 %v1858, %v2102
      %v2249 = vadd.f32 %v1859, %v2107
      %v2250 = vadd.f32 %v1860, %v2112
      %v2251 = vadd.f32 %v1861, %v2117
      %v2252 = vadd.f32 %v1862, %v2122
      %v2253 = vadd.f32 %v1863, %v2127
      %v2254 = vadd.f32 %v1864, %v2132
      %v2255 = vadd.f32 %v1865, %v2137
      %v2256 = vadd.f32 %v1866, %v2142
      %v2257 = vadd.f32 %v1867, %v2147
      %v2258 = vadd.f32 %v1868, %v2152
      %v2259 = vadd.f32 %v1869, %v2157
      %v2260 = vadd.f32 %v1870, %v2162
      %v2261 = vadd.f32 %v1871, %v2167
      %v2262 = vadd.f32 %v1872, %v2172
      %v2263 = vadd.f32 %v1873, %v2177
      %v2264 = vadd.f32 %v1874, %v2182
      %v2265 = vadd.f32 %v1875, %v2187
      %v2266 = vadd.f32 %v1876, %v2192
      %v2267 = vadd.f32 %v1877, %v2197
      %v2268 = vadd.f32 %v1878, %v2202
      %v2269 = vadd.f32 %v1879, %v2207
      %v2270 = vadd.f32 %v1880, %v2212
      %v2271 = vadd.f32 %v1881, %v2217
      %v2272 = vadd.f32 %v1882, %v2222
      %v2273 = vadd.f32 %v1883, %v2227
      %v2274 = vadd.f32 %v1884, %v2232
      %v2275 = vadd.f32 %v1885, %v2237
      %v2276 = vadd.f32 %v1886, %v2242
      %v2277 = vld [vmem:[%s358 + $0x9] sm:$0xff]
      %v2278 = vld [vmem:[%s358 + $0x11] sm:$0xff]
      %v2279 = vld [vmem:[%s358 + $0x29] sm:$0xff]
      %v2280 = vld [vmem:[%s358 + $0x31] sm:$0xff]
      %v2281 = vld [vmem:[%s358 + $0x49] sm:$0xff]
      %v2282 = vld [vmem:[%s358 + $0x51] sm:$0xff]
      %v2283 = vld [vmem:[%s358 + $0x69] sm:$0xff]
      %v2284 = vld [vmem:[%s358 + $0x71] sm:$0xff]
      %v2285 = vld [vmem:[%s358 + $0x89] sm:$0xff]
      %v2286 = vld [vmem:[%s358 + $0x91] sm:$0xff]
      %v2287 = vld [vmem:[%s358 + $0xa9] sm:$0xff]
      %v2288 = vld [vmem:[%s358 + $0xb1] sm:$0xff]
      %v2289 = vld [vmem:[%s358 + $0xc9] sm:$0xff]
      %v2290 = vld [vmem:[%s358 + $0xd1] sm:$0xff]
      %v2291 = vld [vmem:[%s358 + $0xe9] sm:$0xff]
      %v2292 = vld [vmem:[%s358 + $0xf1] sm:$0xff]
      %v2293 = vld [vmem:[%s358 + $0x109] sm:$0xff]
      %v2294 = vld [vmem:[%s358 + $0x111] sm:$0xff]
      %v2295 = vld [vmem:[%s358 + $0x129] sm:$0xff]
      %v2296 = vld [vmem:[%s358 + $0x131] sm:$0xff]
      %v2297 = vld [vmem:[%s358 + $0x149] sm:$0xff]
      %v2298 = vld [vmem:[%s358 + $0x151] sm:$0xff]
      %v2299 = vld [vmem:[%s358 + $0x169] sm:$0xff]
      %v2300 = vld [vmem:[%s358 + $0x171] sm:$0xff]
      %v2301 = vld [vmem:[%s358 + $0x189] sm:$0xff]
      %v2302 = vld [vmem:[%s358 + $0x191] sm:$0xff]
      %v2303 = vld [vmem:[%s358 + $0x1a9] sm:$0xff]
      %v2304 = vld [vmem:[%s358 + $0x1b1] sm:$0xff]
      %v2305 = vld [vmem:[%s358 + $0x1c9] sm:$0xff]
      %v2306 = vld [vmem:[%s358 + $0x1d1] sm:$0xff]
      %v2307 = vld [vmem:[%s358 + $0x1e9] sm:$0xff]
      %v2308 = vld [vmem:[%s358 + $0x1f1] sm:$0xff]
      %s2309 = scalar_lea.vmem %s1, 20
      %v2310 = vld [vmem:[%s2309] sm:$0xf]
      %v2312 = vsel %vm279, %v2277, 0
      %v2315 = vsel %vm279, %v2278, 0
      %v2318 = vsel %vm279, %v2279, 0
      %v2321 = vsel %vm279, %v2280, 0
      %v2324 = vsel %vm279, %v2281, 0
      %v2327 = vsel %vm279, %v2282, 0
      %v2330 = vsel %vm279, %v2283, 0
      %v2333 = vsel %vm279, %v2284, 0
      %v2336 = vsel %vm279, %v2285, 0
      %v2339 = vsel %vm279, %v2286, 0
      %v2342 = vsel %vm279, %v2287, 0
      %v2345 = vsel %vm279, %v2288, 0
      %v2348 = vsel %vm279, %v2289, 0
      %v2351 = vsel %vm279, %v2290, 0
      %v2354 = vsel %vm279, %v2291, 0
      %v2357 = vsel %vm279, %v2292, 0
      %v2360 = vsel %vm279, %v2293, 0
      %v2363 = vsel %vm279, %v2294, 0
      %v2366 = vsel %vm279, %v2295, 0
      %v2369 = vsel %vm279, %v2296, 0
      %v2372 = vsel %vm279, %v2297, 0
      %v2375 = vsel %vm279, %v2298, 0
      %v2378 = vsel %vm279, %v2299, 0
      %v2381 = vsel %vm279, %v2300, 0
      %v2384 = vsel %vm279, %v2301, 0
      %v2387 = vsel %vm279, %v2302, 0
      %v2390 = vsel %vm279, %v2303, 0
      %v2393 = vsel %vm279, %v2304, 0
      %v2396 = vsel %vm279, %v2305, 0
      %v2399 = vsel %vm279, %v2306, 0
      %v2402 = vsel %vm279, %v2307, 0
      %v2405 = vsel %vm279, %v2308, 0
      %v2408 = vsel %vm554, %v2310, 0
      %2410 = vmatprep.subr.mxu0 0.0
      %2411 = vmatpush1.msra.mxu0 %v2408
      %2412 = vmatprep.subr.mxu0 0.0
      %2413 = vmatpush1.msra.mxu0 0.0
      %2414 = vmatprep.subr.mxu0 0.0
      %2415 = vmatpush1.msra.mxu0 0.0
      %2416 = vmatprep.subr.mxu0 0.0
      %2417 = vmatpush1.msra.mxu0 0.0
      %2418 = vmatprep.subr.mxu0 0.0
      %2419 = vmatpush1.msra.mxu0 0.0
      %2420 = vmatprep.subr.mxu0 0.0
      %2421 = vmatpush1.msra.mxu0 0.0
      %2422 = vmatprep.subr.mxu0 0.0
      %2423 = vmatpush1.msra.mxu0 0.0
      %2424 = vmatprep.subr.mxu0 0.0
      %2425 = vmatpush1.msra.mxu0 0.0
      %2426 = vmatprep.subr.mxu0 0.0
      %2427 = vmatpush1.msra.mxu0 0.0
      %2428 = vmatprep.subr.mxu0 0.0
      %2429 = vmatpush1.msra.mxu0 0.0
      %2430 = vmatprep.subr.mxu0 0.0
      %2431 = vmatpush1.msra.mxu0 0.0
      %2432 = vmatprep.subr.mxu0 0.0
      %2433 = vmatpush1.msra.mxu0 0.0
      %2434 = vmatprep.subr.mxu0 0.0
      %2435 = vmatpush1.msra.mxu0 0.0
      %2436 = vmatprep.subr.mxu0 0.0
      %2437 = vmatpush1.msra.mxu0 0.0
      %2438 = vmatprep.subr.mxu0 0.0
      %2439 = vmatpush1.msra.mxu0 0.0
      %2440 = vmatprep.subr.mxu0 0.0
      %2441 = vmatpush1.msra.mxu0 0.0
      %2442 = vmatprep.subr.mxu0 0.0
      %2443 = vmatpush1.msra.mxu0 0.0
      %2444 = vmatprep.subr.mxu0 0.0
      %2445 = vmatpush1.msra.mxu0 0.0
      %2446 = vmatprep.subr.mxu0 0.0
      %2447 = vmatpush1.msra.mxu0 0.0
      %2448 = vmatprep.subr.mxu0 0.0
      %2449 = vmatpush1.msra.mxu0 0.0
      %2450 = vmatprep.subr.mxu0 0.0
      %2451 = vmatpush1.msra.mxu0 0.0
      %2452 = vmatprep.subr.mxu0 0.0
      %2453 = vmatpush1.msra.mxu0 0.0
      %2454 = vmatprep.subr.mxu0 0.0
      %2455 = vmatpush1.msra.mxu0 0.0
      %2456 = vmatprep.subr.mxu0 0.0
      %2457 = vmatpush1.msra.mxu0 0.0
      %2458 = vmatprep.subr.mxu0 0.0
      %2459 = vmatpush1.msra.mxu0 0.0
      %2460 = vmatprep.subr.mxu0 0.0
      %2461 = vmatpush1.msra.mxu0 0.0
      %2462 = vmatprep.subr.mxu0 0.0
      %2463 = vmatpush1.msra.mxu0 0.0
      %2464 = vmatprep.subr.mxu0 0.0
      %2465 = vmatpush1.msra.mxu0 0.0
      %2466 = vmatprep.subr.mxu0 0.0
      %2467 = vmatpush1.msra.mxu0 0.0
      %2468 = vmatprep.subr.mxu0 0.0
      %2469 = vmatpush1.msra.mxu0 0.0
      %2470 = vmatprep.subr.mxu0 0.0
      %2471 = vmatpush1.msra.mxu0 0.0
      %2472 = vmatprep.subr.mxu0 0.0
      %2473 = vmatpush1.msra.mxu0 0.0
      %2474 = vmatprep.mubr.f32.mxu0 0.0
      %2475 = vmatmul.mubr.f32.gmra.mrb[0].mxu0 %v2312
      %v2476 = vpop.f32.mrb[0].mxu0
      %v2477 = vadd.f32 0.0, %v2476
      %v2478 = vpop.f32.mrb[0].mxu0
      %2479 = vmatprep.mubr.f32.mxu0 0.0
      %2480 = vmatmul.mubr.f32.gmra.mrb[0].mxu0 %v2315
      %v2481 = vpop.f32.mrb[0].mxu0
      %v2482 = vadd.f32 0.0, %v2481
      %v2483 = vpop.f32.mrb[0].mxu0
      %2484 = vmatprep.mubr.f32.mxu0 0.0
      %2485 = vmatmul.mubr.f32.gmra.mrb[0].mxu0 %v2318
      %v2486 = vpop.f32.mrb[0].mxu0
      %v2487 = vadd.f32 0.0, %v2486
      %v2488 = vpop.f32.mrb[0].mxu0
      %2489 = vmatprep.mubr.f32.mxu0 0.0
      %2490 = vmatmul.mubr.f32.gmra.mrb[0].mxu0 %v2321
      %v2491 = vpop.f32.mrb[0].mxu0
      %v2492 = vadd.f32 0.0, %v2491
      %v2493 = vpop.f32.mrb[0].mxu0
      %2494 = vmatprep.mubr.f32.mxu0 0.0
      %2495 = vmatmul.mubr.f32.gmra.mrb[0].mxu0 %v2324
      %v2496 = vpop.f32.mrb[0].mxu0
      %v2497 = vadd.f32 0.0, %v2496
      %v2498 = vpop.f32.mrb[0].mxu0
      %2499 = vmatprep.mubr.f32.mxu0 0.0
      %2500 = vmatmul.mubr.f32.gmra.mrb[0].mxu0 %v2327
      %v2501 = vpop.f32.mrb[0].mxu0
      %v2502 = vadd.f32 0.0, %v2501
      %v2503 = vpop.f32.mrb[0].mxu0
      %2504 = vmatprep.mubr.f32.mxu0 0.0
      %2505 = vmatmul.mubr.f32.gmra.mrb[0].mxu0 %v2330
      %v2506 = vpop.f32.mrb[0].mxu0
      %v2507 = vadd.f32 0.0, %v2506
      %v2508 = vpop.f32.mrb[0].mxu0
      %2509 = vmatprep.mubr.f32.mxu0 0.0
      %2510 = vmatmul.mubr.f32.gmra.mrb[0].mxu0 %v2333
      %v2511 = vpop.f32.mrb[0].mxu0
      %v2512 = vadd.f32 0.0, %v2511
      %v2513 = vpop.f32.mrb[0].mxu0
      %2514 = vmatprep.mubr.f32.mxu0 0.0
      %2515 = vmatmul.mubr.f32.gmra.mrb[0].mxu0 %v2336
      %v2516 = vpop.f32.mrb[0].mxu0
      %v2517 = vadd.f32 0.0, %v2516
      %v2518 = vpop.f32.mrb[0].mxu0
      %2519 = vmatprep.mubr.f32.mxu0 0.0
      %2520 = vmatmul.mubr.f32.gmra.mrb[0].mxu0 %v2339
      %v2521 = vpop.f32.mrb[0].mxu0
      %v2522 = vadd.f32 0.0, %v2521
      %v2523 = vpop.f32.mrb[0].mxu0
      %2524 = vmatprep.mubr.f32.mxu0 0.0
      %2525 = vmatmul.mubr.f32.gmra.mrb[0].mxu0 %v2342
      %v2526 = vpop.f32.mrb[0].mxu0
      %v2527 = vadd.f32 0.0, %v2526
      %v2528 = vpop.f32.mrb[0].mxu0
      %2529 = vmatprep.mubr.f32.mxu0 0.0
      %2530 = vmatmul.mubr.f32.gmra.mrb[0].mxu0 %v2345
      %v2531 = vpop.f32.mrb[0].mxu0
      %v2532 = vadd.f32 0.0, %v2531
      %v2533 = vpop.f32.mrb[0].mxu0
      %2534 = vmatprep.mubr.f32.mxu0 0.0
      %2535 = vmatmul.mubr.f32.gmra.mrb[0].mxu0 %v2348
      %v2536 = vpop.f32.mrb[0].mxu0
      %v2537 = vadd.f32 0.0, %v2536
      %v2538 = vpop.f32.mrb[0].mxu0
      %2539 = vmatprep.mubr.f32.mxu0 0.0
      %2540 = vmatmul.mubr.f32.gmra.mrb[0].mxu0 %v2351
      %v2541 = vpop.f32.mrb[0].mxu0
      %v2542 = vadd.f32 0.0, %v2541
      %v2543 = vpop.f32.mrb[0].mxu0
      %2544 = vmatprep.mubr.f32.mxu0 0.0
      %2545 = vmatmul.mubr.f32.gmra.mrb[0].mxu0 %v2354
      %v2546 = vpop.f32.mrb[0].mxu0
      %v2547 = vadd.f32 0.0, %v2546
      %v2548 = vpop.f32.mrb[0].mxu0
      %2549 = vmatprep.mubr.f32.mxu0 0.0
      %2550 = vmatmul.mubr.f32.gmra.mrb[0].mxu0 %v2357
      %v2551 = vpop.f32.mrb[0].mxu0
      %v2552 = vadd.f32 0.0, %v2551
      %v2553 = vpop.f32.mrb[0].mxu0
      %2554 = vmatprep.mubr.f32.mxu0 0.0
      %2555 = vmatmul.mubr.f32.gmra.mrb[0].mxu0 %v2360
      %v2556 = vpop.f32.mrb[0].mxu0
      %v2557 = vadd.f32 0.0, %v2556
      %v2558 = vpop.f32.mrb[0].mxu0
      %2559 = vmatprep.mubr.f32.mxu0 0.0
      %2560 = vmatmul.mubr.f32.gmra.mrb[0].mxu0 %v2363
      %v2561 = vpop.f32.mrb[0].mxu0
      %v2562 = vadd.f32 0.0, %v2561
      %v2563 = vpop.f32.mrb[0].mxu0
      %2564 = vmatprep.mubr.f32.mxu0 0.0
      %2565 = vmatmul.mubr.f32.gmra.mrb[0].mxu0 %v2366
      %v2566 = vpop.f32.mrb[0].mxu0
      %v2567 = vadd.f32 0.0, %v2566
      %v2568 = vpop.f32.mrb[0].mxu0
      %2569 = vmatprep.mubr.f32.mxu0 0.0
      %2570 = vmatmul.mubr.f32.gmra.mrb[0].mxu0 %v2369
      %v2571 = vpop.f32.mrb[0].mxu0
      %v2572 = vadd.f32 0.0, %v2571
      %v2573 = vpop.f32.mrb[0].mxu0
      %2574 = vmatprep.mubr.f32.mxu0 0.0
      %2575 = vmatmul.mubr.f32.gmra.mrb[0].mxu0 %v2372
      %v2576 = vpop.f32.mrb[0].mxu0
      %v2577 = vadd.f32 0.0, %v2576
      %v2578 = vpop.f32.mrb[0].mxu0
      %2579 = vmatprep.mubr.f32.mxu0 0.0
      %2580 = vmatmul.mubr.f32.gmra.mrb[0].mxu0 %v2375
      %v2581 = vpop.f32.mrb[0].mxu0
      %v2582 = vadd.f32 0.0, %v2581
      %v2583 = vpop.f32.mrb[0].mxu0
      %2584 = vmatprep.mubr.f32.mxu0 0.0
      %2585 = vmatmul.mubr.f32.gmra.mrb[0].mxu0 %v2378
      %v2586 = vpop.f32.mrb[0].mxu0
      %v2587 = vadd.f32 0.0, %v2586
      %v2588 = vpop.f32.mrb[0].mxu0
      %2589 = vmatprep.mubr.f32.mxu0 0.0
      %2590 = vmatmul.mubr.f32.gmra.mrb[0].mxu0 %v2381
      %v2591 = vpop.f32.mrb[0].mxu0
      %v2592 = vadd.f32 0.0, %v2591
      %v2593 = vpop.f32.mrb[0].mxu0
      %2594 = vmatprep.mubr.f32.mxu0 0.0
      %2595 = vmatmul.mubr.f32.gmra.mrb[0].mxu0 %v2384
      %v2596 = vpop.f32.mrb[0].mxu0
      %v2597 = vadd.f32 0.0, %v2596
      %v2598 = vpop.f32.mrb[0].mxu0
      %2599 = vmatprep.mubr.f32.mxu0 0.0
      %2600 = vmatmul.mubr.f32.gmra.mrb[0].mxu0 %v2387
      %v2601 = vpop.f32.mrb[0].mxu0
      %v2602 = vadd.f32 0.0, %v2601
      %v2603 = vpop.f32.mrb[0].mxu0
      %2604 = vmatprep.mubr.f32.mxu0 0.0
      %2605 = vmatmul.mubr.f32.gmra.mrb[0].mxu0 %v2390
      %v2606 = vpop.f32.mrb[0].mxu0
      %v2607 = vadd.f32 0.0, %v2606
      %v2608 = vpop.f32.mrb[0].mxu0
      %2609 = vmatprep.mubr.f32.mxu0 0.0
      %2610 = vmatmul.mubr.f32.gmra.mrb[0].mxu0 %v2393
      %v2611 = vpop.f32.mrb[0].mxu0
      %v2612 = vadd.f32 0.0, %v2611
      %v2613 = vpop.f32.mrb[0].mxu0
      %2614 = vmatprep.mubr.f32.mxu0 0.0
      %2615 = vmatmul.mubr.f32.gmra.mrb[0].mxu0 %v2396
      %v2616 = vpop.f32.mrb[0].mxu0
      %v2617 = vadd.f32 0.0, %v2616
      %v2618 = vpop.f32.mrb[0].mxu0
      %2619 = vmatprep.mubr.f32.mxu0 0.0
      %2620 = vmatmul.mubr.f32.gmra.mrb[0].mxu0 %v2399
      %v2621 = vpop.f32.mrb[0].mxu0
      %v2622 = vadd.f32 0.0, %v2621
      %v2623 = vpop.f32.mrb[0].mxu0
      %2624 = vmatprep.mubr.f32.mxu0 0.0
      %2625 = vmatmul.mubr.f32.gmra.mrb[0].mxu0 %v2402
      %v2626 = vpop.f32.mrb[0].mxu0
      %v2627 = vadd.f32 0.0, %v2626
      %v2628 = vpop.f32.mrb[0].mxu0
      %2629 = vmatprep.mubr.f32.mxu0 0.0
      %2630 = vmatmul.mubr.f32.gmra.mrb[0].mxu0 %v2405
      %v2631 = vpop.f32.mrb[0].mxu0
      %v2632 = vadd.f32 0.0, %v2631
      %v2633 = vpop.f32.mrb[0].mxu0
      %2634 = vdwg.mxu0
      %v2635 = vadd.f32 %v2245, %v2477
      %v2636 = vadd.f32 %v2246, %v2482
      %v2637 = vadd.f32 %v2247, %v2487
      %v2638 = vadd.f32 %v2248, %v2492
      %v2639 = vadd.f32 %v2249, %v2497
      %v2640 = vadd.f32 %v2250, %v2502
      %v2641 = vadd.f32 %v2251, %v2507
      %v2642 = vadd.f32 %v2252, %v2512
      %v2643 = vadd.f32 %v2253, %v2517
      %v2644 = vadd.f32 %v2254, %v2522
      %v2645 = vadd.f32 %v2255, %v2527
      %v2646 = vadd.f32 %v2256, %v2532
      %v2647 = vadd.f32 %v2257, %v2537
      %v2648 = vadd.f32 %v2258, %v2542
      %v2649 = vadd.f32 %v2259, %v2547
      %v2650 = vadd.f32 %v2260, %v2552
      %v2651 = vadd.f32 %v2261, %v2557
      %v2652 = vadd.f32 %v2262, %v2562
      %v2653 = vadd.f32 %v2263, %v2567
      %v2654 = vadd.f32 %v2264, %v2572
      %v2655 = vadd.f32 %v2265, %v2577
      %v2656 = vadd.f32 %v2266, %v2582
      %v2657 = vadd.f32 %v2267, %v2587
      %v2658 = vadd.f32 %v2268, %v2592
      %v2659 = vadd.f32 %v2269, %v2597
      %v2660 = vadd.f32 %v2270, %v2602
      %v2661 = vadd.f32 %v2271, %v2607
      %v2662 = vadd.f32 %v2272, %v2612
      %v2663 = vadd.f32 %v2273, %v2617
      %v2664 = vadd.f32 %v2274, %v2622
      %v2665 = vadd.f32 %v2275, %v2627
      %v2666 = vadd.f32 %v2276, %v2632
      %s2667 = scalar_lea.vmem [#allocation2], 64
      %v2668 = vld [vmem:[%s2667 + $0x7] sm:$0xff]
      %v2669 = vld [vmem:[%s2667 + $0xf] sm:$0xff]
      %v2670 = vld [vmem:[%s2667 + $0x27] sm:$0xff]
      %v2671 = vld [vmem:[%s2667 + $0x2f] sm:$0xff]
      %v2672 = vld [vmem:[%s2667 + $0x47] sm:$0xff]
      %v2673 = vld [vmem:[%s2667 + $0x4f] sm:$0xff]
      %v2674 = vld [vmem:[%s2667 + $0x67] sm:$0xff]
      %v2675 = vld [vmem:[%s2667 + $0x6f] sm:$0xff]
      %v2676 = vld [vmem:[%s2667 + $0x87] sm:$0xff]
      %v2677 = vld [vmem:[%s2667 + $0x8f] sm:$0xff]
      %v2678 = vld [vmem:[%s2667 + $0xa7] sm:$0xff]
      %v2679 = vld [vmem:[%s2667 + $0xaf] sm:$0xff]
      %v2680 = vld [vmem:[%s2667 + $0xc7] sm:$0xff]
      %v2681 = vld [vmem:[%s2667 + $0xcf] sm:$0xff]
      %v2682 = vld [vmem:[%s2667 + $0xe7] sm:$0xff]
      %v2683 = vld [vmem:[%s2667 + $0xef] sm:$0xff]
      %v2684 = vld [vmem:[%s2667 + $0x107] sm:$0xff]
      %v2685 = vld [vmem:[%s2667 + $0x10f] sm:$0xff]
      %v2686 = vld [vmem:[%s2667 + $0x127] sm:$0xff]
      %v2687 = vld [vmem:[%s2667 + $0x12f] sm:$0xff]
      %v2688 = vld [vmem:[%s2667 + $0x147] sm:$0xff]
      %v2689 = vld [vmem:[%s2667 + $0x14f] sm:$0xff]
      %v2690 = vld [vmem:[%s2667 + $0x167] sm:$0xff]
      %v2691 = vld [vmem:[%s2667 + $0x16f] sm:$0xff]
      %v2692 = vld [vmem:[%s2667 + $0x187] sm:$0xff]
      %v2693 = vld [vmem:[%s2667 + $0x18f] sm:$0xff]
      %v2694 = vld [vmem:[%s2667 + $0x1a7] sm:$0xff]
      %v2695 = vld [vmem:[%s2667 + $0x1af] sm:$0xff]
      %v2696 = vld [vmem:[%s2667 + $0x1c7] sm:$0xff]
      %v2697 = vld [vmem:[%s2667 + $0x1cf] sm:$0xff]
      %v2698 = vld [vmem:[%s2667 + $0x1e7] sm:$0xff]
      %v2699 = vld [vmem:[%s2667 + $0x1ef] sm:$0xff]
      %s2700 = scalar_lea.vmem %s1, 24
      %v2701 = vld [vmem:[%s2700] sm:$0xf]
      %v2703 = vsel %vm279, %v2668, 0
      %v2706 = vsel %vm279, %v2669, 0
      %v2709 = vsel %vm279, %v2670, 0
      %v2712 = vsel %vm279, %v2671, 0
      %v2715 = vsel %vm279, %v2672, 0
      %v2718 = vsel %vm279, %v2673, 0
      %v2721 = vsel %vm279, %v2674, 0
      %v2724 = vsel %vm279, %v2675, 0
      %v2727 = vsel %vm279, %v2676, 0
      %v2730 = vsel %vm279, %v2677, 0
      %v2733 = vsel %vm279, %v2678, 0
      %v2736 = vsel %vm279, %v2679, 0
      %v2739 = vsel %vm279, %v2680, 0
      %v2742 = vsel %vm279, %v2681, 0
      %v2745 = vsel %vm279, %v2682, 0
      %v2748 = vsel %vm279, %v2683, 0
      %v2751 = vsel %vm279, %v2684, 0
      %v2754 = vsel %vm279, %v2685, 0
      %v2757 = vsel %vm279, %v2686, 0
      %v2760 = vsel %vm279, %v2687, 0
      %v2763 = vsel %vm279, %v2688, 0
      %v2766 = vsel %vm279, %v2689, 0
      %v2769 = vsel %vm279, %v2690, 0
      %v2772 = vsel %vm279, %v2691, 0
      %v2775 = vsel %vm279, %v2692, 0
      %v2778 = vsel %vm279, %v2693, 0
      %v2781 = vsel %vm279, %v2694, 0
      %v2784 = vsel %vm279, %v2695, 0
      %v2787 = vsel %vm279, %v2696, 0
      %v2790 = vsel %vm279, %v2697, 0
      %v2793 = vsel %vm279, %v2698, 0
      %v2796 = vsel %vm279, %v2699, 0
      %v2799 = vsel %vm554, %v2701, 0
      %2801 = vmatprep.subr.mxu0 0.0
      %2802 = vmatpush1.msra.mxu0 %v2799
      %2803 = vmatprep.subr.mxu0 0.0
      %2804 = vmatpush1.msra.mxu0 0.0
      %2805 = vmatprep.subr.mxu0 0.0
      %2806 = vmatpush1.msra.mxu0 0.0
      %2807 = vmatprep.subr.mxu0 0.0
      %2808 = vmatpush1.msra.mxu0 0.0
      %2809 = vmatprep.subr.mxu0 0.0
      %2810 = vmatpush1.msra.mxu0 0.0
      %2811 = vmatprep.subr.mxu0 0.0
      %2812 = vmatpush1.msra.mxu0 0.0
      %2813 = vmatprep.subr.mxu0 0.0
      %2814 = vmatpush1.msra.mxu0 0.0
      %2815 = vmatprep.subr.mxu0 0.0
      %2816 = vmatpush1.msra.mxu0 0.0
      %2817 = vmatprep.subr.mxu0 0.0
      %2818 = vmatpush1.msra.mxu0 0.0
      %2819 = vmatprep.subr.mxu0 0.0
      %2820 = vmatpush1.msra.mxu0 0.0
      %2821 = vmatprep.subr.mxu0 0.0
      %2822 = vmatpush1.msra.mxu0 0.0
      %2823 = vmatprep.subr.mxu0 0.0
      %2824 = vmatpush1.msra.mxu0 0.0
      %2825 = vmatprep.subr.mxu0 0.0
      %2826 = vmatpush1.msra.mxu0 0.0
      %2827 = vmatprep.subr.mxu0 0.0
      %2828 = vmatpush1.msra.mxu0 0.0
      %2829 = vmatprep.subr.mxu0 0.0
      %2830 = vmatpush1.msra.mxu0 0.0
      %2831 = vmatprep.subr.mxu0 0.0
      %2832 = vmatpush1.msra.mxu0 0.0
      %2833 = vmatprep.subr.mxu0 0.0
      %2834 = vmatpush1.msra.mxu0 0.0
      %2835 = vmatprep.subr.mxu0 0.0
      %2836 = vmatpush1.msra.mxu0 0.0
      %2837 = vmatprep.subr.mxu0 0.0
      %2838 = vmatpush1.msra.mxu0 0.0
      %2839 = vmatprep.subr.mxu0 0.0
      %2840 = vmatpush1.msra.mxu0 0.0
      %2841 = vmatprep.subr.mxu0 0.0
      %2842 = vmatpush1.msra.mxu0 0.0
      %2843 = vmatprep.subr.mxu0 0.0
      %2844 = vmatpush1.msra.mxu0 0.0
      %2845 = vmatprep.subr.mxu0 0.0
      %2846 = vmatpush1.msra.mxu0 0.0
      %2847 = vmatprep.subr.mxu0 0.0
      %2848 = vmatpush1.msra.mxu0 0.0
      %2849 = vmatprep.subr.mxu0 0.0
      %2850 = vmatpush1.msra.mxu0 0.0
      %2851 = vmatprep.subr.mxu0 0.0
      %2852 = vmatpush1.msra.mxu0 0.0
      %2853 = vmatprep.subr.mxu0 0.0
      %2854 = vmatpush1.msra.mxu0 0.0
      %2855 = vmatprep.subr.mxu0 0.0
      %2856 = vmatpush1.msra.mxu0 0.0
      %2857 = vmatprep.subr.mxu0 0.0
      %2858 = vmatpush1.msra.mxu0 0.0
      %2859 = vmatprep.subr.mxu0 0.0
      %2860 = vmatpush1.msra.mxu0 0.0
      %2861 = vmatprep.subr.mxu0 0.0
      %2862 = vmatpush1.msra.mxu0 0.0
      %2863 = vmatprep.subr.mxu0 0.0
      %2864 = vmatpush1.msra.mxu0 0.0
      %2865 = vmatprep.mubr.f32.mxu0 0.0
      %2866 = vmatmul.mubr.f32.gmra.mrb[0].mxu0 %v2703
      %v2867 = vpop.f32.mrb[0].mxu0
      %v2868 = vadd.f32 0.0, %v2867
      %v2869 = vpop.f32.mrb[0].mxu0
      %2870 = vmatprep.mubr.f32.mxu0 0.0
      %2871 = vmatmul.mubr.f32.gmra.mrb[0].mxu0 %v2706
      %v2872 = vpop.f32.mrb[0].mxu0
      %v2873 = vadd.f32 0.0, %v2872
      %v2874 = vpop.f32.mrb[0].mxu0
      %2875 = vmatprep.mubr.f32.mxu0 0.0
      %2876 = vmatmul.mubr.f32.gmra.mrb[0].mxu0 %v2709
      %v2877 = vpop.f32.mrb[0].mxu0
      %v2878 = vadd.f32 0.0, %v2877
      %v2879 = vpop.f32.mrb[0].mxu0
      %2880 = vmatprep.mubr.f32.mxu0 0.0
      %2881 = vmatmul.mubr.f32.gmra.mrb[0].mxu0 %v2712
      %v2882 = vpop.f32.mrb[0].mxu0
      %v2883 = vadd.f32 0.0, %v2882
      %v2884 = vpop.f32.mrb[0].mxu0
      %2885 = vmatprep.mubr.f32.mxu0 0.0
      %2886 = vmatmul.mubr.f32.gmra.mrb[0].mxu0 %v2715
      %v2887 = vpop.f32.mrb[0].mxu0
      %v2888 = vadd.f32 0.0, %v2887
      %v2889 = vpop.f32.mrb[0].mxu0
      %2890 = vmatprep.mubr.f32.mxu0 0.0
      %2891 = vmatmul.mubr.f32.gmra.mrb[0].mxu0 %v2718
      %v2892 = vpop.f32.mrb[0].mxu0
      %v2893 = vadd.f32 0.0, %v2892
      %v2894 = vpop.f32.mrb[0].mxu0
      %2895 = vmatprep.mubr.f32.mxu0 0.0
      %2896 = vmatmul.mubr.f32.gmra.mrb[0].mxu0 %v2721
      %v2897 = vpop.f32.mrb[0].mxu0
      %v2898 = vadd.f32 0.0, %v2897
      %v2899 = vpop.f32.mrb[0].mxu0
      %2900 = vmatprep.mubr.f32.mxu0 0.0
      %2901 = vmatmul.mubr.f32.gmra.mrb[0].mxu0 %v2724
      %v2902 = vpop.f32.mrb[0].mxu0
      %v2903 = vadd.f32 0.0, %v2902
      %v2904 = vpop.f32.mrb[0].mxu0
      %2905 = vmatprep.mubr.f32.mxu0 0.0
      %2906 = vmatmul.mubr.f32.gmra.mrb[0].mxu0 %v2727
      %v2907 = vpop.f32.mrb[0].mxu0
      %v2908 = vadd.f32 0.0, %v2907
      %v2909 = vpop.f32.mrb[0].mxu0
      %2910 = vmatprep.mubr.f32.mxu0 0.0
      %2911 = vmatmul.mubr.f32.gmra.mrb[0].mxu0 %v2730
      %v2912 = vpop.f32.mrb[0].mxu0
      %v2913 = vadd.f32 0.0, %v2912
      %v2914 = vpop.f32.mrb[0].mxu0
      %2915 = vmatprep.mubr.f32.mxu0 0.0
      %2916 = vmatmul.mubr.f32.gmra.mrb[0].mxu0 %v2733
      %v2917 = vpop.f32.mrb[0].mxu0
      %v2918 = vadd.f32 0.0, %v2917
      %v2919 = vpop.f32.mrb[0].mxu0
      %2920 = vmatprep.mubr.f32.mxu0 0.0
      %2921 = vmatmul.mubr.f32.gmra.mrb[0].mxu0 %v2736
      %v2922 = vpop.f32.mrb[0].mxu0
      %v2923 = vadd.f32 0.0, %v2922
      %v2924 = vpop.f32.mrb[0].mxu0
      %2925 = vmatprep.mubr.f32.mxu0 0.0
      %2926 = vmatmul.mubr.f32.gmra.mrb[0].mxu0 %v2739
      %v2927 = vpop.f32.mrb[0].mxu0
      %v2928 = vadd.f32 0.0, %v2927
      %v2929 = vpop.f32.mrb[0].mxu0
      %2930 = vmatprep.mubr.f32.mxu0 0.0
      %2931 = vmatmul.mubr.f32.gmra.mrb[0].mxu0 %v2742
      %v2932 = vpop.f32.mrb[0].mxu0
      %v2933 = vadd.f32 0.0, %v2932
      %v2934 = vpop.f32.mrb[0].mxu0
      %2935 = vmatprep.mubr.f32.mxu0 0.0
      %2936 = vmatmul.mubr.f32.gmra.mrb[0].mxu0 %v2745
      %v2937 = vpop.f32.mrb[0].mxu0
      %v2938 = vadd.f32 0.0, %v2937
      %v2939 = vpop.f32.mrb[0].mxu0
      %2940 = vmatprep.mubr.f32.mxu0 0.0
      %2941 = vmatmul.mubr.f32.gmra.mrb[0].mxu0 %v2748
      %v2942 = vpop.f32.mrb[0].mxu0
      %v2943 = vadd.f32 0.0, %v2942
      %v2944 = vpop.f32.mrb[0].mxu0
      %2945 = vmatprep.mubr.f32.mxu0 0.0
      %2946 = vmatmul.mubr.f32.gmra.mrb[0].mxu0 %v2751
      %v2947 = vpop.f32.mrb[0].mxu0
      %v2948 = vadd.f32 0.0, %v2947
      %v2949 = vpop.f32.mrb[0].mxu0
      %2950 = vmatprep.mubr.f32.mxu0 0.0
      %2951 = vmatmul.mubr.f32.gmra.mrb[0].mxu0 %v2754
      %v2952 = vpop.f32.mrb[0].mxu0
      %v2953 = vadd.f32 0.0, %v2952
      %v2954 = vpop.f32.mrb[0].mxu0
      %2955 = vmatprep.mubr.f32.mxu0 0.0
      %2956 = vmatmul.mubr.f32.gmra.mrb[0].mxu0 %v2757
      %v2957 = vpop.f32.mrb[0].mxu0
      %v2958 = vadd.f32 0.0, %v2957
      %v2959 = vpop.f32.mrb[0].mxu0
      %2960 = vmatprep.mubr.f32.mxu0 0.0
      %2961 = vmatmul.mubr.f32.gmra.mrb[0].mxu0 %v2760
      %v2962 = vpop.f32.mrb[0].mxu0
      %v2963 = vadd.f32 0.0, %v2962
      %v2964 = vpop.f32.mrb[0].mxu0
      %2965 = vmatprep.mubr.f32.mxu0 0.0
      %2966 = vmatmul.mubr.f32.gmra.mrb[0].mxu0 %v2763
      %v2967 = vpop.f32.mrb[0].mxu0
      %v2968 = vadd.f32 0.0, %v2967
      %v2969 = vpop.f32.mrb[0].mxu0
      %2970 = vmatprep.mubr.f32.mxu0 0.0
      %2971 = vmatmul.mubr.f32.gmra.mrb[0].mxu0 %v2766
      %v2972 = vpop.f32.mrb[0].mxu0
      %v2973 = vadd.f32 0.0, %v2972
      %v2974 = vpop.f32.mrb[0].mxu0
      %2975 = vmatprep.mubr.f32.mxu0 0.0
      %2976 = vmatmul.mubr.f32.gmra.mrb[0].mxu0 %v2769
      %v2977 = vpop.f32.mrb[0].mxu0
      %v2978 = vadd.f32 0.0, %v2977
      %v2979 = vpop.f32.mrb[0].mxu0
      %2980 = vmatprep.mubr.f32.mxu0 0.0
      %2981 = vmatmul.mubr.f32.gmra.mrb[0].mxu0 %v2772
      %v2982 = vpop.f32.mrb[0].mxu0
      %v2983 = vadd.f32 0.0, %v2982
      %v2984 = vpop.f32.mrb[0].mxu0
      %2985 = vmatprep.mubr.f32.mxu0 0.0
      %2986 = vmatmul.mubr.f32.gmra.mrb[0].mxu0 %v2775
      %v2987 = vpop.f32.mrb[0].mxu0
      %v2988 = vadd.f32 0.0, %v2987
      %v2989 = vpop.f32.mrb[0].mxu0
      %2990 = vmatprep.mubr.f32.mxu0 0.0
      %2991 = vmatmul.mubr.f32.gmra.mrb[0].mxu0 %v2778
      %v2992 = vpop.f32.mrb[0].mxu0
      %v2993 = vadd.f32 0.0, %v2992
      %v2994 = vpop.f32.mrb[0].mxu0
      %2995 = vmatprep.mubr.f32.mxu0 0.0
      %2996 = vmatmul.mubr.f32.gmra.mrb[0].mxu0 %v2781
      %v2997 = vpop.f32.mrb[0].mxu0
      %v2998 = vadd.f32 0.0, %v2997
      %v2999 = vpop.f32.mrb[0].mxu0
      %3000 = vmatprep.mubr.f32.mxu0 0.0
      %3001 = vmatmul.mubr.f32.gmra.mrb[0].mxu0 %v2784
      %v3002 = vpop.f32.mrb[0].mxu0
      %v3003 = vadd.f32 0.0, %v3002
      %v3004 = vpop.f32.mrb[0].mxu0
      %3005 = vmatprep.mubr.f32.mxu0 0.0
      %3006 = vmatmul.mubr.f32.gmra.mrb[0].mxu0 %v2787
      %v3007 = vpop.f32.mrb[0].mxu0
      %v3008 = vadd.f32 0.0, %v3007
      %v3009 = vpop.f32.mrb[0].mxu0
      %3010 = vmatprep.mubr.f32.mxu0 0.0
      %3011 = vmatmul.mubr.f32.gmra.mrb[0].mxu0 %v2790
      %v3012 = vpop.f32.mrb[0].mxu0
      %v3013 = vadd.f32 0.0, %v3012
      %v3014 = vpop.f32.mrb[0].mxu0
      %3015 = vmatprep.mubr.f32.mxu0 0.0
      %3016 = vmatmul.mubr.f32.gmra.mrb[0].mxu0 %v2793
      %v3017 = vpop.f32.mrb[0].mxu0
      %v3018 = vadd.f32 0.0, %v3017
      %v3019 = vpop.f32.mrb[0].mxu0
      %3020 = vmatprep.mubr.f32.mxu0 0.0
      %3021 = vmatmul.mubr.f32.gmra.mrb[0].mxu0 %v2796
      %v3022 = vpop.f32.mrb[0].mxu0
      %v3023 = vadd.f32 0.0, %v3022
      %v3024 = vpop.f32.mrb[0].mxu0
      %3025 = vdwg.mxu0
      %v3026 = vadd.f32 %v2635, %v2868
      %v3027 = vadd.f32 %v2636, %v2873
      %v3028 = vadd.f32 %v2637, %v2878
      %v3029 = vadd.f32 %v2638, %v2883
      %v3030 = vadd.f32 %v2639, %v2888
      %v3031 = vadd.f32 %v2640, %v2893
      %v3032 = vadd.f32 %v2641, %v2898
      %v3033 = vadd.f32 %v2642, %v2903
      %v3034 = vadd.f32 %v2643, %v2908
      %v3035 = vadd.f32 %v2644, %v2913
      %v3036 = vadd.f32 %v2645, %v2918
      %v3037 = vadd.f32 %v2646, %v2923
      %v3038 = vadd.f32 %v2647, %v2928
      %v3039 = vadd.f32 %v2648, %v2933
      %v3040 = vadd.f32 %v2649, %v2938
      %v3041 = vadd.f32 %v2650, %v2943
      %v3042 = vadd.f32 %v2651, %v2948
      %v3043 = vadd.f32 %v2652, %v2953
      %v3044 = vadd.f32 %v2653, %v2958
      %v3045 = vadd.f32 %v2654, %v2963
      %v3046 = vadd.f32 %v2655, %v2968
      %v3047 = vadd.f32 %v2656, %v2973
      %v3048 = vadd.f32 %v2657, %v2978
      %v3049 = vadd.f32 %v2658, %v2983
      %v3050 = vadd.f32 %v2659, %v2988
      %v3051 = vadd.f32 %v2660, %v2993
      %v3052 = vadd.f32 %v2661, %v2998
      %v3053 = vadd.f32 %v2662, %v3003
      %v3054 = vadd.f32 %v2663, %v3008
      %v3055 = vadd.f32 %v2664, %v3013
      %v3056 = vadd.f32 %v2665, %v3018
      %v3057 = vadd.f32 %v2666, %v3023
      %v3058 = vld [vmem:[%s2667 + $0x8] sm:$0xff]
      %v3059 = vld [vmem:[%s2667 + $0x10] sm:$0xff]
      %v3060 = vld [vmem:[%s2667 + $0x28] sm:$0xff]
      %v3061 = vld [vmem:[%s2667 + $0x30] sm:$0xff]
      %v3062 = vld [vmem:[%s2667 + $0x48] sm:$0xff]
      %v3063 = vld [vmem:[%s2667 + $0x50] sm:$0xff]
      %v3064 = vld [vmem:[%s2667 + $0x68] sm:$0xff]
      %v3065 = vld [vmem:[%s2667 + $0x70] sm:$0xff]
      %v3066 = vld [vmem:[%s2667 + $0x88] sm:$0xff]
      %v3067 = vld [vmem:[%s2667 + $0x90] sm:$0xff]
      %v3068 = vld [vmem:[%s2667 + $0xa8] sm:$0xff]
      %v3069 = vld [vmem:[%s2667 + $0xb0] sm:$0xff]
      %v3070 = vld [vmem:[%s2667 + $0xc8] sm:$0xff]
      %v3071 = vld [vmem:[%s2667 + $0xd0] sm:$0xff]
      %v3072 = vld [vmem:[%s2667 + $0xe8] sm:$0xff]
      %v3073 = vld [vmem:[%s2667 + $0xf0] sm:$0xff]
      %v3074 = vld [vmem:[%s2667 + $0x108] sm:$0xff]
      %v3075 = vld [vmem:[%s2667 + $0x110] sm:$0xff]
      %v3076 = vld [vmem:[%s2667 + $0x128] sm:$0xff]
      %v3077 = vld [vmem:[%s2667 + $0x130] sm:$0xff]
      %v3078 = vld [vmem:[%s2667 + $0x148] sm:$0xff]
      %v3079 = vld [vmem:[%s2667 + $0x150] sm:$0xff]
      %v3080 = vld [vmem:[%s2667 + $0x168] sm:$0xff]
      %v3081 = vld [vmem:[%s2667 + $0x170] sm:$0xff]
      %v3082 = vld [vmem:[%s2667 + $0x188] sm:$0xff]
      %v3083 = vld [vmem:[%s2667 + $0x190] sm:$0xff]
      %v3084 = vld [vmem:[%s2667 + $0x1a8] sm:$0xff]
      %v3085 = vld [vmem:[%s2667 + $0x1b0] sm:$0xff]
      %v3086 = vld [vmem:[%s2667 + $0x1c8] sm:$0xff]
      %v3087 = vld [vmem:[%s2667 + $0x1d0] sm:$0xff]
      %v3088 = vld [vmem:[%s2667 + $0x1e8] sm:$0xff]
      %v3089 = vld [vmem:[%s2667 + $0x1f0] sm:$0xff]
      %s3090 = scalar_lea.vmem %s1, 28
      %v3091 = vld [vmem:[%s3090] sm:$0xf]
      %v3093 = vsel %vm279, %v3058, 0
      %v3096 = vsel %vm279, %v3059, 0
      %v3099 = vsel %vm279, %v3060, 0
      %v3102 = vsel %vm279, %v3061, 0
      %v3105 = vsel %vm279, %v3062, 0
      %v3108 = vsel %vm279, %v3063, 0
      %v3111 = vsel %vm279, %v3064, 0
      %v3114 = vsel %vm279, %v3065, 0
      %v3117 = vsel %vm279, %v3066, 0
      %v3120 = vsel %vm279, %v3067, 0
      %v3123 = vsel %vm279, %v3068, 0
      %v3126 = vsel %vm279, %v3069, 0
      %v3129 = vsel %vm279, %v3070, 0
      %v3132 = vsel %vm279, %v3071, 0
      %v3135 = vsel %vm279, %v3072, 0
      %v3138 = vsel %vm279, %v3073, 0
      %v3141 = vsel %vm279, %v3074, 0
      %v3144 = vsel %vm279, %v3075, 0
      %v3147 = vsel %vm279, %v3076, 0
      %v3150 = vsel %vm279, %v3077, 0
      %v3153 = vsel %vm279, %v3078, 0
      %v3156 = vsel %vm279, %v3079, 0
      %v3159 = vsel %vm279, %v3080, 0
      %v3162 = vsel %vm279, %v3081, 0
      %v3165 = vsel %vm279, %v3082, 0
      %v3168 = vsel %vm279, %v3083, 0
      %v3171 = vsel %vm279, %v3084, 0
      %v3174 = vsel %vm279, %v3085, 0
      %v3177 = vsel %vm279, %v3086, 0
      %v3180 = vsel %vm279, %v3087, 0
      %v3183 = vsel %vm279, %v3088, 0
      %v3186 = vsel %vm279, %v3089, 0
      %v3189 = vsel %vm554, %v3091, 0
      %3191 = vmatprep.subr.mxu0 0.0
      %3192 = vmatpush1.msra.mxu0 %v3189
      %3193 = vmatprep.subr.mxu0 0.0
      %3194 = vmatpush1.msra.mxu0 0.0
      %3195 = vmatprep.subr.mxu0 0.0
      %3196 = vmatpush1.msra.mxu0 0.0
      %3197 = vmatprep.subr.mxu0 0.0
      %3198 = vmatpush1.msra.mxu0 0.0
      %3199 = vmatprep.subr.mxu0 0.0
      %3200 = vmatpush1.msra.mxu0 0.0
      %3201 = vmatprep.subr.mxu0 0.0
      %3202 = vmatpush1.msra.mxu0 0.0
      %3203 = vmatprep.subr.mxu0 0.0
      %3204 = vmatpush1.msra.mxu0 0.0
      %3205 = vmatprep.subr.mxu0 0.0
      %3206 = vmatpush1.msra.mxu0 0.0
      %3207 = vmatprep.subr.mxu0 0.0
      %3208 = vmatpush1.msra.mxu0 0.0
      %3209 = vmatprep.subr.mxu0 0.0
      %3210 = vmatpush1.msra.mxu0 0.0
      %3211 = vmatprep.subr.mxu0 0.0
      %3212 = vmatpush1.msra.mxu0 0.0
      %3213 = vmatprep.subr.mxu0 0.0
      %3214 = vmatpush1.msra.mxu0 0.0
      %3215 = vmatprep.subr.mxu0 0.0
      %3216 = vmatpush1.msra.mxu0 0.0
      %3217 = vmatprep.subr.mxu0 0.0
      %3218 = vmatpush1.msra.mxu0 0.0
      %3219 = vmatprep.subr.mxu0 0.0
      %3220 = vmatpush1.msra.mxu0 0.0
      %3221 = vmatprep.subr.mxu0 0.0
      %3222 = vmatpush1.msra.mxu0 0.0
      %3223 = vmatprep.subr.mxu0 0.0
      %3224 = vmatpush1.msra.mxu0 0.0
      %3225 = vmatprep.subr.mxu0 0.0
      %3226 = vmatpush1.msra.mxu0 0.0
      %3227 = vmatprep.subr.mxu0 0.0
      %3228 = vmatpush1.msra.mxu0 0.0
      %3229 = vmatprep.subr.mxu0 0.0
      %3230 = vmatpush1.msra.mxu0 0.0
      %3231 = vmatprep.subr.mxu0 0.0
      %3232 = vmatpush1.msra.mxu0 0.0
      %3233 = vmatprep.subr.mxu0 0.0
      %3234 = vmatpush1.msra.mxu0 0.0
      %3235 = vmatprep.subr.mxu0 0.0
      %3236 = vmatpush1.msra.mxu0 0.0
      %3237 = vmatprep.subr.mxu0 0.0
      %3238 = vmatpush1.msra.mxu0 0.0
      %3239 = vmatprep.subr.mxu0 0.0
      %3240 = vmatpush1.msra.mxu0 0.0
      %3241 = vmatprep.subr.mxu0 0.0
      %3242 = vmatpush1.msra.mxu0 0.0
      %3243 = vmatprep.subr.mxu0 0.0
      %3244 = vmatpush1.msra.mxu0 0.0
      %3245 = vmatprep.subr.mxu0 0.0
      %3246 = vmatpush1.msra.mxu0 0.0
      %3247 = vmatprep.subr.mxu0 0.0
      %3248 = vmatpush1.msra.mxu0 0.0
      %3249 = vmatprep.subr.mxu0 0.0
      %3250 = vmatpush1.msra.mxu0 0.0
      %3251 = vmatprep.subr.mxu0 0.0
      %3252 = vmatpush1.msra.mxu0 0.0
      %3253 = vmatprep.subr.mxu0 0.0
      %3254 = vmatpush1.msra.mxu0 0.0
      %3255 = vmatprep.mubr.f32.mxu0 0.0
      %3256 = vmatmul.mubr.f32.gmra.mrb[0].mxu0 %v3093
      %v3257 = vpop.f32.mrb[0].mxu0
      %v3258 = vadd.f32 0.0, %v3257
      %v3259 = vpop.f32.mrb[0].mxu0
      %3260 = vmatprep.mubr.f32.mxu0 0.0
      %3261 = vmatmul.mubr.f32.gmra.mrb[0].mxu0 %v3096
      %v3262 = vpop.f32.mrb[0].mxu0
      %v3263 = vadd.f32 0.0, %v3262
      %v3264 = vpop.f32.mrb[0].mxu0
      %3265 = vmatprep.mubr.f32.mxu0 0.0
      %3266 = vmatmul.mubr.f32.gmra.mrb[0].mxu0 %v3099
      %v3267 = vpop.f32.mrb[0].mxu0
      %v3268 = vadd.f32 0.0, %v3267
      %v3269 = vpop.f32.mrb[0].mxu0
      %3270 = vmatprep.mubr.f32.mxu0 0.0
      %3271 = vmatmul.mubr.f32.gmra.mrb[0].mxu0 %v3102
      %v3272 = vpop.f32.mrb[0].mxu0
      %v3273 = vadd.f32 0.0, %v3272
      %v3274 = vpop.f32.mrb[0].mxu0
      %3275 = vmatprep.mubr.f32.mxu0 0.0
      %3276 = vmatmul.mubr.f32.gmra.mrb[0].mxu0 %v3105
      %v3277 = vpop.f32.mrb[0].mxu0
      %v3278 = vadd.f32 0.0, %v3277
      %v3279 = vpop.f32.mrb[0].mxu0
      %3280 = vmatprep.mubr.f32.mxu0 0.0
      %3281 = vmatmul.mubr.f32.gmra.mrb[0].mxu0 %v3108
      %v3282 = vpop.f32.mrb[0].mxu0
      %v3283 = vadd.f32 0.0, %v3282
      %v3284 = vpop.f32.mrb[0].mxu0
      %3285 = vmatprep.mubr.f32.mxu0 0.0
      %3286 = vmatmul.mubr.f32.gmra.mrb[0].mxu0 %v3111
      %v3287 = vpop.f32.mrb[0].mxu0
      %v3288 = vadd.f32 0.0, %v3287
      %v3289 = vpop.f32.mrb[0].mxu0
      %3290 = vmatprep.mubr.f32.mxu0 0.0
      %3291 = vmatmul.mubr.f32.gmra.mrb[0].mxu0 %v3114
      %v3292 = vpop.f32.mrb[0].mxu0
      %v3293 = vadd.f32 0.0, %v3292
      %v3294 = vpop.f32.mrb[0].mxu0
      %3295 = vmatprep.mubr.f32.mxu0 0.0
      %3296 = vmatmul.mubr.f32.gmra.mrb[0].mxu0 %v3117
      %v3297 = vpop.f32.mrb[0].mxu0
      %v3298 = vadd.f32 0.0, %v3297
      %v3299 = vpop.f32.mrb[0].mxu0
      %3300 = vmatprep.mubr.f32.mxu0 0.0
      %3301 = vmatmul.mubr.f32.gmra.mrb[0].mxu0 %v3120
      %v3302 = vpop.f32.mrb[0].mxu0
      %v3303 = vadd.f32 0.0, %v3302
      %v3304 = vpop.f32.mrb[0].mxu0
      %3305 = vmatprep.mubr.f32.mxu0 0.0
      %3306 = vmatmul.mubr.f32.gmra.mrb[0].mxu0 %v3123
      %v3307 = vpop.f32.mrb[0].mxu0
      %v3308 = vadd.f32 0.0, %v3307
      %v3309 = vpop.f32.mrb[0].mxu0
      %3310 = vmatprep.mubr.f32.mxu0 0.0
      %3311 = vmatmul.mubr.f32.gmra.mrb[0].mxu0 %v3126
      %v3312 = vpop.f32.mrb[0].mxu0
      %v3313 = vadd.f32 0.0, %v3312
      %v3314 = vpop.f32.mrb[0].mxu0
      %3315 = vmatprep.mubr.f32.mxu0 0.0
      %3316 = vmatmul.mubr.f32.gmra.mrb[0].mxu0 %v3129
      %v3317 = vpop.f32.mrb[0].mxu0
      %v3318 = vadd.f32 0.0, %v3317
      %v3319 = vpop.f32.mrb[0].mxu0
      %3320 = vmatprep.mubr.f32.mxu0 0.0
      %3321 = vmatmul.mubr.f32.gmra.mrb[0].mxu0 %v3132
      %v3322 = vpop.f32.mrb[0].mxu0
      %v3323 = vadd.f32 0.0, %v3322
      %v3324 = vpop.f32.mrb[0].mxu0
      %3325 = vmatprep.mubr.f32.mxu0 0.0
      %3326 = vmatmul.mubr.f32.gmra.mrb[0].mxu0 %v3135
      %v3327 = vpop.f32.mrb[0].mxu0
      %v3328 = vadd.f32 0.0, %v3327
      %v3329 = vpop.f32.mrb[0].mxu0
      %3330 = vmatprep.mubr.f32.mxu0 0.0
      %3331 = vmatmul.mubr.f32.gmra.mrb[0].mxu0 %v3138
      %v3332 = vpop.f32.mrb[0].mxu0
      %v3333 = vadd.f32 0.0, %v3332
      %v3334 = vpop.f32.mrb[0].mxu0
      %3335 = vmatprep.mubr.f32.mxu0 0.0
      %3336 = vmatmul.mubr.f32.gmra.mrb[0].mxu0 %v3141
      %v3337 = vpop.f32.mrb[0].mxu0
      %v3338 = vadd.f32 0.0, %v3337
      %v3339 = vpop.f32.mrb[0].mxu0
      %3340 = vmatprep.mubr.f32.mxu0 0.0
      %3341 = vmatmul.mubr.f32.gmra.mrb[0].mxu0 %v3144
      %v3342 = vpop.f32.mrb[0].mxu0
      %v3343 = vadd.f32 0.0, %v3342
      %v3344 = vpop.f32.mrb[0].mxu0
      %3345 = vmatprep.mubr.f32.mxu0 0.0
      %3346 = vmatmul.mubr.f32.gmra.mrb[0].mxu0 %v3147
      %v3347 = vpop.f32.mrb[0].mxu0
      %v3348 = vadd.f32 0.0, %v3347
      %v3349 = vpop.f32.mrb[0].mxu0
      %3350 = vmatprep.mubr.f32.mxu0 0.0
      %3351 = vmatmul.mubr.f32.gmra.mrb[0].mxu0 %v3150
      %v3352 = vpop.f32.mrb[0].mxu0
      %v3353 = vadd.f32 0.0, %v3352
      %v3354 = vpop.f32.mrb[0].mxu0
      %3355 = vmatprep.mubr.f32.mxu0 0.0
      %3356 = vmatmul.mubr.f32.gmra.mrb[0].mxu0 %v3153
      %v3357 = vpop.f32.mrb[0].mxu0
      %v3358 = vadd.f32 0.0, %v3357
      %v3359 = vpop.f32.mrb[0].mxu0
      %3360 = vmatprep.mubr.f32.mxu0 0.0
      %3361 = vmatmul.mubr.f32.gmra.mrb[0].mxu0 %v3156
      %v3362 = vpop.f32.mrb[0].mxu0
      %v3363 = vadd.f32 0.0, %v3362
      %v3364 = vpop.f32.mrb[0].mxu0
      %3365 = vmatprep.mubr.f32.mxu0 0.0
      %3366 = vmatmul.mubr.f32.gmra.mrb[0].mxu0 %v3159
      %v3367 = vpop.f32.mrb[0].mxu0
      %v3368 = vadd.f32 0.0, %v3367
      %v3369 = vpop.f32.mrb[0].mxu0
      %3370 = vmatprep.mubr.f32.mxu0 0.0
      %3371 = vmatmul.mubr.f32.gmra.mrb[0].mxu0 %v3162
      %v3372 = vpop.f32.mrb[0].mxu0
      %v3373 = vadd.f32 0.0, %v3372
      %v3374 = vpop.f32.mrb[0].mxu0
      %3375 = vmatprep.mubr.f32.mxu0 0.0
      %3376 = vmatmul.mubr.f32.gmra.mrb[0].mxu0 %v3165
      %v3377 = vpop.f32.mrb[0].mxu0
      %v3378 = vadd.f32 0.0, %v3377
      %v3379 = vpop.f32.mrb[0].mxu0
      %3380 = vmatprep.mubr.f32.mxu0 0.0
      %3381 = vmatmul.mubr.f32.gmra.mrb[0].mxu0 %v3168
      %v3382 = vpop.f32.mrb[0].mxu0
      %v3383 = vadd.f32 0.0, %v3382
      %v3384 = vpop.f32.mrb[0].mxu0
      %3385 = vmatprep.mubr.f32.mxu0 0.0
      %3386 = vmatmul.mubr.f32.gmra.mrb[0].mxu0 %v3171
      %v3387 = vpop.f32.mrb[0].mxu0
      %v3388 = vadd.f32 0.0, %v3387
      %v3389 = vpop.f32.mrb[0].mxu0
      %3390 = vmatprep.mubr.f32.mxu0 0.0
      %3391 = vmatmul.mubr.f32.gmra.mrb[0].mxu0 %v3174
      %v3392 = vpop.f32.mrb[0].mxu0
      %v3393 = vadd.f32 0.0, %v3392
      %v3394 = vpop.f32.mrb[0].mxu0
      %3395 = vmatprep.mubr.f32.mxu0 0.0
      %3396 = vmatmul.mubr.f32.gmra.mrb[0].mxu0 %v3177
      %v3397 = vpop.f32.mrb[0].mxu0
      %v3398 = vadd.f32 0.0, %v3397
      %v3399 = vpop.f32.mrb[0].mxu0
      %3400 = vmatprep.mubr.f32.mxu0 0.0
      %3401 = vmatmul.mubr.f32.gmra.mrb[0].mxu0 %v3180
      %v3402 = vpop.f32.mrb[0].mxu0
      %v3403 = vadd.f32 0.0, %v3402
      %v3404 = vpop.f32.mrb[0].mxu0
      %3405 = vmatprep.mubr.f32.mxu0 0.0
      %3406 = vmatmul.mubr.f32.gmra.mrb[0].mxu0 %v3183
      %v3407 = vpop.f32.mrb[0].mxu0
      %v3408 = vadd.f32 0.0, %v3407
      %v3409 = vpop.f32.mrb[0].mxu0
      %3410 = vmatprep.mubr.f32.mxu0 0.0
      %3411 = vmatmul.mubr.f32.gmra.mrb[0].mxu0 %v3186
      %v3412 = vpop.f32.mrb[0].mxu0
      %v3413 = vadd.f32 0.0, %v3412
      %v3414 = vpop.f32.mrb[0].mxu0
      %3415 = vdwg.mxu0
      %v3416 = vadd.f32 %v3026, %v3258
      %v3417 = vadd.f32 %v3027, %v3263
      %v3418 = vadd.f32 %v3028, %v3268
      %v3419 = vadd.f32 %v3029, %v3273
      %v3420 = vadd.f32 %v3030, %v3278
      %v3421 = vadd.f32 %v3031, %v3283
      %v3422 = vadd.f32 %v3032, %v3288
      %v3423 = vadd.f32 %v3033, %v3293
      %v3424 = vadd.f32 %v3034, %v3298
      %v3425 = vadd.f32 %v3035, %v3303
      %v3426 = vadd.f32 %v3036, %v3308
      %v3427 = vadd.f32 %v3037, %v3313
      %v3428 = vadd.f32 %v3038, %v3318
      %v3429 = vadd.f32 %v3039, %v3323
      %v3430 = vadd.f32 %v3040, %v3328
      %v3431 = vadd.f32 %v3041, %v3333
      %v3432 = vadd.f32 %v3042, %v3338
      %v3433 = vadd.f32 %v3043, %v3343
      %v3434 = vadd.f32 %v3044, %v3348
      %v3435 = vadd.f32 %v3045, %v3353
      %v3436 = vadd.f32 %v3046, %v3358
      %v3437 = vadd.f32 %v3047, %v3363
      %v3438 = vadd.f32 %v3048, %v3368
      %v3439 = vadd.f32 %v3049, %v3373
      %v3440 = vadd.f32 %v3050, %v3378
      %v3441 = vadd.f32 %v3051, %v3383
      %v3442 = vadd.f32 %v3052, %v3388
      %v3443 = vadd.f32 %v3053, %v3393
      %v3444 = vadd.f32 %v3054, %v3398
      %v3445 = vadd.f32 %v3055, %v3403
      %v3446 = vadd.f32 %v3056, %v3408
      %v3447 = vadd.f32 %v3057, %v3413
      %v3448 = vld [vmem:[%s2667 + $0x9] sm:$0xff]
      %v3449 = vld [vmem:[%s2667 + $0x11] sm:$0xff]
      %v3450 = vld [vmem:[%s2667 + $0x29] sm:$0xff]
      %v3451 = vld [vmem:[%s2667 + $0x31] sm:$0xff]
      %v3452 = vld [vmem:[%s2667 + $0x49] sm:$0xff]
      %v3453 = vld [vmem:[%s2667 + $0x51] sm:$0xff]
      %v3454 = vld [vmem:[%s2667 + $0x69] sm:$0xff]
      %v3455 = vld [vmem:[%s2667 + $0x71] sm:$0xff]
      %v3456 = vld [vmem:[%s2667 + $0x89] sm:$0xff]
      %v3457 = vld [vmem:[%s2667 + $0x91] sm:$0xff]
      %v3458 = vld [vmem:[%s2667 + $0xa9] sm:$0xff]
      %v3459 = vld [vmem:[%s2667 + $0xb1] sm:$0xff]
      %v3460 = vld [vmem:[%s2667 + $0xc9] sm:$0xff]
      %v3461 = vld [vmem:[%s2667 + $0xd1] sm:$0xff]
      %v3462 = vld [vmem:[%s2667 + $0xe9] sm:$0xff]
      %v3463 = vld [vmem:[%s2667 + $0xf1] sm:$0xff]
      %v3464 = vld [vmem:[%s2667 + $0x109] sm:$0xff]
      %v3465 = vld [vmem:[%s2667 + $0x111] sm:$0xff]
      %v3466 = vld [vmem:[%s2667 + $0x129] sm:$0xff]
      %v3467 = vld [vmem:[%s2667 + $0x131] sm:$0xff]
      %v3468 = vld [vmem:[%s2667 + $0x149] sm:$0xff]
      %v3469 = vld [vmem:[%s2667 + $0x151] sm:$0xff]
      %v3470 = vld [vmem:[%s2667 + $0x169] sm:$0xff]
      %v3471 = vld [vmem:[%s2667 + $0x171] sm:$0xff]
      %v3472 = vld [vmem:[%s2667 + $0x189] sm:$0xff]
      %v3473 = vld [vmem:[%s2667 + $0x191] sm:$0xff]
      %v3474 = vld [vmem:[%s2667 + $0x1a9] sm:$0xff]
      %v3475 = vld [vmem:[%s2667 + $0x1b1] sm:$0xff]
      %v3476 = vld [vmem:[%s2667 + $0x1c9] sm:$0xff]
      %v3477 = vld [vmem:[%s2667 + $0x1d1] sm:$0xff]
      %v3478 = vld [vmem:[%s2667 + $0x1e9] sm:$0xff]
      %v3479 = vld [vmem:[%s2667 + $0x1f1] sm:$0xff]
      %s3480 = scalar_lea.vmem %s1, 32
      %v3481 = vld [vmem:[%s3480] sm:$0xf]
      %v3483 = vsel %vm279, %v3448, 0
      %v3486 = vsel %vm279, %v3449, 0
      %v3489 = vsel %vm279, %v3450, 0
      %v3492 = vsel %vm279, %v3451, 0
      %v3495 = vsel %vm279, %v3452, 0
      %v3498 = vsel %vm279, %v3453, 0
      %v3501 = vsel %vm279, %v3454, 0
      %v3504 = vsel %vm279, %v3455, 0
      %v3507 = vsel %vm279, %v3456, 0
      %v3510 = vsel %vm279, %v3457, 0
      %v3513 = vsel %vm279, %v3458, 0
      %v3516 = vsel %vm279, %v3459, 0
      %v3519 = vsel %vm279, %v3460, 0
      %v3522 = vsel %vm279, %v3461, 0
      %v3525 = vsel %vm279, %v3462, 0
      %v3528 = vsel %vm279, %v3463, 0
      %v3531 = vsel %vm279, %v3464, 0
      %v3534 = vsel %vm279, %v3465, 0
      %v3537 = vsel %vm279, %v3466, 0
      %v3540 = vsel %vm279, %v3467, 0
      %v3543 = vsel %vm279, %v3468, 0
      %v3546 = vsel %vm279, %v3469, 0
      %v3549 = vsel %vm279, %v3470, 0
      %v3552 = vsel %vm279, %v3471, 0
      %v3555 = vsel %vm279, %v3472, 0
      %v3558 = vsel %vm279, %v3473, 0
      %v3561 = vsel %vm279, %v3474, 0
      %v3564 = vsel %vm279, %v3475, 0
      %v3567 = vsel %vm279, %v3476, 0
      %v3570 = vsel %vm279, %v3477, 0
      %v3573 = vsel %vm279, %v3478, 0
      %v3576 = vsel %vm279, %v3479, 0
      %v3579 = vsel %vm554, %v3481, 0
      %3581 = vmatprep.subr.mxu0 0.0
      %3582 = vmatpush1.msra.mxu0 %v3579
      %3583 = vmatprep.subr.mxu0 0.0
      %3584 = vmatpush1.msra.mxu0 0.0
      %3585 = vmatprep.subr.mxu0 0.0
      %3586 = vmatpush1.msra.mxu0 0.0
      %3587 = vmatprep.subr.mxu0 0.0
      %3588 = vmatpush1.msra.mxu0 0.0
      %3589 = vmatprep.subr.mxu0 0.0
      %3590 = vmatpush1.msra.mxu0 0.0
      %3591 = vmatprep.subr.mxu0 0.0
      %3592 = vmatpush1.msra.mxu0 0.0
      %3593 = vmatprep.subr.mxu0 0.0
      %3594 = vmatpush1.msra.mxu0 0.0
      %3595 = vmatprep.subr.mxu0 0.0
      %3596 = vmatpush1.msra.mxu0 0.0
      %3597 = vmatprep.subr.mxu0 0.0
      %3598 = vmatpush1.msra.mxu0 0.0
      %3599 = vmatprep.subr.mxu0 0.0
      %3600 = vmatpush1.msra.mxu0 0.0
      %3601 = vmatprep.subr.mxu0 0.0
      %3602 = vmatpush1.msra.mxu0 0.0
      %3603 = vmatprep.subr.mxu0 0.0
      %3604 = vmatpush1.msra.mxu0 0.0
      %3605 = vmatprep.subr.mxu0 0.0
      %3606 = vmatpush1.msra.mxu0 0.0
      %3607 = vmatprep.subr.mxu0 0.0
      %3608 = vmatpush1.msra.mxu0 0.0
      %3609 = vmatprep.subr.mxu0 0.0
      %3610 = vmatpush1.msra.mxu0 0.0
      %3611 = vmatprep.subr.mxu0 0.0
      %3612 = vmatpush1.msra.mxu0 0.0
      %3613 = vmatprep.subr.mxu0 0.0
      %3614 = vmatpush1.msra.mxu0 0.0
      %3615 = vmatprep.subr.mxu0 0.0
      %3616 = vmatpush1.msra.mxu0 0.0
      %3617 = vmatprep.subr.mxu0 0.0
      %3618 = vmatpush1.msra.mxu0 0.0
      %3619 = vmatprep.subr.mxu0 0.0
      %3620 = vmatpush1.msra.mxu0 0.0
      %3621 = vmatprep.subr.mxu0 0.0
      %3622 = vmatpush1.msra.mxu0 0.0
      %3623 = vmatprep.subr.mxu0 0.0
      %3624 = vmatpush1.msra.mxu0 0.0
      %3625 = vmatprep.subr.mxu0 0.0
      %3626 = vmatpush1.msra.mxu0 0.0
      %3627 = vmatprep.subr.mxu0 0.0
      %3628 = vmatpush1.msra.mxu0 0.0
      %3629 = vmatprep.subr.mxu0 0.0
      %3630 = vmatpush1.msra.mxu0 0.0
      %3631 = vmatprep.subr.mxu0 0.0
      %3632 = vmatpush1.msra.mxu0 0.0
      %3633 = vmatprep.subr.mxu0 0.0
      %3634 = vmatpush1.msra.mxu0 0.0
      %3635 = vmatprep.subr.mxu0 0.0
      %3636 = vmatpush1.msra.mxu0 0.0
      %3637 = vmatprep.subr.mxu0 0.0
      %3638 = vmatpush1.msra.mxu0 0.0
      %3639 = vmatprep.subr.mxu0 0.0
      %3640 = vmatpush1.msra.mxu0 0.0
      %3641 = vmatprep.subr.mxu0 0.0
      %3642 = vmatpush1.msra.mxu0 0.0
      %3643 = vmatprep.subr.mxu0 0.0
      %3644 = vmatpush1.msra.mxu0 0.0
      %3645 = vmatprep.mubr.f32.mxu0 0.0
      %3646 = vmatmul.mubr.f32.gmra.mrb[0].mxu0 %v3483
      %v3647 = vpop.f32.mrb[0].mxu0
      %v3648 = vadd.f32 0.0, %v3647
      %v3649 = vpop.f32.mrb[0].mxu0
      %3650 = vmatprep.mubr.f32.mxu0 0.0
      %3651 = vmatmul.mubr.f32.gmra.mrb[0].mxu0 %v3486
      %v3652 = vpop.f32.mrb[0].mxu0
      %v3653 = vadd.f32 0.0, %v3652
      %v3654 = vpop.f32.mrb[0].mxu0
      %3655 = vmatprep.mubr.f32.mxu0 0.0
      %3656 = vmatmul.mubr.f32.gmra.mrb[0].mxu0 %v3489
      %v3657 = vpop.f32.mrb[0].mxu0
      %v3658 = vadd.f32 0.0, %v3657
      %v3659 = vpop.f32.mrb[0].mxu0
      %3660 = vmatprep.mubr.f32.mxu0 0.0
      %3661 = vmatmul.mubr.f32.gmra.mrb[0].mxu0 %v3492
      %v3662 = vpop.f32.mrb[0].mxu0
      %v3663 = vadd.f32 0.0, %v3662
      %v3664 = vpop.f32.mrb[0].mxu0
      %3665 = vmatprep.mubr.f32.mxu0 0.0
      %3666 = vmatmul.mubr.f32.gmra.mrb[0].mxu0 %v3495
      %v3667 = vpop.f32.mrb[0].mxu0
      %v3668 = vadd.f32 0.0, %v3667
      %v3669 = vpop.f32.mrb[0].mxu0
      %3670 = vmatprep.mubr.f32.mxu0 0.0
      %3671 = vmatmul.mubr.f32.gmra.mrb[0].mxu0 %v3498
      %v3672 = vpop.f32.mrb[0].mxu0
      %v3673 = vadd.f32 0.0, %v3672
      %v3674 = vpop.f32.mrb[0].mxu0
      %3675 = vmatprep.mubr.f32.mxu0 0.0
      %3676 = vmatmul.mubr.f32.gmra.mrb[0].mxu0 %v3501
      %v3677 = vpop.f32.mrb[0].mxu0
      %v3678 = vadd.f32 0.0, %v3677
      %v3679 = vpop.f32.mrb[0].mxu0
      %3680 = vmatprep.mubr.f32.mxu0 0.0
      %3681 = vmatmul.mubr.f32.gmra.mrb[0].mxu0 %v3504
      %v3682 = vpop.f32.mrb[0].mxu0
      %v3683 = vadd.f32 0.0, %v3682
      %v3684 = vpop.f32.mrb[0].mxu0
      %3685 = vmatprep.mubr.f32.mxu0 0.0
      %3686 = vmatmul.mubr.f32.gmra.mrb[0].mxu0 %v3507
      %v3687 = vpop.f32.mrb[0].mxu0
      %v3688 = vadd.f32 0.0, %v3687
      %v3689 = vpop.f32.mrb[0].mxu0
      %3690 = vmatprep.mubr.f32.mxu0 0.0
      %3691 = vmatmul.mubr.f32.gmra.mrb[0].mxu0 %v3510
      %v3692 = vpop.f32.mrb[0].mxu0
      %v3693 = vadd.f32 0.0, %v3692
      %v3694 = vpop.f32.mrb[0].mxu0
      %3695 = vmatprep.mubr.f32.mxu0 0.0
      %3696 = vmatmul.mubr.f32.gmra.mrb[0].mxu0 %v3513
      %v3697 = vpop.f32.mrb[0].mxu0
      %v3698 = vadd.f32 0.0, %v3697
      %v3699 = vpop.f32.mrb[0].mxu0
      %3700 = vmatprep.mubr.f32.mxu0 0.0
      %3701 = vmatmul.mubr.f32.gmra.mrb[0].mxu0 %v3516
      %v3702 = vpop.f32.mrb[0].mxu0
      %v3703 = vadd.f32 0.0, %v3702
      %v3704 = vpop.f32.mrb[0].mxu0
      %3705 = vmatprep.mubr.f32.mxu0 0.0
      %3706 = vmatmul.mubr.f32.gmra.mrb[0].mxu0 %v3519
      %v3707 = vpop.f32.mrb[0].mxu0
      %v3708 = vadd.f32 0.0, %v3707
      %v3709 = vpop.f32.mrb[0].mxu0
      %3710 = vmatprep.mubr.f32.mxu0 0.0
      %3711 = vmatmul.mubr.f32.gmra.mrb[0].mxu0 %v3522
      %v3712 = vpop.f32.mrb[0].mxu0
      %v3713 = vadd.f32 0.0, %v3712
      %v3714 = vpop.f32.mrb[0].mxu0
      %3715 = vmatprep.mubr.f32.mxu0 0.0
      %3716 = vmatmul.mubr.f32.gmra.mrb[0].mxu0 %v3525
      %v3717 = vpop.f32.mrb[0].mxu0
      %v3718 = vadd.f32 0.0, %v3717
      %v3719 = vpop.f32.mrb[0].mxu0
      %3720 = vmatprep.mubr.f32.mxu0 0.0
      %3721 = vmatmul.mubr.f32.gmra.mrb[0].mxu0 %v3528
      %v3722 = vpop.f32.mrb[0].mxu0
      %v3723 = vadd.f32 0.0, %v3722
      %v3724 = vpop.f32.mrb[0].mxu0
      %3725 = vmatprep.mubr.f32.mxu0 0.0
      %3726 = vmatmul.mubr.f32.gmra.mrb[0].mxu0 %v3531
      %v3727 = vpop.f32.mrb[0].mxu0
      %v3728 = vadd.f32 0.0, %v3727
      %v3729 = vpop.f32.mrb[0].mxu0
      %3730 = vmatprep.mubr.f32.mxu0 0.0
      %3731 = vmatmul.mubr.f32.gmra.mrb[0].mxu0 %v3534
      %v3732 = vpop.f32.mrb[0].mxu0
      %v3733 = vadd.f32 0.0, %v3732
      %v3734 = vpop.f32.mrb[0].mxu0
      %3735 = vmatprep.mubr.f32.mxu0 0.0
      %3736 = vmatmul.mubr.f32.gmra.mrb[0].mxu0 %v3537
      %v3737 = vpop.f32.mrb[0].mxu0
      %v3738 = vadd.f32 0.0, %v3737
      %v3739 = vpop.f32.mrb[0].mxu0
      %3740 = vmatprep.mubr.f32.mxu0 0.0
      %3741 = vmatmul.mubr.f32.gmra.mrb[0].mxu0 %v3540
      %v3742 = vpop.f32.mrb[0].mxu0
      %v3743 = vadd.f32 0.0, %v3742
      %v3744 = vpop.f32.mrb[0].mxu0
      %3745 = vmatprep.mubr.f32.mxu0 0.0
      %3746 = vmatmul.mubr.f32.gmra.mrb[0].mxu0 %v3543
      %v3747 = vpop.f32.mrb[0].mxu0
      %v3748 = vadd.f32 0.0, %v3747
      %v3749 = vpop.f32.mrb[0].mxu0
      %3750 = vmatprep.mubr.f32.mxu0 0.0
      %3751 = vmatmul.mubr.f32.gmra.mrb[0].mxu0 %v3546
      %v3752 = vpop.f32.mrb[0].mxu0
      %v3753 = vadd.f32 0.0, %v3752
      %v3754 = vpop.f32.mrb[0].mxu0
      %3755 = vmatprep.mubr.f32.mxu0 0.0
      %3756 = vmatmul.mubr.f32.gmra.mrb[0].mxu0 %v3549
      %v3757 = vpop.f32.mrb[0].mxu0
      %v3758 = vadd.f32 0.0, %v3757
      %v3759 = vpop.f32.mrb[0].mxu0
      %3760 = vmatprep.mubr.f32.mxu0 0.0
      %3761 = vmatmul.mubr.f32.gmra.mrb[0].mxu0 %v3552
      %v3762 = vpop.f32.mrb[0].mxu0
      %v3763 = vadd.f32 0.0, %v3762
      %v3764 = vpop.f32.mrb[0].mxu0
      %3765 = vmatprep.mubr.f32.mxu0 0.0
      %3766 = vmatmul.mubr.f32.gmra.mrb[0].mxu0 %v3555
      %v3767 = vpop.f32.mrb[0].mxu0
      %v3768 = vadd.f32 0.0, %v3767
      %v3769 = vpop.f32.mrb[0].mxu0
      %3770 = vmatprep.mubr.f32.mxu0 0.0
      %3771 = vmatmul.mubr.f32.gmra.mrb[0].mxu0 %v3558
      %v3772 = vpop.f32.mrb[0].mxu0
      %v3773 = vadd.f32 0.0, %v3772
      %v3774 = vpop.f32.mrb[0].mxu0
      %3775 = vmatprep.mubr.f32.mxu0 0.0
      %3776 = vmatmul.mubr.f32.gmra.mrb[0].mxu0 %v3561
      %v3777 = vpop.f32.mrb[0].mxu0
      %v3778 = vadd.f32 0.0, %v3777
      %v3779 = vpop.f32.mrb[0].mxu0
      %3780 = vmatprep.mubr.f32.mxu0 0.0
      %3781 = vmatmul.mubr.f32.gmra.mrb[0].mxu0 %v3564
      %v3782 = vpop.f32.mrb[0].mxu0
      %v3783 = vadd.f32 0.0, %v3782
      %v3784 = vpop.f32.mrb[0].mxu0
      %3785 = vmatprep.mubr.f32.mxu0 0.0
      %3786 = vmatmul.mubr.f32.gmra.mrb[0].mxu0 %v3567
      %v3787 = vpop.f32.mrb[0].mxu0
      %v3788 = vadd.f32 0.0, %v3787
      %v3789 = vpop.f32.mrb[0].mxu0
      %3790 = vmatprep.mubr.f32.mxu0 0.0
      %3791 = vmatmul.mubr.f32.gmra.mrb[0].mxu0 %v3570
      %v3792 = vpop.f32.mrb[0].mxu0
      %v3793 = vadd.f32 0.0, %v3792
      %v3794 = vpop.f32.mrb[0].mxu0
      %3795 = vmatprep.mubr.f32.mxu0 0.0
      %3796 = vmatmul.mubr.f32.gmra.mrb[0].mxu0 %v3573
      %v3797 = vpop.f32.mrb[0].mxu0
      %v3798 = vadd.f32 0.0, %v3797
      %v3799 = vpop.f32.mrb[0].mxu0
      %3800 = vmatprep.mubr.f32.mxu0 0.0
      %3801 = vmatmul.mubr.f32.gmra.mrb[0].mxu0 %v3576
      %v3802 = vpop.f32.mrb[0].mxu0
      %v3803 = vadd.f32 0.0, %v3802
      %v3804 = vpop.f32.mrb[0].mxu0
      %3805 = vdwg.mxu0
      %v3806 = vadd.f32 %v3416, %v3648
      %v3807 = vadd.f32 %v3417, %v3653
      %v3808 = vadd.f32 %v3418, %v3658
      %v3809 = vadd.f32 %v3419, %v3663
      %v3810 = vadd.f32 %v3420, %v3668
      %v3811 = vadd.f32 %v3421, %v3673
      %v3812 = vadd.f32 %v3422, %v3678
      %v3813 = vadd.f32 %v3423, %v3683
      %v3814 = vadd.f32 %v3424, %v3688
      %v3815 = vadd.f32 %v3425, %v3693
      %v3816 = vadd.f32 %v3426, %v3698
      %v3817 = vadd.f32 %v3427, %v3703
      %v3818 = vadd.f32 %v3428, %v3708
      %v3819 = vadd.f32 %v3429, %v3713
      %v3820 = vadd.f32 %v3430, %v3718
      %v3821 = vadd.f32 %v3431, %v3723
      %v3822 = vadd.f32 %v3432, %v3728
      %v3823 = vadd.f32 %v3433, %v3733
      %v3824 = vadd.f32 %v3434, %v3738
      %v3825 = vadd.f32 %v3435, %v3743
      %v3826 = vadd.f32 %v3436, %v3748
      %v3827 = vadd.f32 %v3437, %v3753
      %v3828 = vadd.f32 %v3438, %v3758
      %v3829 = vadd.f32 %v3439, %v3763
      %v3830 = vadd.f32 %v3440, %v3768
      %v3831 = vadd.f32 %v3441, %v3773
      %v3832 = vadd.f32 %v3442, %v3778
      %v3833 = vadd.f32 %v3443, %v3783
      %v3834 = vadd.f32 %v3444, %v3788
      %v3835 = vadd.f32 %v3445, %v3793
      %v3836 = vadd.f32 %v3446, %v3798
      %v3837 = vadd.f32 %v3447, %v3803
      %v3838 = vld [vmem:[%s2] sm:$0x1]
      %v3840 = vlaneseq
      %v3841 = vshrl.u32 %v3840, 7
      %v3842 = vsub.s32 0, %v3841
      %v3843 = vrot.slane %v3838, %v3842
      %v3845 = vmul.f32 %v3806, %v3843
      %v3846 = vmul.f32 %v3807, %v3843
      %v3847 = vmul.f32 %v3808, %v3843
      %v3848 = vmul.f32 %v3809, %v3843
      %v3849 = vmul.f32 %v3810, %v3843
      %v3850 = vmul.f32 %v3811, %v3843
      %v3851 = vmul.f32 %v3812, %v3843
      %v3852 = vmul.f32 %v3813, %v3843
      %v3853 = vmul.f32 %v3814, %v3843
      %v3854 = vmul.f32 %v3815, %v3843
      %v3855 = vmul.f32 %v3816, %v3843
      %v3856 = vmul.f32 %v3817, %v3843
      %v3857 = vmul.f32 %v3818, %v3843
      %v3858 = vmul.f32 %v3819, %v3843
      %v3859 = vmul.f32 %v3820, %v3843
      %v3860 = vmul.f32 %v3821, %v3843
      %v3861 = vmul.f32 %v3822, %v3843
      %v3862 = vmul.f32 %v3823, %v3843
      %v3863 = vmul.f32 %v3824, %v3843
      %v3864 = vmul.f32 %v3825, %v3843
      %v3865 = vmul.f32 %v3826, %v3843
      %v3866 = vmul.f32 %v3827, %v3843
      %v3867 = vmul.f32 %v3828, %v3843
      %v3868 = vmul.f32 %v3829, %v3843
      %v3869 = vmul.f32 %v3830, %v3843
      %v3870 = vmul.f32 %v3831, %v3843
      %v3871 = vmul.f32 %v3832, %v3843
      %v3872 = vmul.f32 %v3833, %v3843
      %v3873 = vmul.f32 %v3834, %v3843
      %v3874 = vmul.f32 %v3835, %v3843
      %v3875 = vmul.f32 %v3836, %v3843
      %v3876 = vmul.f32 %v3837, %v3843
      %v3877 = vld [vmem:[%s3] sm:$0x1]
      %v3879 = vlaneseq
      %v3880 = vshrl.u32 %v3879, 7
      %v3881 = vsub.s32 0, %v3880
      %v3882 = vrot.slane %v3877, %v3881
      %v3884 = vadd.f32 %v3845, %v3882
      %v3885 = vadd.f32 %v3846, %v3882
      %v3886 = vadd.f32 %v3847, %v3882
      %v3887 = vadd.f32 %v3848, %v3882
      %v3888 = vadd.f32 %v3849, %v3882
      %v3889 = vadd.f32 %v3850, %v3882
      %v3890 = vadd.f32 %v3851, %v3882
      %v3891 = vadd.f32 %v3852, %v3882
      %v3892 = vadd.f32 %v3853, %v3882
      %v3893 = vadd.f32 %v3854, %v3882
      %v3894 = vadd.f32 %v3855, %v3882
      %v3895 = vadd.f32 %v3856, %v3882
      %v3896 = vadd.f32 %v3857, %v3882
      %v3897 = vadd.f32 %v3858, %v3882
      %v3898 = vadd.f32 %v3859, %v3882
      %v3899 = vadd.f32 %v3860, %v3882
      %v3900 = vadd.f32 %v3861, %v3882
      %v3901 = vadd.f32 %v3862, %v3882
      %v3902 = vadd.f32 %v3863, %v3882
      %v3903 = vadd.f32 %v3864, %v3882
      %v3904 = vadd.f32 %v3865, %v3882
      %v3905 = vadd.f32 %v3866, %v3882
      %v3906 = vadd.f32 %v3867, %v3882
      %v3907 = vadd.f32 %v3868, %v3882
      %v3908 = vadd.f32 %v3869, %v3882
      %v3909 = vadd.f32 %v3870, %v3882
      %v3910 = vadd.f32 %v3871, %v3882
      %v3911 = vadd.f32 %v3872, %v3882
      %v3912 = vadd.f32 %v3873, %v3882
      %v3913 = vadd.f32 %v3874, %v3882
      %v3914 = vadd.f32 %v3875, %v3882
      %v3915 = vadd.f32 %v3876, %v3882
      %v3916 = vmax.f32 %v3884, 0.0
      %v3917 = vmax.f32 %v3885, 0.0
      %v3918 = vmax.f32 %v3886, 0.0
      %v3919 = vmax.f32 %v3887, 0.0
      %v3920 = vmax.f32 %v3888, 0.0
      %v3921 = vmax.f32 %v3889, 0.0
      %v3922 = vmax.f32 %v3890, 0.0
      %v3923 = vmax.f32 %v3891, 0.0
      %v3924 = vmax.f32 %v3892, 0.0
      %v3925 = vmax.f32 %v3893, 0.0
      %v3926 = vmax.f32 %v3894, 0.0
      %v3927 = vmax.f32 %v3895, 0.0
      %v3928 = vmax.f32 %v3896, 0.0
      %v3929 = vmax.f32 %v3897, 0.0
      %v3930 = vmax.f32 %v3898, 0.0
      %v3931 = vmax.f32 %v3899, 0.0
      %v3932 = vmax.f32 %v3900, 0.0
      %v3933 = vmax.f32 %v3901, 0.0
      %v3934 = vmax.f32 %v3902, 0.0
      %v3935 = vmax.f32 %v3903, 0.0
      %v3936 = vmax.f32 %v3904, 0.0
      %v3937 = vmax.f32 %v3905, 0.0
      %v3938 = vmax.f32 %v3906, 0.0
      %v3939 = vmax.f32 %v3907, 0.0
      %v3940 = vmax.f32 %v3908, 0.0
      %v3941 = vmax.f32 %v3909, 0.0
      %v3942 = vmax.f32 %v3910, 0.0
      %v3943 = vmax.f32 %v3911, 0.0
      %v3944 = vmax.f32 %v3912, 0.0
      %v3945 = vmax.f32 %v3913, 0.0
      %v3946 = vmax.f32 %v3914, 0.0
      %v3947 = vmax.f32 %v3915, 0.0
      %vm3948 = vcmask 64512
      %3949 = vst.msk [vmem:[#allocation3] sm:$0xff] %vm3948, 0.0
      %3950 = vst.msk [vmem:[#allocation3 + $0x8] sm:$0xff] %vm3948, 0.0
      %3951 = vst.msk [vmem:[#allocation3 + $0x10] sm:$0xff] %vm3948, 0.0
      %vm3952 = vcmask 57344
      %3953 = vst.msk [vmem:[#allocation3 + $0x18] sm:$0x1] %vm3952, 0.0
      %s3954 = scalar_lea.vmem [#allocation3], 544
      %3955 = vst.msk [vmem:[%s3954] sm:$0xff] %vm3948, 0.0
      %3956 = vst.msk [vmem:[%s3954 + $0x8] sm:$0xff] %vm3948, 0.0
      %3957 = vst.msk [vmem:[%s3954 + $0x10] sm:$0xff] %vm3948, 0.0
      %3958 = vst.msk [vmem:[%s3954 + $0x18] sm:$0x1] %vm3952, 0.0
      %3959 = vst.msk [vmem:[#allocation3 + $0x7] sm:$0x1] %vm3952, 0.0
      %3960 = vst.msk [vmem:[#allocation3 + $0x27] sm:$0x1] %vm3952, 0.0
      %3961 = vst.msk [vmem:[#allocation3 + $0x47] sm:$0x1] %vm3952, 0.0
      %3962 = vst.msk [vmem:[#allocation3 + $0x67] sm:$0x1] %vm3952, 0.0
      %3963 = vst.msk [vmem:[#allocation3 + $0x87] sm:$0x1] %vm3952, 0.0
      %3964 = vst.msk [vmem:[#allocation3 + $0xa7] sm:$0x1] %vm3952, 0.0
      %3965 = vst.msk [vmem:[#allocation3 + $0xc7] sm:$0x1] %vm3952, 0.0
      %3966 = vst.msk [vmem:[#allocation3 + $0xe7] sm:$0x1] %vm3952, 0.0
      %3967 = vst.msk [vmem:[#allocation3 + $0x107] sm:$0x1] %vm3952, 0.0
      %3968 = vst.msk [vmem:[#allocation3 + $0x127] sm:$0x1] %vm3952, 0.0
      %3969 = vst.msk [vmem:[#allocation3 + $0x147] sm:$0x1] %vm3952, 0.0
      %3970 = vst.msk [vmem:[#allocation3 + $0x167] sm:$0x1] %vm3952, 0.0
      %3971 = vst.msk [vmem:[#allocation3 + $0x187] sm:$0x1] %vm3952, 0.0
      %3972 = vst.msk [vmem:[#allocation3 + $0x1a7] sm:$0x1] %vm3952, 0.0
      %3973 = vst.msk [vmem:[#allocation3 + $0x1c7] sm:$0x1] %vm3952, 0.0
      %3974 = vst.msk [vmem:[#allocation3 + $0x1e7] sm:$0x1] %vm3952, 0.0
      %3975 = vst.msk [vmem:[#allocation3 + $0x207] sm:$0x1] %vm3952, 0.0
      %3976 = vst.msk [vmem:[#allocation3 + $0x227] sm:$0x1] %vm3952, 0.0
      %3977 = vst.msk [vmem:[#allocation3 + $0x18] sm:$0x1] %vm3952, 0.0
      %3978 = vst.msk [vmem:[#allocation3 + $0x38] sm:$0x1] %vm3952, 0.0
      %3979 = vst.msk [vmem:[#allocation3 + $0x58] sm:$0x1] %vm3952, 0.0
      %3980 = vst.msk [vmem:[#allocation3 + $0x78] sm:$0x1] %vm3952, 0.0
      %3981 = vst.msk [vmem:[#allocation3 + $0x98] sm:$0x1] %vm3952, 0.0
      %3982 = vst.msk [vmem:[#allocation3 + $0xb8] sm:$0x1] %vm3952, 0.0
      %3983 = vst.msk [vmem:[#allocation3 + $0xd8] sm:$0x1] %vm3952, 0.0
      %3984 = vst.msk [vmem:[#allocation3 + $0xf8] sm:$0x1] %vm3952, 0.0
      %3985 = vst.msk [vmem:[#allocation3 + $0x118] sm:$0x1] %vm3952, 0.0
      %3986 = vst.msk [vmem:[#allocation3 + $0x138] sm:$0x1] %vm3952, 0.0
      %3987 = vst.msk [vmem:[#allocation3 + $0x158] sm:$0x1] %vm3952, 0.0
      %3988 = vst.msk [vmem:[#allocation3 + $0x178] sm:$0x1] %vm3952, 0.0
      %3989 = vst.msk [vmem:[#allocation3 + $0x198] sm:$0x1] %vm3952, 0.0
      %3990 = vst.msk [vmem:[#allocation3 + $0x1b8] sm:$0x1] %vm3952, 0.0
      %3991 = vst.msk [vmem:[#allocation3 + $0x1d8] sm:$0x1] %vm3952, 0.0
      %3992 = vst.msk [vmem:[#allocation3 + $0x1f8] sm:$0x1] %vm3952, 0.0
      %3993 = vst.msk [vmem:[#allocation3 + $0x218] sm:$0x1] %vm3952, 0.0
      %3994 = vst.msk [vmem:[#allocation3 + $0x238] sm:$0x1] %vm3952, 0.0
      %s3995 = scalar_lea.vmem [#allocation3], 32
      %3996 = vst.msk [vmem:[%s3995 + $0x8] sm:$0xff] %vm3948, %v3916
      %3997 = vst.msk [vmem:[%s3995 + $0x10] sm:$0xff] %vm3948, %v3917
      %3998 = vst.msk [vmem:[%s3995 + $0x28] sm:$0xff] %vm3948, %v3918
      %3999 = vst.msk [vmem:[%s3995 + $0x30] sm:$0xff] %vm3948, %v3919
      %4000 = vst.msk [vmem:[%s3995 + $0x48] sm:$0xff] %vm3948, %v3920
      %4001 = vst.msk [vmem:[%s3995 + $0x50] sm:$0xff] %vm3948, %v3921
      %4002 = vst.msk [vmem:[%s3995 + $0x68] sm:$0xff] %vm3948, %v3922
      %4003 = vst.msk [vmem:[%s3995 + $0x70] sm:$0xff] %vm3948, %v3923
      %4004 = vst.msk [vmem:[%s3995 + $0x88] sm:$0xff] %vm3948, %v3924
      %4005 = vst.msk [vmem:[%s3995 + $0x90] sm:$0xff] %vm3948, %v3925
      %4006 = vst.msk [vmem:[%s3995 + $0xa8] sm:$0xff] %vm3948, %v3926
      %4007 = vst.msk [vmem:[%s3995 + $0xb0] sm:$0xff] %vm3948, %v3927
      %4008 = vst.msk [vmem:[%s3995 + $0xc8] sm:$0xff] %vm3948, %v3928
      %4009 = vst.msk [vmem:[%s3995 + $0xd0] sm:$0xff] %vm3948, %v3929
      %4010 = vst.msk [vmem:[%s3995 + $0xe8] sm:$0xff] %vm3948, %v3930
      %4011 = vst.msk [vmem:[%s3995 + $0xf0] sm:$0xff] %vm3948, %v3931
      %4012 = vst.msk [vmem:[%s3995 + $0x108] sm:$0xff] %vm3948, %v3932
      %4013 = vst.msk [vmem:[%s3995 + $0x110] sm:$0xff] %vm3948, %v3933
      %4014 = vst.msk [vmem:[%s3995 + $0x128] sm:$0xff] %vm3948, %v3934
      %4015 = vst.msk [vmem:[%s3995 + $0x130] sm:$0xff] %vm3948, %v3935
      %4016 = vst.msk [vmem:[%s3995 + $0x148] sm:$0xff] %vm3948, %v3936
      %4017 = vst.msk [vmem:[%s3995 + $0x150] sm:$0xff] %vm3948, %v3937
      %4018 = vst.msk [vmem:[%s3995 + $0x168] sm:$0xff] %vm3948, %v3938
      %4019 = vst.msk [vmem:[%s3995 + $0x170] sm:$0xff] %vm3948, %v3939
      %4020 = vst.msk [vmem:[%s3995 + $0x188] sm:$0xff] %vm3948, %v3940
      %4021 = vst.msk [vmem:[%s3995 + $0x190] sm:$0xff] %vm3948, %v3941
      %4022 = vst.msk [vmem:[%s3995 + $0x1a8] sm:$0xff] %vm3948, %v3942
      %4023 = vst.msk [vmem:[%s3995 + $0x1b0] sm:$0xff] %vm3948, %v3943
      %4024 = vst.msk [vmem:[%s3995 + $0x1c8] sm:$0xff] %vm3948, %v3944
      %4025 = vst.msk [vmem:[%s3995 + $0x1d0] sm:$0xff] %vm3948, %v3945
      %4026 = vst.msk [vmem:[%s3995 + $0x1e8] sm:$0xff] %vm3948, %v3946
      %4027 = vst.msk [vmem:[%s3995 + $0x1f0] sm:$0xff] %vm3948, %v3947
      %v4028 = vld [vmem:[#allocation3 + $0x7] sm:$0xff]
      %v4029 = vld [vmem:[#allocation3 + $0xf] sm:$0xff]
      %v4030 = vld [vmem:[#allocation3 + $0x27] sm:$0xff]
      %v4031 = vld [vmem:[#allocation3 + $0x2f] sm:$0xff]
      %v4032 = vld [vmem:[#allocation3 + $0x47] sm:$0xff]
      %v4033 = vld [vmem:[#allocation3 + $0x4f] sm:$0xff]
      %v4034 = vld [vmem:[#allocation3 + $0x67] sm:$0xff]
      %v4035 = vld [vmem:[#allocation3 + $0x6f] sm:$0xff]
      %v4036 = vld [vmem:[#allocation3 + $0x87] sm:$0xff]
      %v4037 = vld [vmem:[#allocation3 + $0x8f] sm:$0xff]
      %v4038 = vld [vmem:[#allocation3 + $0xa7] sm:$0xff]
      %v4039 = vld [vmem:[#allocation3 + $0xaf] sm:$0xff]
      %v4040 = vld [vmem:[#allocation3 + $0xc7] sm:$0xff]
      %v4041 = vld [vmem:[#allocation3 + $0xcf] sm:$0xff]
      %v4042 = vld [vmem:[#allocation3 + $0xe7] sm:$0xff]
      %v4043 = vld [vmem:[#allocation3 + $0xef] sm:$0xff]
      %v4044 = vld [vmem:[#allocation3 + $0x107] sm:$0xff]
      %v4045 = vld [vmem:[#allocation3 + $0x10f] sm:$0xff]
      %v4046 = vld [vmem:[#allocation3 + $0x127] sm:$0xff]
      %v4047 = vld [vmem:[#allocation3 + $0x12f] sm:$0xff]
      %v4048 = vld [vmem:[#allocation3 + $0x147] sm:$0xff]
      %v4049 = vld [vmem:[#allocation3 + $0x14f] sm:$0xff]
      %v4050 = vld [vmem:[#allocation3 + $0x167] sm:$0xff]
      %v4051 = vld [vmem:[#allocation3 + $0x16f] sm:$0xff]
      %v4052 = vld [vmem:[#allocation3 + $0x187] sm:$0xff]
      %v4053 = vld [vmem:[#allocation3 + $0x18f] sm:$0xff]
      %v4054 = vld [vmem:[#allocation3 + $0x1a7] sm:$0xff]
      %v4055 = vld [vmem:[#allocation3 + $0x1af] sm:$0xff]
      %v4056 = vld [vmem:[#allocation3 + $0x1c7] sm:$0xff]
      %v4057 = vld [vmem:[#allocation3 + $0x1cf] sm:$0xff]
      %v4058 = vld [vmem:[#allocation3 + $0x1e7] sm:$0xff]
      %v4059 = vld [vmem:[#allocation3 + $0x1ef] sm:$0xff]
      %v4060 = vld [vmem:[%s4] sm:$0xff]
      %v4061 = vld [vmem:[#allocation3 + $0x8] sm:$0xff]
      %v4062 = vld [vmem:[#allocation3 + $0x10] sm:$0xff]
      %v4063 = vld [vmem:[#allocation3 + $0x28] sm:$0xff]
      %v4064 = vld [vmem:[#allocation3 + $0x30] sm:$0xff]
      %v4065 = vld [vmem:[#allocation3 + $0x48] sm:$0xff]
      %v4066 = vld [vmem:[#allocation3 + $0x50] sm:$0xff]
      %v4067 = vld [vmem:[#allocation3 + $0x68] sm:$0xff]
      %v4068 = vld [vmem:[#allocation3 + $0x70] sm:$0xff]
      %v4069 = vld [vmem:[#allocation3 + $0x88] sm:$0xff]
      %v4070 = vld [vmem:[#allocation3 + $0x90] sm:$0xff]
      %v4071 = vld [vmem:[#allocation3 + $0xa8] sm:$0xff]
      %v4072 = vld [vmem:[#allocation3 + $0xb0] sm:$0xff]
      %v4073 = vld [vmem:[#allocation3 + $0xc8] sm:$0xff]
      %v4074 = vld [vmem:[#allocation3 + $0xd0] sm:$0xff]
      %v4075 = vld [vmem:[#allocation3 + $0xe8] sm:$0xff]
      %v4076 = vld [vmem:[#allocation3 + $0xf0] sm:$0xff]
      %v4077 = vld [vmem:[#allocation3 + $0x108] sm:$0xff]
      %v4078 = vld [vmem:[#allocation3 + $0x110] sm:$0xff]
      %v4079 = vld [vmem:[#allocation3 + $0x128] sm:$0xff]
      %v4080 = vld [vmem:[#allocation3 + $0x130] sm:$0xff]
      %v4081 = vld [vmem:[#allocation3 + $0x148] sm:$0xff]
      %v4082 = vld [vmem:[#allocation3 + $0x150] sm:$0xff]
      %v4083 = vld [vmem:[#allocation3 + $0x168] sm:$0xff]
      %v4084 = vld [vmem:[#allocation3 + $0x170] sm:$0xff]
      %v4085 = vld [vmem:[#allocation3 + $0x188] sm:$0xff]
      %v4086 = vld [vmem:[#allocation3 + $0x190] sm:$0xff]
      %v4087 = vld [vmem:[#allocation3 + $0x1a8] sm:$0xff]
      %v4088 = vld [vmem:[#allocation3 + $0x1b0] sm:$0xff]
      %v4089 = vld [vmem:[#allocation3 + $0x1c8] sm:$0xff]
      %v4090 = vld [vmem:[#allocation3 + $0x1d0] sm:$0xff]
      %v4091 = vld [vmem:[#allocation3 + $0x1e8] sm:$0xff]
      %v4092 = vld [vmem:[#allocation3 + $0x1f0] sm:$0xff]
      %s4093 = scalar_lea.vmem %s4, 8
      %v4094 = vld [vmem:[%s4093] sm:$0xff]
      %v4096 = vsel %vm3948, %v4061, 0
      %v4099 = vsel %vm3948, %v4062, 0
      %v4102 = vsel %vm3948, %v4063, 0
      %v4105 = vsel %vm3948, %v4064, 0
      %v4108 = vsel %vm3948, %v4065, 0
      %v4111 = vsel %vm3948, %v4066, 0
      %v4114 = vsel %vm3948, %v4067, 0
      %v4117 = vsel %vm3948, %v4068, 0
      %v4120 = vsel %vm3948, %v4069, 0
      %v4123 = vsel %vm3948, %v4070, 0
      %v4126 = vsel %vm3948, %v4071, 0
      %v4129 = vsel %vm3948, %v4072, 0
      %v4132 = vsel %vm3948, %v4073, 0
      %v4135 = vsel %vm3948, %v4074, 0
      %v4138 = vsel %vm3948, %v4075, 0
      %v4141 = vsel %vm3948, %v4076, 0
      %v4144 = vsel %vm3948, %v4077, 0
      %v4147 = vsel %vm3948, %v4078, 0
      %v4150 = vsel %vm3948, %v4079, 0
      %v4153 = vsel %vm3948, %v4080, 0
      %v4156 = vsel %vm3948, %v4081, 0
      %v4159 = vsel %vm3948, %v4082, 0
      %v4162 = vsel %vm3948, %v4083, 0
      %v4165 = vsel %vm3948, %v4084, 0
      %v4168 = vsel %vm3948, %v4085, 0
      %v4171 = vsel %vm3948, %v4086, 0
      %v4174 = vsel %vm3948, %v4087, 0
      %v4177 = vsel %vm3948, %v4088, 0
      %v4180 = vsel %vm3948, %v4089, 0
      %v4183 = vsel %vm3948, %v4090, 0
      %v4186 = vsel %vm3948, %v4091, 0
      %v4189 = vsel %vm3948, %v4092, 0
      %4191 = vmatprep.subr.mxu0 0.0
      %4192 = vmatpush1.msra.mxu0 %v4094
      %4193 = vmatprep.subr.mxu0 0.0
      %4194 = vmatpush1.msra.mxu0 0.0
      %4195 = vmatprep.subr.mxu0 0.0
      %4196 = vmatpush1.msra.mxu0 0.0
      %4197 = vmatprep.subr.mxu0 0.0
      %4198 = vmatpush1.msra.mxu0 0.0
      %4199 = vmatprep.subr.mxu0 0.0
      %4200 = vmatpush1.msra.mxu0 0.0
      %4201 = vmatprep.subr.mxu0 0.0
      %4202 = vmatpush1.msra.mxu0 0.0
      %4203 = vmatprep.subr.mxu0 0.0
      %4204 = vmatpush1.msra.mxu0 0.0
      %4205 = vmatprep.subr.mxu0 0.0
      %4206 = vmatpush1.msra.mxu0 0.0
      %4207 = vmatprep.subr.mxu0 0.0
      %4208 = vmatpush1.msra.mxu0 0.0
      %4209 = vmatprep.subr.mxu0 0.0
      %4210 = vmatpush1.msra.mxu0 0.0
      %4211 = vmatprep.subr.mxu0 0.0
      %4212 = vmatpush1.msra.mxu0 0.0
      %4213 = vmatprep.subr.mxu0 0.0
      %4214 = vmatpush1.msra.mxu0 0.0
      %4215 = vmatprep.subr.mxu0 0.0
      %4216 = vmatpush1.msra.mxu0 0.0
      %4217 = vmatprep.subr.mxu0 0.0
      %4218 = vmatpush1.msra.mxu0 0.0
      %4219 = vmatprep.subr.mxu0 0.0
      %4220 = vmatpush1.msra.mxu0 0.0
      %4221 = vmatprep.subr.mxu0 0.0
      %4222 = vmatpush1.msra.mxu0 0.0
      %4223 = vmatprep.subr.mxu0 0.0
      %4224 = vmatpush1.msra.mxu0 0.0
      %4225 = vmatprep.subr.mxu0 0.0
      %4226 = vmatpush1.msra.mxu0 0.0
      %4227 = vmatprep.subr.mxu0 0.0
      %4228 = vmatpush1.msra.mxu0 0.0
      %4229 = vmatprep.subr.mxu0 0.0
      %4230 = vmatpush1.msra.mxu0 0.0
      %4231 = vmatprep.subr.mxu0 0.0
      %4232 = vmatpush1.msra.mxu0 0.0
      %4233 = vmatprep.subr.mxu0 0.0
      %4234 = vmatpush1.msra.mxu0 0.0
      %4235 = vmatprep.subr.mxu0 0.0
      %4236 = vmatpush1.msra.mxu0 0.0
      %4237 = vmatprep.subr.mxu0 0.0
      %4238 = vmatpush1.msra.mxu0 0.0
      %4239 = vmatprep.subr.mxu0 0.0
      %4240 = vmatpush1.msra.mxu0 0.0
      %4241 = vmatprep.subr.mxu0 0.0
      %4242 = vmatpush1.msra.mxu0 0.0
      %4243 = vmatprep.subr.mxu0 0.0
      %4244 = vmatpush1.msra.mxu0 0.0
      %4245 = vmatprep.subr.mxu0 0.0
      %4246 = vmatpush1.msra.mxu0 0.0
      %4247 = vmatprep.subr.mxu0 0.0
      %4248 = vmatpush1.msra.mxu0 0.0
      %4249 = vmatprep.subr.mxu0 0.0
      %4250 = vmatpush1.msra.mxu0 0.0
      %4251 = vmatprep.subr.mxu0 0.0
      %4252 = vmatpush1.msra.mxu0 0.0
      %4253 = vmatprep.subr.mxu0 0.0
      %4254 = vmatpush1.msra.mxu0 0.0
      %4255 = vmatprep.mubr.f32.mxu0 0.0
      %4256 = vmatmul.mubr.f32.gmra.mrb[0].mxu0 %v4096
      %v4257 = vpop.f32.mrb[0].mxu0
      %v4258 = vadd.f32 0.0, %v4257
      %v4259 = vpop.f32.mrb[0].mxu0
      %4260 = vmatprep.mubr.f32.mxu0 0.0
      %4261 = vmatmul.mubr.f32.gmra.mrb[0].mxu0 %v4099
      %v4262 = vpop.f32.mrb[0].mxu0
      %v4263 = vadd.f32 0.0, %v4262
      %v4264 = vpop.f32.mrb[0].mxu0
      %4265 = vmatprep.mubr.f32.mxu0 0.0
      %4266 = vmatmul.mubr.f32.gmra.mrb[0].mxu0 %v4102
      %v4267 = vpop.f32.mrb[0].mxu0
      %v4268 = vadd.f32 0.0, %v4267
      %v4269 = vpop.f32.mrb[0].mxu0
      %4270 = vmatprep.mubr.f32.mxu0 0.0
      %4271 = vmatmul.mubr.f32.gmra.mrb[0].mxu0 %v4105
      %v4272 = vpop.f32.mrb[0].mxu0
      %v4273 = vadd.f32 0.0, %v4272
      %v4274 = vpop.f32.mrb[0].mxu0
      %4275 = vmatprep.mubr.f32.mxu0 0.0
      %4276 = vmatmul.mubr.f32.gmra.mrb[0].mxu0 %v4108
      %v4277 = vpop.f32.mrb[0].mxu0
      %v4278 = vadd.f32 0.0, %v4277
      %v4279 = vpop.f32.mrb[0].mxu0
      %4280 = vmatprep.mubr.f32.mxu0 0.0
      %4281 = vmatmul.mubr.f32.gmra.mrb[0].mxu0 %v4111
      %v4282 = vpop.f32.mrb[0].mxu0
      %v4283 = vadd.f32 0.0, %v4282
      %v4284 = vpop.f32.mrb[0].mxu0
      %4285 = vmatprep.mubr.f32.mxu0 0.0
      %4286 = vmatmul.mubr.f32.gmra.mrb[0].mxu0 %v4114
      %v4287 = vpop.f32.mrb[0].mxu0
      %v4288 = vadd.f32 0.0, %v4287
      %v4289 = vpop.f32.mrb[0].mxu0
      %4290 = vmatprep.mubr.f32.mxu0 0.0
      %4291 = vmatmul.mubr.f32.gmra.mrb[0].mxu0 %v4117
      %v4292 = vpop.f32.mrb[0].mxu0
      %v4293 = vadd.f32 0.0, %v4292
      %v4294 = vpop.f32.mrb[0].mxu0
      %4295 = vmatprep.mubr.f32.mxu0 0.0
      %4296 = vmatmul.mubr.f32.gmra.mrb[0].mxu0 %v4120
      %v4297 = vpop.f32.mrb[0].mxu0
      %v4298 = vadd.f32 0.0, %v4297
      %v4299 = vpop.f32.mrb[0].mxu0
      %4300 = vmatprep.mubr.f32.mxu0 0.0
      %4301 = vmatmul.mubr.f32.gmra.mrb[0].mxu0 %v4123
      %v4302 = vpop.f32.mrb[0].mxu0
      %v4303 = vadd.f32 0.0, %v4302
      %v4304 = vpop.f32.mrb[0].mxu0
      %4305 = vmatprep.mubr.f32.mxu0 0.0
      %4306 = vmatmul.mubr.f32.gmra.mrb[0].mxu0 %v4126
      %v4307 = vpop.f32.mrb[0].mxu0
      %v4308 = vadd.f32 0.0, %v4307
      %v4309 = vpop.f32.mrb[0].mxu0
      %4310 = vmatprep.mubr.f32.mxu0 0.0
      %4311 = vmatmul.mubr.f32.gmra.mrb[0].mxu0 %v4129
      %v4312 = vpop.f32.mrb[0].mxu0
      %v4313 = vadd.f32 0.0, %v4312
      %v4314 = vpop.f32.mrb[0].mxu0
      %4315 = vmatprep.mubr.f32.mxu0 0.0
      %4316 = vmatmul.mubr.f32.gmra.mrb[0].mxu0 %v4132
      %v4317 = vpop.f32.mrb[0].mxu0
      %v4318 = vadd.f32 0.0, %v4317
      %v4319 = vpop.f32.mrb[0].mxu0
      %4320 = vmatprep.mubr.f32.mxu0 0.0
      %4321 = vmatmul.mubr.f32.gmra.mrb[0].mxu0 %v4135
      %v4322 = vpop.f32.mrb[0].mxu0
      %v4323 = vadd.f32 0.0, %v4322
      %v4324 = vpop.f32.mrb[0].mxu0
      %4325 = vmatprep.mubr.f32.mxu0 0.0
      %4326 = vmatmul.mubr.f32.gmra.mrb[0].mxu0 %v4138
      %v4327 = vpop.f32.mrb[0].mxu0
      %v4328 = vadd.f32 0.0, %v4327
      %v4329 = vpop.f32.mrb[0].mxu0
      %4330 = vmatprep.mubr.f32.mxu0 0.0
      %4331 = vmatmul.mubr.f32.gmra.mrb[0].mxu0 %v4141
      %v4332 = vpop.f32.mrb[0].mxu0
      %v4333 = vadd.f32 0.0, %v4332
      %v4334 = vpop.f32.mrb[0].mxu0
      %4335 = vmatprep.mubr.f32.mxu0 0.0
      %4336 = vmatmul.mubr.f32.gmra.mrb[0].mxu0 %v4144
      %v4337 = vpop.f32.mrb[0].mxu0
      %v4338 = vadd.f32 0.0, %v4337
      %v4339 = vpop.f32.mrb[0].mxu0
      %4340 = vmatprep.mubr.f32.mxu0 0.0
      %4341 = vmatmul.mubr.f32.gmra.mrb[0].mxu0 %v4147
      %v4342 = vpop.f32.mrb[0].mxu0
      %v4343 = vadd.f32 0.0, %v4342
      %v4344 = vpop.f32.mrb[0].mxu0
      %4345 = vmatprep.mubr.f32.mxu0 0.0
      %4346 = vmatmul.mubr.f32.gmra.mrb[0].mxu0 %v4150
      %v4347 = vpop.f32.mrb[0].mxu0
      %v4348 = vadd.f32 0.0, %v4347
      %v4349 = vpop.f32.mrb[0].mxu0
      %4350 = vmatprep.mubr.f32.mxu0 0.0
      %4351 = vmatmul.mubr.f32.gmra.mrb[0].mxu0 %v4153
      %v4352 = vpop.f32.mrb[0].mxu0
      %v4353 = vadd.f32 0.0, %v4352
      %v4354 = vpop.f32.mrb[0].mxu0
      %4355 = vmatprep.mubr.f32.mxu0 0.0
      %4356 = vmatmul.mubr.f32.gmra.mrb[0].mxu0 %v4156
      %v4357 = vpop.f32.mrb[0].mxu0
      %v4358 = vadd.f32 0.0, %v4357
      %v4359 = vpop.f32.mrb[0].mxu0
      %4360 = vmatprep.mubr.f32.mxu0 0.0
      %4361 = vmatmul.mubr.f32.gmra.mrb[0].mxu0 %v4159
      %v4362 = vpop.f32.mrb[0].mxu0
      %v4363 = vadd.f32 0.0, %v4362
      %v4364 = vpop.f32.mrb[0].mxu0
      %4365 = vmatprep.mubr.f32.mxu0 0.0
      %4366 = vmatmul.mubr.f32.gmra.mrb[0].mxu0 %v4162
      %v4367 = vpop.f32.mrb[0].mxu0
      %v4368 = vadd.f32 0.0, %v4367
      %v4369 = vpop.f32.mrb[0].mxu0
      %4370 = vmatprep.mubr.f32.mxu0 0.0
      %4371 = vmatmul.mubr.f32.gmra.mrb[0].mxu0 %v4165
      %v4372 = vpop.f32.mrb[0].mxu0
      %v4373 = vadd.f32 0.0, %v4372
      %v4374 = vpop.f32.mrb[0].mxu0
      %4375 = vmatprep.mubr.f32.mxu0 0.0
      %4376 = vmatmul.mubr.f32.gmra.mrb[0].mxu0 %v4168
      %v4377 = vpop.f32.mrb[0].mxu0
      %v4378 = vadd.f32 0.0, %v4377
      %v4379 = vpop.f32.mrb[0].mxu0
      %4380 = vmatprep.mubr.f32.mxu0 0.0
      %4381 = vmatmul.mubr.f32.gmra.mrb[0].mxu0 %v4171
      %v4382 = vpop.f32.mrb[0].mxu0
      %v4383 = vadd.f32 0.0, %v4382
      %v4384 = vpop.f32.mrb[0].mxu0
      %4385 = vmatprep.mubr.f32.mxu0 0.0
      %4386 = vmatmul.mubr.f32.gmra.mrb[0].mxu0 %v4174
      %v4387 = vpop.f32.mrb[0].mxu0
      %v4388 = vadd.f32 0.0, %v4387
      %v4389 = vpop.f32.mrb[0].mxu0
      %4390 = vmatprep.mubr.f32.mxu0 0.0
      %4391 = vmatmul.mubr.f32.gmra.mrb[0].mxu0 %v4177
      %v4392 = vpop.f32.mrb[0].mxu0
      %v4393 = vadd.f32 0.0, %v4392
      %v4394 = vpop.f32.mrb[0].mxu0
      %4395 = vmatprep.mubr.f32.mxu0 0.0
      %4396 = vmatmul.mubr.f32.gmra.mrb[0].mxu0 %v4180
      %v4397 = vpop.f32.mrb[0].mxu0
      %v4398 = vadd.f32 0.0, %v4397
      %v4399 = vpop.f32.mrb[0].mxu0
      %4400 = vmatprep.mubr.f32.mxu0 0.0
      %4401 = vmatmul.mubr.f32.gmra.mrb[0].mxu0 %v4183
      %v4402 = vpop.f32.mrb[0].mxu0
      %v4403 = vadd.f32 0.0, %v4402
      %v4404 = vpop.f32.mrb[0].mxu0
      %4405 = vmatprep.mubr.f32.mxu0 0.0
      %4406 = vmatmul.mubr.f32.gmra.mrb[0].mxu0 %v4186
      %v4407 = vpop.f32.mrb[0].mxu0
      %v4408 = vadd.f32 0.0, %v4407
      %v4409 = vpop.f32.mrb[0].mxu0
      %4410 = vmatprep.mubr.f32.mxu0 0.0
      %4411 = vmatmul.mubr.f32.gmra.mrb[0].mxu0 %v4189
      %v4412 = vpop.f32.mrb[0].mxu0
      %v4413 = vadd.f32 0.0, %v4412
      %v4414 = vpop.f32.mrb[0].mxu0
      %4415 = vdwg.mxu0
      %v4417 = vsel %vm3948, %v4028, 0
      %v4420 = vsel %vm3948, %v4029, 0
      %v4423 = vsel %vm3948, %v4030, 0
      %v4426 = vsel %vm3948, %v4031, 0
      %v4429 = vsel %vm3948, %v4032, 0
      %v4432 = vsel %vm3948, %v4033, 0
      %v4435 = vsel %vm3948, %v4034, 0
      %v4438 = vsel %vm3948, %v4035, 0
      %v4441 = vsel %vm3948, %v4036, 0
      %v4444 = vsel %vm3948, %v4037, 0
      %v4447 = vsel %vm3948, %v4038, 0
      %v4450 = vsel %vm3948, %v4039, 0
      %v4453 = vsel %vm3948, %v4040, 0
      %v4456 = vsel %vm3948, %v4041, 0
      %v4459 = vsel %vm3948, %v4042, 0
      %v4462 = vsel %vm3948, %v4043, 0
      %v4465 = vsel %vm3948, %v4044, 0
      %v4468 = vsel %vm3948, %v4045, 0
      %v4471 = vsel %vm3948, %v4046, 0
      %v4474 = vsel %vm3948, %v4047, 0
      %v4477 = vsel %vm3948, %v4048, 0
      %v4480 = vsel %vm3948, %v4049, 0
      %v4483 = vsel %vm3948, %v4050, 0
      %v4486 = vsel %vm3948, %v4051, 0
      %v4489 = vsel %vm3948, %v4052, 0
      %v4492 = vsel %vm3948, %v4053, 0
      %v4495 = vsel %vm3948, %v4054, 0
      %v4498 = vsel %vm3948, %v4055, 0
      %v4501 = vsel %vm3948, %v4056, 0
      %v4504 = vsel %vm3948, %v4057, 0
      %v4507 = vsel %vm3948, %v4058, 0
      %v4510 = vsel %vm3948, %v4059, 0
      %4512 = vmatprep.subr.mxu0 0.0
      %4513 = vmatpush1.msra.mxu0 %v4060
      %4514 = vmatprep.subr.mxu0 0.0
      %4515 = vmatpush1.msra.mxu0 0.0
      %4516 = vmatprep.subr.mxu0 0.0
      %4517 = vmatpush1.msra.mxu0 0.0
      %4518 = vmatprep.subr.mxu0 0.0
      %4519 = vmatpush1.msra.mxu0 0.0
      %4520 = vmatprep.subr.mxu0 0.0
      %4521 = vmatpush1.msra.mxu0 0.0
      %4522 = vmatprep.subr.mxu0 0.0
      %4523 = vmatpush1.msra.mxu0 0.0
      %4524 = vmatprep.subr.mxu0 0.0
      %4525 = vmatpush1.msra.mxu0 0.0
      %4526 = vmatprep.subr.mxu0 0.0
      %4527 = vmatpush1.msra.mxu0 0.0
      %4528 = vmatprep.subr.mxu0 0.0
      %4529 = vmatpush1.msra.mxu0 0.0
      %4530 = vmatprep.subr.mxu0 0.0
      %4531 = vmatpush1.msra.mxu0 0.0
      %4532 = vmatprep.subr.mxu0 0.0
      %4533 = vmatpush1.msra.mxu0 0.0
      %4534 = vmatprep.subr.mxu0 0.0
      %4535 = vmatpush1.msra.mxu0 0.0
      %4536 = vmatprep.subr.mxu0 0.0
      %4537 = vmatpush1.msra.mxu0 0.0
      %4538 = vmatprep.subr.mxu0 0.0
      %4539 = vmatpush1.msra.mxu0 0.0
      %4540 = vmatprep.subr.mxu0 0.0
      %4541 = vmatpush1.msra.mxu0 0.0
      %4542 = vmatprep.subr.mxu0 0.0
      %4543 = vmatpush1.msra.mxu0 0.0
      %4544 = vmatprep.subr.mxu0 0.0
      %4545 = vmatpush1.msra.mxu0 0.0
      %4546 = vmatprep.subr.mxu0 0.0
      %4547 = vmatpush1.msra.mxu0 0.0
      %4548 = vmatprep.subr.mxu0 0.0
      %4549 = vmatpush1.msra.mxu0 0.0
      %4550 = vmatprep.subr.mxu0 0.0
      %4551 = vmatpush1.msra.mxu0 0.0
      %4552 = vmatprep.subr.mxu0 0.0
      %4553 = vmatpush1.msra.mxu0 0.0
      %4554 = vmatprep.subr.mxu0 0.0
      %4555 = vmatpush1.msra.mxu0 0.0
      %4556 = vmatprep.subr.mxu0 0.0
      %4557 = vmatpush1.msra.mxu0 0.0
      %4558 = vmatprep.subr.mxu0 0.0
      %4559 = vmatpush1.msra.mxu0 0.0
      %4560 = vmatprep.subr.mxu0 0.0
      %4561 = vmatpush1.msra.mxu0 0.0
      %4562 = vmatprep.subr.mxu0 0.0
      %4563 = vmatpush1.msra.mxu0 0.0
      %4564 = vmatprep.subr.mxu0 0.0
      %4565 = vmatpush1.msra.mxu0 0.0
      %4566 = vmatprep.subr.mxu0 0.0
      %4567 = vmatpush1.msra.mxu0 0.0
      %4568 = vmatprep.subr.mxu0 0.0
      %4569 = vmatpush1.msra.mxu0 0.0
      %4570 = vmatprep.subr.mxu0 0.0
      %4571 = vmatpush1.msra.mxu0 0.0
      %4572 = vmatprep.subr.mxu0 0.0
      %4573 = vmatpush1.msra.mxu0 0.0
      %4574 = vmatprep.subr.mxu0 0.0
      %4575 = vmatpush1.msra.mxu0 0.0
      %4576 = vmatprep.mubr.f32.mxu0 0.0
      %4577 = vmatmul.mubr.f32.gmra.mrb[0].mxu0 %v4417
      %v4578 = vpop.f32.mrb[0].mxu0
      %v4579 = vadd.f32 %v4258, %v4578
      %v4580 = vpop.f32.mrb[0].mxu0
      %4581 = vmatprep.mubr.f32.mxu0 0.0
      %4582 = vmatmul.mubr.f32.gmra.mrb[0].mxu0 %v4420
      %v4583 = vpop.f32.mrb[0].mxu0
      %v4584 = vadd.f32 %v4263, %v4583
      %v4585 = vpop.f32.mrb[0].mxu0
      %4586 = vmatprep.mubr.f32.mxu0 0.0
      %4587 = vmatmul.mubr.f32.gmra.mrb[0].mxu0 %v4423
      %v4588 = vpop.f32.mrb[0].mxu0
      %v4589 = vadd.f32 %v4268, %v4588
      %v4590 = vpop.f32.mrb[0].mxu0
      %4591 = vmatprep.mubr.f32.mxu0 0.0
      %4592 = vmatmul.mubr.f32.gmra.mrb[0].mxu0 %v4426
      %v4593 = vpop.f32.mrb[0].mxu0
      %v4594 = vadd.f32 %v4273, %v4593
      %v4595 = vpop.f32.mrb[0].mxu0
      %4596 = vmatprep.mubr.f32.mxu0 0.0
      %4597 = vmatmul.mubr.f32.gmra.mrb[0].mxu0 %v4429
      %v4598 = vpop.f32.mrb[0].mxu0
      %v4599 = vadd.f32 %v4278, %v4598
      %v4600 = vpop.f32.mrb[0].mxu0
      %4601 = vmatprep.mubr.f32.mxu0 0.0
      %4602 = vmatmul.mubr.f32.gmra.mrb[0].mxu0 %v4432
      %v4603 = vpop.f32.mrb[0].mxu0
      %v4604 = vadd.f32 %v4283, %v4603
      %v4605 = vpop.f32.mrb[0].mxu0
      %4606 = vmatprep.mubr.f32.mxu0 0.0
      %4607 = vmatmul.mubr.f32.gmra.mrb[0].mxu0 %v4435
      %v4608 = vpop.f32.mrb[0].mxu0
      %v4609 = vadd.f32 %v4288, %v4608
      %v4610 = vpop.f32.mrb[0].mxu0
      %4611 = vmatprep.mubr.f32.mxu0 0.0
      %4612 = vmatmul.mubr.f32.gmra.mrb[0].mxu0 %v4438
      %v4613 = vpop.f32.mrb[0].mxu0
      %v4614 = vadd.f32 %v4293, %v4613
      %v4615 = vpop.f32.mrb[0].mxu0
      %4616 = vmatprep.mubr.f32.mxu0 0.0
      %4617 = vmatmul.mubr.f32.gmra.mrb[0].mxu0 %v4441
      %v4618 = vpop.f32.mrb[0].mxu0
      %v4619 = vadd.f32 %v4298, %v4618
      %v4620 = vpop.f32.mrb[0].mxu0
      %4621 = vmatprep.mubr.f32.mxu0 0.0
      %4622 = vmatmul.mubr.f32.gmra.mrb[0].mxu0 %v4444
      %v4623 = vpop.f32.mrb[0].mxu0
      %v4624 = vadd.f32 %v4303, %v4623
      %v4625 = vpop.f32.mrb[0].mxu0
      %4626 = vmatprep.mubr.f32.mxu0 0.0
      %4627 = vmatmul.mubr.f32.gmra.mrb[0].mxu0 %v4447
      %v4628 = vpop.f32.mrb[0].mxu0
      %v4629 = vadd.f32 %v4308, %v4628
      %v4630 = vpop.f32.mrb[0].mxu0
      %4631 = vmatprep.mubr.f32.mxu0 0.0
      %4632 = vmatmul.mubr.f32.gmra.mrb[0].mxu0 %v4450
      %v4633 = vpop.f32.mrb[0].mxu0
      %v4634 = vadd.f32 %v4313, %v4633
      %v4635 = vpop.f32.mrb[0].mxu0
      %4636 = vmatprep.mubr.f32.mxu0 0.0
      %4637 = vmatmul.mubr.f32.gmra.mrb[0].mxu0 %v4453
      %v4638 = vpop.f32.mrb[0].mxu0
      %v4639 = vadd.f32 %v4318, %v4638
      %v4640 = vpop.f32.mrb[0].mxu0
      %4641 = vmatprep.mubr.f32.mxu0 0.0
      %4642 = vmatmul.mubr.f32.gmra.mrb[0].mxu0 %v4456
      %v4643 = vpop.f32.mrb[0].mxu0
      %v4644 = vadd.f32 %v4323, %v4643
      %v4645 = vpop.f32.mrb[0].mxu0
      %4646 = vmatprep.mubr.f32.mxu0 0.0
      %4647 = vmatmul.mubr.f32.gmra.mrb[0].mxu0 %v4459
      %v4648 = vpop.f32.mrb[0].mxu0
      %v4649 = vadd.f32 %v4328, %v4648
      %v4650 = vpop.f32.mrb[0].mxu0
      %4651 = vmatprep.mubr.f32.mxu0 0.0
      %4652 = vmatmul.mubr.f32.gmra.mrb[0].mxu0 %v4462
      %v4653 = vpop.f32.mrb[0].mxu0
      %v4654 = vadd.f32 %v4333, %v4653
      %v4655 = vpop.f32.mrb[0].mxu0
      %4656 = vmatprep.mubr.f32.mxu0 0.0
      %4657 = vmatmul.mubr.f32.gmra.mrb[0].mxu0 %v4465
      %v4658 = vpop.f32.mrb[0].mxu0
      %v4659 = vadd.f32 %v4338, %v4658
      %v4660 = vpop.f32.mrb[0].mxu0
      %4661 = vmatprep.mubr.f32.mxu0 0.0
      %4662 = vmatmul.mubr.f32.gmra.mrb[0].mxu0 %v4468
      %v4663 = vpop.f32.mrb[0].mxu0
      %v4664 = vadd.f32 %v4343, %v4663
      %v4665 = vpop.f32.mrb[0].mxu0
      %4666 = vmatprep.mubr.f32.mxu0 0.0
      %4667 = vmatmul.mubr.f32.gmra.mrb[0].mxu0 %v4471
      %v4668 = vpop.f32.mrb[0].mxu0
      %v4669 = vadd.f32 %v4348, %v4668
      %v4670 = vpop.f32.mrb[0].mxu0
      %4671 = vmatprep.mubr.f32.mxu0 0.0
      %4672 = vmatmul.mubr.f32.gmra.mrb[0].mxu0 %v4474
      %v4673 = vpop.f32.mrb[0].mxu0
      %v4674 = vadd.f32 %v4353, %v4673
      %v4675 = vpop.f32.mrb[0].mxu0
      %4676 = vmatprep.mubr.f32.mxu0 0.0
      %4677 = vmatmul.mubr.f32.gmra.mrb[0].mxu0 %v4477
      %v4678 = vpop.f32.mrb[0].mxu0
      %v4679 = vadd.f32 %v4358, %v4678
      %v4680 = vpop.f32.mrb[0].mxu0
      %4681 = vmatprep.mubr.f32.mxu0 0.0
      %4682 = vmatmul.mubr.f32.gmra.mrb[0].mxu0 %v4480
      %v4683 = vpop.f32.mrb[0].mxu0
      %v4684 = vadd.f32 %v4363, %v4683
      %v4685 = vpop.f32.mrb[0].mxu0
      %4686 = vmatprep.mubr.f32.mxu0 0.0
      %4687 = vmatmul.mubr.f32.gmra.mrb[0].mxu0 %v4483
      %v4688 = vpop.f32.mrb[0].mxu0
      %v4689 = vadd.f32 %v4368, %v4688
      %v4690 = vpop.f32.mrb[0].mxu0
      %4691 = vmatprep.mubr.f32.mxu0 0.0
      %4692 = vmatmul.mubr.f32.gmra.mrb[0].mxu0 %v4486
      %v4693 = vpop.f32.mrb[0].mxu0
      %v4694 = vadd.f32 %v4373, %v4693
      %v4695 = vpop.f32.mrb[0].mxu0
      %4696 = vmatprep.mubr.f32.mxu0 0.0
      %4697 = vmatmul.mubr.f32.gmra.mrb[0].mxu0 %v4489
      %v4698 = vpop.f32.mrb[0].mxu0
      %v4699 = vadd.f32 %v4378, %v4698
      %v4700 = vpop.f32.mrb[0].mxu0
      %4701 = vmatprep.mubr.f32.mxu0 0.0
      %4702 = vmatmul.mubr.f32.gmra.mrb[0].mxu0 %v4492
      %v4703 = vpop.f32.mrb[0].mxu0
      %v4704 = vadd.f32 %v4383, %v4703
      %v4705 = vpop.f32.mrb[0].mxu0
      %4706 = vmatprep.mubr.f32.mxu0 0.0
      %4707 = vmatmul.mubr.f32.gmra.mrb[0].mxu0 %v4495
      %v4708 = vpop.f32.mrb[0].mxu0
      %v4709 = vadd.f32 %v4388, %v4708
      %v4710 = vpop.f32.mrb[0].mxu0
      %4711 = vmatprep.mubr.f32.mxu0 0.0
      %4712 = vmatmul.mubr.f32.gmra.mrb[0].mxu0 %v4498
      %v4713 = vpop.f32.mrb[0].mxu0
      %v4714 = vadd.f32 %v4393, %v4713
      %v4715 = vpop.f32.mrb[0].mxu0
      %4716 = vmatprep.mubr.f32.mxu0 0.0
      %4717 = vmatmul.mubr.f32.gmra.mrb[0].mxu0 %v4501
      %v4718 = vpop.f32.mrb[0].mxu0
      %v4719 = vadd.f32 %v4398, %v4718
      %v4720 = vpop.f32.mrb[0].mxu0
      %4721 = vmatprep.mubr.f32.mxu0 0.0
      %4722 = vmatmul.mubr.f32.gmra.mrb[0].mxu0 %v4504
      %v4723 = vpop.f32.mrb[0].mxu0
      %v4724 = vadd.f32 %v4403, %v4723
      %v4725 = vpop.f32.mrb[0].mxu0
      %4726 = vmatprep.mubr.f32.mxu0 0.0
      %4727 = vmatmul.mubr.f32.gmra.mrb[0].mxu0 %v4507
      %v4728 = vpop.f32.mrb[0].mxu0
      %v4729 = vadd.f32 %v4408, %v4728
      %v4730 = vpop.f32.mrb[0].mxu0
      %4731 = vmatprep.mubr.f32.mxu0 0.0
      %4732 = vmatmul.mubr.f32.gmra.mrb[0].mxu0 %v4510
      %v4733 = vpop.f32.mrb[0].mxu0
      %v4734 = vadd.f32 %v4413, %v4733
      %v4735 = vpop.f32.mrb[0].mxu0
      %4736 = vdwg.mxu0
      %v4737 = vld [vmem:[#allocation3 + $0x9] sm:$0xff]
      %v4738 = vld [vmem:[#allocation3 + $0x11] sm:$0xff]
      %v4739 = vld [vmem:[#allocation3 + $0x29] sm:$0xff]
      %v4740 = vld [vmem:[#allocation3 + $0x31] sm:$0xff]
      %v4741 = vld [vmem:[#allocation3 + $0x49] sm:$0xff]
      %v4742 = vld [vmem:[#allocation3 + $0x51] sm:$0xff]
      %v4743 = vld [vmem:[#allocation3 + $0x69] sm:$0xff]
      %v4744 = vld [vmem:[#allocation3 + $0x71] sm:$0xff]
      %v4745 = vld [vmem:[#allocation3 + $0x89] sm:$0xff]
      %v4746 = vld [vmem:[#allocation3 + $0x91] sm:$0xff]
      %v4747 = vld [vmem:[#allocation3 + $0xa9] sm:$0xff]
      %v4748 = vld [vmem:[#allocation3 + $0xb1] sm:$0xff]
      %v4749 = vld [vmem:[#allocation3 + $0xc9] sm:$0xff]
      %v4750 = vld [vmem:[#allocation3 + $0xd1] sm:$0xff]
      %v4751 = vld [vmem:[#allocation3 + $0xe9] sm:$0xff]
      %v4752 = vld [vmem:[#allocation3 + $0xf1] sm:$0xff]
      %v4753 = vld [vmem:[#allocation3 + $0x109] sm:$0xff]
      %v4754 = vld [vmem:[#allocation3 + $0x111] sm:$0xff]
      %v4755 = vld [vmem:[#allocation3 + $0x129] sm:$0xff]
      %v4756 = vld [vmem:[#allocation3 + $0x131] sm:$0xff]
      %v4757 = vld [vmem:[#allocation3 + $0x149] sm:$0xff]
      %v4758 = vld [vmem:[#allocation3 + $0x151] sm:$0xff]
      %v4759 = vld [vmem:[#allocation3 + $0x169] sm:$0xff]
      %v4760 = vld [vmem:[#allocation3 + $0x171] sm:$0xff]
      %v4761 = vld [vmem:[#allocation3 + $0x189] sm:$0xff]
      %v4762 = vld [vmem:[#allocation3 + $0x191] sm:$0xff]
      %v4763 = vld [vmem:[#allocation3 + $0x1a9] sm:$0xff]
      %v4764 = vld [vmem:[#allocation3 + $0x1b1] sm:$0xff]
      %v4765 = vld [vmem:[#allocation3 + $0x1c9] sm:$0xff]
      %v4766 = vld [vmem:[#allocation3 + $0x1d1] sm:$0xff]
      %v4767 = vld [vmem:[#allocation3 + $0x1e9] sm:$0xff]
      %v4768 = vld [vmem:[#allocation3 + $0x1f1] sm:$0xff]
      %s4769 = scalar_lea.vmem %s4, 16
      %v4770 = vld [vmem:[%s4769] sm:$0xff]
      %v4772 = vsel %vm3948, %v4737, 0
      %v4775 = vsel %vm3948, %v4738, 0
      %v4778 = vsel %vm3948, %v4739, 0
      %v4781 = vsel %vm3948, %v4740, 0
      %v4784 = vsel %vm3948, %v4741, 0
      %v4787 = vsel %vm3948, %v4742, 0
      %v4790 = vsel %vm3948, %v4743, 0
      %v4793 = vsel %vm3948, %v4744, 0
      %v4796 = vsel %vm3948, %v4745, 0
      %v4799 = vsel %vm3948, %v4746, 0
      %v4802 = vsel %vm3948, %v4747, 0
      %v4805 = vsel %vm3948, %v4748, 0
      %v4808 = vsel %vm3948, %v4749, 0
      %v4811 = vsel %vm3948, %v4750, 0
      %v4814 = vsel %vm3948, %v4751, 0
      %v4817 = vsel %vm3948, %v4752, 0
      %v4820 = vsel %vm3948, %v4753, 0
      %v4823 = vsel %vm3948, %v4754, 0
      %v4826 = vsel %vm3948, %v4755, 0
      %v4829 = vsel %vm3948, %v4756, 0
      %v4832 = vsel %vm3948, %v4757, 0
      %v4835 = vsel %vm3948, %v4758, 0
      %v4838 = vsel %vm3948, %v4759, 0
      %v4841 = vsel %vm3948, %v4760, 0
      %v4844 = vsel %vm3948, %v4761, 0
      %v4847 = vsel %vm3948, %v4762, 0
      %v4850 = vsel %vm3948, %v4763, 0
      %v4853 = vsel %vm3948, %v4764, 0
      %v4856 = vsel %vm3948, %v4765, 0
      %v4859 = vsel %vm3948, %v4766, 0
      %v4862 = vsel %vm3948, %v4767, 0
      %v4865 = vsel %vm3948, %v4768, 0
      %4867 = vmatprep.subr.mxu0 0.0
      %4868 = vmatpush1.msra.mxu0 %v4770
      %4869 = vmatprep.subr.mxu0 0.0
      %4870 = vmatpush1.msra.mxu0 0.0
      %4871 = vmatprep.subr.mxu0 0.0
      %4872 = vmatpush1.msra.mxu0 0.0
      %4873 = vmatprep.subr.mxu0 0.0
      %4874 = vmatpush1.msra.mxu0 0.0
      %4875 = vmatprep.subr.mxu0 0.0
      %4876 = vmatpush1.msra.mxu0 0.0
      %4877 = vmatprep.subr.mxu0 0.0
      %4878 = vmatpush1.msra.mxu0 0.0
      %4879 = vmatprep.subr.mxu0 0.0
      %4880 = vmatpush1.msra.mxu0 0.0
      %4881 = vmatprep.subr.mxu0 0.0
      %4882 = vmatpush1.msra.mxu0 0.0
      %4883 = vmatprep.subr.mxu0 0.0
      %4884 = vmatpush1.msra.mxu0 0.0
      %4885 = vmatprep.subr.mxu0 0.0
      %4886 = vmatpush1.msra.mxu0 0.0
      %4887 = vmatprep.subr.mxu0 0.0
      %4888 = vmatpush1.msra.mxu0 0.0
      %4889 = vmatprep.subr.mxu0 0.0
      %4890 = vmatpush1.msra.mxu0 0.0
      %4891 = vmatprep.subr.mxu0 0.0
      %4892 = vmatpush1.msra.mxu0 0.0
      %4893 = vmatprep.subr.mxu0 0.0
      %4894 = vmatpush1.msra.mxu0 0.0
      %4895 = vmatprep.subr.mxu0 0.0
      %4896 = vmatpush1.msra.mxu0 0.0
      %4897 = vmatprep.subr.mxu0 0.0
      %4898 = vmatpush1.msra.mxu0 0.0
      %4899 = vmatprep.subr.mxu0 0.0
      %4900 = vmatpush1.msra.mxu0 0.0
      %4901 = vmatprep.subr.mxu0 0.0
      %4902 = vmatpush1.msra.mxu0 0.0
      %4903 = vmatprep.subr.mxu0 0.0
      %4904 = vmatpush1.msra.mxu0 0.0
      %4905 = vmatprep.subr.mxu0 0.0
      %4906 = vmatpush1.msra.mxu0 0.0
      %4907 = vmatprep.subr.mxu0 0.0
      %4908 = vmatpush1.msra.mxu0 0.0
      %4909 = vmatprep.subr.mxu0 0.0
      %4910 = vmatpush1.msra.mxu0 0.0
      %4911 = vmatprep.subr.mxu0 0.0
      %4912 = vmatpush1.msra.mxu0 0.0
      %4913 = vmatprep.subr.mxu0 0.0
      %4914 = vmatpush1.msra.mxu0 0.0
      %4915 = vmatprep.subr.mxu0 0.0
      %4916 = vmatpush1.msra.mxu0 0.0
      %4917 = vmatprep.subr.mxu0 0.0
      %4918 = vmatpush1.msra.mxu0 0.0
      %4919 = vmatprep.subr.mxu0 0.0
      %4920 = vmatpush1.msra.mxu0 0.0
      %4921 = vmatprep.subr.mxu0 0.0
      %4922 = vmatpush1.msra.mxu0 0.0
      %4923 = vmatprep.subr.mxu0 0.0
      %4924 = vmatpush1.msra.mxu0 0.0
      %4925 = vmatprep.subr.mxu0 0.0
      %4926 = vmatpush1.msra.mxu0 0.0
      %4927 = vmatprep.subr.mxu0 0.0
      %4928 = vmatpush1.msra.mxu0 0.0
      %4929 = vmatprep.subr.mxu0 0.0
      %4930 = vmatpush1.msra.mxu0 0.0
      %4931 = vmatprep.mubr.f32.mxu0 0.0
      %4932 = vmatmul.mubr.f32.gmra.mrb[0].mxu0 %v4772
      %v4933 = vpop.f32.mrb[0].mxu0
      %v4934 = vadd.f32 0.0, %v4933
      %v4935 = vpop.f32.mrb[0].mxu0
      %4936 = vmatprep.mubr.f32.mxu0 0.0
      %4937 = vmatmul.mubr.f32.gmra.mrb[0].mxu0 %v4775
      %v4938 = vpop.f32.mrb[0].mxu0
      %v4939 = vadd.f32 0.0, %v4938
      %v4940 = vpop.f32.mrb[0].mxu0
      %4941 = vmatprep.mubr.f32.mxu0 0.0
      %4942 = vmatmul.mubr.f32.gmra.mrb[0].mxu0 %v4778
      %v4943 = vpop.f32.mrb[0].mxu0
      %v4944 = vadd.f32 0.0, %v4943
      %v4945 = vpop.f32.mrb[0].mxu0
      %4946 = vmatprep.mubr.f32.mxu0 0.0
      %4947 = vmatmul.mubr.f32.gmra.mrb[0].mxu0 %v4781
      %v4948 = vpop.f32.mrb[0].mxu0
      %v4949 = vadd.f32 0.0, %v4948
      %v4950 = vpop.f32.mrb[0].mxu0
      %4951 = vmatprep.mubr.f32.mxu0 0.0
      %4952 = vmatmul.mubr.f32.gmra.mrb[0].mxu0 %v4784
      %v4953 = vpop.f32.mrb[0].mxu0
      %v4954 = vadd.f32 0.0, %v4953
      %v4955 = vpop.f32.mrb[0].mxu0
      %4956 = vmatprep.mubr.f32.mxu0 0.0
      %4957 = vmatmul.mubr.f32.gmra.mrb[0].mxu0 %v4787
      %v4958 = vpop.f32.mrb[0].mxu0
      %v4959 = vadd.f32 0.0, %v4958
      %v4960 = vpop.f32.mrb[0].mxu0
      %4961 = vmatprep.mubr.f32.mxu0 0.0
      %4962 = vmatmul.mubr.f32.gmra.mrb[0].mxu0 %v4790
      %v4963 = vpop.f32.mrb[0].mxu0
      %v4964 = vadd.f32 0.0, %v4963
      %v4965 = vpop.f32.mrb[0].mxu0
      %4966 = vmatprep.mubr.f32.mxu0 0.0
      %4967 = vmatmul.mubr.f32.gmra.mrb[0].mxu0 %v4793
      %v4968 = vpop.f32.mrb[0].mxu0
      %v4969 = vadd.f32 0.0, %v4968
      %v4970 = vpop.f32.mrb[0].mxu0
      %4971 = vmatprep.mubr.f32.mxu0 0.0
      %4972 = vmatmul.mubr.f32.gmra.mrb[0].mxu0 %v4796
      %v4973 = vpop.f32.mrb[0].mxu0
      %v4974 = vadd.f32 0.0, %v4973
      %v4975 = vpop.f32.mrb[0].mxu0
      %4976 = vmatprep.mubr.f32.mxu0 0.0
      %4977 = vmatmul.mubr.f32.gmra.mrb[0].mxu0 %v4799
      %v4978 = vpop.f32.mrb[0].mxu0
      %v4979 = vadd.f32 0.0, %v4978
      %v4980 = vpop.f32.mrb[0].mxu0
      %4981 = vmatprep.mubr.f32.mxu0 0.0
      %4982 = vmatmul.mubr.f32.gmra.mrb[0].mxu0 %v4802
      %v4983 = vpop.f32.mrb[0].mxu0
      %v4984 = vadd.f32 0.0, %v4983
      %v4985 = vpop.f32.mrb[0].mxu0
      %4986 = vmatprep.mubr.f32.mxu0 0.0
      %4987 = vmatmul.mubr.f32.gmra.mrb[0].mxu0 %v4805
      %v4988 = vpop.f32.mrb[0].mxu0
      %v4989 = vadd.f32 0.0, %v4988
      %v4990 = vpop.f32.mrb[0].mxu0
      %4991 = vmatprep.mubr.f32.mxu0 0.0
      %4992 = vmatmul.mubr.f32.gmra.mrb[0].mxu0 %v4808
      %v4993 = vpop.f32.mrb[0].mxu0
      %v4994 = vadd.f32 0.0, %v4993
      %v4995 = vpop.f32.mrb[0].mxu0
      %4996 = vmatprep.mubr.f32.mxu0 0.0
      %4997 = vmatmul.mubr.f32.gmra.mrb[0].mxu0 %v4811
      %v4998 = vpop.f32.mrb[0].mxu0
      %v4999 = vadd.f32 0.0, %v4998
      %v5000 = vpop.f32.mrb[0].mxu0
      %5001 = vmatprep.mubr.f32.mxu0 0.0
      %5002 = vmatmul.mubr.f32.gmra.mrb[0].mxu0 %v4814
      %v5003 = vpop.f32.mrb[0].mxu0
      %v5004 = vadd.f32 0.0, %v5003
      %v5005 = vpop.f32.mrb[0].mxu0
      %5006 = vmatprep.mubr.f32.mxu0 0.0
      %5007 = vmatmul.mubr.f32.gmra.mrb[0].mxu0 %v4817
      %v5008 = vpop.f32.mrb[0].mxu0
      %v5009 = vadd.f32 0.0, %v5008
      %v5010 = vpop.f32.mrb[0].mxu0
      %5011 = vmatprep.mubr.f32.mxu0 0.0
      %5012 = vmatmul.mubr.f32.gmra.mrb[0].mxu0 %v4820
      %v5013 = vpop.f32.mrb[0].mxu0
      %v5014 = vadd.f32 0.0, %v5013
      %v5015 = vpop.f32.mrb[0].mxu0
      %5016 = vmatprep.mubr.f32.mxu0 0.0
      %5017 = vmatmul.mubr.f32.gmra.mrb[0].mxu0 %v4823
      %v5018 = vpop.f32.mrb[0].mxu0
      %v5019 = vadd.f32 0.0, %v5018
      %v5020 = vpop.f32.mrb[0].mxu0
      %5021 = vmatprep.mubr.f32.mxu0 0.0
      %5022 = vmatmul.mubr.f32.gmra.mrb[0].mxu0 %v4826
      %v5023 = vpop.f32.mrb[0].mxu0
      %v5024 = vadd.f32 0.0, %v5023
      %v5025 = vpop.f32.mrb[0].mxu0
      %5026 = vmatprep.mubr.f32.mxu0 0.0
      %5027 = vmatmul.mubr.f32.gmra.mrb[0].mxu0 %v4829
      %v5028 = vpop.f32.mrb[0].mxu0
      %v5029 = vadd.f32 0.0, %v5028
      %v5030 = vpop.f32.mrb[0].mxu0
      %5031 = vmatprep.mubr.f32.mxu0 0.0
      %5032 = vmatmul.mubr.f32.gmra.mrb[0].mxu0 %v4832
      %v5033 = vpop.f32.mrb[0].mxu0
      %v5034 = vadd.f32 0.0, %v5033
      %v5035 = vpop.f32.mrb[0].mxu0
      %5036 = vmatprep.mubr.f32.mxu0 0.0
      %5037 = vmatmul.mubr.f32.gmra.mrb[0].mxu0 %v4835
      %v5038 = vpop.f32.mrb[0].mxu0
      %v5039 = vadd.f32 0.0, %v5038
      %v5040 = vpop.f32.mrb[0].mxu0
      %5041 = vmatprep.mubr.f32.mxu0 0.0
      %5042 = vmatmul.mubr.f32.gmra.mrb[0].mxu0 %v4838
      %v5043 = vpop.f32.mrb[0].mxu0
      %v5044 = vadd.f32 0.0, %v5043
      %v5045 = vpop.f32.mrb[0].mxu0
      %5046 = vmatprep.mubr.f32.mxu0 0.0
      %5047 = vmatmul.mubr.f32.gmra.mrb[0].mxu0 %v4841
      %v5048 = vpop.f32.mrb[0].mxu0
      %v5049 = vadd.f32 0.0, %v5048
      %v5050 = vpop.f32.mrb[0].mxu0
      %5051 = vmatprep.mubr.f32.mxu0 0.0
      %5052 = vmatmul.mubr.f32.gmra.mrb[0].mxu0 %v4844
      %v5053 = vpop.f32.mrb[0].mxu0
      %v5054 = vadd.f32 0.0, %v5053
      %v5055 = vpop.f32.mrb[0].mxu0
      %5056 = vmatprep.mubr.f32.mxu0 0.0
      %5057 = vmatmul.mubr.f32.gmra.mrb[0].mxu0 %v4847
      %v5058 = vpop.f32.mrb[0].mxu0
      %v5059 = vadd.f32 0.0, %v5058
      %v5060 = vpop.f32.mrb[0].mxu0
      %5061 = vmatprep.mubr.f32.mxu0 0.0
      %5062 = vmatmul.mubr.f32.gmra.mrb[0].mxu0 %v4850
      %v5063 = vpop.f32.mrb[0].mxu0
      %v5064 = vadd.f32 0.0, %v5063
      %v5065 = vpop.f32.mrb[0].mxu0
      %5066 = vmatprep.mubr.f32.mxu0 0.0
      %5067 = vmatmul.mubr.f32.gmra.mrb[0].mxu0 %v4853
      %v5068 = vpop.f32.mrb[0].mxu0
      %v5069 = vadd.f32 0.0, %v5068
      %v5070 = vpop.f32.mrb[0].mxu0
      %5071 = vmatprep.mubr.f32.mxu0 0.0
      %5072 = vmatmul.mubr.f32.gmra.mrb[0].mxu0 %v4856
      %v5073 = vpop.f32.mrb[0].mxu0
      %v5074 = vadd.f32 0.0, %v5073
      %v5075 = vpop.f32.mrb[0].mxu0
      %5076 = vmatprep.mubr.f32.mxu0 0.0
      %5077 = vmatmul.mubr.f32.gmra.mrb[0].mxu0 %v4859
      %v5078 = vpop.f32.mrb[0].mxu0
      %v5079 = vadd.f32 0.0, %v5078
      %v5080 = vpop.f32.mrb[0].mxu0
      %5081 = vmatprep.mubr.f32.mxu0 0.0
      %5082 = vmatmul.mubr.f32.gmra.mrb[0].mxu0 %v4862
      %v5083 = vpop.f32.mrb[0].mxu0
      %v5084 = vadd.f32 0.0, %v5083
      %v5085 = vpop.f32.mrb[0].mxu0
      %5086 = vmatprep.mubr.f32.mxu0 0.0
      %5087 = vmatmul.mubr.f32.gmra.mrb[0].mxu0 %v4865
      %v5088 = vpop.f32.mrb[0].mxu0
      %v5089 = vadd.f32 0.0, %v5088
      %v5090 = vpop.f32.mrb[0].mxu0
      %5091 = vdwg.mxu0
      %v5092 = vadd.f32 %v4579, %v4934
      %v5093 = vadd.f32 %v4584, %v4939
      %v5094 = vadd.f32 %v4589, %v4944
      %v5095 = vadd.f32 %v4594, %v4949
      %v5096 = vadd.f32 %v4599, %v4954
      %v5097 = vadd.f32 %v4604, %v4959
      %v5098 = vadd.f32 %v4609, %v4964
      %v5099 = vadd.f32 %v4614, %v4969
      %v5100 = vadd.f32 %v4619, %v4974
      %v5101 = vadd.f32 %v4624, %v4979
      %v5102 = vadd.f32 %v4629, %v4984
      %v5103 = vadd.f32 %v4634, %v4989
      %v5104 = vadd.f32 %v4639, %v4994
      %v5105 = vadd.f32 %v4644, %v4999
      %v5106 = vadd.f32 %v4649, %v5004
      %v5107 = vadd.f32 %v4654, %v5009
      %v5108 = vadd.f32 %v4659, %v5014
      %v5109 = vadd.f32 %v4664, %v5019
      %v5110 = vadd.f32 %v4669, %v5024
      %v5111 = vadd.f32 %v4674, %v5029
      %v5112 = vadd.f32 %v4679, %v5034
      %v5113 = vadd.f32 %v4684, %v5039
      %v5114 = vadd.f32 %v4689, %v5044
      %v5115 = vadd.f32 %v4694, %v5049
      %v5116 = vadd.f32 %v4699, %v5054
      %v5117 = vadd.f32 %v4704, %v5059
      %v5118 = vadd.f32 %v4709, %v5064
      %v5119 = vadd.f32 %v4714, %v5069
      %v5120 = vadd.f32 %v4719, %v5074
      %v5121 = vadd.f32 %v4724, %v5079
      %v5122 = vadd.f32 %v4729, %v5084
      %v5123 = vadd.f32 %v4734, %v5089
      %v5124 = vld [vmem:[%s3995 + $0x7] sm:$0xff]
      %v5125 = vld [vmem:[%s3995 + $0xf] sm:$0xff]
      %v5126 = vld [vmem:[%s3995 + $0x27] sm:$0xff]
      %v5127 = vld [vmem:[%s3995 + $0x2f] sm:$0xff]
      %v5128 = vld [vmem:[%s3995 + $0x47] sm:$0xff]
      %v5129 = vld [vmem:[%s3995 + $0x4f] sm:$0xff]
      %v5130 = vld [vmem:[%s3995 + $0x67] sm:$0xff]
      %v5131 = vld [vmem:[%s3995 + $0x6f] sm:$0xff]
      %v5132 = vld [vmem:[%s3995 + $0x87] sm:$0xff]
      %v5133 = vld [vmem:[%s3995 + $0x8f] sm:$0xff]
      %v5134 = vld [vmem:[%s3995 + $0xa7] sm:$0xff]
      %v5135 = vld [vmem:[%s3995 + $0xaf] sm:$0xff]
      %v5136 = vld [vmem:[%s3995 + $0xc7] sm:$0xff]
      %v5137 = vld [vmem:[%s3995 + $0xcf] sm:$0xff]
      %v5138 = vld [vmem:[%s3995 + $0xe7] sm:$0xff]
      %v5139 = vld [vmem:[%s3995 + $0xef] sm:$0xff]
      %v5140 = vld [vmem:[%s3995 + $0x107] sm:$0xff]
      %v5141 = vld [vmem:[%s3995 + $0x10f] sm:$0xff]
      %v5142 = vld [vmem:[%s3995 + $0x127] sm:$0xff]
      %v5143 = vld [vmem:[%s3995 + $0x12f] sm:$0xff]
      %v5144 = vld [vmem:[%s3995 + $0x147] sm:$0xff]
      %v5145 = vld [vmem:[%s3995 + $0x14f] sm:$0xff]
      %v5146 = vld [vmem:[%s3995 + $0x167] sm:$0xff]
      %v5147 = vld [vmem:[%s3995 + $0x16f] sm:$0xff]
      %v5148 = vld [vmem:[%s3995 + $0x187] sm:$0xff]
      %v5149 = vld [vmem:[%s3995 + $0x18f] sm:$0xff]
      %v5150 = vld [vmem:[%s3995 + $0x1a7] sm:$0xff]
      %v5151 = vld [vmem:[%s3995 + $0x1af] sm:$0xff]
      %v5152 = vld [vmem:[%s3995 + $0x1c7] sm:$0xff]
      %v5153 = vld [vmem:[%s3995 + $0x1cf] sm:$0xff]
      %v5154 = vld [vmem:[%s3995 + $0x1e7] sm:$0xff]
      %v5155 = vld [vmem:[%s3995 + $0x1ef] sm:$0xff]
      %s5156 = scalar_lea.vmem %s4, 24
      %v5157 = vld [vmem:[%s5156] sm:$0xff]
      %v5159 = vsel %vm3948, %v5124, 0
      %v5162 = vsel %vm3948, %v5125, 0
      %v5165 = vsel %vm3948, %v5126, 0
      %v5168 = vsel %vm3948, %v5127, 0
      %v5171 = vsel %vm3948, %v5128, 0
      %v5174 = vsel %vm3948, %v5129, 0
      %v5177 = vsel %vm3948, %v5130, 0
      %v5180 = vsel %vm3948, %v5131, 0
      %v5183 = vsel %vm3948, %v5132, 0
      %v5186 = vsel %vm3948, %v5133, 0
      %v5189 = vsel %vm3948, %v5134, 0
      %v5192 = vsel %vm3948, %v5135, 0
      %v5195 = vsel %vm3948, %v5136, 0
      %v5198 = vsel %vm3948, %v5137, 0
      %v5201 = vsel %vm3948, %v5138, 0
      %v5204 = vsel %vm3948, %v5139, 0
      %v5207 = vsel %vm3948, %v5140, 0
      %v5210 = vsel %vm3948, %v5141, 0
      %v5213 = vsel %vm3948, %v5142, 0
      %v5216 = vsel %vm3948, %v5143, 0
      %v5219 = vsel %vm3948, %v5144, 0
      %v5222 = vsel %vm3948, %v5145, 0
      %v5225 = vsel %vm3948, %v5146, 0
      %v5228 = vsel %vm3948, %v5147, 0
      %v5231 = vsel %vm3948, %v5148, 0
      %v5234 = vsel %vm3948, %v5149, 0
      %v5237 = vsel %vm3948, %v5150, 0
      %v5240 = vsel %vm3948, %v5151, 0
      %v5243 = vsel %vm3948, %v5152, 0
      %v5246 = vsel %vm3948, %v5153, 0
      %v5249 = vsel %vm3948, %v5154, 0
      %v5252 = vsel %vm3948, %v5155, 0
      %5254 = vmatprep.subr.mxu0 0.0
      %5255 = vmatpush1.msra.mxu0 %v5157
      %5256 = vmatprep.subr.mxu0 0.0
      %5257 = vmatpush1.msra.mxu0 0.0
      %5258 = vmatprep.subr.mxu0 0.0
      %5259 = vmatpush1.msra.mxu0 0.0
      %5260 = vmatprep.subr.mxu0 0.0
      %5261 = vmatpush1.msra.mxu0 0.0
      %5262 = vmatprep.subr.mxu0 0.0
      %5263 = vmatpush1.msra.mxu0 0.0
      %5264 = vmatprep.subr.mxu0 0.0
      %5265 = vmatpush1.msra.mxu0 0.0
      %5266 = vmatprep.subr.mxu0 0.0
      %5267 = vmatpush1.msra.mxu0 0.0
      %5268 = vmatprep.subr.mxu0 0.0
      %5269 = vmatpush1.msra.mxu0 0.0
      %5270 = vmatprep.subr.mxu0 0.0
      %5271 = vmatpush1.msra.mxu0 0.0
      %5272 = vmatprep.subr.mxu0 0.0
      %5273 = vmatpush1.msra.mxu0 0.0
      %5274 = vmatprep.subr.mxu0 0.0
      %5275 = vmatpush1.msra.mxu0 0.0
      %5276 = vmatprep.subr.mxu0 0.0
      %5277 = vmatpush1.msra.mxu0 0.0
      %5278 = vmatprep.subr.mxu0 0.0
      %5279 = vmatpush1.msra.mxu0 0.0
      %5280 = vmatprep.subr.mxu0 0.0
      %5281 = vmatpush1.msra.mxu0 0.0
      %5282 = vmatprep.subr.mxu0 0.0
      %5283 = vmatpush1.msra.mxu0 0.0
      %5284 = vmatprep.subr.mxu0 0.0
      %5285 = vmatpush1.msra.mxu0 0.0
      %5286 = vmatprep.subr.mxu0 0.0
      %5287 = vmatpush1.msra.mxu0 0.0
      %5288 = vmatprep.subr.mxu0 0.0
      %5289 = vmatpush1.msra.mxu0 0.0
      %5290 = vmatprep.subr.mxu0 0.0
      %5291 = vmatpush1.msra.mxu0 0.0
      %5292 = vmatprep.subr.mxu0 0.0
      %5293 = vmatpush1.msra.mxu0 0.0
      %5294 = vmatprep.subr.mxu0 0.0
      %5295 = vmatpush1.msra.mxu0 0.0
      %5296 = vmatprep.subr.mxu0 0.0
      %5297 = vmatpush1.msra.mxu0 0.0
      %5298 = vmatprep.subr.mxu0 0.0
      %5299 = vmatpush1.msra.mxu0 0.0
      %5300 = vmatprep.subr.mxu0 0.0
      %5301 = vmatpush1.msra.mxu0 0.0
      %5302 = vmatprep.subr.mxu0 0.0
      %5303 = vmatpush1.msra.mxu0 0.0
      %5304 = vmatprep.subr.mxu0 0.0
      %5305 = vmatpush1.msra.mxu0 0.0
      %5306 = vmatprep.subr.mxu0 0.0
      %5307 = vmatpush1.msra.mxu0 0.0
      %5308 = vmatprep.subr.mxu0 0.0
      %5309 = vmatpush1.msra.mxu0 0.0
      %5310 = vmatprep.subr.mxu0 0.0
      %5311 = vmatpush1.msra.mxu0 0.0
      %5312 = vmatprep.subr.mxu0 0.0
      %5313 = vmatpush1.msra.mxu0 0.0
      %5314 = vmatprep.subr.mxu0 0.0
      %5315 = vmatpush1.msra.mxu0 0.0
      %5316 = vmatprep.subr.mxu0 0.0
      %5317 = vmatpush1.msra.mxu0 0.0
      %5318 = vmatprep.mubr.f32.mxu0 0.0
      %5319 = vmatmul.mubr.f32.gmra.mrb[0].mxu0 %v5159
      %v5320 = vpop.f32.mrb[0].mxu0
      %v5321 = vadd.f32 0.0, %v5320
      %v5322 = vpop.f32.mrb[0].mxu0
      %5323 = vmatprep.mubr.f32.mxu0 0.0
      %5324 = vmatmul.mubr.f32.gmra.mrb[0].mxu0 %v5162
      %v5325 = vpop.f32.mrb[0].mxu0
      %v5326 = vadd.f32 0.0, %v5325
      %v5327 = vpop.f32.mrb[0].mxu0
      %5328 = vmatprep.mubr.f32.mxu0 0.0
      %5329 = vmatmul.mubr.f32.gmra.mrb[0].mxu0 %v5165
      %v5330 = vpop.f32.mrb[0].mxu0
      %v5331 = vadd.f32 0.0, %v5330
      %v5332 = vpop.f32.mrb[0].mxu0
      %5333 = vmatprep.mubr.f32.mxu0 0.0
      %5334 = vmatmul.mubr.f32.gmra.mrb[0].mxu0 %v5168
      %v5335 = vpop.f32.mrb[0].mxu0
      %v5336 = vadd.f32 0.0, %v5335
      %v5337 = vpop.f32.mrb[0].mxu0
      %5338 = vmatprep.mubr.f32.mxu0 0.0
      %5339 = vmatmul.mubr.f32.gmra.mrb[0].mxu0 %v5171
      %v5340 = vpop.f32.mrb[0].mxu0
      %v5341 = vadd.f32 0.0, %v5340
      %v5342 = vpop.f32.mrb[0].mxu0
      %5343 = vmatprep.mubr.f32.mxu0 0.0
      %5344 = vmatmul.mubr.f32.gmra.mrb[0].mxu0 %v5174
      %v5345 = vpop.f32.mrb[0].mxu0
      %v5346 = vadd.f32 0.0, %v5345
      %v5347 = vpop.f32.mrb[0].mxu0
      %5348 = vmatprep.mubr.f32.mxu0 0.0
      %5349 = vmatmul.mubr.f32.gmra.mrb[0].mxu0 %v5177
      %v5350 = vpop.f32.mrb[0].mxu0
      %v5351 = vadd.f32 0.0, %v5350
      %v5352 = vpop.f32.mrb[0].mxu0
      %5353 = vmatprep.mubr.f32.mxu0 0.0
      %5354 = vmatmul.mubr.f32.gmra.mrb[0].mxu0 %v5180
      %v5355 = vpop.f32.mrb[0].mxu0
      %v5356 = vadd.f32 0.0, %v5355
      %v5357 = vpop.f32.mrb[0].mxu0
      %5358 = vmatprep.mubr.f32.mxu0 0.0
      %5359 = vmatmul.mubr.f32.gmra.mrb[0].mxu0 %v5183
      %v5360 = vpop.f32.mrb[0].mxu0
      %v5361 = vadd.f32 0.0, %v5360
      %v5362 = vpop.f32.mrb[0].mxu0
      %5363 = vmatprep.mubr.f32.mxu0 0.0
      %5364 = vmatmul.mubr.f32.gmra.mrb[0].mxu0 %v5186
      %v5365 = vpop.f32.mrb[0].mxu0
      %v5366 = vadd.f32 0.0, %v5365
      %v5367 = vpop.f32.mrb[0].mxu0
      %5368 = vmatprep.mubr.f32.mxu0 0.0
      %5369 = vmatmul.mubr.f32.gmra.mrb[0].mxu0 %v5189
      %v5370 = vpop.f32.mrb[0].mxu0
      %v5371 = vadd.f32 0.0, %v5370
      %v5372 = vpop.f32.mrb[0].mxu0
      %5373 = vmatprep.mubr.f32.mxu0 0.0
      %5374 = vmatmul.mubr.f32.gmra.mrb[0].mxu0 %v5192
      %v5375 = vpop.f32.mrb[0].mxu0
      %v5376 = vadd.f32 0.0, %v5375
      %v5377 = vpop.f32.mrb[0].mxu0
      %5378 = vmatprep.mubr.f32.mxu0 0.0
      %5379 = vmatmul.mubr.f32.gmra.mrb[0].mxu0 %v5195
      %v5380 = vpop.f32.mrb[0].mxu0
      %v5381 = vadd.f32 0.0, %v5380
      %v5382 = vpop.f32.mrb[0].mxu0
      %5383 = vmatprep.mubr.f32.mxu0 0.0
      %5384 = vmatmul.mubr.f32.gmra.mrb[0].mxu0 %v5198
      %v5385 = vpop.f32.mrb[0].mxu0
      %v5386 = vadd.f32 0.0, %v5385
      %v5387 = vpop.f32.mrb[0].mxu0
      %5388 = vmatprep.mubr.f32.mxu0 0.0
      %5389 = vmatmul.mubr.f32.gmra.mrb[0].mxu0 %v5201
      %v5390 = vpop.f32.mrb[0].mxu0
      %v5391 = vadd.f32 0.0, %v5390
      %v5392 = vpop.f32.mrb[0].mxu0
      %5393 = vmatprep.mubr.f32.mxu0 0.0
      %5394 = vmatmul.mubr.f32.gmra.mrb[0].mxu0 %v5204
      %v5395 = vpop.f32.mrb[0].mxu0
      %v5396 = vadd.f32 0.0, %v5395
      %v5397 = vpop.f32.mrb[0].mxu0
      %5398 = vmatprep.mubr.f32.mxu0 0.0
      %5399 = vmatmul.mubr.f32.gmra.mrb[0].mxu0 %v5207
      %v5400 = vpop.f32.mrb[0].mxu0
      %v5401 = vadd.f32 0.0, %v5400
      %v5402 = vpop.f32.mrb[0].mxu0
      %5403 = vmatprep.mubr.f32.mxu0 0.0
      %5404 = vmatmul.mubr.f32.gmra.mrb[0].mxu0 %v5210
      %v5405 = vpop.f32.mrb[0].mxu0
      %v5406 = vadd.f32 0.0, %v5405
      %v5407 = vpop.f32.mrb[0].mxu0
      %5408 = vmatprep.mubr.f32.mxu0 0.0
      %5409 = vmatmul.mubr.f32.gmra.mrb[0].mxu0 %v5213
      %v5410 = vpop.f32.mrb[0].mxu0
      %v5411 = vadd.f32 0.0, %v5410
      %v5412 = vpop.f32.mrb[0].mxu0
      %5413 = vmatprep.mubr.f32.mxu0 0.0
      %5414 = vmatmul.mubr.f32.gmra.mrb[0].mxu0 %v5216
      %v5415 = vpop.f32.mrb[0].mxu0
      %v5416 = vadd.f32 0.0, %v5415
      %v5417 = vpop.f32.mrb[0].mxu0
      %5418 = vmatprep.mubr.f32.mxu0 0.0
      %5419 = vmatmul.mubr.f32.gmra.mrb[0].mxu0 %v5219
      %v5420 = vpop.f32.mrb[0].mxu0
      %v5421 = vadd.f32 0.0, %v5420
      %v5422 = vpop.f32.mrb[0].mxu0
      %5423 = vmatprep.mubr.f32.mxu0 0.0
      %5424 = vmatmul.mubr.f32.gmra.mrb[0].mxu0 %v5222
      %v5425 = vpop.f32.mrb[0].mxu0
      %v5426 = vadd.f32 0.0, %v5425
      %v5427 = vpop.f32.mrb[0].mxu0
      %5428 = vmatprep.mubr.f32.mxu0 0.0
      %5429 = vmatmul.mubr.f32.gmra.mrb[0].mxu0 %v5225
      %v5430 = vpop.f32.mrb[0].mxu0
      %v5431 = vadd.f32 0.0, %v5430
      %v5432 = vpop.f32.mrb[0].mxu0
      %5433 = vmatprep.mubr.f32.mxu0 0.0
      %5434 = vmatmul.mubr.f32.gmra.mrb[0].mxu0 %v5228
      %v5435 = vpop.f32.mrb[0].mxu0
      %v5436 = vadd.f32 0.0, %v5435
      %v5437 = vpop.f32.mrb[0].mxu0
      %5438 = vmatprep.mubr.f32.mxu0 0.0
      %5439 = vmatmul.mubr.f32.gmra.mrb[0].mxu0 %v5231
      %v5440 = vpop.f32.mrb[0].mxu0
      %v5441 = vadd.f32 0.0, %v5440
      %v5442 = vpop.f32.mrb[0].mxu0
      %5443 = vmatprep.mubr.f32.mxu0 0.0
      %5444 = vmatmul.mubr.f32.gmra.mrb[0].mxu0 %v5234
      %v5445 = vpop.f32.mrb[0].mxu0
      %v5446 = vadd.f32 0.0, %v5445
      %v5447 = vpop.f32.mrb[0].mxu0
      %5448 = vmatprep.mubr.f32.mxu0 0.0
      %5449 = vmatmul.mubr.f32.gmra.mrb[0].mxu0 %v5237
      %v5450 = vpop.f32.mrb[0].mxu0
      %v5451 = vadd.f32 0.0, %v5450
      %v5452 = vpop.f32.mrb[0].mxu0
      %5453 = vmatprep.mubr.f32.mxu0 0.0
      %5454 = vmatmul.mubr.f32.gmra.mrb[0].mxu0 %v5240
      %v5455 = vpop.f32.mrb[0].mxu0
      %v5456 = vadd.f32 0.0, %v5455
      %v5457 = vpop.f32.mrb[0].mxu0
      %5458 = vmatprep.mubr.f32.mxu0 0.0
      %5459 = vmatmul.mubr.f32.gmra.mrb[0].mxu0 %v5243
      %v5460 = vpop.f32.mrb[0].mxu0
      %v5461 = vadd.f32 0.0, %v5460
      %v5462 = vpop.f32.mrb[0].mxu0
      %5463 = vmatprep.mubr.f32.mxu0 0.0
      %5464 = vmatmul.mubr.f32.gmra.mrb[0].mxu0 %v5246
      %v5465 = vpop.f32.mrb[0].mxu0
      %v5466 = vadd.f32 0.0, %v5465
      %v5467 = vpop.f32.mrb[0].mxu0
      %5468 = vmatprep.mubr.f32.mxu0 0.0
      %5469 = vmatmul.mubr.f32.gmra.mrb[0].mxu0 %v5249
      %v5470 = vpop.f32.mrb[0].mxu0
      %v5471 = vadd.f32 0.0, %v5470
      %v5472 = vpop.f32.mrb[0].mxu0
      %5473 = vmatprep.mubr.f32.mxu0 0.0
      %5474 = vmatmul.mubr.f32.gmra.mrb[0].mxu0 %v5252
      %v5475 = vpop.f32.mrb[0].mxu0
      %v5476 = vadd.f32 0.0, %v5475
      %v5477 = vpop.f32.mrb[0].mxu0
      %5478 = vdwg.mxu0
      %v5479 = vadd.f32 %v5092, %v5321
      %v5480 = vadd.f32 %v5093, %v5326
      %v5481 = vadd.f32 %v5094, %v5331
      %v5482 = vadd.f32 %v5095, %v5336
      %v5483 = vadd.f32 %v5096, %v5341
      %v5484 = vadd.f32 %v5097, %v5346
      %v5485 = vadd.f32 %v5098, %v5351
      %v5486 = vadd.f32 %v5099, %v5356
      %v5487 = vadd.f32 %v5100, %v5361
      %v5488 = vadd.f32 %v5101, %v5366
      %v5489 = vadd.f32 %v5102, %v5371
      %v5490 = vadd.f32 %v5103, %v5376
      %v5491 = vadd.f32 %v5104, %v5381
      %v5492 = vadd.f32 %v5105, %v5386
      %v5493 = vadd.f32 %v5106, %v5391
      %v5494 = vadd.f32 %v5107, %v5396
      %v5495 = vadd.f32 %v5108, %v5401
      %v5496 = vadd.f32 %v5109, %v5406
      %v5497 = vadd.f32 %v5110, %v5411
      %v5498 = vadd.f32 %v5111, %v5416
      %v5499 = vadd.f32 %v5112, %v5421
      %v5500 = vadd.f32 %v5113, %v5426
      %v5501 = vadd.f32 %v5114, %v5431
      %v5502 = vadd.f32 %v5115, %v5436
      %v5503 = vadd.f32 %v5116, %v5441
      %v5504 = vadd.f32 %v5117, %v5446
      %v5505 = vadd.f32 %v5118, %v5451
      %v5506 = vadd.f32 %v5119, %v5456
      %v5507 = vadd.f32 %v5120, %v5461
      %v5508 = vadd.f32 %v5121, %v5466
      %v5509 = vadd.f32 %v5122, %v5471
      %v5510 = vadd.f32 %v5123, %v5476
      %v5511 = vld [vmem:[%s3995 + $0x8] sm:$0xff]
      %v5512 = vld [vmem:[%s3995 + $0x10] sm:$0xff]
      %v5513 = vld [vmem:[%s3995 + $0x28] sm:$0xff]
      %v5514 = vld [vmem:[%s3995 + $0x30] sm:$0xff]
      %v5515 = vld [vmem:[%s3995 + $0x48] sm:$0xff]
      %v5516 = vld [vmem:[%s3995 + $0x50] sm:$0xff]
      %v5517 = vld [vmem:[%s3995 + $0x68] sm:$0xff]
      %v5518 = vld [vmem:[%s3995 + $0x70] sm:$0xff]
      %v5519 = vld [vmem:[%s3995 + $0x88] sm:$0xff]
      %v5520 = vld [vmem:[%s3995 + $0x90] sm:$0xff]
      %v5521 = vld [vmem:[%s3995 + $0xa8] sm:$0xff]
      %v5522 = vld [vmem:[%s3995 + $0xb0] sm:$0xff]
      %v5523 = vld [vmem:[%s3995 + $0xc8] sm:$0xff]
      %v5524 = vld [vmem:[%s3995 + $0xd0] sm:$0xff]
      %v5525 = vld [vmem:[%s3995 + $0xe8] sm:$0xff]
      %v5526 = vld [vmem:[%s3995 + $0xf0] sm:$0xff]
      %v5527 = vld [vmem:[%s3995 + $0x108] sm:$0xff]
      %v5528 = vld [vmem:[%s3995 + $0x110] sm:$0xff]
      %v5529 = vld [vmem:[%s3995 + $0x128] sm:$0xff]
      %v5530 = vld [vmem:[%s3995 + $0x130] sm:$0xff]
      %v5531 = vld [vmem:[%s3995 + $0x148] sm:$0xff]
      %v5532 = vld [vmem:[%s3995 + $0x150] sm:$0xff]
      %v5533 = vld [vmem:[%s3995 + $0x168] sm:$0xff]
      %v5534 = vld [vmem:[%s3995 + $0x170] sm:$0xff]
      %v5535 = vld [vmem:[%s3995 + $0x188] sm:$0xff]
      %v5536 = vld [vmem:[%s3995 + $0x190] sm:$0xff]
      %v5537 = vld [vmem:[%s3995 + $0x1a8] sm:$0xff]
      %v5538 = vld [vmem:[%s3995 + $0x1b0] sm:$0xff]
      %v5539 = vld [vmem:[%s3995 + $0x1c8] sm:$0xff]
      %v5540 = vld [vmem:[%s3995 + $0x1d0] sm:$0xff]
      %v5541 = vld [vmem:[%s3995 + $0x1e8] sm:$0xff]
      %v5542 = vld [vmem:[%s3995 + $0x1f0] sm:$0xff]
      %s5543 = scalar_lea.vmem %s4, 32
      %v5544 = vld [vmem:[%s5543] sm:$0xff]
      %v5546 = vsel %vm3948, %v5511, 0
      %v5549 = vsel %vm3948, %v5512, 0
      %v5552 = vsel %vm3948, %v5513, 0
      %v5555 = vsel %vm3948, %v5514, 0
      %v5558 = vsel %vm3948, %v5515, 0
      %v5561 = vsel %vm3948, %v5516, 0
      %v5564 = vsel %vm3948, %v5517, 0
      %v5567 = vsel %vm3948, %v5518, 0
      %v5570 = vsel %vm3948, %v5519, 0
      %v5573 = vsel %vm3948, %v5520, 0
      %v5576 = vsel %vm3948, %v5521, 0
      %v5579 = vsel %vm3948, %v5522, 0
      %v5582 = vsel %vm3948, %v5523, 0
      %v5585 = vsel %vm3948, %v5524, 0
      %v5588 = vsel %vm3948, %v5525, 0
      %v5591 = vsel %vm3948, %v5526, 0
      %v5594 = vsel %vm3948, %v5527, 0
      %v5597 = vsel %vm3948, %v5528, 0
      %v5600 = vsel %vm3948, %v5529, 0
      %v5603 = vsel %vm3948, %v5530, 0
      %v5606 = vsel %vm3948, %v5531, 0
      %v5609 = vsel %vm3948, %v5532, 0
      %v5612 = vsel %vm3948, %v5533, 0
      %v5615 = vsel %vm3948, %v5534, 0
      %v5618 = vsel %vm3948, %v5535, 0
      %v5621 = vsel %vm3948, %v5536, 0
      %v5624 = vsel %vm3948, %v5537, 0
      %v5627 = vsel %vm3948, %v5538, 0
      %v5630 = vsel %vm3948, %v5539, 0
      %v5633 = vsel %vm3948, %v5540, 0
      %v5636 = vsel %vm3948, %v5541, 0
      %v5639 = vsel %vm3948, %v5542, 0
      %5641 = vmatprep.subr.mxu0 0.0
      %5642 = vmatpush1.msra.mxu0 %v5544
      %5643 = vmatprep.subr.mxu0 0.0
      %5644 = vmatpush1.msra.mxu0 0.0
      %5645 = vmatprep.subr.mxu0 0.0
      %5646 = vmatpush1.msra.mxu0 0.0
      %5647 = vmatprep.subr.mxu0 0.0
      %5648 = vmatpush1.msra.mxu0 0.0
      %5649 = vmatprep.subr.mxu0 0.0
      %5650 = vmatpush1.msra.mxu0 0.0
      %5651 = vmatprep.subr.mxu0 0.0
      %5652 = vmatpush1.msra.mxu0 0.0
      %5653 = vmatprep.subr.mxu0 0.0
      %5654 = vmatpush1.msra.mxu0 0.0
      %5655 = vmatprep.subr.mxu0 0.0
      %5656 = vmatpush1.msra.mxu0 0.0
      %5657 = vmatprep.subr.mxu0 0.0
      %5658 = vmatpush1.msra.mxu0 0.0
      %5659 = vmatprep.subr.mxu0 0.0
      %5660 = vmatpush1.msra.mxu0 0.0
      %5661 = vmatprep.subr.mxu0 0.0
      %5662 = vmatpush1.msra.mxu0 0.0
      %5663 = vmatprep.subr.mxu0 0.0
      %5664 = vmatpush1.msra.mxu0 0.0
      %5665 = vmatprep.subr.mxu0 0.0
      %5666 = vmatpush1.msra.mxu0 0.0
      %5667 = vmatprep.subr.mxu0 0.0
      %5668 = vmatpush1.msra.mxu0 0.0
      %5669 = vmatprep.subr.mxu0 0.0
      %5670 = vmatpush1.msra.mxu0 0.0
      %5671 = vmatprep.subr.mxu0 0.0
      %5672 = vmatpush1.msra.mxu0 0.0
      %5673 = vmatprep.subr.mxu0 0.0
      %5674 = vmatpush1.msra.mxu0 0.0
      %5675 = vmatprep.subr.mxu0 0.0
      %5676 = vmatpush1.msra.mxu0 0.0
      %5677 = vmatprep.subr.mxu0 0.0
      %5678 = vmatpush1.msra.mxu0 0.0
      %5679 = vmatprep.subr.mxu0 0.0
      %5680 = vmatpush1.msra.mxu0 0.0
      %5681 = vmatprep.subr.mxu0 0.0
      %5682 = vmatpush1.msra.mxu0 0.0
      %5683 = vmatprep.subr.mxu0 0.0
      %5684 = vmatpush1.msra.mxu0 0.0
      %5685 = vmatprep.subr.mxu0 0.0
      %5686 = vmatpush1.msra.mxu0 0.0
      %5687 = vmatprep.subr.mxu0 0.0
      %5688 = vmatpush1.msra.mxu0 0.0
      %5689 = vmatprep.subr.mxu0 0.0
      %5690 = vmatpush1.msra.mxu0 0.0
      %5691 = vmatprep.subr.mxu0 0.0
      %5692 = vmatpush1.msra.mxu0 0.0
      %5693 = vmatprep.subr.mxu0 0.0
      %5694 = vmatpush1.msra.mxu0 0.0
      %5695 = vmatprep.subr.mxu0 0.0
      %5696 = vmatpush1.msra.mxu0 0.0
      %5697 = vmatprep.subr.mxu0 0.0
      %5698 = vmatpush1.msra.mxu0 0.0
      %5699 = vmatprep.subr.mxu0 0.0
      %5700 = vmatpush1.msra.mxu0 0.0
      %5701 = vmatprep.subr.mxu0 0.0
      %5702 = vmatpush1.msra.mxu0 0.0
      %5703 = vmatprep.subr.mxu0 0.0
      %5704 = vmatpush1.msra.mxu0 0.0
      %5705 = vmatprep.mubr.f32.mxu0 0.0
      %5706 = vmatmul.mubr.f32.gmra.mrb[0].mxu0 %v5546
      %v5707 = vpop.f32.mrb[0].mxu0
      %v5708 = vadd.f32 0.0, %v5707
      %v5709 = vpop.f32.mrb[0].mxu0
      %5710 = vmatprep.mubr.f32.mxu0 0.0
      %5711 = vmatmul.mubr.f32.gmra.mrb[0].mxu0 %v5549
      %v5712 = vpop.f32.mrb[0].mxu0
      %v5713 = vadd.f32 0.0, %v5712
      %v5714 = vpop.f32.mrb[0].mxu0
      %5715 = vmatprep.mubr.f32.mxu0 0.0
      %5716 = vmatmul.mubr.f32.gmra.mrb[0].mxu0 %v5552
      %v5717 = vpop.f32.mrb[0].mxu0
      %v5718 = vadd.f32 0.0, %v5717
      %v5719 = vpop.f32.mrb[0].mxu0
      %5720 = vmatprep.mubr.f32.mxu0 0.0
      %5721 = vmatmul.mubr.f32.gmra.mrb[0].mxu0 %v5555
      %v5722 = vpop.f32.mrb[0].mxu0
      %v5723 = vadd.f32 0.0, %v5722
      %v5724 = vpop.f32.mrb[0].mxu0
      %5725 = vmatprep.mubr.f32.mxu0 0.0
      %5726 = vmatmul.mubr.f32.gmra.mrb[0].mxu0 %v5558
      %v5727 = vpop.f32.mrb[0].mxu0
      %v5728 = vadd.f32 0.0, %v5727
      %v5729 = vpop.f32.mrb[0].mxu0
      %5730 = vmatprep.mubr.f32.mxu0 0.0
      %5731 = vmatmul.mubr.f32.gmra.mrb[0].mxu0 %v5561
      %v5732 = vpop.f32.mrb[0].mxu0
      %v5733 = vadd.f32 0.0, %v5732
      %v5734 = vpop.f32.mrb[0].mxu0
      %5735 = vmatprep.mubr.f32.mxu0 0.0
      %5736 = vmatmul.mubr.f32.gmra.mrb[0].mxu0 %v5564
      %v5737 = vpop.f32.mrb[0].mxu0
      %v5738 = vadd.f32 0.0, %v5737
      %v5739 = vpop.f32.mrb[0].mxu0
      %5740 = vmatprep.mubr.f32.mxu0 0.0
      %5741 = vmatmul.mubr.f32.gmra.mrb[0].mxu0 %v5567
      %v5742 = vpop.f32.mrb[0].mxu0
      %v5743 = vadd.f32 0.0, %v5742
      %v5744 = vpop.f32.mrb[0].mxu0
      %5745 = vmatprep.mubr.f32.mxu0 0.0
      %5746 = vmatmul.mubr.f32.gmra.mrb[0].mxu0 %v5570
      %v5747 = vpop.f32.mrb[0].mxu0
      %v5748 = vadd.f32 0.0, %v5747
      %v5749 = vpop.f32.mrb[0].mxu0
      %5750 = vmatprep.mubr.f32.mxu0 0.0
      %5751 = vmatmul.mubr.f32.gmra.mrb[0].mxu0 %v5573
      %v5752 = vpop.f32.mrb[0].mxu0
      %v5753 = vadd.f32 0.0, %v5752
      %v5754 = vpop.f32.mrb[0].mxu0
      %5755 = vmatprep.mubr.f32.mxu0 0.0
      %5756 = vmatmul.mubr.f32.gmra.mrb[0].mxu0 %v5576
      %v5757 = vpop.f32.mrb[0].mxu0
      %v5758 = vadd.f32 0.0, %v5757
      %v5759 = vpop.f32.mrb[0].mxu0
      %5760 = vmatprep.mubr.f32.mxu0 0.0
      %5761 = vmatmul.mubr.f32.gmra.mrb[0].mxu0 %v5579
      %v5762 = vpop.f32.mrb[0].mxu0
      %v5763 = vadd.f32 0.0, %v5762
      %v5764 = vpop.f32.mrb[0].mxu0
      %5765 = vmatprep.mubr.f32.mxu0 0.0
      %5766 = vmatmul.mubr.f32.gmra.mrb[0].mxu0 %v5582
      %v5767 = vpop.f32.mrb[0].mxu0
      %v5768 = vadd.f32 0.0, %v5767
      %v5769 = vpop.f32.mrb[0].mxu0
      %5770 = vmatprep.mubr.f32.mxu0 0.0
      %5771 = vmatmul.mubr.f32.gmra.mrb[0].mxu0 %v5585
      %v5772 = vpop.f32.mrb[0].mxu0
      %v5773 = vadd.f32 0.0, %v5772
      %v5774 = vpop.f32.mrb[0].mxu0
      %5775 = vmatprep.mubr.f32.mxu0 0.0
      %5776 = vmatmul.mubr.f32.gmra.mrb[0].mxu0 %v5588
      %v5777 = vpop.f32.mrb[0].mxu0
      %v5778 = vadd.f32 0.0, %v5777
      %v5779 = vpop.f32.mrb[0].mxu0
      %5780 = vmatprep.mubr.f32.mxu0 0.0
      %5781 = vmatmul.mubr.f32.gmra.mrb[0].mxu0 %v5591
      %v5782 = vpop.f32.mrb[0].mxu0
      %v5783 = vadd.f32 0.0, %v5782
      %v5784 = vpop.f32.mrb[0].mxu0
      %5785 = vmatprep.mubr.f32.mxu0 0.0
      %5786 = vmatmul.mubr.f32.gmra.mrb[0].mxu0 %v5594
      %v5787 = vpop.f32.mrb[0].mxu0
      %v5788 = vadd.f32 0.0, %v5787
      %v5789 = vpop.f32.mrb[0].mxu0
      %5790 = vmatprep.mubr.f32.mxu0 0.0
      %5791 = vmatmul.mubr.f32.gmra.mrb[0].mxu0 %v5597
      %v5792 = vpop.f32.mrb[0].mxu0
      %v5793 = vadd.f32 0.0, %v5792
      %v5794 = vpop.f32.mrb[0].mxu0
      %5795 = vmatprep.mubr.f32.mxu0 0.0
      %5796 = vmatmul.mubr.f32.gmra.mrb[0].mxu0 %v5600
      %v5797 = vpop.f32.mrb[0].mxu0
      %v5798 = vadd.f32 0.0, %v5797
      %v5799 = vpop.f32.mrb[0].mxu0
      %5800 = vmatprep.mubr.f32.mxu0 0.0
      %5801 = vmatmul.mubr.f32.gmra.mrb[0].mxu0 %v5603
      %v5802 = vpop.f32.mrb[0].mxu0
      %v5803 = vadd.f32 0.0, %v5802
      %v5804 = vpop.f32.mrb[0].mxu0
      %5805 = vmatprep.mubr.f32.mxu0 0.0
      %5806 = vmatmul.mubr.f32.gmra.mrb[0].mxu0 %v5606
      %v5807 = vpop.f32.mrb[0].mxu0
      %v5808 = vadd.f32 0.0, %v5807
      %v5809 = vpop.f32.mrb[0].mxu0
      %5810 = vmatprep.mubr.f32.mxu0 0.0
      %5811 = vmatmul.mubr.f32.gmra.mrb[0].mxu0 %v5609
      %v5812 = vpop.f32.mrb[0].mxu0
      %v5813 = vadd.f32 0.0, %v5812
      %v5814 = vpop.f32.mrb[0].mxu0
      %5815 = vmatprep.mubr.f32.mxu0 0.0
      %5816 = vmatmul.mubr.f32.gmra.mrb[0].mxu0 %v5612
      %v5817 = vpop.f32.mrb[0].mxu0
      %v5818 = vadd.f32 0.0, %v5817
      %v5819 = vpop.f32.mrb[0].mxu0
      %5820 = vmatprep.mubr.f32.mxu0 0.0
      %5821 = vmatmul.mubr.f32.gmra.mrb[0].mxu0 %v5615
      %v5822 = vpop.f32.mrb[0].mxu0
      %v5823 = vadd.f32 0.0, %v5822
      %v5824 = vpop.f32.mrb[0].mxu0
      %5825 = vmatprep.mubr.f32.mxu0 0.0
      %5826 = vmatmul.mubr.f32.gmra.mrb[0].mxu0 %v5618
      %v5827 = vpop.f32.mrb[0].mxu0
      %v5828 = vadd.f32 0.0, %v5827
      %v5829 = vpop.f32.mrb[0].mxu0
      %5830 = vmatprep.mubr.f32.mxu0 0.0
      %5831 = vmatmul.mubr.f32.gmra.mrb[0].mxu0 %v5621
      %v5832 = vpop.f32.mrb[0].mxu0
      %v5833 = vadd.f32 0.0, %v5832
      %v5834 = vpop.f32.mrb[0].mxu0
      %5835 = vmatprep.mubr.f32.mxu0 0.0
      %5836 = vmatmul.mubr.f32.gmra.mrb[0].mxu0 %v5624
      %v5837 = vpop.f32.mrb[0].mxu0
      %v5838 = vadd.f32 0.0, %v5837
      %v5839 = vpop.f32.mrb[0].mxu0
      %5840 = vmatprep.mubr.f32.mxu0 0.0
      %5841 = vmatmul.mubr.f32.gmra.mrb[0].mxu0 %v5627
      %v5842 = vpop.f32.mrb[0].mxu0
      %v5843 = vadd.f32 0.0, %v5842
      %v5844 = vpop.f32.mrb[0].mxu0
      %5845 = vmatprep.mubr.f32.mxu0 0.0
      %5846 = vmatmul.mubr.f32.gmra.mrb[0].mxu0 %v5630
      %v5847 = vpop.f32.mrb[0].mxu0
      %v5848 = vadd.f32 0.0, %v5847
      %v5849 = vpop.f32.mrb[0].mxu0
      %5850 = vmatprep.mubr.f32.mxu0 0.0
      %5851 = vmatmul.mubr.f32.gmra.mrb[0].mxu0 %v5633
      %v5852 = vpop.f32.mrb[0].mxu0
      %v5853 = vadd.f32 0.0, %v5852
      %v5854 = vpop.f32.mrb[0].mxu0
      %5855 = vmatprep.mubr.f32.mxu0 0.0
      %5856 = vmatmul.mubr.f32.gmra.mrb[0].mxu0 %v5636
      %v5857 = vpop.f32.mrb[0].mxu0
      %v5858 = vadd.f32 0.0, %v5857
      %v5859 = vpop.f32.mrb[0].mxu0
      %5860 = vmatprep.mubr.f32.mxu0 0.0
      %5861 = vmatmul.mubr.f32.gmra.mrb[0].mxu0 %v5639
      %v5862 = vpop.f32.mrb[0].mxu0
      %v5863 = vadd.f32 0.0, %v5862
      %v5864 = vpop.f32.mrb[0].mxu0
      %5865 = vdwg.mxu0
      %v5866 = vadd.f32 %v5479, %v5708
      %v5867 = vadd.f32 %v5480, %v5713
      %v5868 = vadd.f32 %v5481, %v5718
      %v5869 = vadd.f32 %v5482, %v5723
      %v5870 = vadd.f32 %v5483, %v5728
      %v5871 = vadd.f32 %v5484, %v5733
      %v5872 = vadd.f32 %v5485, %v5738
      %v5873 = vadd.f32 %v5486, %v5743
      %v5874 = vadd.f32 %v5487, %v5748
      %v5875 = vadd.f32 %v5488, %v5753
      %v5876 = vadd.f32 %v5489, %v5758
      %v5877 = vadd.f32 %v5490, %v5763
      %v5878 = vadd.f32 %v5491, %v5768
      %v5879 = vadd.f32 %v5492, %v5773
      %v5880 = vadd.f32 %v5493, %v5778
      %v5881 = vadd.f32 %v5494, %v5783
      %v5882 = vadd.f32 %v5495, %v5788
      %v5883 = vadd.f32 %v5496, %v5793
      %v5884 = vadd.f32 %v5497, %v5798
      %v5885 = vadd.f32 %v5498, %v5803
      %v5886 = vadd.f32 %v5499, %v5808
      %v5887 = vadd.f32 %v5500, %v5813
      %v5888 = vadd.f32 %v5501, %v5818
      %v5889 = vadd.f32 %v5502, %v5823
      %v5890 = vadd.f32 %v5503, %v5828
      %v5891 = vadd.f32 %v5504, %v5833
      %v5892 = vadd.f32 %v5505, %v5838
      %v5893 = vadd.f32 %v5506, %v5843
      %v5894 = vadd.f32 %v5507, %v5848
      %v5895 = vadd.f32 %v5508, %v5853
      %v5896 = vadd.f32 %v5509, %v5858
      %v5897 = vadd.f32 %v5510, %v5863
      %v5898 = vld [vmem:[%s3995 + $0x9] sm:$0xff]
      %v5899 = vld [vmem:[%s3995 + $0x11] sm:$0xff]
      %v5900 = vld [vmem:[%s3995 + $0x29] sm:$0xff]
      %v5901 = vld [vmem:[%s3995 + $0x31] sm:$0xff]
      %v5902 = vld [vmem:[%s3995 + $0x49] sm:$0xff]
      %v5903 = vld [vmem:[%s3995 + $0x51] sm:$0xff]
      %v5904 = vld [vmem:[%s3995 + $0x69] sm:$0xff]
      %v5905 = vld [vmem:[%s3995 + $0x71] sm:$0xff]
      %v5906 = vld [vmem:[%s3995 + $0x89] sm:$0xff]
      %v5907 = vld [vmem:[%s3995 + $0x91] sm:$0xff]
      %v5908 = vld [vmem:[%s3995 + $0xa9] sm:$0xff]
      %v5909 = vld [vmem:[%s3995 + $0xb1] sm:$0xff]
      %v5910 = vld [vmem:[%s3995 + $0xc9] sm:$0xff]
      %v5911 = vld [vmem:[%s3995 + $0xd1] sm:$0xff]
      %v5912 = vld [vmem:[%s3995 + $0xe9] sm:$0xff]
      %v5913 = vld [vmem:[%s3995 + $0xf1] sm:$0xff]
      %v5914 = vld [vmem:[%s3995 + $0x109] sm:$0xff]
      %v5915 = vld [vmem:[%s3995 + $0x111] sm:$0xff]
      %v5916 = vld [vmem:[%s3995 + $0x129] sm:$0xff]
      %v5917 = vld [vmem:[%s3995 + $0x131] sm:$0xff]
      %v5918 = vld [vmem:[%s3995 + $0x149] sm:$0xff]
      %v5919 = vld [vmem:[%s3995 + $0x151] sm:$0xff]
      %v5920 = vld [vmem:[%s3995 + $0x169] sm:$0xff]
      %v5921 = vld [vmem:[%s3995 + $0x171] sm:$0xff]
      %v5922 = vld [vmem:[%s3995 + $0x189] sm:$0xff]
      %v5923 = vld [vmem:[%s3995 + $0x191] sm:$0xff]
      %v5924 = vld [vmem:[%s3995 + $0x1a9] sm:$0xff]
      %v5925 = vld [vmem:[%s3995 + $0x1b1] sm:$0xff]
      %v5926 = vld [vmem:[%s3995 + $0x1c9] sm:$0xff]
      %v5927 = vld [vmem:[%s3995 + $0x1d1] sm:$0xff]
      %v5928 = vld [vmem:[%s3995 + $0x1e9] sm:$0xff]
      %v5929 = vld [vmem:[%s3995 + $0x1f1] sm:$0xff]
      %s5930 = scalar_lea.vmem %s4, 40
      %v5931 = vld [vmem:[%s5930] sm:$0xff]
      %v5933 = vsel %vm3948, %v5898, 0
      %v5936 = vsel %vm3948, %v5899, 0
      %v5939 = vsel %vm3948, %v5900, 0
      %v5942 = vsel %vm3948, %v5901, 0
      %v5945 = vsel %vm3948, %v5902, 0
      %v5948 = vsel %vm3948, %v5903, 0
      %v5951 = vsel %vm3948, %v5904, 0
      %v5954 = vsel %vm3948, %v5905, 0
      %v5957 = vsel %vm3948, %v5906, 0
      %v5960 = vsel %vm3948, %v5907, 0
      %v5963 = vsel %vm3948, %v5908, 0
      %v5966 = vsel %vm3948, %v5909, 0
      %v5969 = vsel %vm3948, %v5910, 0
      %v5972 = vsel %vm3948, %v5911, 0
      %v5975 = vsel %vm3948, %v5912, 0
      %v5978 = vsel %vm3948, %v5913, 0
      %v5981 = vsel %vm3948, %v5914, 0
      %v5984 = vsel %vm3948, %v5915, 0
      %v5987 = vsel %vm3948, %v5916, 0
      %v5990 = vsel %vm3948, %v5917, 0
      %v5993 = vsel %vm3948, %v5918, 0
      %v5996 = vsel %vm3948, %v5919, 0
      %v5999 = vsel %vm3948, %v5920, 0
      %v6002 = vsel %vm3948, %v5921, 0
      %v6005 = vsel %vm3948, %v5922, 0
      %v6008 = vsel %vm3948, %v5923, 0
      %v6011 = vsel %vm3948, %v5924, 0
      %v6014 = vsel %vm3948, %v5925, 0
      %v6017 = vsel %vm3948, %v5926, 0
      %v6020 = vsel %vm3948, %v5927, 0
      %v6023 = vsel %vm3948, %v5928, 0
      %v6026 = vsel %vm3948, %v5929, 0
      %6028 = vmatprep.subr.mxu0 0.0
      %6029 = vmatpush1.msra.mxu0 %v5931
      %6030 = vmatprep.subr.mxu0 0.0
      %6031 = vmatpush1.msra.mxu0 0.0
      %6032 = vmatprep.subr.mxu0 0.0
      %6033 = vmatpush1.msra.mxu0 0.0
      %6034 = vmatprep.subr.mxu0 0.0
      %6035 = vmatpush1.msra.mxu0 0.0
      %6036 = vmatprep.subr.mxu0 0.0
      %6037 = vmatpush1.msra.mxu0 0.0
      %6038 = vmatprep.subr.mxu0 0.0
      %6039 = vmatpush1.msra.mxu0 0.0
      %6040 = vmatprep.subr.mxu0 0.0
      %6041 = vmatpush1.msra.mxu0 0.0
      %6042 = vmatprep.subr.mxu0 0.0
      %6043 = vmatpush1.msra.mxu0 0.0
      %6044 = vmatprep.subr.mxu0 0.0
      %6045 = vmatpush1.msra.mxu0 0.0
      %6046 = vmatprep.subr.mxu0 0.0
      %6047 = vmatpush1.msra.mxu0 0.0
      %6048 = vmatprep.subr.mxu0 0.0
      %6049 = vmatpush1.msra.mxu0 0.0
      %6050 = vmatprep.subr.mxu0 0.0
      %6051 = vmatpush1.msra.mxu0 0.0
      %6052 = vmatprep.subr.mxu0 0.0
      %6053 = vmatpush1.msra.mxu0 0.0
      %6054 = vmatprep.subr.mxu0 0.0
      %6055 = vmatpush1.msra.mxu0 0.0
      %6056 = vmatprep.subr.mxu0 0.0
      %6057 = vmatpush1.msra.mxu0 0.0
      %6058 = vmatprep.subr.mxu0 0.0
      %6059 = vmatpush1.msra.mxu0 0.0
      %6060 = vmatprep.subr.mxu0 0.0
      %6061 = vmatpush1.msra.mxu0 0.0
      %6062 = vmatprep.subr.mxu0 0.0
      %6063 = vmatpush1.msra.mxu0 0.0
      %6064 = vmatprep.subr.mxu0 0.0
      %6065 = vmatpush1.msra.mxu0 0.0
      %6066 = vmatprep.subr.mxu0 0.0
      %6067 = vmatpush1.msra.mxu0 0.0
      %6068 = vmatprep.subr.mxu0 0.0
      %6069 = vmatpush1.msra.mxu0 0.0
      %6070 = vmatprep.subr.mxu0 0.0
      %6071 = vmatpush1.msra.mxu0 0.0
      %6072 = vmatprep.subr.mxu0 0.0
      %6073 = vmatpush1.msra.mxu0 0.0
      %6074 = vmatprep.subr.mxu0 0.0
      %6075 = vmatpush1.msra.mxu0 0.0
      %6076 = vmatprep.subr.mxu0 0.0
      %6077 = vmatpush1.msra.mxu0 0.0
      %6078 = vmatprep.subr.mxu0 0.0
      %6079 = vmatpush1.msra.mxu0 0.0
      %6080 = vmatprep.subr.mxu0 0.0
      %6081 = vmatpush1.msra.mxu0 0.0
      %6082 = vmatprep.subr.mxu0 0.0
      %6083 = vmatpush1.msra.mxu0 0.0
      %6084 = vmatprep.subr.mxu0 0.0
      %6085 = vmatpush1.msra.mxu0 0.0
      %6086 = vmatprep.subr.mxu0 0.0
      %6087 = vmatpush1.msra.mxu0 0.0
      %6088 = vmatprep.subr.mxu0 0.0
      %6089 = vmatpush1.msra.mxu0 0.0
      %6090 = vmatprep.subr.mxu0 0.0
      %6091 = vmatpush1.msra.mxu0 0.0
      %6092 = vmatprep.mubr.f32.mxu0 0.0
      %6093 = vmatmul.mubr.f32.gmra.mrb[0].mxu0 %v5933
      %v6094 = vpop.f32.mrb[0].mxu0
      %v6095 = vadd.f32 0.0, %v6094
      %v6096 = vpop.f32.mrb[0].mxu0
      %6097 = vmatprep.mubr.f32.mxu0 0.0
      %6098 = vmatmul.mubr.f32.gmra.mrb[0].mxu0 %v5936
      %v6099 = vpop.f32.mrb[0].mxu0
      %v6100 = vadd.f32 0.0, %v6099
      %v6101 = vpop.f32.mrb[0].mxu0
      %6102 = vmatprep.mubr.f32.mxu0 0.0
      %6103 = vmatmul.mubr.f32.gmra.mrb[0].mxu0 %v5939
      %v6104 = vpop.f32.mrb[0].mxu0
      %v6105 = vadd.f32 0.0, %v6104
      %v6106 = vpop.f32.mrb[0].mxu0
      %6107 = vmatprep.mubr.f32.mxu0 0.0
      %6108 = vmatmul.mubr.f32.gmra.mrb[0].mxu0 %v5942
      %v6109 = vpop.f32.mrb[0].mxu0
      %v6110 = vadd.f32 0.0, %v6109
      %v6111 = vpop.f32.mrb[0].mxu0
      %6112 = vmatprep.mubr.f32.mxu0 0.0
      %6113 = vmatmul.mubr.f32.gmra.mrb[0].mxu0 %v5945
      %v6114 = vpop.f32.mrb[0].mxu0
      %v6115 = vadd.f32 0.0, %v6114
      %v6116 = vpop.f32.mrb[0].mxu0
      %6117 = vmatprep.mubr.f32.mxu0 0.0
      %6118 = vmatmul.mubr.f32.gmra.mrb[0].mxu0 %v5948
      %v6119 = vpop.f32.mrb[0].mxu0
      %v6120 = vadd.f32 0.0, %v6119
      %v6121 = vpop.f32.mrb[0].mxu0
      %6122 = vmatprep.mubr.f32.mxu0 0.0
      %6123 = vmatmul.mubr.f32.gmra.mrb[0].mxu0 %v5951
      %v6124 = vpop.f32.mrb[0].mxu0
      %v6125 = vadd.f32 0.0, %v6124
      %v6126 = vpop.f32.mrb[0].mxu0
      %6127 = vmatprep.mubr.f32.mxu0 0.0
      %6128 = vmatmul.mubr.f32.gmra.mrb[0].mxu0 %v5954
      %v6129 = vpop.f32.mrb[0].mxu0
      %v6130 = vadd.f32 0.0, %v6129
      %v6131 = vpop.f32.mrb[0].mxu0
      %6132 = vmatprep.mubr.f32.mxu0 0.0
      %6133 = vmatmul.mubr.f32.gmra.mrb[0].mxu0 %v5957
      %v6134 = vpop.f32.mrb[0].mxu0
      %v6135 = vadd.f32 0.0, %v6134
      %v6136 = vpop.f32.mrb[0].mxu0
      %6137 = vmatprep.mubr.f32.mxu0 0.0
      %6138 = vmatmul.mubr.f32.gmra.mrb[0].mxu0 %v5960
      %v6139 = vpop.f32.mrb[0].mxu0
      %v6140 = vadd.f32 0.0, %v6139
      %v6141 = vpop.f32.mrb[0].mxu0
      %6142 = vmatprep.mubr.f32.mxu0 0.0
      %6143 = vmatmul.mubr.f32.gmra.mrb[0].mxu0 %v5963
      %v6144 = vpop.f32.mrb[0].mxu0
      %v6145 = vadd.f32 0.0, %v6144
      %v6146 = vpop.f32.mrb[0].mxu0
      %6147 = vmatprep.mubr.f32.mxu0 0.0
      %6148 = vmatmul.mubr.f32.gmra.mrb[0].mxu0 %v5966
      %v6149 = vpop.f32.mrb[0].mxu0
      %v6150 = vadd.f32 0.0, %v6149
      %v6151 = vpop.f32.mrb[0].mxu0
      %6152 = vmatprep.mubr.f32.mxu0 0.0
      %6153 = vmatmul.mubr.f32.gmra.mrb[0].mxu0 %v5969
      %v6154 = vpop.f32.mrb[0].mxu0
      %v6155 = vadd.f32 0.0, %v6154
      %v6156 = vpop.f32.mrb[0].mxu0
      %6157 = vmatprep.mubr.f32.mxu0 0.0
      %6158 = vmatmul.mubr.f32.gmra.mrb[0].mxu0 %v5972
      %v6159 = vpop.f32.mrb[0].mxu0
      %v6160 = vadd.f32 0.0, %v6159
      %v6161 = vpop.f32.mrb[0].mxu0
      %6162 = vmatprep.mubr.f32.mxu0 0.0
      %6163 = vmatmul.mubr.f32.gmra.mrb[0].mxu0 %v5975
      %v6164 = vpop.f32.mrb[0].mxu0
      %v6165 = vadd.f32 0.0, %v6164
      %v6166 = vpop.f32.mrb[0].mxu0
      %6167 = vmatprep.mubr.f32.mxu0 0.0
      %6168 = vmatmul.mubr.f32.gmra.mrb[0].mxu0 %v5978
      %v6169 = vpop.f32.mrb[0].mxu0
      %v6170 = vadd.f32 0.0, %v6169
      %v6171 = vpop.f32.mrb[0].mxu0
      %6172 = vmatprep.mubr.f32.mxu0 0.0
      %6173 = vmatmul.mubr.f32.gmra.mrb[0].mxu0 %v5981
      %v6174 = vpop.f32.mrb[0].mxu0
      %v6175 = vadd.f32 0.0, %v6174
      %v6176 = vpop.f32.mrb[0].mxu0
      %6177 = vmatprep.mubr.f32.mxu0 0.0
      %6178 = vmatmul.mubr.f32.gmra.mrb[0].mxu0 %v5984
      %v6179 = vpop.f32.mrb[0].mxu0
      %v6180 = vadd.f32 0.0, %v6179
      %v6181 = vpop.f32.mrb[0].mxu0
      %6182 = vmatprep.mubr.f32.mxu0 0.0
      %6183 = vmatmul.mubr.f32.gmra.mrb[0].mxu0 %v5987
      %v6184 = vpop.f32.mrb[0].mxu0
      %v6185 = vadd.f32 0.0, %v6184
      %v6186 = vpop.f32.mrb[0].mxu0
      %6187 = vmatprep.mubr.f32.mxu0 0.0
      %6188 = vmatmul.mubr.f32.gmra.mrb[0].mxu0 %v5990
      %v6189 = vpop.f32.mrb[0].mxu0
      %v6190 = vadd.f32 0.0, %v6189
      %v6191 = vpop.f32.mrb[0].mxu0
      %6192 = vmatprep.mubr.f32.mxu0 0.0
      %6193 = vmatmul.mubr.f32.gmra.mrb[0].mxu0 %v5993
      %v6194 = vpop.f32.mrb[0].mxu0
      %v6195 = vadd.f32 0.0, %v6194
      %v6196 = vpop.f32.mrb[0].mxu0
      %6197 = vmatprep.mubr.f32.mxu0 0.0
      %6198 = vmatmul.mubr.f32.gmra.mrb[0].mxu0 %v5996
      %v6199 = vpop.f32.mrb[0].mxu0
      %v6200 = vadd.f32 0.0, %v6199
      %v6201 = vpop.f32.mrb[0].mxu0
      %6202 = vmatprep.mubr.f32.mxu0 0.0
      %6203 = vmatmul.mubr.f32.gmra.mrb[0].mxu0 %v5999
      %v6204 = vpop.f32.mrb[0].mxu0
      %v6205 = vadd.f32 0.0, %v6204
      %v6206 = vpop.f32.mrb[0].mxu0
      %6207 = vmatprep.mubr.f32.mxu0 0.0
      %6208 = vmatmul.mubr.f32.gmra.mrb[0].mxu0 %v6002
      %v6209 = vpop.f32.mrb[0].mxu0
      %v6210 = vadd.f32 0.0, %v6209
      %v6211 = vpop.f32.mrb[0].mxu0
      %6212 = vmatprep.mubr.f32.mxu0 0.0
      %6213 = vmatmul.mubr.f32.gmra.mrb[0].mxu0 %v6005
      %v6214 = vpop.f32.mrb[0].mxu0
      %v6215 = vadd.f32 0.0, %v6214
      %v6216 = vpop.f32.mrb[0].mxu0
      %6217 = vmatprep.mubr.f32.mxu0 0.0
      %6218 = vmatmul.mubr.f32.gmra.mrb[0].mxu0 %v6008
      %v6219 = vpop.f32.mrb[0].mxu0
      %v6220 = vadd.f32 0.0, %v6219
      %v6221 = vpop.f32.mrb[0].mxu0
      %6222 = vmatprep.mubr.f32.mxu0 0.0
      %6223 = vmatmul.mubr.f32.gmra.mrb[0].mxu0 %v6011
      %v6224 = vpop.f32.mrb[0].mxu0
      %v6225 = vadd.f32 0.0, %v6224
      %v6226 = vpop.f32.mrb[0].mxu0
      %6227 = vmatprep.mubr.f32.mxu0 0.0
      %6228 = vmatmul.mubr.f32.gmra.mrb[0].mxu0 %v6014
      %v6229 = vpop.f32.mrb[0].mxu0
      %v6230 = vadd.f32 0.0, %v6229
      %v6231 = vpop.f32.mrb[0].mxu0
      %6232 = vmatprep.mubr.f32.mxu0 0.0
      %6233 = vmatmul.mubr.f32.gmra.mrb[0].mxu0 %v6017
      %v6234 = vpop.f32.mrb[0].mxu0
      %v6235 = vadd.f32 0.0, %v6234
      %v6236 = vpop.f32.mrb[0].mxu0
      %6237 = vmatprep.mubr.f32.mxu0 0.0
      %6238 = vmatmul.mubr.f32.gmra.mrb[0].mxu0 %v6020
      %v6239 = vpop.f32.mrb[0].mxu0
      %v6240 = vadd.f32 0.0, %v6239
      %v6241 = vpop.f32.mrb[0].mxu0
      %6242 = vmatprep.mubr.f32.mxu0 0.0
      %6243 = vmatmul.mubr.f32.gmra.mrb[0].mxu0 %v6023
      %v6244 = vpop.f32.mrb[0].mxu0
      %v6245 = vadd.f32 0.0, %v6244
      %v6246 = vpop.f32.mrb[0].mxu0
      %6247 = vmatprep.mubr.f32.mxu0 0.0
      %6248 = vmatmul.mubr.f32.gmra.mrb[0].mxu0 %v6026
      %v6249 = vpop.f32.mrb[0].mxu0
      %v6250 = vadd.f32 0.0, %v6249
      %v6251 = vpop.f32.mrb[0].mxu0
      %6252 = vdwg.mxu0
      %v6253 = vadd.f32 %v5866, %v6095
      %v6254 = vadd.f32 %v5867, %v6100
      %v6255 = vadd.f32 %v5868, %v6105
      %v6256 = vadd.f32 %v5869, %v6110
      %v6257 = vadd.f32 %v5870, %v6115
      %v6258 = vadd.f32 %v5871, %v6120
      %v6259 = vadd.f32 %v5872, %v6125
      %v6260 = vadd.f32 %v5873, %v6130
      %v6261 = vadd.f32 %v5874, %v6135
      %v6262 = vadd.f32 %v5875, %v6140
      %v6263 = vadd.f32 %v5876, %v6145
      %v6264 = vadd.f32 %v5877, %v6150
      %v6265 = vadd.f32 %v5878, %v6155
      %v6266 = vadd.f32 %v5879, %v6160
      %v6267 = vadd.f32 %v5880, %v6165
      %v6268 = vadd.f32 %v5881, %v6170
      %v6269 = vadd.f32 %v5882, %v6175
      %v6270 = vadd.f32 %v5883, %v6180
      %v6271 = vadd.f32 %v5884, %v6185
      %v6272 = vadd.f32 %v5885, %v6190
      %v6273 = vadd.f32 %v5886, %v6195
      %v6274 = vadd.f32 %v5887, %v6200
      %v6275 = vadd.f32 %v5888, %v6205
      %v6276 = vadd.f32 %v5889, %v6210
      %v6277 = vadd.f32 %v5890, %v6215
      %v6278 = vadd.f32 %v5891, %v6220
      %v6279 = vadd.f32 %v5892, %v6225
      %v6280 = vadd.f32 %v5893, %v6230
      %v6281 = vadd.f32 %v5894, %v6235
      %v6282 = vadd.f32 %v5895, %v6240
      %v6283 = vadd.f32 %v5896, %v6245
      %v6284 = vadd.f32 %v5897, %v6250
      %s6285 = scalar_lea.vmem [#allocation3], 64
      %v6286 = vld [vmem:[%s6285 + $0x7] sm:$0xff]
      %v6287 = vld [vmem:[%s6285 + $0xf] sm:$0xff]
      %v6288 = vld [vmem:[%s6285 + $0x27] sm:$0xff]
      %v6289 = vld [vmem:[%s6285 + $0x2f] sm:$0xff]
      %v6290 = vld [vmem:[%s6285 + $0x47] sm:$0xff]
      %v6291 = vld [vmem:[%s6285 + $0x4f] sm:$0xff]
      %v6292 = vld [vmem:[%s6285 + $0x67] sm:$0xff]
      %v6293 = vld [vmem:[%s6285 + $0x6f] sm:$0xff]
      %v6294 = vld [vmem:[%s6285 + $0x87] sm:$0xff]
      %v6295 = vld [vmem:[%s6285 + $0x8f] sm:$0xff]
      %v6296 = vld [vmem:[%s6285 + $0xa7] sm:$0xff]
      %v6297 = vld [vmem:[%s6285 + $0xaf] sm:$0xff]
      %v6298 = vld [vmem:[%s6285 + $0xc7] sm:$0xff]
      %v6299 = vld [vmem:[%s6285 + $0xcf] sm:$0xff]
      %v6300 = vld [vmem:[%s6285 + $0xe7] sm:$0xff]
      %v6301 = vld [vmem:[%s6285 + $0xef] sm:$0xff]
      %v6302 = vld [vmem:[%s6285 + $0x107] sm:$0xff]
      %v6303 = vld [vmem:[%s6285 + $0x10f] sm:$0xff]
      %v6304 = vld [vmem:[%s6285 + $0x127] sm:$0xff]
      %v6305 = vld [vmem:[%s6285 + $0x12f] sm:$0xff]
      %v6306 = vld [vmem:[%s6285 + $0x147] sm:$0xff]
      %v6307 = vld [vmem:[%s6285 + $0x14f] sm:$0xff]
      %v6308 = vld [vmem:[%s6285 + $0x167] sm:$0xff]
      %v6309 = vld [vmem:[%s6285 + $0x16f] sm:$0xff]
      %v6310 = vld [vmem:[%s6285 + $0x187] sm:$0xff]
      %v6311 = vld [vmem:[%s6285 + $0x18f] sm:$0xff]
      %v6312 = vld [vmem:[%s6285 + $0x1a7] sm:$0xff]
      %v6313 = vld [vmem:[%s6285 + $0x1af] sm:$0xff]
      %v6314 = vld [vmem:[%s6285 + $0x1c7] sm:$0xff]
      %v6315 = vld [vmem:[%s6285 + $0x1cf] sm:$0xff]
      %v6316 = vld [vmem:[%s6285 + $0x1e7] sm:$0xff]
      %v6317 = vld [vmem:[%s6285 + $0x1ef] sm:$0xff]
      %s6318 = scalar_lea.vmem %s4, 48
      %v6319 = vld [vmem:[%s6318] sm:$0xff]
      %v6321 = vsel %vm3948, %v6286, 0
      %v6324 = vsel %vm3948, %v6287, 0
      %v6327 = vsel %vm3948, %v6288, 0
      %v6330 = vsel %vm3948, %v6289, 0
      %v6333 = vsel %vm3948, %v6290, 0
      %v6336 = vsel %vm3948, %v6291, 0
      %v6339 = vsel %vm3948, %v6292, 0
      %v6342 = vsel %vm3948, %v6293, 0
      %v6345 = vsel %vm3948, %v6294, 0
      %v6348 = vsel %vm3948, %v6295, 0
      %v6351 = vsel %vm3948, %v6296, 0
      %v6354 = vsel %vm3948, %v6297, 0
      %v6357 = vsel %vm3948, %v6298, 0
      %v6360 = vsel %vm3948, %v6299, 0
      %v6363 = vsel %vm3948, %v6300, 0
      %v6366 = vsel %vm3948, %v6301, 0
      %v6369 = vsel %vm3948, %v6302, 0
      %v6372 = vsel %vm3948, %v6303, 0
      %v6375 = vsel %vm3948, %v6304, 0
      %v6378 = vsel %vm3948, %v6305, 0
      %v6381 = vsel %vm3948, %v6306, 0
      %v6384 = vsel %vm3948, %v6307, 0
      %v6387 = vsel %vm3948, %v6308, 0
      %v6390 = vsel %vm3948, %v6309, 0
      %v6393 = vsel %vm3948, %v6310, 0
      %v6396 = vsel %vm3948, %v6311, 0
      %v6399 = vsel %vm3948, %v6312, 0
      %v6402 = vsel %vm3948, %v6313, 0
      %v6405 = vsel %vm3948, %v6314, 0
      %v6408 = vsel %vm3948, %v6315, 0
      %v6411 = vsel %vm3948, %v6316, 0
      %v6414 = vsel %vm3948, %v6317, 0
      %6416 = vmatprep.subr.mxu0 0.0
      %6417 = vmatpush1.msra.mxu0 %v6319
      %6418 = vmatprep.subr.mxu0 0.0
      %6419 = vmatpush1.msra.mxu0 0.0
      %6420 = vmatprep.subr.mxu0 0.0
      %6421 = vmatpush1.msra.mxu0 0.0
      %6422 = vmatprep.subr.mxu0 0.0
      %6423 = vmatpush1.msra.mxu0 0.0
      %6424 = vmatprep.subr.mxu0 0.0
      %6425 = vmatpush1.msra.mxu0 0.0
      %6426 = vmatprep.subr.mxu0 0.0
      %6427 = vmatpush1.msra.mxu0 0.0
      %6428 = vmatprep.subr.mxu0 0.0
      %6429 = vmatpush1.msra.mxu0 0.0
      %6430 = vmatprep.subr.mxu0 0.0
      %6431 = vmatpush1.msra.mxu0 0.0
      %6432 = vmatprep.subr.mxu0 0.0
      %6433 = vmatpush1.msra.mxu0 0.0
      %6434 = vmatprep.subr.mxu0 0.0
      %6435 = vmatpush1.msra.mxu0 0.0
      %6436 = vmatprep.subr.mxu0 0.0
      %6437 = vmatpush1.msra.mxu0 0.0
      %6438 = vmatprep.subr.mxu0 0.0
      %6439 = vmatpush1.msra.mxu0 0.0
      %6440 = vmatprep.subr.mxu0 0.0
      %6441 = vmatpush1.msra.mxu0 0.0
      %6442 = vmatprep.subr.mxu0 0.0
      %6443 = vmatpush1.msra.mxu0 0.0
      %6444 = vmatprep.subr.mxu0 0.0
      %6445 = vmatpush1.msra.mxu0 0.0
      %6446 = vmatprep.subr.mxu0 0.0
      %6447 = vmatpush1.msra.mxu0 0.0
      %6448 = vmatprep.subr.mxu0 0.0
      %6449 = vmatpush1.msra.mxu0 0.0
      %6450 = vmatprep.subr.mxu0 0.0
      %6451 = vmatpush1.msra.mxu0 0.0
      %6452 = vmatprep.subr.mxu0 0.0
      %6453 = vmatpush1.msra.mxu0 0.0
      %6454 = vmatprep.subr.mxu0 0.0
      %6455 = vmatpush1.msra.mxu0 0.0
      %6456 = vmatprep.subr.mxu0 0.0
      %6457 = vmatpush1.msra.mxu0 0.0
      %6458 = vmatprep.subr.mxu0 0.0
      %6459 = vmatpush1.msra.mxu0 0.0
      %6460 = vmatprep.subr.mxu0 0.0
      %6461 = vmatpush1.msra.mxu0 0.0
      %6462 = vmatprep.subr.mxu0 0.0
      %6463 = vmatpush1.msra.mxu0 0.0
      %6464 = vmatprep.subr.mxu0 0.0
      %6465 = vmatpush1.msra.mxu0 0.0
      %6466 = vmatprep.subr.mxu0 0.0
      %6467 = vmatpush1.msra.mxu0 0.0
      %6468 = vmatprep.subr.mxu0 0.0
      %6469 = vmatpush1.msra.mxu0 0.0
      %6470 = vmatprep.subr.mxu0 0.0
      %6471 = vmatpush1.msra.mxu0 0.0
      %6472 = vmatprep.subr.mxu0 0.0
      %6473 = vmatpush1.msra.mxu0 0.0
      %6474 = vmatprep.subr.mxu0 0.0
      %6475 = vmatpush1.msra.mxu0 0.0
      %6476 = vmatprep.subr.mxu0 0.0
      %6477 = vmatpush1.msra.mxu0 0.0
      %6478 = vmatprep.subr.mxu0 0.0
      %6479 = vmatpush1.msra.mxu0 0.0
      %6480 = vmatprep.mubr.f32.mxu0 0.0
      %6481 = vmatmul.mubr.f32.gmra.mrb[0].mxu0 %v6321
      %v6482 = vpop.f32.mrb[0].mxu0
      %v6483 = vadd.f32 0.0, %v6482
      %v6484 = vpop.f32.mrb[0].mxu0
      %6485 = vmatprep.mubr.f32.mxu0 0.0
      %6486 = vmatmul.mubr.f32.gmra.mrb[0].mxu0 %v6324
      %v6487 = vpop.f32.mrb[0].mxu0
      %v6488 = vadd.f32 0.0, %v6487
      %v6489 = vpop.f32.mrb[0].mxu0
      %6490 = vmatprep.mubr.f32.mxu0 0.0
      %6491 = vmatmul.mubr.f32.gmra.mrb[0].mxu0 %v6327
      %v6492 = vpop.f32.mrb[0].mxu0
      %v6493 = vadd.f32 0.0, %v6492
      %v6494 = vpop.f32.mrb[0].mxu0
      %6495 = vmatprep.mubr.f32.mxu0 0.0
      %6496 = vmatmul.mubr.f32.gmra.mrb[0].mxu0 %v6330
      %v6497 = vpop.f32.mrb[0].mxu0
      %v6498 = vadd.f32 0.0, %v6497
      %v6499 = vpop.f32.mrb[0].mxu0
      %6500 = vmatprep.mubr.f32.mxu0 0.0
      %6501 = vmatmul.mubr.f32.gmra.mrb[0].mxu0 %v6333
      %v6502 = vpop.f32.mrb[0].mxu0
      %v6503 = vadd.f32 0.0, %v6502
      %v6504 = vpop.f32.mrb[0].mxu0
      %6505 = vmatprep.mubr.f32.mxu0 0.0
      %6506 = vmatmul.mubr.f32.gmra.mrb[0].mxu0 %v6336
      %v6507 = vpop.f32.mrb[0].mxu0
      %v6508 = vadd.f32 0.0, %v6507
      %v6509 = vpop.f32.mrb[0].mxu0
      %6510 = vmatprep.mubr.f32.mxu0 0.0
      %6511 = vmatmul.mubr.f32.gmra.mrb[0].mxu0 %v6339
      %v6512 = vpop.f32.mrb[0].mxu0
      %v6513 = vadd.f32 0.0, %v6512
      %v6514 = vpop.f32.mrb[0].mxu0
      %6515 = vmatprep.mubr.f32.mxu0 0.0
      %6516 = vmatmul.mubr.f32.gmra.mrb[0].mxu0 %v6342
      %v6517 = vpop.f32.mrb[0].mxu0
      %v6518 = vadd.f32 0.0, %v6517
      %v6519 = vpop.f32.mrb[0].mxu0
      %6520 = vmatprep.mubr.f32.mxu0 0.0
      %6521 = vmatmul.mubr.f32.gmra.mrb[0].mxu0 %v6345
      %v6522 = vpop.f32.mrb[0].mxu0
      %v6523 = vadd.f32 0.0, %v6522
      %v6524 = vpop.f32.mrb[0].mxu0
      %6525 = vmatprep.mubr.f32.mxu0 0.0
      %6526 = vmatmul.mubr.f32.gmra.mrb[0].mxu0 %v6348
      %v6527 = vpop.f32.mrb[0].mxu0
      %v6528 = vadd.f32 0.0, %v6527
      %v6529 = vpop.f32.mrb[0].mxu0
      %6530 = vmatprep.mubr.f32.mxu0 0.0
      %6531 = vmatmul.mubr.f32.gmra.mrb[0].mxu0 %v6351
      %v6532 = vpop.f32.mrb[0].mxu0
      %v6533 = vadd.f32 0.0, %v6532
      %v6534 = vpop.f32.mrb[0].mxu0
      %6535 = vmatprep.mubr.f32.mxu0 0.0
      %6536 = vmatmul.mubr.f32.gmra.mrb[0].mxu0 %v6354
      %v6537 = vpop.f32.mrb[0].mxu0
      %v6538 = vadd.f32 0.0, %v6537
      %v6539 = vpop.f32.mrb[0].mxu0
      %6540 = vmatprep.mubr.f32.mxu0 0.0
      %6541 = vmatmul.mubr.f32.gmra.mrb[0].mxu0 %v6357
      %v6542 = vpop.f32.mrb[0].mxu0
      %v6543 = vadd.f32 0.0, %v6542
      %v6544 = vpop.f32.mrb[0].mxu0
      %6545 = vmatprep.mubr.f32.mxu0 0.0
      %6546 = vmatmul.mubr.f32.gmra.mrb[0].mxu0 %v6360
      %v6547 = vpop.f32.mrb[0].mxu0
      %v6548 = vadd.f32 0.0, %v6547
      %v6549 = vpop.f32.mrb[0].mxu0
      %6550 = vmatprep.mubr.f32.mxu0 0.0
      %6551 = vmatmul.mubr.f32.gmra.mrb[0].mxu0 %v6363
      %v6552 = vpop.f32.mrb[0].mxu0
      %v6553 = vadd.f32 0.0, %v6552
      %v6554 = vpop.f32.mrb[0].mxu0
      %6555 = vmatprep.mubr.f32.mxu0 0.0
      %6556 = vmatmul.mubr.f32.gmra.mrb[0].mxu0 %v6366
      %v6557 = vpop.f32.mrb[0].mxu0
      %v6558 = vadd.f32 0.0, %v6557
      %v6559 = vpop.f32.mrb[0].mxu0
      %6560 = vmatprep.mubr.f32.mxu0 0.0
      %6561 = vmatmul.mubr.f32.gmra.mrb[0].mxu0 %v6369
      %v6562 = vpop.f32.mrb[0].mxu0
      %v6563 = vadd.f32 0.0, %v6562
      %v6564 = vpop.f32.mrb[0].mxu0
      %6565 = vmatprep.mubr.f32.mxu0 0.0
      %6566 = vmatmul.mubr.f32.gmra.mrb[0].mxu0 %v6372
      %v6567 = vpop.f32.mrb[0].mxu0
      %v6568 = vadd.f32 0.0, %v6567
      %v6569 = vpop.f32.mrb[0].mxu0
      %6570 = vmatprep.mubr.f32.mxu0 0.0
      %6571 = vmatmul.mubr.f32.gmra.mrb[0].mxu0 %v6375
      %v6572 = vpop.f32.mrb[0].mxu0
      %v6573 = vadd.f32 0.0, %v6572
      %v6574 = vpop.f32.mrb[0].mxu0
      %6575 = vmatprep.mubr.f32.mxu0 0.0
      %6576 = vmatmul.mubr.f32.gmra.mrb[0].mxu0 %v6378
      %v6577 = vpop.f32.mrb[0].mxu0
      %v6578 = vadd.f32 0.0, %v6577
      %v6579 = vpop.f32.mrb[0].mxu0
      %6580 = vmatprep.mubr.f32.mxu0 0.0
      %6581 = vmatmul.mubr.f32.gmra.mrb[0].mxu0 %v6381
      %v6582 = vpop.f32.mrb[0].mxu0
      %v6583 = vadd.f32 0.0, %v6582
      %v6584 = vpop.f32.mrb[0].mxu0
      %6585 = vmatprep.mubr.f32.mxu0 0.0
      %6586 = vmatmul.mubr.f32.gmra.mrb[0].mxu0 %v6384
      %v6587 = vpop.f32.mrb[0].mxu0
      %v6588 = vadd.f32 0.0, %v6587
      %v6589 = vpop.f32.mrb[0].mxu0
      %6590 = vmatprep.mubr.f32.mxu0 0.0
      %6591 = vmatmul.mubr.f32.gmra.mrb[0].mxu0 %v6387
      %v6592 = vpop.f32.mrb[0].mxu0
      %v6593 = vadd.f32 0.0, %v6592
      %v6594 = vpop.f32.mrb[0].mxu0
      %6595 = vmatprep.mubr.f32.mxu0 0.0
      %6596 = vmatmul.mubr.f32.gmra.mrb[0].mxu0 %v6390
      %v6597 = vpop.f32.mrb[0].mxu0
      %v6598 = vadd.f32 0.0, %v6597
      %v6599 = vpop.f32.mrb[0].mxu0
      %6600 = vmatprep.mubr.f32.mxu0 0.0
      %6601 = vmatmul.mubr.f32.gmra.mrb[0].mxu0 %v6393
      %v6602 = vpop.f32.mrb[0].mxu0
      %v6603 = vadd.f32 0.0, %v6602
      %v6604 = vpop.f32.mrb[0].mxu0
      %6605 = vmatprep.mubr.f32.mxu0 0.0
      %6606 = vmatmul.mubr.f32.gmra.mrb[0].mxu0 %v6396
      %v6607 = vpop.f32.mrb[0].mxu0
      %v6608 = vadd.f32 0.0, %v6607
      %v6609 = vpop.f32.mrb[0].mxu0
      %6610 = vmatprep.mubr.f32.mxu0 0.0
      %6611 = vmatmul.mubr.f32.gmra.mrb[0].mxu0 %v6399
      %v6612 = vpop.f32.mrb[0].mxu0
      %v6613 = vadd.f32 0.0, %v6612
      %v6614 = vpop.f32.mrb[0].mxu0
      %6615 = vmatprep.mubr.f32.mxu0 0.0
      %6616 = vmatmul.mubr.f32.gmra.mrb[0].mxu0 %v6402
      %v6617 = vpop.f32.mrb[0].mxu0
      %v6618 = vadd.f32 0.0, %v6617
      %v6619 = vpop.f32.mrb[0].mxu0
      %6620 = vmatprep.mubr.f32.mxu0 0.0
      %6621 = vmatmul.mubr.f32.gmra.mrb[0].mxu0 %v6405
      %v6622 = vpop.f32.mrb[0].mxu0
      %v6623 = vadd.f32 0.0, %v6622
      %v6624 = vpop.f32.mrb[0].mxu0
      %6625 = vmatprep.mubr.f32.mxu0 0.0
      %6626 = vmatmul.mubr.f32.gmra.mrb[0].mxu0 %v6408
      %v6627 = vpop.f32.mrb[0].mxu0
      %v6628 = vadd.f32 0.0, %v6627
      %v6629 = vpop.f32.mrb[0].mxu0
      %6630 = vmatprep.mubr.f32.mxu0 0.0
      %6631 = vmatmul.mubr.f32.gmra.mrb[0].mxu0 %v6411
      %v6632 = vpop.f32.mrb[0].mxu0
      %v6633 = vadd.f32 0.0, %v6632
      %v6634 = vpop.f32.mrb[0].mxu0
      %6635 = vmatprep.mubr.f32.mxu0 0.0
      %6636 = vmatmul.mubr.f32.gmra.mrb[0].mxu0 %v6414
      %v6637 = vpop.f32.mrb[0].mxu0
      %v6638 = vadd.f32 0.0, %v6637
      %v6639 = vpop.f32.mrb[0].mxu0
      %6640 = vdwg.mxu0
      %v6641 = vadd.f32 %v6253, %v6483
      %v6642 = vadd.f32 %v6254, %v6488
      %v6643 = vadd.f32 %v6255, %v6493
      %v6644 = vadd.f32 %v6256, %v6498
      %v6645 = vadd.f32 %v6257, %v6503
      %v6646 = vadd.f32 %v6258, %v6508
      %v6647 = vadd.f32 %v6259, %v6513
      %v6648 = vadd.f32 %v6260, %v6518
      %v6649 = vadd.f32 %v6261, %v6523
      %v6650 = vadd.f32 %v6262, %v6528
      %v6651 = vadd.f32 %v6263, %v6533
      %v6652 = vadd.f32 %v6264, %v6538
      %v6653 = vadd.f32 %v6265, %v6543
      %v6654 = vadd.f32 %v6266, %v6548
      %v6655 = vadd.f32 %v6267, %v6553
      %v6656 = vadd.f32 %v6268, %v6558
      %v6657 = vadd.f32 %v6269, %v6563
      %v6658 = vadd.f32 %v6270, %v6568
      %v6659 = vadd.f32 %v6271, %v6573
      %v6660 = vadd.f32 %v6272, %v6578
      %v6661 = vadd.f32 %v6273, %v6583
      %v6662 = vadd.f32 %v6274, %v6588
      %v6663 = vadd.f32 %v6275, %v6593
      %v6664 = vadd.f32 %v6276, %v6598
      %v6665 = vadd.f32 %v6277, %v6603
      %v6666 = vadd.f32 %v6278, %v6608
      %v6667 = vadd.f32 %v6279, %v6613
      %v6668 = vadd.f32 %v6280, %v6618
      %v6669 = vadd.f32 %v6281, %v6623
      %v6670 = vadd.f32 %v6282, %v6628
      %v6671 = vadd.f32 %v6283, %v6633
      %v6672 = vadd.f32 %v6284, %v6638
      %v6673 = vld [vmem:[%s6285 + $0x8] sm:$0xff]
      %v6674 = vld [vmem:[%s6285 + $0x10] sm:$0xff]
      %v6675 = vld [vmem:[%s6285 + $0x28] sm:$0xff]
      %v6676 = vld [vmem:[%s6285 + $0x30] sm:$0xff]
      %v6677 = vld [vmem:[%s6285 + $0x48] sm:$0xff]
      %v6678 = vld [vmem:[%s6285 + $0x50] sm:$0xff]
      %v6679 = vld [vmem:[%s6285 + $0x68] sm:$0xff]
      %v6680 = vld [vmem:[%s6285 + $0x70] sm:$0xff]
      %v6681 = vld [vmem:[%s6285 + $0x88] sm:$0xff]
      %v6682 = vld [vmem:[%s6285 + $0x90] sm:$0xff]
      %v6683 = vld [vmem:[%s6285 + $0xa8] sm:$0xff]
      %v6684 = vld [vmem:[%s6285 + $0xb0] sm:$0xff]
      %v6685 = vld [vmem:[%s6285 + $0xc8] sm:$0xff]
      %v6686 = vld [vmem:[%s6285 + $0xd0] sm:$0xff]
      %v6687 = vld [vmem:[%s6285 + $0xe8] sm:$0xff]
      %v6688 = vld [vmem:[%s6285 + $0xf0] sm:$0xff]
      %v6689 = vld [vmem:[%s6285 + $0x108] sm:$0xff]
      %v6690 = vld [vmem:[%s6285 + $0x110] sm:$0xff]
      %v6691 = vld [vmem:[%s6285 + $0x128] sm:$0xff]
      %v6692 = vld [vmem:[%s6285 + $0x130] sm:$0xff]
      %v6693 = vld [vmem:[%s6285 + $0x148] sm:$0xff]
      %v6694 = vld [vmem:[%s6285 + $0x150] sm:$0xff]
      %v6695 = vld [vmem:[%s6285 + $0x168] sm:$0xff]
      %v6696 = vld [vmem:[%s6285 + $0x170] sm:$0xff]
      %v6697 = vld [vmem:[%s6285 + $0x188] sm:$0xff]
      %v6698 = vld [vmem:[%s6285 + $0x190] sm:$0xff]
      %v6699 = vld [vmem:[%s6285 + $0x1a8] sm:$0xff]
      %v6700 = vld [vmem:[%s6285 + $0x1b0] sm:$0xff]
      %v6701 = vld [vmem:[%s6285 + $0x1c8] sm:$0xff]
      %v6702 = vld [vmem:[%s6285 + $0x1d0] sm:$0xff]
      %v6703 = vld [vmem:[%s6285 + $0x1e8] sm:$0xff]
      %v6704 = vld [vmem:[%s6285 + $0x1f0] sm:$0xff]
      %s6705 = scalar_lea.vmem %s4, 56
      %v6706 = vld [vmem:[%s6705] sm:$0xff]
      %v6708 = vsel %vm3948, %v6673, 0
      %v6711 = vsel %vm3948, %v6674, 0
      %v6714 = vsel %vm3948, %v6675, 0
      %v6717 = vsel %vm3948, %v6676, 0
      %v6720 = vsel %vm3948, %v6677, 0
      %v6723 = vsel %vm3948, %v6678, 0
      %v6726 = vsel %vm3948, %v6679, 0
      %v6729 = vsel %vm3948, %v6680, 0
      %v6732 = vsel %vm3948, %v6681, 0
      %v6735 = vsel %vm3948, %v6682, 0
      %v6738 = vsel %vm3948, %v6683, 0
      %v6741 = vsel %vm3948, %v6684, 0
      %v6744 = vsel %vm3948, %v6685, 0
      %v6747 = vsel %vm3948, %v6686, 0
      %v6750 = vsel %vm3948, %v6687, 0
      %v6753 = vsel %vm3948, %v6688, 0
      %v6756 = vsel %vm3948, %v6689, 0
      %v6759 = vsel %vm3948, %v6690, 0
      %v6762 = vsel %vm3948, %v6691, 0
      %v6765 = vsel %vm3948, %v6692, 0
      %v6768 = vsel %vm3948, %v6693, 0
      %v6771 = vsel %vm3948, %v6694, 0
      %v6774 = vsel %vm3948, %v6695, 0
      %v6777 = vsel %vm3948, %v6696, 0
      %v6780 = vsel %vm3948, %v6697, 0
      %v6783 = vsel %vm3948, %v6698, 0
      %v6786 = vsel %vm3948, %v6699, 0
      %v6789 = vsel %vm3948, %v6700, 0
      %v6792 = vsel %vm3948, %v6701, 0
      %v6795 = vsel %vm3948, %v6702, 0
      %v6798 = vsel %vm3948, %v6703, 0
      %v6801 = vsel %vm3948, %v6704, 0
      %6803 = vmatprep.subr.mxu0 0.0
      %6804 = vmatpush1.msra.mxu0 %v6706
      %6805 = vmatprep.subr.mxu0 0.0
      %6806 = vmatpush1.msra.mxu0 0.0
      %6807 = vmatprep.subr.mxu0 0.0
      %6808 = vmatpush1.msra.mxu0 0.0
      %6809 = vmatprep.subr.mxu0 0.0
      %6810 = vmatpush1.msra.mxu0 0.0
      %6811 = vmatprep.subr.mxu0 0.0
      %6812 = vmatpush1.msra.mxu0 0.0
      %6813 = vmatprep.subr.mxu0 0.0
      %6814 = vmatpush1.msra.mxu0 0.0
      %6815 = vmatprep.subr.mxu0 0.0
      %6816 = vmatpush1.msra.mxu0 0.0
      %6817 = vmatprep.subr.mxu0 0.0
      %6818 = vmatpush1.msra.mxu0 0.0
      %6819 = vmatprep.subr.mxu0 0.0
      %6820 = vmatpush1.msra.mxu0 0.0
      %6821 = vmatprep.subr.mxu0 0.0
      %6822 = vmatpush1.msra.mxu0 0.0
      %6823 = vmatprep.subr.mxu0 0.0
      %6824 = vmatpush1.msra.mxu0 0.0
      %6825 = vmatprep.subr.mxu0 0.0
      %6826 = vmatpush1.msra.mxu0 0.0
      %6827 = vmatprep.subr.mxu0 0.0
      %6828 = vmatpush1.msra.mxu0 0.0
      %6829 = vmatprep.subr.mxu0 0.0
      %6830 = vmatpush1.msra.mxu0 0.0
      %6831 = vmatprep.subr.mxu0 0.0
      %6832 = vmatpush1.msra.mxu0 0.0
      %6833 = vmatprep.subr.mxu0 0.0
      %6834 = vmatpush1.msra.mxu0 0.0
      %6835 = vmatprep.subr.mxu0 0.0
      %6836 = vmatpush1.msra.mxu0 0.0
      %6837 = vmatprep.subr.mxu0 0.0
      %6838 = vmatpush1.msra.mxu0 0.0
      %6839 = vmatprep.subr.mxu0 0.0
      %6840 = vmatpush1.msra.mxu0 0.0
      %6841 = vmatprep.subr.mxu0 0.0
      %6842 = vmatpush1.msra.mxu0 0.0
      %6843 = vmatprep.subr.mxu0 0.0
      %6844 = vmatpush1.msra.mxu0 0.0
      %6845 = vmatprep.subr.mxu0 0.0
      %6846 = vmatpush1.msra.mxu0 0.0
      %6847 = vmatprep.subr.mxu0 0.0
      %6848 = vmatpush1.msra.mxu0 0.0
      %6849 = vmatprep.subr.mxu0 0.0
      %6850 = vmatpush1.msra.mxu0 0.0
      %6851 = vmatprep.subr.mxu0 0.0
      %6852 = vmatpush1.msra.mxu0 0.0
      %6853 = vmatprep.subr.mxu0 0.0
      %6854 = vmatpush1.msra.mxu0 0.0
      %6855 = vmatprep.subr.mxu0 0.0
      %6856 = vmatpush1.msra.mxu0 0.0
      %6857 = vmatprep.subr.mxu0 0.0
      %6858 = vmatpush1.msra.mxu0 0.0
      %6859 = vmatprep.subr.mxu0 0.0
      %6860 = vmatpush1.msra.mxu0 0.0
      %6861 = vmatprep.subr.mxu0 0.0
      %6862 = vmatpush1.msra.mxu0 0.0
      %6863 = vmatprep.subr.mxu0 0.0
      %6864 = vmatpush1.msra.mxu0 0.0
      %6865 = vmatprep.subr.mxu0 0.0
      %6866 = vmatpush1.msra.mxu0 0.0
      %6867 = vmatprep.mubr.f32.mxu0 0.0
      %6868 = vmatmul.mubr.f32.gmra.mrb[0].mxu0 %v6708
      %v6869 = vpop.f32.mrb[0].mxu0
      %v6870 = vadd.f32 0.0, %v6869
      %v6871 = vpop.f32.mrb[0].mxu0
      %6872 = vmatprep.mubr.f32.mxu0 0.0
      %6873 = vmatmul.mubr.f32.gmra.mrb[0].mxu0 %v6711
      %v6874 = vpop.f32.mrb[0].mxu0
      %v6875 = vadd.f32 0.0, %v6874
      %v6876 = vpop.f32.mrb[0].mxu0
      %6877 = vmatprep.mubr.f32.mxu0 0.0
      %6878 = vmatmul.mubr.f32.gmra.mrb[0].mxu0 %v6714
      %v6879 = vpop.f32.mrb[0].mxu0
      %v6880 = vadd.f32 0.0, %v6879
      %v6881 = vpop.f32.mrb[0].mxu0
      %6882 = vmatprep.mubr.f32.mxu0 0.0
      %6883 = vmatmul.mubr.f32.gmra.mrb[0].mxu0 %v6717
      %v6884 = vpop.f32.mrb[0].mxu0
      %v6885 = vadd.f32 0.0, %v6884
      %v6886 = vpop.f32.mrb[0].mxu0
      %6887 = vmatprep.mubr.f32.mxu0 0.0
      %6888 = vmatmul.mubr.f32.gmra.mrb[0].mxu0 %v6720
      %v6889 = vpop.f32.mrb[0].mxu0
      %v6890 = vadd.f32 0.0, %v6889
      %v6891 = vpop.f32.mrb[0].mxu0
      %6892 = vmatprep.mubr.f32.mxu0 0.0
      %6893 = vmatmul.mubr.f32.gmra.mrb[0].mxu0 %v6723
      %v6894 = vpop.f32.mrb[0].mxu0
      %v6895 = vadd.f32 0.0, %v6894
      %v6896 = vpop.f32.mrb[0].mxu0
      %6897 = vmatprep.mubr.f32.mxu0 0.0
      %6898 = vmatmul.mubr.f32.gmra.mrb[0].mxu0 %v6726
      %v6899 = vpop.f32.mrb[0].mxu0
      %v6900 = vadd.f32 0.0, %v6899
      %v6901 = vpop.f32.mrb[0].mxu0
      %6902 = vmatprep.mubr.f32.mxu0 0.0
      %6903 = vmatmul.mubr.f32.gmra.mrb[0].mxu0 %v6729
      %v6904 = vpop.f32.mrb[0].mxu0
      %v6905 = vadd.f32 0.0, %v6904
      %v6906 = vpop.f32.mrb[0].mxu0
      %6907 = vmatprep.mubr.f32.mxu0 0.0
      %6908 = vmatmul.mubr.f32.gmra.mrb[0].mxu0 %v6732
      %v6909 = vpop.f32.mrb[0].mxu0
      %v6910 = vadd.f32 0.0, %v6909
      %v6911 = vpop.f32.mrb[0].mxu0
      %6912 = vmatprep.mubr.f32.mxu0 0.0
      %6913 = vmatmul.mubr.f32.gmra.mrb[0].mxu0 %v6735
      %v6914 = vpop.f32.mrb[0].mxu0
      %v6915 = vadd.f32 0.0, %v6914
      %v6916 = vpop.f32.mrb[0].mxu0
      %6917 = vmatprep.mubr.f32.mxu0 0.0
      %6918 = vmatmul.mubr.f32.gmra.mrb[0].mxu0 %v6738
      %v6919 = vpop.f32.mrb[0].mxu0
      %v6920 = vadd.f32 0.0, %v6919
      %v6921 = vpop.f32.mrb[0].mxu0
      %6922 = vmatprep.mubr.f32.mxu0 0.0
      %6923 = vmatmul.mubr.f32.gmra.mrb[0].mxu0 %v6741
      %v6924 = vpop.f32.mrb[0].mxu0
      %v6925 = vadd.f32 0.0, %v6924
      %v6926 = vpop.f32.mrb[0].mxu0
      %6927 = vmatprep.mubr.f32.mxu0 0.0
      %6928 = vmatmul.mubr.f32.gmra.mrb[0].mxu0 %v6744
      %v6929 = vpop.f32.mrb[0].mxu0
      %v6930 = vadd.f32 0.0, %v6929
      %v6931 = vpop.f32.mrb[0].mxu0
      %6932 = vmatprep.mubr.f32.mxu0 0.0
      %6933 = vmatmul.mubr.f32.gmra.mrb[0].mxu0 %v6747
      %v6934 = vpop.f32.mrb[0].mxu0
      %v6935 = vadd.f32 0.0, %v6934
      %v6936 = vpop.f32.mrb[0].mxu0
      %6937 = vmatprep.mubr.f32.mxu0 0.0
      %6938 = vmatmul.mubr.f32.gmra.mrb[0].mxu0 %v6750
      %v6939 = vpop.f32.mrb[0].mxu0
      %v6940 = vadd.f32 0.0, %v6939
      %v6941 = vpop.f32.mrb[0].mxu0
      %6942 = vmatprep.mubr.f32.mxu0 0.0
      %6943 = vmatmul.mubr.f32.gmra.mrb[0].mxu0 %v6753
      %v6944 = vpop.f32.mrb[0].mxu0
      %v6945 = vadd.f32 0.0, %v6944
      %v6946 = vpop.f32.mrb[0].mxu0
      %6947 = vmatprep.mubr.f32.mxu0 0.0
      %6948 = vmatmul.mubr.f32.gmra.mrb[0].mxu0 %v6756
      %v6949 = vpop.f32.mrb[0].mxu0
      %v6950 = vadd.f32 0.0, %v6949
      %v6951 = vpop.f32.mrb[0].mxu0
      %6952 = vmatprep.mubr.f32.mxu0 0.0
      %6953 = vmatmul.mubr.f32.gmra.mrb[0].mxu0 %v6759
      %v6954 = vpop.f32.mrb[0].mxu0
      %v6955 = vadd.f32 0.0, %v6954
      %v6956 = vpop.f32.mrb[0].mxu0
      %6957 = vmatprep.mubr.f32.mxu0 0.0
      %6958 = vmatmul.mubr.f32.gmra.mrb[0].mxu0 %v6762
      %v6959 = vpop.f32.mrb[0].mxu0
      %v6960 = vadd.f32 0.0, %v6959
      %v6961 = vpop.f32.mrb[0].mxu0
      %6962 = vmatprep.mubr.f32.mxu0 0.0
      %6963 = vmatmul.mubr.f32.gmra.mrb[0].mxu0 %v6765
      %v6964 = vpop.f32.mrb[0].mxu0
      %v6965 = vadd.f32 0.0, %v6964
      %v6966 = vpop.f32.mrb[0].mxu0
      %6967 = vmatprep.mubr.f32.mxu0 0.0
      %6968 = vmatmul.mubr.f32.gmra.mrb[0].mxu0 %v6768
      %v6969 = vpop.f32.mrb[0].mxu0
      %v6970 = vadd.f32 0.0, %v6969
      %v6971 = vpop.f32.mrb[0].mxu0
      %6972 = vmatprep.mubr.f32.mxu0 0.0
      %6973 = vmatmul.mubr.f32.gmra.mrb[0].mxu0 %v6771
      %v6974 = vpop.f32.mrb[0].mxu0
      %v6975 = vadd.f32 0.0, %v6974
      %v6976 = vpop.f32.mrb[0].mxu0
      %6977 = vmatprep.mubr.f32.mxu0 0.0
      %6978 = vmatmul.mubr.f32.gmra.mrb[0].mxu0 %v6774
      %v6979 = vpop.f32.mrb[0].mxu0
      %v6980 = vadd.f32 0.0, %v6979
      %v6981 = vpop.f32.mrb[0].mxu0
      %6982 = vmatprep.mubr.f32.mxu0 0.0
      %6983 = vmatmul.mubr.f32.gmra.mrb[0].mxu0 %v6777
      %v6984 = vpop.f32.mrb[0].mxu0
      %v6985 = vadd.f32 0.0, %v6984
      %v6986 = vpop.f32.mrb[0].mxu0
      %6987 = vmatprep.mubr.f32.mxu0 0.0
      %6988 = vmatmul.mubr.f32.gmra.mrb[0].mxu0 %v6780
      %v6989 = vpop.f32.mrb[0].mxu0
      %v6990 = vadd.f32 0.0, %v6989
      %v6991 = vpop.f32.mrb[0].mxu0
      %6992 = vmatprep.mubr.f32.mxu0 0.0
      %6993 = vmatmul.mubr.f32.gmra.mrb[0].mxu0 %v6783
      %v6994 = vpop.f32.mrb[0].mxu0
      %v6995 = vadd.f32 0.0, %v6994
      %v6996 = vpop.f32.mrb[0].mxu0
      %6997 = vmatprep.mubr.f32.mxu0 0.0
      %6998 = vmatmul.mubr.f32.gmra.mrb[0].mxu0 %v6786
      %v6999 = vpop.f32.mrb[0].mxu0
      %v7000 = vadd.f32 0.0, %v6999
      %v7001 = vpop.f32.mrb[0].mxu0
      %7002 = vmatprep.mubr.f32.mxu0 0.0
      %7003 = vmatmul.mubr.f32.gmra.mrb[0].mxu0 %v6789
      %v7004 = vpop.f32.mrb[0].mxu0
      %v7005 = vadd.f32 0.0, %v7004
      %v7006 = vpop.f32.mrb[0].mxu0
      %7007 = vmatprep.mubr.f32.mxu0 0.0
      %7008 = vmatmul.mubr.f32.gmra.mrb[0].mxu0 %v6792
      %v7009 = vpop.f32.mrb[0].mxu0
      %v7010 = vadd.f32 0.0, %v7009
      %v7011 = vpop.f32.mrb[0].mxu0
      %7012 = vmatprep.mubr.f32.mxu0 0.0
      %7013 = vmatmul.mubr.f32.gmra.mrb[0].mxu0 %v6795
      %v7014 = vpop.f32.mrb[0].mxu0
      %v7015 = vadd.f32 0.0, %v7014
      %v7016 = vpop.f32.mrb[0].mxu0
      %7017 = vmatprep.mubr.f32.mxu0 0.0
      %7018 = vmatmul.mubr.f32.gmra.mrb[0].mxu0 %v6798
      %v7019 = vpop.f32.mrb[0].mxu0
      %v7020 = vadd.f32 0.0, %v7019
      %v7021 = vpop.f32.mrb[0].mxu0
      %7022 = vmatprep.mubr.f32.mxu0 0.0
      %7023 = vmatmul.mubr.f32.gmra.mrb[0].mxu0 %v6801
      %v7024 = vpop.f32.mrb[0].mxu0
      %v7025 = vadd.f32 0.0, %v7024
      %v7026 = vpop.f32.mrb[0].mxu0
      %7027 = vdwg.mxu0
      %v7028 = vadd.f32 %v6641, %v6870
      %v7029 = vadd.f32 %v6642, %v6875
      %v7030 = vadd.f32 %v6643, %v6880
      %v7031 = vadd.f32 %v6644, %v6885
      %v7032 = vadd.f32 %v6645, %v6890
      %v7033 = vadd.f32 %v6646, %v6895
      %v7034 = vadd.f32 %v6647, %v6900
      %v7035 = vadd.f32 %v6648, %v6905
      %v7036 = vadd.f32 %v6649, %v6910
      %v7037 = vadd.f32 %v6650, %v6915
      %v7038 = vadd.f32 %v6651, %v6920
      %v7039 = vadd.f32 %v6652, %v6925
      %v7040 = vadd.f32 %v6653, %v6930
      %v7041 = vadd.f32 %v6654, %v6935
      %v7042 = vadd.f32 %v6655, %v6940
      %v7043 = vadd.f32 %v6656, %v6945
      %v7044 = vadd.f32 %v6657, %v6950
      %v7045 = vadd.f32 %v6658, %v6955
      %v7046 = vadd.f32 %v6659, %v6960
      %v7047 = vadd.f32 %v6660, %v6965
      %v7048 = vadd.f32 %v6661, %v6970
      %v7049 = vadd.f32 %v6662, %v6975
      %v7050 = vadd.f32 %v6663, %v6980
      %v7051 = vadd.f32 %v6664, %v6985
      %v7052 = vadd.f32 %v6665, %v6990
      %v7053 = vadd.f32 %v6666, %v6995
      %v7054 = vadd.f32 %v6667, %v7000
      %v7055 = vadd.f32 %v6668, %v7005
      %v7056 = vadd.f32 %v6669, %v7010
      %v7057 = vadd.f32 %v6670, %v7015
      %v7058 = vadd.f32 %v6671, %v7020
      %v7059 = vadd.f32 %v6672, %v7025
      %v7060 = vld [vmem:[%s6285 + $0x9] sm:$0xff]
      %v7061 = vld [vmem:[%s6285 + $0x11] sm:$0xff]
      %v7062 = vld [vmem:[%s6285 + $0x29] sm:$0xff]
      %v7063 = vld [vmem:[%s6285 + $0x31] sm:$0xff]
      %v7064 = vld [vmem:[%s6285 + $0x49] sm:$0xff]
      %v7065 = vld [vmem:[%s6285 + $0x51] sm:$0xff]
      %v7066 = vld [vmem:[%s6285 + $0x69] sm:$0xff]
      %v7067 = vld [vmem:[%s6285 + $0x71] sm:$0xff]
      %v7068 = vld [vmem:[%s6285 + $0x89] sm:$0xff]
      %v7069 = vld [vmem:[%s6285 + $0x91] sm:$0xff]
      %v7070 = vld [vmem:[%s6285 + $0xa9] sm:$0xff]
      %v7071 = vld [vmem:[%s6285 + $0xb1] sm:$0xff]
      %v7072 = vld [vmem:[%s6285 + $0xc9] sm:$0xff]
      %v7073 = vld [vmem:[%s6285 + $0xd1] sm:$0xff]
      %v7074 = vld [vmem:[%s6285 + $0xe9] sm:$0xff]
      %v7075 = vld [vmem:[%s6285 + $0xf1] sm:$0xff]
      %v7076 = vld [vmem:[%s6285 + $0x109] sm:$0xff]
      %v7077 = vld [vmem:[%s6285 + $0x111] sm:$0xff]
      %v7078 = vld [vmem:[%s6285 + $0x129] sm:$0xff]
      %v7079 = vld [vmem:[%s6285 + $0x131] sm:$0xff]
      %v7080 = vld [vmem:[%s6285 + $0x149] sm:$0xff]
      %v7081 = vld [vmem:[%s6285 + $0x151] sm:$0xff]
      %v7082 = vld [vmem:[%s6285 + $0x169] sm:$0xff]
      %v7083 = vld [vmem:[%s6285 + $0x171] sm:$0xff]
      %v7084 = vld [vmem:[%s6285 + $0x189] sm:$0xff]
      %v7085 = vld [vmem:[%s6285 + $0x191] sm:$0xff]
      %v7086 = vld [vmem:[%s6285 + $0x1a9] sm:$0xff]
      %v7087 = vld [vmem:[%s6285 + $0x1b1] sm:$0xff]
      %v7088 = vld [vmem:[%s6285 + $0x1c9] sm:$0xff]
      %v7089 = vld [vmem:[%s6285 + $0x1d1] sm:$0xff]
      %v7090 = vld [vmem:[%s6285 + $0x1e9] sm:$0xff]
      %v7091 = vld [vmem:[%s6285 + $0x1f1] sm:$0xff]
      %s7092 = scalar_lea.vmem %s4, 64
      %v7093 = vld [vmem:[%s7092] sm:$0xff]
      %v7095 = vsel %vm3948, %v7060, 0
      %v7098 = vsel %vm3948, %v7061, 0
      %v7101 = vsel %vm3948, %v7062, 0
      %v7104 = vsel %vm3948, %v7063, 0
      %v7107 = vsel %vm3948, %v7064, 0
      %v7110 = vsel %vm3948, %v7065, 0
      %v7113 = vsel %vm3948, %v7066, 0
      %v7116 = vsel %vm3948, %v7067, 0
      %v7119 = vsel %vm3948, %v7068, 0
      %v7122 = vsel %vm3948, %v7069, 0
      %v7125 = vsel %vm3948, %v7070, 0
      %v7128 = vsel %vm3948, %v7071, 0
      %v7131 = vsel %vm3948, %v7072, 0
      %v7134 = vsel %vm3948, %v7073, 0
      %v7137 = vsel %vm3948, %v7074, 0
      %v7140 = vsel %vm3948, %v7075, 0
      %v7143 = vsel %vm3948, %v7076, 0
      %v7146 = vsel %vm3948, %v7077, 0
      %v7149 = vsel %vm3948, %v7078, 0
      %v7152 = vsel %vm3948, %v7079, 0
      %v7155 = vsel %vm3948, %v7080, 0
      %v7158 = vsel %vm3948, %v7081, 0
      %v7161 = vsel %vm3948, %v7082, 0
      %v7164 = vsel %vm3948, %v7083, 0
      %v7167 = vsel %vm3948, %v7084, 0
      %v7170 = vsel %vm3948, %v7085, 0
      %v7173 = vsel %vm3948, %v7086, 0
      %v7176 = vsel %vm3948, %v7087, 0
      %v7179 = vsel %vm3948, %v7088, 0
      %v7182 = vsel %vm3948, %v7089, 0
      %v7185 = vsel %vm3948, %v7090, 0
      %v7188 = vsel %vm3948, %v7091, 0
      %7190 = vmatprep.subr.mxu0 0.0
      %7191 = vmatpush1.msra.mxu0 %v7093
      %7192 = vmatprep.subr.mxu0 0.0
      %7193 = vmatpush1.msra.mxu0 0.0
      %7194 = vmatprep.subr.mxu0 0.0
      %7195 = vmatpush1.msra.mxu0 0.0
      %7196 = vmatprep.subr.mxu0 0.0
      %7197 = vmatpush1.msra.mxu0 0.0
      %7198 = vmatprep.subr.mxu0 0.0
      %7199 = vmatpush1.msra.mxu0 0.0
      %7200 = vmatprep.subr.mxu0 0.0
      %7201 = vmatpush1.msra.mxu0 0.0
      %7202 = vmatprep.subr.mxu0 0.0
      %7203 = vmatpush1.msra.mxu0 0.0
      %7204 = vmatprep.subr.mxu0 0.0
      %7205 = vmatpush1.msra.mxu0 0.0
      %7206 = vmatprep.subr.mxu0 0.0
      %7207 = vmatpush1.msra.mxu0 0.0
      %7208 = vmatprep.subr.mxu0 0.0
      %7209 = vmatpush1.msra.mxu0 0.0
      %7210 = vmatprep.subr.mxu0 0.0
      %7211 = vmatpush1.msra.mxu0 0.0
      %7212 = vmatprep.subr.mxu0 0.0
      %7213 = vmatpush1.msra.mxu0 0.0
      %7214 = vmatprep.subr.mxu0 0.0
      %7215 = vmatpush1.msra.mxu0 0.0
      %7216 = vmatprep.subr.mxu0 0.0
      %7217 = vmatpush1.msra.mxu0 0.0
      %7218 = vmatprep.subr.mxu0 0.0
      %7219 = vmatpush1.msra.mxu0 0.0
      %7220 = vmatprep.subr.mxu0 0.0
      %7221 = vmatpush1.msra.mxu0 0.0
      %7222 = vmatprep.subr.mxu0 0.0
      %7223 = vmatpush1.msra.mxu0 0.0
      %7224 = vmatprep.subr.mxu0 0.0
      %7225 = vmatpush1.msra.mxu0 0.0
      %7226 = vmatprep.subr.mxu0 0.0
      %7227 = vmatpush1.msra.mxu0 0.0
      %7228 = vmatprep.subr.mxu0 0.0
      %7229 = vmatpush1.msra.mxu0 0.0
      %7230 = vmatprep.subr.mxu0 0.0
      %7231 = vmatpush1.msra.mxu0 0.0
      %7232 = vmatprep.subr.mxu0 0.0
      %7233 = vmatpush1.msra.mxu0 0.0
      %7234 = vmatprep.subr.mxu0 0.0
      %7235 = vmatpush1.msra.mxu0 0.0
      %7236 = vmatprep.subr.mxu0 0.0
      %7237 = vmatpush1.msra.mxu0 0.0
      %7238 = vmatprep.subr.mxu0 0.0
      %7239 = vmatpush1.msra.mxu0 0.0
      %7240 = vmatprep.subr.mxu0 0.0
      %7241 = vmatpush1.msra.mxu0 0.0
      %7242 = vmatprep.subr.mxu0 0.0
      %7243 = vmatpush1.msra.mxu0 0.0
      %7244 = vmatprep.subr.mxu0 0.0
      %7245 = vmatpush1.msra.mxu0 0.0
      %7246 = vmatprep.subr.mxu0 0.0
      %7247 = vmatpush1.msra.mxu0 0.0
      %7248 = vmatprep.subr.mxu0 0.0
      %7249 = vmatpush1.msra.mxu0 0.0
      %7250 = vmatprep.subr.mxu0 0.0
      %7251 = vmatpush1.msra.mxu0 0.0
      %7252 = vmatprep.subr.mxu0 0.0
      %7253 = vmatpush1.msra.mxu0 0.0
      %7254 = vmatprep.mubr.f32.mxu0 0.0
      %7255 = vmatmul.mubr.f32.gmra.mrb[0].mxu0 %v7095
      %v7256 = vpop.f32.mrb[0].mxu0
      %v7257 = vadd.f32 0.0, %v7256
      %v7258 = vpop.f32.mrb[0].mxu0
      %7259 = vmatprep.mubr.f32.mxu0 0.0
      %7260 = vmatmul.mubr.f32.gmra.mrb[0].mxu0 %v7098
      %v7261 = vpop.f32.mrb[0].mxu0
      %v7262 = vadd.f32 0.0, %v7261
      %v7263 = vpop.f32.mrb[0].mxu0
      %7264 = vmatprep.mubr.f32.mxu0 0.0
      %7265 = vmatmul.mubr.f32.gmra.mrb[0].mxu0 %v7101
      %v7266 = vpop.f32.mrb[0].mxu0
      %v7267 = vadd.f32 0.0, %v7266
      %v7268 = vpop.f32.mrb[0].mxu0
      %7269 = vmatprep.mubr.f32.mxu0 0.0
      %7270 = vmatmul.mubr.f32.gmra.mrb[0].mxu0 %v7104
      %v7271 = vpop.f32.mrb[0].mxu0
      %v7272 = vadd.f32 0.0, %v7271
      %v7273 = vpop.f32.mrb[0].mxu0
      %7274 = vmatprep.mubr.f32.mxu0 0.0
      %7275 = vmatmul.mubr.f32.gmra.mrb[0].mxu0 %v7107
      %v7276 = vpop.f32.mrb[0].mxu0
      %v7277 = vadd.f32 0.0, %v7276
      %v7278 = vpop.f32.mrb[0].mxu0
      %7279 = vmatprep.mubr.f32.mxu0 0.0
      %7280 = vmatmul.mubr.f32.gmra.mrb[0].mxu0 %v7110
      %v7281 = vpop.f32.mrb[0].mxu0
      %v7282 = vadd.f32 0.0, %v7281
      %v7283 = vpop.f32.mrb[0].mxu0
      %7284 = vmatprep.mubr.f32.mxu0 0.0
      %7285 = vmatmul.mubr.f32.gmra.mrb[0].mxu0 %v7113
      %v7286 = vpop.f32.mrb[0].mxu0
      %v7287 = vadd.f32 0.0, %v7286
      %v7288 = vpop.f32.mrb[0].mxu0
      %7289 = vmatprep.mubr.f32.mxu0 0.0
      %7290 = vmatmul.mubr.f32.gmra.mrb[0].mxu0 %v7116
      %v7291 = vpop.f32.mrb[0].mxu0
      %v7292 = vadd.f32 0.0, %v7291
      %v7293 = vpop.f32.mrb[0].mxu0
      %7294 = vmatprep.mubr.f32.mxu0 0.0
      %7295 = vmatmul.mubr.f32.gmra.mrb[0].mxu0 %v7119
      %v7296 = vpop.f32.mrb[0].mxu0
      %v7297 = vadd.f32 0.0, %v7296
      %v7298 = vpop.f32.mrb[0].mxu0
      %7299 = vmatprep.mubr.f32.mxu0 0.0
      %7300 = vmatmul.mubr.f32.gmra.mrb[0].mxu0 %v7122
      %v7301 = vpop.f32.mrb[0].mxu0
      %v7302 = vadd.f32 0.0, %v7301
      %v7303 = vpop.f32.mrb[0].mxu0
      %7304 = vmatprep.mubr.f32.mxu0 0.0
      %7305 = vmatmul.mubr.f32.gmra.mrb[0].mxu0 %v7125
      %v7306 = vpop.f32.mrb[0].mxu0
      %v7307 = vadd.f32 0.0, %v7306
      %v7308 = vpop.f32.mrb[0].mxu0
      %7309 = vmatprep.mubr.f32.mxu0 0.0
      %7310 = vmatmul.mubr.f32.gmra.mrb[0].mxu0 %v7128
      %v7311 = vpop.f32.mrb[0].mxu0
      %v7312 = vadd.f32 0.0, %v7311
      %v7313 = vpop.f32.mrb[0].mxu0
      %7314 = vmatprep.mubr.f32.mxu0 0.0
      %7315 = vmatmul.mubr.f32.gmra.mrb[0].mxu0 %v7131
      %v7316 = vpop.f32.mrb[0].mxu0
      %v7317 = vadd.f32 0.0, %v7316
      %v7318 = vpop.f32.mrb[0].mxu0
      %7319 = vmatprep.mubr.f32.mxu0 0.0
      %7320 = vmatmul.mubr.f32.gmra.mrb[0].mxu0 %v7134
      %v7321 = vpop.f32.mrb[0].mxu0
      %v7322 = vadd.f32 0.0, %v7321
      %v7323 = vpop.f32.mrb[0].mxu0
      %7324 = vmatprep.mubr.f32.mxu0 0.0
      %7325 = vmatmul.mubr.f32.gmra.mrb[0].mxu0 %v7137
      %v7326 = vpop.f32.mrb[0].mxu0
      %v7327 = vadd.f32 0.0, %v7326
      %v7328 = vpop.f32.mrb[0].mxu0
      %7329 = vmatprep.mubr.f32.mxu0 0.0
      %7330 = vmatmul.mubr.f32.gmra.mrb[0].mxu0 %v7140
      %v7331 = vpop.f32.mrb[0].mxu0
      %v7332 = vadd.f32 0.0, %v7331
      %v7333 = vpop.f32.mrb[0].mxu0
      %7334 = vmatprep.mubr.f32.mxu0 0.0
      %7335 = vmatmul.mubr.f32.gmra.mrb[0].mxu0 %v7143
      %v7336 = vpop.f32.mrb[0].mxu0
      %v7337 = vadd.f32 0.0, %v7336
      %v7338 = vpop.f32.mrb[0].mxu0
      %7339 = vmatprep.mubr.f32.mxu0 0.0
      %7340 = vmatmul.mubr.f32.gmra.mrb[0].mxu0 %v7146
      %v7341 = vpop.f32.mrb[0].mxu0
      %v7342 = vadd.f32 0.0, %v7341
      %v7343 = vpop.f32.mrb[0].mxu0
      %7344 = vmatprep.mubr.f32.mxu0 0.0
      %7345 = vmatmul.mubr.f32.gmra.mrb[0].mxu0 %v7149
      %v7346 = vpop.f32.mrb[0].mxu0
      %v7347 = vadd.f32 0.0, %v7346
      %v7348 = vpop.f32.mrb[0].mxu0
      %7349 = vmatprep.mubr.f32.mxu0 0.0
      %7350 = vmatmul.mubr.f32.gmra.mrb[0].mxu0 %v7152
      %v7351 = vpop.f32.mrb[0].mxu0
      %v7352 = vadd.f32 0.0, %v7351
      %v7353 = vpop.f32.mrb[0].mxu0
      %7354 = vmatprep.mubr.f32.mxu0 0.0
      %7355 = vmatmul.mubr.f32.gmra.mrb[0].mxu0 %v7155
      %v7356 = vpop.f32.mrb[0].mxu0
      %v7357 = vadd.f32 0.0, %v7356
      %v7358 = vpop.f32.mrb[0].mxu0
      %7359 = vmatprep.mubr.f32.mxu0 0.0
      %7360 = vmatmul.mubr.f32.gmra.mrb[0].mxu0 %v7158
      %v7361 = vpop.f32.mrb[0].mxu0
      %v7362 = vadd.f32 0.0, %v7361
      %v7363 = vpop.f32.mrb[0].mxu0
      %7364 = vmatprep.mubr.f32.mxu0 0.0
      %7365 = vmatmul.mubr.f32.gmra.mrb[0].mxu0 %v7161
      %v7366 = vpop.f32.mrb[0].mxu0
      %v7367 = vadd.f32 0.0, %v7366
      %v7368 = vpop.f32.mrb[0].mxu0
      %7369 = vmatprep.mubr.f32.mxu0 0.0
      %7370 = vmatmul.mubr.f32.gmra.mrb[0].mxu0 %v7164
      %v7371 = vpop.f32.mrb[0].mxu0
      %v7372 = vadd.f32 0.0, %v7371
      %v7373 = vpop.f32.mrb[0].mxu0
      %7374 = vmatprep.mubr.f32.mxu0 0.0
      %7375 = vmatmul.mubr.f32.gmra.mrb[0].mxu0 %v7167
      %v7376 = vpop.f32.mrb[0].mxu0
      %v7377 = vadd.f32 0.0, %v7376
      %v7378 = vpop.f32.mrb[0].mxu0
      %7379 = vmatprep.mubr.f32.mxu0 0.0
      %7380 = vmatmul.mubr.f32.gmra.mrb[0].mxu0 %v7170
      %v7381 = vpop.f32.mrb[0].mxu0
      %v7382 = vadd.f32 0.0, %v7381
      %v7383 = vpop.f32.mrb[0].mxu0
      %7384 = vmatprep.mubr.f32.mxu0 0.0
      %7385 = vmatmul.mubr.f32.gmra.mrb[0].mxu0 %v7173
      %v7386 = vpop.f32.mrb[0].mxu0
      %v7387 = vadd.f32 0.0, %v7386
      %v7388 = vpop.f32.mrb[0].mxu0
      %7389 = vmatprep.mubr.f32.mxu0 0.0
      %7390 = vmatmul.mubr.f32.gmra.mrb[0].mxu0 %v7176
      %v7391 = vpop.f32.mrb[0].mxu0
      %v7392 = vadd.f32 0.0, %v7391
      %v7393 = vpop.f32.mrb[0].mxu0
      %7394 = vmatprep.mubr.f32.mxu0 0.0
      %7395 = vmatmul.mubr.f32.gmra.mrb[0].mxu0 %v7179
      %v7396 = vpop.f32.mrb[0].mxu0
      %v7397 = vadd.f32 0.0, %v7396
      %v7398 = vpop.f32.mrb[0].mxu0
      %7399 = vmatprep.mubr.f32.mxu0 0.0
      %7400 = vmatmul.mubr.f32.gmra.mrb[0].mxu0 %v7182
      %v7401 = vpop.f32.mrb[0].mxu0
      %v7402 = vadd.f32 0.0, %v7401
      %v7403 = vpop.f32.mrb[0].mxu0
      %7404 = vmatprep.mubr.f32.mxu0 0.0
      %7405 = vmatmul.mubr.f32.gmra.mrb[0].mxu0 %v7185
      %v7406 = vpop.f32.mrb[0].mxu0
      %v7407 = vadd.f32 0.0, %v7406
      %v7408 = vpop.f32.mrb[0].mxu0
      %7409 = vmatprep.mubr.f32.mxu0 0.0
      %7410 = vmatmul.mubr.f32.gmra.mrb[0].mxu0 %v7188
      %v7411 = vpop.f32.mrb[0].mxu0
      %v7412 = vadd.f32 0.0, %v7411
      %v7413 = vpop.f32.mrb[0].mxu0
      %7414 = vdwg.mxu0
      %v7415 = vadd.f32 %v7028, %v7257
      %v7416 = vadd.f32 %v7029, %v7262
      %v7417 = vadd.f32 %v7030, %v7267
      %v7418 = vadd.f32 %v7031, %v7272
      %v7419 = vadd.f32 %v7032, %v7277
      %v7420 = vadd.f32 %v7033, %v7282
      %v7421 = vadd.f32 %v7034, %v7287
      %v7422 = vadd.f32 %v7035, %v7292
      %v7423 = vadd.f32 %v7036, %v7297
      %v7424 = vadd.f32 %v7037, %v7302
      %v7425 = vadd.f32 %v7038, %v7307
      %v7426 = vadd.f32 %v7039, %v7312
      %v7427 = vadd.f32 %v7040, %v7317
      %v7428 = vadd.f32 %v7041, %v7322
      %v7429 = vadd.f32 %v7042, %v7327
      %v7430 = vadd.f32 %v7043, %v7332
      %v7431 = vadd.f32 %v7044, %v7337
      %v7432 = vadd.f32 %v7045, %v7342
      %v7433 = vadd.f32 %v7046, %v7347
      %v7434 = vadd.f32 %v7047, %v7352
      %v7435 = vadd.f32 %v7048, %v7357
      %v7436 = vadd.f32 %v7049, %v7362
      %v7437 = vadd.f32 %v7050, %v7367
      %v7438 = vadd.f32 %v7051, %v7372
      %v7439 = vadd.f32 %v7052, %v7377
      %v7440 = vadd.f32 %v7053, %v7382
      %v7441 = vadd.f32 %v7054, %v7387
      %v7442 = vadd.f32 %v7055, %v7392
      %v7443 = vadd.f32 %v7056, %v7397
      %v7444 = vadd.f32 %v7057, %v7402
      %v7445 = vadd.f32 %v7058, %v7407
      %v7446 = vadd.f32 %v7059, %v7412
      %v7447 = vld [vmem:[%s5] sm:$0x1]
      %v7449 = vlaneseq
      %v7450 = vshrl.u32 %v7449, 7
      %v7451 = vsub.s32 0, %v7450
      %v7452 = vrot.slane %v7447, %v7451
      %v7454 = vmul.f32 %v7415, %v7452
      %v7455 = vmul.f32 %v7416, %v7452
      %v7456 = vmul.f32 %v7417, %v7452
      %v7457 = vmul.f32 %v7418, %v7452
      %v7458 = vmul.f32 %v7419, %v7452
      %v7459 = vmul.f32 %v7420, %v7452
      %v7460 = vmul.f32 %v7421, %v7452
      %v7461 = vmul.f32 %v7422, %v7452
      %v7462 = vmul.f32 %v7423, %v7452
      %v7463 = vmul.f32 %v7424, %v7452
      %v7464 = vmul.f32 %v7425, %v7452
      %v7465 = vmul.f32 %v7426, %v7452
      %v7466 = vmul.f32 %v7427, %v7452
      %v7467 = vmul.f32 %v7428, %v7452
      %v7468 = vmul.f32 %v7429, %v7452
      %v7469 = vmul.f32 %v7430, %v7452
      %v7470 = vmul.f32 %v7431, %v7452
      %v7471 = vmul.f32 %v7432, %v7452
      %v7472 = vmul.f32 %v7433, %v7452
      %v7473 = vmul.f32 %v7434, %v7452
      %v7474 = vmul.f32 %v7435, %v7452
      %v7475 = vmul.f32 %v7436, %v7452
      %v7476 = vmul.f32 %v7437, %v7452
      %v7477 = vmul.f32 %v7438, %v7452
      %v7478 = vmul.f32 %v7439, %v7452
      %v7479 = vmul.f32 %v7440, %v7452
      %v7480 = vmul.f32 %v7441, %v7452
      %v7481 = vmul.f32 %v7442, %v7452
      %v7482 = vmul.f32 %v7443, %v7452
      %v7483 = vmul.f32 %v7444, %v7452
      %v7484 = vmul.f32 %v7445, %v7452
      %v7485 = vmul.f32 %v7446, %v7452
      %v7486 = vld [vmem:[%s6] sm:$0x1]
      %v7488 = vlaneseq
      %v7489 = vshrl.u32 %v7488, 7
      %v7490 = vsub.s32 0, %v7489
      %v7491 = vrot.slane %v7486, %v7490
      %v7493 = vadd.f32 %v7454, %v7491
      %v7494 = vadd.f32 %v7455, %v7491
      %v7495 = vadd.f32 %v7456, %v7491
      %v7496 = vadd.f32 %v7457, %v7491
      %v7497 = vadd.f32 %v7458, %v7491
      %v7498 = vadd.f32 %v7459, %v7491
      %v7499 = vadd.f32 %v7460, %v7491
      %v7500 = vadd.f32 %v7461, %v7491
      %v7501 = vadd.f32 %v7462, %v7491
      %v7502 = vadd.f32 %v7463, %v7491
      %v7503 = vadd.f32 %v7464, %v7491
      %v7504 = vadd.f32 %v7465, %v7491
      %v7505 = vadd.f32 %v7466, %v7491
      %v7506 = vadd.f32 %v7467, %v7491
      %v7507 = vadd.f32 %v7468, %v7491
      %v7508 = vadd.f32 %v7469, %v7491
      %v7509 = vadd.f32 %v7470, %v7491
      %v7510 = vadd.f32 %v7471, %v7491
      %v7511 = vadd.f32 %v7472, %v7491
      %v7512 = vadd.f32 %v7473, %v7491
      %v7513 = vadd.f32 %v7474, %v7491
      %v7514 = vadd.f32 %v7475, %v7491
      %v7515 = vadd.f32 %v7476, %v7491
      %v7516 = vadd.f32 %v7477, %v7491
      %v7517 = vadd.f32 %v7478, %v7491
      %v7518 = vadd.f32 %v7479, %v7491
      %v7519 = vadd.f32 %v7480, %v7491
      %v7520 = vadd.f32 %v7481, %v7491
      %v7521 = vadd.f32 %v7482, %v7491
      %v7522 = vadd.f32 %v7483, %v7491
      %v7523 = vadd.f32 %v7484, %v7491
      %v7524 = vadd.f32 %v7485, %v7491
      %v7525 = vmax.f32 %v7493, 0.0
      %v7526 = vmax.f32 %v7494, 0.0
      %v7527 = vmax.f32 %v7495, 0.0
      %v7528 = vmax.f32 %v7496, 0.0
      %v7529 = vmax.f32 %v7497, 0.0
      %v7530 = vmax.f32 %v7498, 0.0
      %v7531 = vmax.f32 %v7499, 0.0
      %v7532 = vmax.f32 %v7500, 0.0
      %v7533 = vmax.f32 %v7501, 0.0
      %v7534 = vmax.f32 %v7502, 0.0
      %v7535 = vmax.f32 %v7503, 0.0
      %v7536 = vmax.f32 %v7504, 0.0
      %v7537 = vmax.f32 %v7505, 0.0
      %v7538 = vmax.f32 %v7506, 0.0
      %v7539 = vmax.f32 %v7507, 0.0
      %v7540 = vmax.f32 %v7508, 0.0
      %v7541 = vmax.f32 %v7509, 0.0
      %v7542 = vmax.f32 %v7510, 0.0
      %v7543 = vmax.f32 %v7511, 0.0
      %v7544 = vmax.f32 %v7512, 0.0
      %v7545 = vmax.f32 %v7513, 0.0
      %v7546 = vmax.f32 %v7514, 0.0
      %v7547 = vmax.f32 %v7515, 0.0
      %v7548 = vmax.f32 %v7516, 0.0
      %v7549 = vmax.f32 %v7517, 0.0
      %v7550 = vmax.f32 %v7518, 0.0
      %v7551 = vmax.f32 %v7519, 0.0
      %v7552 = vmax.f32 %v7520, 0.0
      %v7553 = vmax.f32 %v7521, 0.0
      %v7554 = vmax.f32 %v7522, 0.0
      %v7555 = vmax.f32 %v7523, 0.0
      %v7556 = vmax.f32 %v7524, 0.0
      %7557 = vst.msk [vmem:[%s278] sm:$0xff] %vm3948, %v7525
      %7558 = vst.msk [vmem:[%s278 + $0x8] sm:$0xff] %vm3948, %v7526
      %7559 = vst.msk [vmem:[%s278 + $0x10] sm:$0xff] %vm3948, %v7527
      %7560 = vst.msk [vmem:[%s278 + $0x18] sm:$0xff] %vm3948, %v7528
      %7561 = vst.msk [vmem:[%s278 + $0x20] sm:$0xff] %vm3948, %v7529
      %7562 = vst.msk [vmem:[%s278 + $0x28] sm:$0xff] %vm3948, %v7530
      %7563 = vst.msk [vmem:[%s278 + $0x30] sm:$0xff] %vm3948, %v7531
      %7564 = vst.msk [vmem:[%s278 + $0x38] sm:$0xff] %vm3948, %v7532
      %7565 = vst.msk [vmem:[%s278 + $0x40] sm:$0xff] %vm3948, %v7533
      %7566 = vst.msk [vmem:[%s278 + $0x48] sm:$0xff] %vm3948, %v7534
      %7567 = vst.msk [vmem:[%s278 + $0x50] sm:$0xff] %vm3948, %v7535
      %7568 = vst.msk [vmem:[%s278 + $0x58] sm:$0xff] %vm3948, %v7536
      %7569 = vst.msk [vmem:[%s278 + $0x60] sm:$0xff] %vm3948, %v7537
      %7570 = vst.msk [vmem:[%s278 + $0x68] sm:$0xff] %vm3948, %v7538
      %7571 = vst.msk [vmem:[%s278 + $0x70] sm:$0xff] %vm3948, %v7539
      %7572 = vst.msk [vmem:[%s278 + $0x78] sm:$0xff] %vm3948, %v7540
      %7573 = vst.msk [vmem:[%s278 + $0x80] sm:$0xff] %vm3948, %v7541
      %7574 = vst.msk [vmem:[%s278 + $0x88] sm:$0xff] %vm3948, %v7542
      %7575 = vst.msk [vmem:[%s278 + $0x90] sm:$0xff] %vm3948, %v7543
      %7576 = vst.msk [vmem:[%s278 + $0x98] sm:$0xff] %vm3948, %v7544
      %7577 = vst.msk [vmem:[%s278 + $0xa0] sm:$0xff] %vm3948, %v7545
      %7578 = vst.msk [vmem:[%s278 + $0xa8] sm:$0xff] %vm3948, %v7546
      %7579 = vst.msk [vmem:[%s278 + $0xb0] sm:$0xff] %vm3948, %v7547
      %7580 = vst.msk [vmem:[%s278 + $0xb8] sm:$0xff] %vm3948, %v7548
      %7581 = vst.msk [vmem:[%s278 + $0xc0] sm:$0xff] %vm3948, %v7549
      %7582 = vst.msk [vmem:[%s278 + $0xc8] sm:$0xff] %vm3948, %v7550
      %7583 = vst.msk [vmem:[%s278 + $0xd0] sm:$0xff] %vm3948, %v7551
      %7584 = vst.msk [vmem:[%s278 + $0xd8] sm:$0xff] %vm3948, %v7552
      %7585 = vst.msk [vmem:[%s278 + $0xe0] sm:$0xff] %vm3948, %v7553
      %7586 = vst.msk [vmem:[%s278 + $0xe8] sm:$0xff] %vm3948, %v7554
      %7587 = vst.msk [vmem:[%s278 + $0xf0] sm:$0xff] %vm3948, %v7555
      %7588 = vst.msk [vmem:[%s278 + $0xf8] sm:$0xff] %vm3948, %v7556
      %p7589 = scmp.lt.s32.totalorder %s18, 1
      %s7590 = scalar_select %p7589, %s18, 1
      %s7591 = smul.addr %s7590, 32
      %s7592 = smul.addr %s7591, 8
      %s7593 = scalar_lea.vmem %s7, %s7592
      // Predicated region
      $region49: #{tpu_custom_call.1} parent=47 // pred_check
        %p7594 = pneg %p188
      $region50: #{tpu_custom_call.1} parent=47 // pred_check_branch
        %7596 = sbr.rel (%p7594) target = $region52
      $region51: #{tpu_custom_call.1} parent=47 // pred_region
        _
      $region52: #{tpu_custom_call.1} parent=47 // pred_fallthru
        _
    $region48: #{tpu_custom_call.1} parent=5 // pred_fallthru
      _
    %p7597 = scmp.le.s32.totalorder 2, %s13
    // Predicated region
    $region53: #{tpu_custom_call.1} parent=5 // pred_check
      %p7598 = pneg %p7597
    $region54: #{tpu_custom_call.1} parent=5 // pred_check_branch
      %7600 = sbr.rel (%p7598) target = $region56
    $region55: #{tpu_custom_call.1} parent=5 // pred_region
      %s7601 = ssub.s32 %s13, 2
      // Predicated region
      $region57: #{tpu_custom_call.1} parent=55 // pred_check
        %p7602 = pneg %p194
      $region58: #{tpu_custom_call.1} parent=55 // pred_check_branch
        %7604 = sbr.rel (%p7602) target = $region60
      $region59: #{tpu_custom_call.1} parent=55 // pred_region
        %p7605 = scmp.lt.s32.totalorder %s19, 1
        %s7606 = scalar_select %p7605, %s19, 1
        %s7607 = smul.addr %s7606, 32
        %s7608 = smul.addr %s7607, 8
        %s7609 = scalar_lea.vmem %s7, %s7608
      $region60: #{tpu_custom_call.1} parent=55 // pred_fallthru
        _
    $region56: #{tpu_custom_call.1} parent=5 // pred_fallthru
      _
  $region6: #{tpu_custom_call.1} parent=0 // loop_footer
    %s17 = sadd.s32 1, %s13
  $region7: #{tpu_custom_call.1} parent=0 // loop_footer_branch
    %12 = sbr.rel target = $region3
  $region8: #{tpu_custom_call.1} parent=0 // loop_exit
    _

</llo_original>
